<compile_context>
chip_gen: v7x
topology: tpu7x:2x2x1
jax: 0.10.0
libtpu: 0.0.40
codegen_flags: <defaults>
</compile_context>

<pallas_src>
import functools
import numpy as np

import jax
import jax.numpy as jnp
from jax.experimental import pallas as pl
from jax.experimental.pallas import tpu as pltpu

D = 15
BN_EPS = 1e-5

# Feature widths (real / lane-padded to multiples of 128).
DIN_PAD = 128                   # 15  -> 128
H_LIN1 = 128                    # 128 (already lane-aligned)
L2, L2_PAD = 288, 384           # 3*3*32
C1, HW1 = 16, 7 * 7
F1, F1_PAD = C1 * HW1, 896      # 784  -> 896
C2, HW2 = 8, 14 * 14
F2, F2_PAD = C2 * HW2, 1664     # 1568 -> 1664
F3, F3_PAD = 784, 896           # 1*28*28 -> 896


# --------------------------------------------------------------------------
# Host-side, one-time parameter preparation
# --------------------------------------------------------------------------
def convT_dense_matrix(weight, stride, padding, output_padding, H_in, W_in):
    """Dense M s.t. y_flat = x_flat @ M == ConvTranspose2d(x) (no bias)."""
    C_in, C_out, kH, kW = weight.shape
    H_out = (H_in - 1) * stride - 2 * padding + kH + output_padding
    W_out = (W_in - 1) * stride - 2 * padding + kW + output_padding
    M = np.zeros((C_in, H_in, W_in, C_out, H_out, W_out), np.float32)
    for ih in range(H_in):
        for kh in range(kH):
            oh = ih * stride - padding + kh
            if not (0 <= oh < H_out):
                continue
            for iw in range(W_in):
                for kw in range(kW):
                    ow = iw * stride - padding + kw
                    if not (0 <= ow < W_out):
                        continue
                    M[:, ih, iw, :, oh, ow] += weight[:, :, kh, kw]
    return M.reshape(C_in * H_in * W_in, C_out * H_out * W_out), H_out, W_out


def _pad2(a, rows, cols):
    return np.pad(a, ((0, rows - a.shape[0]), (0, cols - a.shape[1])))


def init_params(key):
    ks = jax.random.split(key, 10)

    def rn(k, shape, scale):
        return np.asarray(scale * jax.random.normal(k, shape, jnp.float32))

    p = {}
    p["W1"] = rn(ks[0], (D, 128), 0.2)
    p["b1"] = rn(ks[1], (128,), 0.1)
    p["W2"] = rn(ks[2], (128, L2), 0.1)
    p["b2"] = rn(ks[3], (L2,), 0.1)
    p["Wc1"] = rn(ks[4], (32, 16, 3, 3), 0.1)   # ConvTranspose2d: (Cin,Cout,kH,kW)
    p["bc1"] = rn(ks[5], (16,), 0.1)
    p["Wc2"] = rn(ks[6], (16, 8, 3, 3), 0.1)
    p["bc2"] = rn(ks[7], (8,), 0.1)
    p["Wc3"] = rn(ks[8], (8, 1, 3, 3), 0.1)
    p["bc3"] = rn(ks[9], (1,), 0.1)
    p["g1"] = np.ones((16,), np.float32)
    p["be1"] = np.zeros((16,), np.float32)
    p["g2"] = np.ones((8,), np.float32)
    p["be2"] = np.zeros((8,), np.float32)
    return p


def prepare_weights(p):
    """One-time: build dense conv matrices, lane-pad, cast, upload to device."""
    f32, bf16 = jnp.float32, jnp.bfloat16
    M1, _, _ = convT_dense_matrix(p["Wc1"], 2, 0, 0, 3, 3)      # (288, 784)  3x3->7x7
    M2, _, _ = convT_dense_matrix(p["Wc2"], 2, 1, 1, 7, 7)      # (784, 1568) 7x7->14x14
    M3, _, _ = convT_dense_matrix(p["Wc3"], 2, 1, 1, 14, 14)    # (1568, 784) 14x14->28x28
    return dict(
        w1=jnp.asarray(_pad2(p["W1"], DIN_PAD, H_LIN1), bf16),
        b1=jnp.asarray(p["b1"][None, :], f32),
        w2=jnp.asarray(_pad2(p["W2"], H_LIN1, L2_PAD), bf16),
        b2=jnp.asarray(np.pad(p["b2"], (0, L2_PAD - L2))[None, :], f32),
        m1=jnp.asarray(_pad2(M1, L2_PAD, F1_PAD), bf16),
        cb1=jnp.asarray(np.pad(np.repeat(p["bc1"], HW1), (0, F1_PAD - F1))[None, :], f32),
        m2=jnp.asarray(_pad2(M2, F1_PAD, F2_PAD), bf16),
        cb2=jnp.asarray(np.pad(np.repeat(p["bc2"], HW2), (0, F2_PAD - F2))[None, :], f32),
        m3=jnp.asarray(_pad2(M3, F2_PAD, F3_PAD), bf16),
        cb3=jnp.asarray(np.pad(np.repeat(p["bc3"], 28 * 28), (0, F3_PAD - F3))[None, :], f32),
        g1=jnp.asarray(p["g1"], f32), be1=jnp.asarray(p["be1"], f32),
        g2=jnp.asarray(p["g2"], f32), be2=jnp.asarray(p["be2"], f32),
    )


# --------------------------------------------------------------------------
# Pallas kernels
# --------------------------------------------------------------------------
def _write_masked_stats(z, n_ref, st_ref):
    """Per-tile [colsum; colsumsq] over valid batch rows only (f32, exact)."""
    tm = z.shape[0]
    rows = jax.lax.broadcasted_iota(jnp.int32, (tm, 1), 0) + pl.program_id(0) * tm
    mask = (rows < n_ref[0]).astype(z.dtype)
    zm = z * mask
    st_ref[...] = jnp.concatenate(
        [jnp.sum(zm, axis=0, keepdims=True),
         jnp.sum(zm * zm, axis=0, keepdims=True)], axis=0)[None]


def _stage1_kernel(n_ref, x_ref, w1_ref, b1_ref, w2_ref, b2_ref, m1_ref, cb1_ref,
                   z_ref, st_ref):
    """Linear(15,128)+ReLU, Linear(128,288)+ReLU, ConvT1 (3x3->7x7) pre-BN."""
    f32, bf16 = jnp.float32, jnp.bfloat16
    h = jnp.maximum(jnp.dot(x_ref[...].astype(bf16), w1_ref[...],
                            preferred_element_type=f32) + b1_ref[...], 0.0)
    h = jnp.maximum(jnp.dot(h.astype(bf16), w2_ref[...],
                            preferred_element_type=f32) + b2_ref[...], 0.0)
    z = jnp.dot(h.astype(bf16), m1_ref[...], preferred_element_type=f32) + cb1_ref[...]
    z_ref[...] = z
    _write_masked_stats(z, n_ref, st_ref)


def _stage2_kernel(n_ref, z1_ref, a_ref, bsh_ref, m2_ref, cb2_ref, z_ref, st_ref):
    """Apply BN1 (scale/shift) + ReLU, ConvT2 (7x7->14x14) pre-BN."""
    f32, bf16 = jnp.float32, jnp.bfloat16
    y = jnp.maximum(z1_ref[...] * a_ref[...] + bsh_ref[...], 0.0)
    z = jnp.dot(y.astype(bf16), m2_ref[...], preferred_element_type=f32) + cb2_ref[...]
    z_ref[...] = z
    _write_masked_stats(z, n_ref, st_ref)


def _stage3_kernel(z2_ref, a_ref, bsh_ref, m3_ref, cb3_ref, o_ref):
    """Apply BN2 + ReLU, ConvT3 (14x14->28x28), sigmoid."""
    f32, bf16 = jnp.float32, jnp.bfloat16
    y = jnp.maximum(z2_ref[...] * a_ref[...] + bsh_ref[...], 0.0)
    z = jnp.dot(y.astype(bf16), m3_ref[...], preferred_element_type=f32) + cb3_ref[...]
    # sigmoid(x) = 0.5*tanh(0.5*x)+0.5 : single exact EUP pass.
    o_ref[...] = 0.5 * jnp.tanh(0.5 * z) + 0.5


# --------------------------------------------------------------------------
# Forward pass (jitted; all weights already device-resident)
# --------------------------------------------------------------------------
def _compiler_params():
    # 48 MiB scoped VMEM: raises v5e's 16 MiB default, comfortably under v7x's
    # 64 MiB physical VMEM even with double-buffered ~3 MiB bf16 conv matrices.
    return pltpu.CompilerParams(
        dimension_semantics=("parallel",),
        vmem_limit_bytes=48 * 1024 * 1024)


def _const(shape):
    return pl.BlockSpec(shape, lambda i, n: (0,) * len(shape))


def _bn_scale_shift(stats, n, C, HW, Wpad, gamma, beta):
    """Finalize BN from per-tile sums (exact f32, tiny) -> per-column a, b."""
    s = jnp.sum(stats, axis=0)                          # (2, Wpad)
    s = s[:, :C * HW].reshape(2, C, HW).sum(axis=-1)    # (2, C)
    cnt = n[0].astype(jnp.float32) * HW
    mean = s[0] / cnt
    # TODO(synk): E[x^2]-E[x]^2 can cancel if |mean| >> std; fine at unit scale.
    var = jnp.maximum(s[1] / cnt - mean * mean, 0.0)
    a = gamma * jax.lax.rsqrt(var + BN_EPS)
    b = beta - mean * a
    a_col = jnp.pad(jnp.repeat(a, HW), (0, Wpad - C * HW))[None, :]
    b_col = jnp.pad(jnp.repeat(b, HW), (0, Wpad - C * HW))[None, :]
    return a_col, b_col


def _forward(w, x, n, *, tm):
    f32 = jnp.float32
    N = x.shape[0]
    tm = min(tm, -(-N // 16) * 16)          # small batches: pad to 16 (bf16 pack)
    npad = -(-N // tm) * tm
    nt = npad // tm
    xp = jnp.pad(x.astype(f32), ((0, npad - N), (0, DIN_PAD - x.shape[1])))

    row = lambda width: pl.BlockSpec((tm, width), lambda i, n_: (i, 0))
    st_spec = pl.BlockSpec((1, 2, F1_PAD), lambda i, n_: (i, 0, 0))
    st_spec2 = pl.BlockSpec((1, 2, F2_PAD), lambda i, n_: (i, 0, 0))

    # ---- stage 1: lin1 + lin2 + convT1 (pre-BN) + BN1 partial stats --------
    fl1 = 2 * npad * (DIN_PAD * H_LIN1 + H_LIN1 * L2_PAD + L2_PAD * F1_PAD)
    by1 = (2 * (DIN_PAD * H_LIN1 + H_LIN1 * L2_PAD + L2_PAD * F1_PAD)
           + 4 * npad * (DIN_PAD + F1_PAD) + 4 * nt * 2 * F1_PAD)
    z1, st1 = pl.pallas_call(
        _stage1_kernel,
        out_shape=(jax.ShapeDtypeStruct((npad, F1_PAD), f32),
                   jax.ShapeDtypeStruct((nt, 2, F1_PAD), f32)),
        grid_spec=pltpu.PrefetchScalarGridSpec(
            num_scalar_prefetch=1, grid=(nt,),
            in_specs=[row(DIN_PAD),
                      _const((DIN_PAD, H_LIN1)), _const((1, H_LIN1)),
                      _const((H_LIN1, L2_PAD)), _const((1, L2_PAD)),
                      _const((L2_PAD, F1_PAD)), _const((1, F1_PAD))],
            out_specs=[row(F1_PAD), st_spec]),
        compiler_params=_compiler_params(),
        cost_estimate=pl.CostEstimate(flops=fl1, transcendentals=0,
                                      bytes_accessed=by1),
    )(n, xp, w["w1"], w["b1"], w["w2"], w["b2"], w["m1"], w["cb1"])

    a1, b1 = _bn_scale_shift(st1, n, C1, HW1, F1_PAD, w["g1"], w["be1"])

    # ---- stage 2: BN1 apply + ReLU + convT2 (pre-BN) + BN2 partial stats ---
    fl2 = 2 * npad * F1_PAD * F2_PAD
    by2 = (2 * F1_PAD * F2_PAD + 4 * npad * (F1_PAD + F2_PAD)
           + 4 * nt * 2 * F2_PAD + 4 * 3 * F2_PAD)
    z2, st2 = pl.pallas_call(
        _stage2_kernel,
        out_shape=(jax.ShapeDtypeStruct((npad, F2_PAD), f32),
                   jax.ShapeDtypeStruct((nt, 2, F2_PAD), f32)),
        grid_spec=pltpu.PrefetchScalarGridSpec(
            num_scalar_prefetch=1, grid=(nt,),
            in_specs=[row(F1_PAD), _const((1, F1_PAD)), _const((1, F1_PAD)),
                      _const((F1_PAD, F2_PAD)), _const((1, F2_PAD))],
            out_specs=[row(F2_PAD), st_spec2]),
        compiler_params=_compiler_params(),
        cost_estimate=pl.CostEstimate(flops=fl2, transcendentals=0,
                                      bytes_accessed=by2),
    )(n, z1, a1, b1, w["m2"], w["cb2"])

    a2, b2 = _bn_scale_shift(st2, n, C2, HW2, F2_PAD, w["g2"], w["be2"])

    # ---- stage 3: BN2 apply + ReLU + convT3 + sigmoid ----------------------
    fl3 = 2 * npad * F2_PAD * F3_PAD
    by3 = 2 * F2_PAD * F3_PAD + 4 * npad * (F2_PAD + F3_PAD) + 4 * 3 * F3_PAD
    out = pl.pallas_call(
        _stage3_kernel,
        out_shape=jax.ShapeDtypeStruct((npad, F3_PAD), f32),
        grid_spec=pltpu.PrefetchScalarGridSpec(
            num_scalar_prefetch=0, grid=(nt,),
            in_specs=[pl.BlockSpec((tm, F2_PAD), lambda i: (i, 0)),
                      pl.BlockSpec((1, F2_PAD), lambda i: (0, 0)),
                      pl.BlockSpec((1, F2_PAD), lambda i: (0, 0)),
                      pl.BlockSpec((F2_PAD, F3_PAD), lambda i: (0, 0)),
                      pl.BlockSpec((1, F3_PAD), lambda i: (0, 0))],
            out_specs=pl.BlockSpec((tm, F3_PAD), lambda i: (i, 0))),
        compiler_params=_compiler_params(),
        cost_estimate=pl.CostEstimate(flops=fl3, transcendentals=npad * F3_PAD,
                                      bytes_accessed=by3),
    )(z2, a2, b2, w["m3"], w["cb3"])

    return out[:N, :F3].reshape(N, 1, 28, 28)


def make_decoder3l(params, tm=128):
    """Returns (device_weights, jitted_forward).  tm: 128 (v5e) / 256 (v6e,v7x)."""
    weights = prepare_weights(params)
    fwd = jax.jit(functools.partial(_forward, tm=tm))
    return weights, fwd


# --------------------------------------------------------------------------
# Pure numpy reference (float64)
# --------------------------------------------------------------------------
def ref_forward(x, p):
    h = np.maximum(x @ p["W1"].astype(np.float64) + p["b1"], 0.0)
    h = np.maximum(h @ p["W2"].astype(np.float64) + p["b2"], 0.0)
    h = h.reshape(x.shape[0], 32, 3, 3)

    def convT(inp, w, b, stride, pad, outpad):
        Nb, C_in, H_in, W_in = inp.shape
        _, C_out, kH, kW = w.shape
        H_out = (H_in - 1) * stride - 2 * pad + kH + outpad
        W_out = (W_in - 1) * stride - 2 * pad + kW + outpad
        y = np.zeros((Nb, C_out, H_out, W_out), np.float64)
        for ih in range(H_in):
            for iw in range(W_in):
                for kh in range(kH):
                    for kw in range(kW):
                        oh = ih * stride - pad + kh
                        ow = iw * stride - pad + kw
                        if 0 <= oh < H_out and 0 <= ow < W_out:
                            y[:, :, oh, ow] += np.einsum(
                                "nc,co->no", inp[:, :, ih, iw], w[:, :, kh, kw])
        return y + b.reshape(1, -1, 1, 1)

    def bn_relu(y, g, be):
        mean = y.mean(axis=(0, 2, 3), keepdims=True)
        var = y.var(axis=(0, 2, 3), keepdims=True)     # biased (train-mode BN)
        yn = (y - mean) / np.sqrt(var + BN_EPS)
        return np.maximum(yn * g.reshape(1, -1, 1, 1) + be.reshape(1, -1, 1, 1), 0.0)

    y = bn_relu(convT(h, p["Wc1"].astype(np.float64), p["bc1"], 2, 0, 0), p["g1"], p["be1"])
    y = bn_relu(convT(y, p["Wc2"].astype(np.float64), p["bc2"], 2, 1, 1), p["g2"], p["be2"])
    y = convT(y, p["Wc3"].astype(np.float64), p["bc3"], 2, 1, 1)
    return 1.0 / (1.0 + np.exp(-y))


if __name__ == "__main__":
    key = jax.random.PRNGKey(0)
    kx, kp = jax.random.split(key)
    N = 8
    x = jax.random.normal(kx, (N, D), jnp.float32)
    params = init_params(kp)

    weights, fwd = make_decoder3l(params, tm=128)
    out = fwd(weights, x, jnp.array([N], jnp.int32))
    out = jax.block_until_ready(out)
    assert out.shape == (N, 1, 28, 28), out.shape

    ref = ref_forward(np.asarray(x, np.float64), params)
    # bf16 MXU operands on the chained matmuls -> loose-ish tolerance.
    np.testing.assert_allclose(np.asarray(out, np.float64), ref, rtol=3e-2, atol=3e-2)
    print("KERNEL_OK")
</pallas_src>

<mosaic_0001>
module attributes {stable_mosaic.version = 11 : i64} {
  func.func @_stage1_kernel(%arg0: i32, %arg1: memref<1xi32, #tpu.memory_space<smem>>, %arg2: memref<16x128xf32, #tpu.memory_space<vmem>>, %arg3: memref<128x128xbf16, #tpu.memory_space<vmem>>, %arg4: memref<1x128xf32, #tpu.memory_space<vmem>>, %arg5: memref<128x384xbf16, #tpu.memory_space<vmem>>, %arg6: memref<1x384xf32, #tpu.memory_space<vmem>>, %arg7: memref<384x896xbf16, #tpu.memory_space<vmem>>, %arg8: memref<1x896xf32, #tpu.memory_space<vmem>>, %arg9: memref<16x896xf32, #tpu.memory_space<vmem>>, %arg10: memref<1x2x896xf32, #tpu.memory_space<vmem>>) attributes {dimension_semantics = [#tpu.dimension_semantics<parallel>], iteration_bounds = array<i64: 1>, scalar_prefetch = 1 : i64, scratch_operands = 0 : i64, tpu.core_type = #tpu.core_type<tc>, window_params = [{transform_indices = @transform_0, window_bounds = array<i64: 16, 128>}, {pipeline_mode = #tpu.pipeline_mode<synchronous>, transform_indices = @transform_1, window_bounds = array<i64: 128, 128>}, {pipeline_mode = #tpu.pipeline_mode<synchronous>, transform_indices = @transform_2, window_bounds = array<i64: 1, 128>}, {pipeline_mode = #tpu.pipeline_mode<synchronous>, transform_indices = @transform_3, window_bounds = array<i64: 128, 384>}, {pipeline_mode = #tpu.pipeline_mode<synchronous>, transform_indices = @transform_4, window_bounds = array<i64: 1, 384>}, {pipeline_mode = #tpu.pipeline_mode<synchronous>, transform_indices = @transform_5, window_bounds = array<i64: 384, 896>}, {pipeline_mode = #tpu.pipeline_mode<synchronous>, transform_indices = @transform_6, window_bounds = array<i64: 1, 896>}, {transform_indices = @transform_7, window_bounds = array<i64: 16, 896>}, {transform_indices = @transform_8, window_bounds = array<i64: 1, 2, 896>}]} {
    %c0 = arith.constant 0 : index
    %c0_0 = arith.constant 0 : index
    %0 = vector.load %arg2[%c0, %c0_0] : memref<16x128xf32, #tpu.memory_space<vmem>>, vector<16x128xf32>
    %1 = arith.truncf %0 : vector<16x128xf32> to vector<16x128xbf16>
    %c0_1 = arith.constant 0 : index
    %c0_2 = arith.constant 0 : index
    %2 = vector.load %arg3[%c0_1, %c0_2] : memref<128x128xbf16, #tpu.memory_space<vmem>>, vector<128x128xbf16>
    %cst = arith.constant dense<0.000000e+00> : vector<16x128xf32>
    %3 = tpu.matmul %1, %2, %cst {dimension_numbers = #tpu.dot_dimension_numbers<[1], [0], [0], [1], [0, 0, 1, 1], [], []>} : vector<16x128xbf16>, vector<128x128xbf16>, vector<16x128xf32> -> vector<16x128xf32>
    %c0_3 = arith.constant 0 : index
    %c0_4 = arith.constant 0 : index
    %4 = vector.load %arg4[%c0_3, %c0_4] : memref<1x128xf32, #tpu.memory_space<vmem>>, vector<1x128xf32>
    %5 = vector.broadcast %4 : vector<1x128xf32> to vector<16x128xf32>
    %6 = arith.addf %3, %5 : vector<16x128xf32>
    %cst_5 = arith.constant 0.000000e+00 : f32
    %7 = vector.broadcast %cst_5 : f32 to vector<16x128xf32>
    %8 = arith.maximumf %6, %7 : vector<16x128xf32>
    %9 = arith.truncf %8 : vector<16x128xf32> to vector<16x128xbf16>
    %c0_6 = arith.constant 0 : index
    %c0_7 = arith.constant 0 : index
    %10 = vector.load %arg5[%c0_6, %c0_7] : memref<128x384xbf16, #tpu.memory_space<vmem>>, vector<128x384xbf16>
    %cst_8 = arith.constant dense<0.000000e+00> : vector<16x384xf32>
    %11 = tpu.matmul %9, %10, %cst_8 {dimension_numbers = #tpu.dot_dimension_numbers<[1], [0], [0], [1], [0, 0, 1, 1], [], []>} : vector<16x128xbf16>, vector<128x384xbf16>, vector<16x384xf32> -> vector<16x384xf32>
    %c0_9 = arith.constant 0 : index
    %c0_10 = arith.constant 0 : index
    %12 = vector.load %arg6[%c0_9, %c0_10] : memref<1x384xf32, #tpu.memory_space<vmem>>, vector<1x384xf32>
    %13 = vector.broadcast %12 : vector<1x384xf32> to vector<16x384xf32>
    %14 = arith.addf %11, %13 : vector<16x384xf32>
    %cst_11 = arith.constant 0.000000e+00 : f32
    %15 = vector.broadcast %cst_11 : f32 to vector<16x384xf32>
    %16 = arith.maximumf %14, %15 : vector<16x384xf32>
    %17 = arith.truncf %16 : vector<16x384xf32> to vector<16x384xbf16>
    %c0_12 = arith.constant 0 : index
    %c0_13 = arith.constant 0 : index
    %18 = vector.load %arg7[%c0_12, %c0_13] : memref<384x896xbf16, #tpu.memory_space<vmem>>, vector<384x896xbf16>
    %cst_14 = arith.constant dense<0.000000e+00> : vector<16x896xf32>
    %19 = tpu.matmul %17, %18, %cst_14 {dimension_numbers = #tpu.dot_dimension_numbers<[1], [0], [0], [1], [0, 0, 1, 1], [], []>} : vector<16x384xbf16>, vector<384x896xbf16>, vector<16x896xf32> -> vector<16x896xf32>
    %c0_15 = arith.constant 0 : index
    %c0_16 = arith.constant 0 : index
    %20 = vector.load %arg8[%c0_15, %c0_16] : memref<1x896xf32, #tpu.memory_space<vmem>>, vector<1x896xf32>
    %21 = vector.broadcast %20 : vector<1x896xf32> to vector<16x896xf32>
    %22 = arith.addf %19, %21 : vector<16x896xf32>
    %c0_17 = arith.constant 0 : index
    %c0_18 = arith.constant 0 : index
    %23 = vector.load %arg9[%c0_17, %c0_18] : memref<16x896xf32, #tpu.memory_space<vmem>>, vector<16x896xf32>
    tpu.vector_store %arg9[%c0_17, %c0_18], %22 {strides = array<i32>} : memref<16x896xf32, #tpu.memory_space<vmem>>, vector<16x896xf32>,
    %24 = tpu.iota {dimensions = array<i32: 0>} : vector<16x1xi32>
    %c16_i32 = arith.constant 16 : i32
    %25 = arith.muli %arg0, %c16_i32 : i32
    %26 = vector.broadcast %25 : i32 to vector<16x1xi32>
    %27 = arith.addi %24, %26 : vector<16x1xi32>
    %c0_19 = arith.constant 0 : index
    %28 = memref.load %arg1[%c0_19] : memref<1xi32, #tpu.memory_space<smem>>
    %29 = vector.broadcast %28 : i32 to vector<16x1xi32>
    %30 = arith.cmpi slt, %27, %29 : vector<16x1xi32>
    %31 = arith.extui %30 : vector<16x1xi1> to vector<16x1xi32>
    %32 = arith.sitofp %31 : vector<16x1xi32> to vector<16x1xf32>
    %33 = vector.broadcast %32 : vector<16x1xf32> to vector<16x896xf32>
    %34 = arith.mulf %22, %33 : vector<16x896xf32>
    %cst_20 = arith.constant dense<0.000000e+00> : vector<896xf32>
    %35 = vector.multi_reduction <add>, %34, %cst_20 [0] : vector<16x896xf32> to vector<896xf32>
    %36 = vector.shape_cast %35 : vector<896xf32> to vector<1x896xf32>
    %37 = arith.mulf %34, %34 : vector<16x896xf32>
    %cst_21 = arith.constant dense<0.000000e+00> : vector<896xf32>
    %38 = vector.multi_reduction <add>, %37, %cst_21 [0] : vector<16x896xf32> to vector<896xf32>
    %39 = vector.shape_cast %38 : vector<896xf32> to vector<1x896xf32>
    %40 = tpu.concatenate %36, %39 in 0 : vector<1x896xf32>, vector<1x896xf32> -> vector<2x896xf32>
    %41 = vector.shape_cast %40 : vector<2x896xf32> to vector<1x2x896xf32>
    %c0_22 = arith.constant 0 : index
    %c0_23 = arith.constant 0 : index
    %c0_24 = arith.constant 0 : index
    %42 = vector.load %arg10[%c0_22, %c0_23, %c0_24] : memref<1x2x896xf32, #tpu.memory_space<vmem>>, vector<1x2x896xf32>
    tpu.vector_store %arg10[%c0_22, %c0_23, %c0_24], %41 {strides = array<i32>} : memref<1x2x896xf32, #tpu.memory_space<vmem>>, vector<1x2x896xf32>,
    return
  }
  func.func @transform_0(%arg0: i32, %arg1: memref<1xi32, #tpu.memory_space<smem>>) -> (i32, i32) {
    %c0_i32 = arith.constant 0 : i32
    %c0_i32_0 = arith.constant 0 : i32
    return %arg0, %c0_i32 : i32, i32
  }
  func.func @transform_1(%arg0: i32, %arg1: memref<1xi32, #tpu.memory_space<smem>>) -> (i32, i32) {
    %c0_i32 = arith.constant 0 : i32
    %c0_i32_0 = arith.constant 0 : i32
    %c0_i32_1 = arith.constant 0 : i32
    return %c0_i32, %c0_i32_0 : i32, i32
  }
  func.func @transform_2(%arg0: i32, %arg1: memref<1xi32, #tpu.memory_space<smem>>) -> (i32, i32) {
    %c0_i32 = arith.constant 0 : i32
    %c0_i32_0 = arith.constant 0 : i32
    %c0_i32_1 = arith.constant 0 : i32
    return %c0_i32, %c0_i32_0 : i32, i32
  }
  func.func @transform_3(%arg0: i32, %arg1: memref<1xi32, #tpu.memory_space<smem>>) -> (i32, i32) {
    %c0_i32 = arith.constant 0 : i32
    %c0_i32_0 = arith.constant 0 : i32
    %c0_i32_1 = arith.constant 0 : i32
    return %c0_i32, %c0_i32_0 : i32, i32
  }
  func.func @transform_4(%arg0: i32, %arg1: memref<1xi32, #tpu.memory_space<smem>>) -> (i32, i32) {
    %c0_i32 = arith.constant 0 : i32
    %c0_i32_0 = arith.constant 0 : i32
    %c0_i32_1 = arith.constant 0 : i32
    return %c0_i32, %c0_i32_0 : i32, i32
  }
  func.func @transform_5(%arg0: i32, %arg1: memref<1xi32, #tpu.memory_space<smem>>) -> (i32, i32) {
    %c0_i32 = arith.constant 0 : i32
    %c0_i32_0 = arith.constant 0 : i32
    %c0_i32_1 = arith.constant 0 : i32
    return %c0_i32, %c0_i32_0 : i32, i32
  }
  func.func @transform_6(%arg0: i32, %arg1: memref<1xi32, #tpu.memory_space<smem>>) -> (i32, i32) {
    %c0_i32 = arith.constant 0 : i32
    %c0_i32_0 = arith.constant 0 : i32
    %c0_i32_1 = arith.constant 0 : i32
    return %c0_i32, %c0_i32_0 : i32, i32
  }
  func.func @transform_7(%arg0: i32, %arg1: memref<1xi32, #tpu.memory_space<smem>>) -> (i32, i32) {
    %c0_i32 = arith.constant 0 : i32
    %c0_i32_0 = arith.constant 0 : i32
    return %arg0, %c0_i32 : i32, i32
  }
  func.func @transform_8(%arg0: i32, %arg1: memref<1xi32, #tpu.memory_space<smem>>) -> (i32, i32, i32) {
    %c0_i32 = arith.constant 0 : i32
    %c0_i32_0 = arith.constant 0 : i32
    %c0_i32_1 = arith.constant 0 : i32
    return %arg0, %c0_i32, %c0_i32_0 : i32, i32, i32
  }
}

module attributes {stable_mosaic.version = 11 : i64} {
  func.func @_stage2_kernel(%arg0: i32, %arg1: memref<1xi32, #tpu.memory_space<smem>>, %arg2: memref<16x896xf32, #tpu.memory_space<vmem>>, %arg3: memref<1x896xf32, #tpu.memory_space<vmem>>, %arg4: memref<1x896xf32, #tpu.memory_space<vmem>>, %arg5: memref<896x1664xbf16, #tpu.memory_space<vmem>>, %arg6: memref<1x1664xf32, #tpu.memory_space<vmem>>, %arg7: memref<16x1664xf32, #tpu.memory_space<vmem>>, %arg8: memref<1x2x1664xf32, #tpu.memory_space<vmem>>) attributes {dimension_semantics = [#tpu.dimension_semantics<parallel>], iteration_bounds = array<i64: 1>, scalar_prefetch = 1 : i64, scratch_operands = 0 : i64, tpu.core_type = #tpu.core_type<tc>, window_params = [{transform_indices = @transform_0, window_bounds = array<i64: 16, 896>}, {pipeline_mode = #tpu.pipeline_mode<synchronous>, transform_indices = @transform_1, window_bounds = array<i64: 1, 896>}, {pipeline_mode = #tpu.pipeline_mode<synchronous>, transform_indices = @transform_2, window_bounds = array<i64: 1, 896>}, {pipeline_mode = #tpu.pipeline_mode<synchronous>, transform_indices = @transform_3, window_bounds = array<i64: 896, 1664>}, {pipeline_mode = #tpu.pipeline_mode<synchronous>, transform_indices = @transform_4, window_bounds = array<i64: 1, 1664>}, {transform_indices = @transform_5, window_bounds = array<i64: 16, 1664>}, {transform_indices = @transform_6, window_bounds = array<i64: 1, 2, 1664>}]} {
    %c0 = arith.constant 0 : index
    %c0_0 = arith.constant 0 : index
    %0 = vector.load %arg2[%c0, %c0_0] : memref<16x896xf32, #tpu.memory_space<vmem>>, vector<16x896xf32>
    %c0_1 = arith.constant 0 : index
    %c0_2 = arith.constant 0 : index
    %1 = vector.load %arg3[%c0_1, %c0_2] : memref<1x896xf32, #tpu.memory_space<vmem>>, vector<1x896xf32>
    %2 = vector.broadcast %1 : vector<1x896xf32> to vector<16x896xf32>
    %3 = arith.mulf %0, %2 : vector<16x896xf32>
    %c0_3 = arith.constant 0 : index
    %c0_4 = arith.constant 0 : index
    %4 = vector.load %arg4[%c0_3, %c0_4] : memref<1x896xf32, #tpu.memory_space<vmem>>, vector<1x896xf32>
    %5 = vector.broadcast %4 : vector<1x896xf32> to vector<16x896xf32>
    %6 = arith.addf %3, %5 : vector<16x896xf32>
    %cst = arith.constant 0.000000e+00 : f32
    %7 = vector.broadcast %cst : f32 to vector<16x896xf32>
    %8 = arith.maximumf %6, %7 : vector<16x896xf32>
    %9 = arith.truncf %8 : vector<16x896xf32> to vector<16x896xbf16>
    %c0_5 = arith.constant 0 : index
    %c0_6 = arith.constant 0 : index
    %10 = vector.load %arg5[%c0_5, %c0_6] : memref<896x1664xbf16, #tpu.memory_space<vmem>>, vector<896x1664xbf16>
    %cst_7 = arith.constant dense<0.000000e+00> : vector<16x1664xf32>
    %11 = tpu.matmul %9, %10, %cst_7 {dimension_numbers = #tpu.dot_dimension_numbers<[1], [0], [0], [1], [0, 0, 1, 1], [], []>} : vector<16x896xbf16>, vector<896x1664xbf16>, vector<16x1664xf32> -> vector<16x1664xf32>
    %c0_8 = arith.constant 0 : index
    %c0_9 = arith.constant 0 : index
    %12 = vector.load %arg6[%c0_8, %c0_9] : memref<1x1664xf32, #tpu.memory_space<vmem>>, vector<1x1664xf32>
    %13 = vector.broadcast %12 : vector<1x1664xf32> to vector<16x1664xf32>
    %14 = arith.addf %11, %13 : vector<16x1664xf32>
    %c0_10 = arith.constant 0 : index
    %c0_11 = arith.constant 0 : index
    %15 = vector.load %arg7[%c0_10, %c0_11] : memref<16x1664xf32, #tpu.memory_space<vmem>>, vector<16x1664xf32>
    tpu.vector_store %arg7[%c0_10, %c0_11], %14 {strides = array<i32>} : memref<16x1664xf32, #tpu.memory_space<vmem>>, vector<16x1664xf32>,
    %16 = tpu.iota {dimensions = array<i32: 0>} : vector<16x1xi32>
    %c16_i32 = arith.constant 16 : i32
    %17 = arith.muli %arg0, %c16_i32 : i32
    %18 = vector.broadcast %17 : i32 to vector<16x1xi32>
    %19 = arith.addi %16, %18 : vector<16x1xi32>
    %c0_12 = arith.constant 0 : index
    %20 = memref.load %arg1[%c0_12] : memref<1xi32, #tpu.memory_space<smem>>
    %21 = vector.broadcast %20 : i32 to vector<16x1xi32>
    %22 = arith.cmpi slt, %19, %21 : vector<16x1xi32>
    %23 = arith.extui %22 : vector<16x1xi1> to vector<16x1xi32>
    %24 = arith.sitofp %23 : vector<16x1xi32> to vector<16x1xf32>
    %25 = vector.broadcast %24 : vector<16x1xf32> to vector<16x1664xf32>
    %26 = arith.mulf %14, %25 : vector<16x1664xf32>
    %cst_13 = arith.constant dense<0.000000e+00> : vector<1664xf32>
    %27 = vector.multi_reduction <add>, %26, %cst_13 [0] : vector<16x1664xf32> to vector<1664xf32>
    %28 = vector.shape_cast %27 : vector<1664xf32> to vector<1x1664xf32>
    %29 = arith.mulf %26, %26 : vector<16x1664xf32>
    %cst_14 = arith.constant dense<0.000000e+00> : vector<1664xf32>
    %30 = vector.multi_reduction <add>, %29, %cst_14 [0] : vector<16x1664xf32> to vector<1664xf32>
    %31 = vector.shape_cast %30 : vector<1664xf32> to vector<1x1664xf32>
    %32 = tpu.concatenate %28, %31 in 0 : vector<1x1664xf32>, vector<1x1664xf32> -> vector<2x1664xf32>
    %33 = vector.shape_cast %32 : vector<2x1664xf32> to vector<1x2x1664xf32>
    %c0_15 = arith.constant 0 : index
    %c0_16 = arith.constant 0 : index
    %c0_17 = arith.constant 0 : index
    %34 = vector.load %arg8[%c0_15, %c0_16, %c0_17] : memref<1x2x1664xf32, #tpu.memory_space<vmem>>, vector<1x2x1664xf32>
    tpu.vector_store %arg8[%c0_15, %c0_16, %c0_17], %33 {strides = array<i32>} : memref<1x2x1664xf32, #tpu.memory_space<vmem>>, vector<1x2x1664xf32>,
    return
  }
  func.func @transform_0(%arg0: i32, %arg1: memref<1xi32, #tpu.memory_space<smem>>) -> (i32, i32) {
    %c0_i32 = arith.constant 0 : i32
    %c0_i32_0 = arith.constant 0 : i32
    return %arg0, %c0_i32 : i32, i32
  }
  func.func @transform_1(%arg0: i32, %arg1: memref<1xi32, #tpu.memory_space<smem>>) -> (i32, i32) {
    %c0_i32 = arith.constant 0 : i32
    %c0_i32_0 = arith.constant 0 : i32
    %c0_i32_1 = arith.constant 0 : i32
    return %c0_i32, %c0_i32_0 : i32, i32
  }
  func.func @transform_2(%arg0: i32, %arg1: memref<1xi32, #tpu.memory_space<smem>>) -> (i32, i32) {
    %c0_i32 = arith.constant 0 : i32
    %c0_i32_0 = arith.constant 0 : i32
    %c0_i32_1 = arith.constant 0 : i32
    return %c0_i32, %c0_i32_0 : i32, i32
  }
  func.func @transform_3(%arg0: i32, %arg1: memref<1xi32, #tpu.memory_space<smem>>) -> (i32, i32) {
    %c0_i32 = arith.constant 0 : i32
    %c0_i32_0 = arith.constant 0 : i32
    %c0_i32_1 = arith.constant 0 : i32
    return %c0_i32, %c0_i32_0 : i32, i32
  }
  func.func @transform_4(%arg0: i32, %arg1: memref<1xi32, #tpu.memory_space<smem>>) -> (i32, i32) {
    %c0_i32 = arith.constant 0 : i32
    %c0_i32_0 = arith.constant 0 : i32
    %c0_i32_1 = arith.constant 0 : i32
    return %c0_i32, %c0_i32_0 : i32, i32
  }
  func.func @transform_5(%arg0: i32, %arg1: memref<1xi32, #tpu.memory_space<smem>>) -> (i32, i32) {
    %c0_i32 = arith.constant 0 : i32
    %c0_i32_0 = arith.constant 0 : i32
    return %arg0, %c0_i32 : i32, i32
  }
  func.func @transform_6(%arg0: i32, %arg1: memref<1xi32, #tpu.memory_space<smem>>) -> (i32, i32, i32) {
    %c0_i32 = arith.constant 0 : i32
    %c0_i32_0 = arith.constant 0 : i32
    %c0_i32_1 = arith.constant 0 : i32
    return %arg0, %c0_i32, %c0_i32_0 : i32, i32, i32
  }
}

module attributes {stable_mosaic.version = 11 : i64} {
  func.func @_stage3_kernel(%arg0: i32, %arg1: memref<16x1664xf32, #tpu.memory_space<vmem>>, %arg2: memref<1x1664xf32, #tpu.memory_space<vmem>>, %arg3: memref<1x1664xf32, #tpu.memory_space<vmem>>, %arg4: memref<1664x896xbf16, #tpu.memory_space<vmem>>, %arg5: memref<1x896xf32, #tpu.memory_space<vmem>>, %arg6: memref<16x896xf32, #tpu.memory_space<vmem>>) attributes {dimension_semantics = [#tpu.dimension_semantics<parallel>], iteration_bounds = array<i64: 1>, scalar_prefetch = 0 : i64, scratch_operands = 0 : i64, tpu.core_type = #tpu.core_type<tc>, window_params = [{transform_indices = @transform_0, window_bounds = array<i64: 16, 1664>}, {pipeline_mode = #tpu.pipeline_mode<synchronous>, transform_indices = @transform_1, window_bounds = array<i64: 1, 1664>}, {pipeline_mode = #tpu.pipeline_mode<synchronous>, transform_indices = @transform_2, window_bounds = array<i64: 1, 1664>}, {pipeline_mode = #tpu.pipeline_mode<synchronous>, transform_indices = @transform_3, window_bounds = array<i64: 1664, 896>}, {pipeline_mode = #tpu.pipeline_mode<synchronous>, transform_indices = @transform_4, window_bounds = array<i64: 1, 896>}, {transform_indices = @transform_5, window_bounds = array<i64: 16, 896>}]} {
    %c0 = arith.constant 0 : index
    %c0_0 = arith.constant 0 : index
    %0 = vector.load %arg1[%c0, %c0_0] : memref<16x1664xf32, #tpu.memory_space<vmem>>, vector<16x1664xf32>
    %c0_1 = arith.constant 0 : index
    %c0_2 = arith.constant 0 : index
    %1 = vector.load %arg2[%c0_1, %c0_2] : memref<1x1664xf32, #tpu.memory_space<vmem>>, vector<1x1664xf32>
    %2 = vector.broadcast %1 : vector<1x1664xf32> to vector<16x1664xf32>
    %3 = arith.mulf %0, %2 : vector<16x1664xf32>
    %c0_3 = arith.constant 0 : index
    %c0_4 = arith.constant 0 : index
    %4 = vector.load %arg3[%c0_3, %c0_4] : memref<1x1664xf32, #tpu.memory_space<vmem>>, vector<1x1664xf32>
    %5 = vector.broadcast %4 : vector<1x1664xf32> to vector<16x1664xf32>
    %6 = arith.addf %3, %5 : vector<16x1664xf32>
    %cst = arith.constant 0.000000e+00 : f32
    %7 = vector.broadcast %cst : f32 to vector<16x1664xf32>
    %8 = arith.maximumf %6, %7 : vector<16x1664xf32>
    %9 = arith.truncf %8 : vector<16x1664xf32> to vector<16x1664xbf16>
    %c0_5 = arith.constant 0 : index
    %c0_6 = arith.constant 0 : index
    %10 = vector.load %arg4[%c0_5, %c0_6] : memref<1664x896xbf16, #tpu.memory_space<vmem>>, vector<1664x896xbf16>
    %cst_7 = arith.constant dense<0.000000e+00> : vector<16x896xf32>
    %11 = tpu.matmul %9, %10, %cst_7 {dimension_numbers = #tpu.dot_dimension_numbers<[1], [0], [0], [1], [0, 0, 1, 1], [], []>} : vector<16x1664xbf16>, vector<1664x896xbf16>, vector<16x896xf32> -> vector<16x896xf32>
    %c0_8 = arith.constant 0 : index
    %c0_9 = arith.constant 0 : index
    %12 = vector.load %arg5[%c0_8, %c0_9] : memref<1x896xf32, #tpu.memory_space<vmem>>, vector<1x896xf32>
    %13 = vector.broadcast %12 : vector<1x896xf32> to vector<16x896xf32>
    %14 = arith.addf %11, %13 : vector<16x896xf32>
    %cst_10 = arith.constant 5.000000e-01 : f32
    %15 = vector.broadcast %cst_10 : f32 to vector<16x896xf32>
    %16 = arith.mulf %15, %14 : vector<16x896xf32>
    %17 = math.tanh %16 : vector<16x896xf32>
    %cst_11 = arith.constant 5.000000e-01 : f32
    %18 = vector.broadcast %cst_11 : f32 to vector<16x896xf32>
    %19 = arith.mulf %18, %17 : vector<16x896xf32>
    %cst_12 = arith.constant 5.000000e-01 : f32
    %20 = vector.broadcast %cst_12 : f32 to vector<16x896xf32>
    %21 = arith.addf %19, %20 : vector<16x896xf32>
    %c0_13 = arith.constant 0 : index
    %c0_14 = arith.constant 0 : index
    %22 = vector.load %arg6[%c0_13, %c0_14] : memref<16x896xf32, #tpu.memory_space<vmem>>, vector<16x896xf32>
    tpu.vector_store %arg6[%c0_13, %c0_14], %21 {strides = array<i32>} : memref<16x896xf32, #tpu.memory_space<vmem>>, vector<16x896xf32>,
    return
  }
  func.func @transform_0(%arg0: i32) -> (i32, i32) {
    %c0_i32 = arith.constant 0 : i32
    %c0_i32_0 = arith.constant 0 : i32
    return %arg0, %c0_i32 : i32, i32
  }
  func.func @transform_1(%arg0: i32) -> (i32, i32) {
    %c0_i32 = arith.constant 0 : i32
    %c0_i32_0 = arith.constant 0 : i32
    %c0_i32_1 = arith.constant 0 : i32
    return %c0_i32, %c0_i32_0 : i32, i32
  }
  func.func @transform_2(%arg0: i32) -> (i32, i32) {
    %c0_i32 = arith.constant 0 : i32
    %c0_i32_0 = arith.constant 0 : i32
    %c0_i32_1 = arith.constant 0 : i32
    return %c0_i32, %c0_i32_0 : i32, i32
  }
  func.func @transform_3(%arg0: i32) -> (i32, i32) {
    %c0_i32 = arith.constant 0 : i32
    %c0_i32_0 = arith.constant 0 : i32
    %c0_i32_1 = arith.constant 0 : i32
    return %c0_i32, %c0_i32_0 : i32, i32
  }
  func.func @transform_4(%arg0: i32) -> (i32, i32) {
    %c0_i32 = arith.constant 0 : i32
    %c0_i32_0 = arith.constant 0 : i32
    %c0_i32_1 = arith.constant 0 : i32
    return %c0_i32, %c0_i32_0 : i32, i32
  }
  func.func @transform_5(%arg0: i32) -> (i32, i32) {
    %c0_i32 = arith.constant 0 : i32
    %c0_i32_0 = arith.constant 0 : i32
    return %arg0, %c0_i32 : i32, i32
  }
}

</mosaic_0001>

<llo_original>
// kernel: _forward.3
$region0: #{_forward.3}
  #allocation0 [shape = 'u32[]', space=smem, size = 0x4, offset = 0x4, fixed_abs, tag = 'smem constant byte address 0x4 - core index']
  #allocation1 [shape = 'u32[144,128]{1,0:T(1,128)}', space=vmem, size = 0x12000, scoped, tag = 'internal scratch']
  #allocation2 [shape = 's32[1]{0}', space=sflag, size = 0x4, scoped, tag = 'scoped memory for _forward.3']
  #allocation3 [shape = 's32[1]{0:T(128)S(6)}', space=smem, size = 0x200, scoped, tag = 'prefetched SMEM operand 0']
  %s0 = inlined_call_operand.<no memory space> [shape: s32[1], index: 0, kind: input, shape index: {}]
  %s1 = inlined_call_operand.vmem [shape: f32[16,128], index: 1, kind: input, shape index: {}]
  %s2 = inlined_call_operand.hbm [shape: bf16[128,128], index: 2, kind: input, shape index: {}]
  %s3 = inlined_call_operand.hbm [shape: f32[1,128], index: 3, kind: input, shape index: {}]
  %s4 = inlined_call_operand.hbm [shape: bf16[128,384], index: 4, kind: input, shape index: {}]
  %s5 = inlined_call_operand.hbm [shape: f32[1,384], index: 5, kind: input, shape index: {}]
  %s6 = inlined_call_operand.hbm [shape: bf16[384,896], index: 6, kind: input, shape index: {}]
  %s7 = inlined_call_operand.hbm [shape: f32[1,896], index: 7, kind: input, shape index: {}]
  %s8 = inlined_call_operand.vmem [shape: f32[16,896], index: 8, kind: output, shape index: {0}]
  %s9 = inlined_call_operand.vmem [shape: f32[1,2,896], index: 9, kind: output, shape index: {1}]
  %10 = xla_tuple %s8, %s9
  %s11 = sld [smem:[#allocation0]]
  $region70: #{_forward.3} parent=0
    _
  %s13 = ssub.s32 1, %s11
  %s14 = scalar_select 0, %s13, %s11
  %15 = sst [smem:[#allocation3]] %s0
  $region1: #{_forward.3} parent=0
    #allocation4 [shape = 'u8[32768]{0}', space=vmem, size = 0x8000, scoped, tag = 'input window, operand 2, single buffered']
    #allocation5 [shape = 's32[1]{0}', space=sflag, size = 0x4, scoped, tag = 'scoped memory for _forward.3']
    #allocation6 [shape = 'u8[512]{0}', space=vmem, size = 0x400, scoped, tag = 'input window, operand 3, single buffered']
    #allocation7 [shape = 's32[1]{0}', space=sflag, size = 0x4, scoped, tag = 'scoped memory for _forward.3']
    #allocation8 [shape = 'u8[98304]{0}', space=vmem, size = 0x18000, scoped, tag = 'input window, operand 4, single buffered']
    #allocation9 [shape = 'u8[1536]{0}', space=vmem, size = 0x800, scoped, tag = 'input window, operand 5, single buffered']
    #allocation10 [shape = 's32[1]{0}', space=sflag, size = 0x4, scoped, tag = 'scoped memory for _forward.3']
    #allocation11 [shape = 'u8[688128]{0}', space=vmem, size = 0xa8000, scoped, tag = 'input window, operand 6, single buffered']
    #allocation12 [shape = 'u8[3584]{0}', space=vmem, size = 0x1000, scoped, tag = 'input window, operand 7, single buffered']
    #allocation13 [shape = 's32[1]{0}', space=sflag, size = 0x4, scoped, tag = 'scoped memory for _forward.3']
    %16 = vsyncpa [#allocation5], 0
    %17 = vsyncpa [#allocation7], 0
    %18 = vsyncpa [#allocation10], 0
    %19 = vsyncpa [#allocation13], 0
    // Predicated region
    $region2: #{_forward.3} parent=1 // pred_check
      _
    $region3: #{_forward.3} parent=1 // pred_check_branch
      %21 = sbr.rel (0) target = $region5
    $region4: #{_forward.3} parent=1 // pred_region
      _
    $region5: #{_forward.3} parent=1 // pred_fallthru
      _
    // Predicated region
    $region6: #{_forward.3} parent=1 // pred_check
      _
    $region7: #{_forward.3} parent=1 // pred_check_branch
      %23 = sbr.rel (0) target = $region9
    $region8: #{_forward.3} parent=1 // pred_region
      %s25 = ssub.s32 1024, 1024
      %26 = vsyncadd [#allocation5], %s25
      %s27 = sshll.u32 [#allocation4], 4
      %s28 = int_to_ptr.vmem [resolvable:$true] %s27
      %33 = dma.hbm_to_vmem [thread:$0]  %s2, 1024, %s28, [#allocation5], 64, 64, 4
    $region9: #{_forward.3} parent=1 // pred_fallthru
      _
    // Predicated region
    $region10: #{_forward.3} parent=1 // pred_check
      _
    $region11: #{_forward.3} parent=1 // pred_check_branch
      %35 = sbr.rel (0) target = $region13
    $region12: #{_forward.3} parent=1 // pred_region
      %s37 = ssub.s32 16, 16
      %38 = vsyncadd [#allocation7], %s37
      %s40 = sshll.u32 [#allocation6], 4
      %s41 = int_to_ptr.vmem [resolvable:$true] %s40
      %43 = dma.hbm_to_vmem [thread:$0]  %s3, 16, %s41, [#allocation7]
    $region13: #{_forward.3} parent=1 // pred_fallthru
      _
    // Predicated region
    $region14: #{_forward.3} parent=1 // pred_check
      _
    $region15: #{_forward.3} parent=1 // pred_check_branch
      %45 = sbr.rel (0) target = $region17
    $region16: #{_forward.3} parent=1 // pred_region
      %s47 = ssub.s32 3072, 3072
      %48 = vsyncadd [#allocation7], %s47
      %s49 = sshll.u32 [#allocation8], 4
      %s50 = int_to_ptr.vmem [resolvable:$true] %s49
      %55 = dma.hbm_to_vmem [thread:$0]  %s4, 3072, %s50, [#allocation7], 192, 192, 12
    $region17: #{_forward.3} parent=1 // pred_fallthru
      _
    // Predicated region
    $region18: #{_forward.3} parent=1 // pred_check
      _
    $region19: #{_forward.3} parent=1 // pred_check_branch
      %57 = sbr.rel (0) target = $region21
    $region20: #{_forward.3} parent=1 // pred_region
      %s59 = ssub.s32 48, 48
      %60 = vsyncadd [#allocation10], %s59
      %s62 = sshll.u32 [#allocation9], 4
      %s63 = int_to_ptr.vmem [resolvable:$true] %s62
      %65 = dma.hbm_to_vmem [thread:$0]  %s5, 48, %s63, [#allocation10]
    $region21: #{_forward.3} parent=1 // pred_fallthru
      _
    // Predicated region
    $region22: #{_forward.3} parent=1 // pred_check
      _
    $region23: #{_forward.3} parent=1 // pred_check_branch
      %67 = sbr.rel (0) target = $region25
    $region24: #{_forward.3} parent=1 // pred_region
      %s69 = ssub.s32 21504, 21504
      %70 = vsyncadd [#allocation10], %s69
      %s71 = sshll.u32 [#allocation11], 4
      %s72 = int_to_ptr.vmem [resolvable:$true] %s71
      %77 = dma.hbm_to_vmem [thread:$0]  %s6, 21504, %s72, [#allocation10], 448, 448, 28
    $region25: #{_forward.3} parent=1 // pred_fallthru
      _
    // Predicated region
    $region26: #{_forward.3} parent=1 // pred_check
      _
    $region27: #{_forward.3} parent=1 // pred_check_branch
      %79 = sbr.rel (0) target = $region29
    $region28: #{_forward.3} parent=1 // pred_region
      %s81 = ssub.s32 112, 112
      %82 = vsyncadd [#allocation13], %s81
      %s84 = sshll.u32 [#allocation12], 4
      %s85 = int_to_ptr.vmem [resolvable:$true] %s84
      %87 = dma.hbm_to_vmem [thread:$0]  %s7, 112, %s85, [#allocation13]
    $region29: #{_forward.3} parent=1 // pred_fallthru
      _
    // Predicated region
    $region30: #{_forward.3} parent=1 // pred_check
      _
    $region31: #{_forward.3} parent=1 // pred_check_branch
      %89 = sbr.rel (0) target = $region33
    $region32: #{_forward.3} parent=1 // pred_region
      %90 = dma.done [#allocation5], 1024
    $region33: #{_forward.3} parent=1 // pred_fallthru
      _
    // Predicated region
    $region34: #{_forward.3} parent=1 // pred_check
      _
    $region35: #{_forward.3} parent=1 // pred_check_branch
      %92 = sbr.rel (0) target = $region37
    $region36: #{_forward.3} parent=1 // pred_region
      %93 = dma.done [#allocation7], 16
    $region37: #{_forward.3} parent=1 // pred_fallthru
      _
    // Predicated region
    $region38: #{_forward.3} parent=1 // pred_check
      _
    $region39: #{_forward.3} parent=1 // pred_check_branch
      %95 = sbr.rel (0) target = $region41
    $region40: #{_forward.3} parent=1 // pred_region
      %96 = dma.done [#allocation7], 3072
    $region41: #{_forward.3} parent=1 // pred_fallthru
      _
    // Predicated region
    $region42: #{_forward.3} parent=1 // pred_check
      _
    $region43: #{_forward.3} parent=1 // pred_check_branch
      %98 = sbr.rel (0) target = $region45
    $region44: #{_forward.3} parent=1 // pred_region
      %99 = dma.done [#allocation10], 48
    $region45: #{_forward.3} parent=1 // pred_fallthru
      _
    // Predicated region
    $region46: #{_forward.3} parent=1 // pred_check
      _
    $region47: #{_forward.3} parent=1 // pred_check_branch
      %101 = sbr.rel (0) target = $region49
    $region48: #{_forward.3} parent=1 // pred_region
      %102 = dma.done [#allocation10], 21504
    $region49: #{_forward.3} parent=1 // pred_fallthru
      _
    // Predicated region
    $region50: #{_forward.3} parent=1 // pred_check
      _
    $region51: #{_forward.3} parent=1 // pred_check_branch
      %104 = sbr.rel (0) target = $region53
    $region52: #{_forward.3} parent=1 // pred_region
      %105 = dma.done [#allocation13], 112
    $region53: #{_forward.3} parent=1 // pred_fallthru
      _
    %v107 = vld [vmem:[%s1] sm:$0xff]
    %v108 = vld [vmem:[%s1 + $0x8] sm:$0xff]
    %v109 = vpack.c.bf16 %v108, %v107
    %v110 = vld [vmem:[#allocation4] sm:$0xf]
    %v111 = vld [vmem:[#allocation4 + $0x4] sm:$0xf]
    %v112 = vld [vmem:[#allocation4 + $0x8] sm:$0xf]
    %v113 = vld [vmem:[#allocation4 + $0xc] sm:$0xf]
    %v114 = vld [vmem:[#allocation4 + $0x10] sm:$0xf]
    %v115 = vld [vmem:[#allocation4 + $0x14] sm:$0xf]
    %v116 = vld [vmem:[#allocation4 + $0x18] sm:$0xf]
    %v117 = vld [vmem:[#allocation4 + $0x1c] sm:$0xf]
    %v118 = vld [vmem:[#allocation4 + $0x20] sm:$0xf]
    %v119 = vld [vmem:[#allocation4 + $0x24] sm:$0xf]
    %v120 = vld [vmem:[#allocation4 + $0x28] sm:$0xf]
    %v121 = vld [vmem:[#allocation4 + $0x2c] sm:$0xf]
    %v122 = vld [vmem:[#allocation4 + $0x30] sm:$0xf]
    %v123 = vld [vmem:[#allocation4 + $0x34] sm:$0xf]
    %v124 = vld [vmem:[#allocation4 + $0x38] sm:$0xf]
    %v125 = vld [vmem:[#allocation4 + $0x3c] sm:$0xf]
    %v126 = vld [vmem:[#allocation6] sm:$0x1]
    %v128 = vlaneseq
    %v129 = vshrl.u32 %v128, 7
    %v130 = vsub.s32 0, %v129
    %v131 = vrot.slane %v126, %v130
    %v149 = vunpack.c.l.b16 %v110
    %v150 = vunpack.c.l.b16 %v111
    %v151 = vunpack.c.l.b16 %v112
    %v152 = vunpack.c.l.b16 %v113
    %v153 = vunpack.c.l.b16 %v114
    %v154 = vunpack.c.l.b16 %v115
    %v155 = vunpack.c.l.b16 %v116
    %v156 = vunpack.c.l.b16 %v117
    %v157 = vunpack.c.l.b16 %v118
    %v158 = vunpack.c.l.b16 %v119
    %v159 = vunpack.c.l.b16 %v120
    %v160 = vunpack.c.l.b16 %v121
    %v161 = vunpack.c.l.b16 %v122
    %v162 = vunpack.c.l.b16 %v123
    %v163 = vunpack.c.l.b16 %v124
    %v164 = vunpack.c.l.b16 %v125
    %v165 = vpack.c.b16 %v150, %v149
    %v166 = vpack.c.b16 %v152, %v151
    %v167 = vpack.c.b16 %v154, %v153
    %v168 = vpack.c.b16 %v156, %v155
    %v169 = vpack.c.b16 %v158, %v157
    %v170 = vpack.c.b16 %v160, %v159
    %v171 = vpack.c.b16 %v162, %v161
    %v172 = vpack.c.b16 %v164, %v163
    %181 = vmatprep.subr.bf16.mxu0 0
    %182 = vmatpush1.bf16.msra.mxu0 %v165
    %183 = vmatprep.subr.bf16.mxu0 0
    %184 = vmatpush1.bf16.msra.mxu0 %v166
    %185 = vmatprep.subr.bf16.mxu0 0
    %186 = vmatpush1.bf16.msra.mxu0 %v167
    %187 = vmatprep.subr.bf16.mxu0 0
    %188 = vmatpush1.bf16.msra.mxu0 %v168
    %189 = vmatprep.subr.bf16.mxu0 0
    %190 = vmatpush1.bf16.msra.mxu0 %v169
    %191 = vmatprep.subr.bf16.mxu0 0
    %192 = vmatpush1.bf16.msra.mxu0 %v170
    %193 = vmatprep.subr.bf16.mxu0 0
    %194 = vmatpush1.bf16.msra.mxu0 %v171
    %195 = vmatprep.subr.bf16.mxu0 0
    %196 = vmatpush1.bf16.msra.mxu0 %v172
    %197 = vmatprep.subr.bf16.mxu0 0
    %198 = vmatpush1.bf16.msra.mxu0 0
    %199 = vmatprep.subr.bf16.mxu0 0
    %200 = vmatpush1.bf16.msra.mxu0 0
    %201 = vmatprep.subr.bf16.mxu0 0
    %202 = vmatpush1.bf16.msra.mxu0 0
    %203 = vmatprep.subr.bf16.mxu0 0
    %204 = vmatpush1.bf16.msra.mxu0 0
    %205 = vmatprep.subr.bf16.mxu0 0
    %206 = vmatpush1.bf16.msra.mxu0 0
    %207 = vmatprep.subr.bf16.mxu0 0
    %208 = vmatpush1.bf16.msra.mxu0 0
    %209 = vmatprep.subr.bf16.mxu0 0
    %210 = vmatpush1.bf16.msra.mxu0 0
    %211 = vmatprep.subr.bf16.mxu0 0
    %212 = vmatpush1.bf16.msra.mxu0 0
    %213 = vmatprep.mubr.bf16.mxu0 0
    %214 = vmatmul.mubr.bf16.gmra.mrb[0].mxu0 %v109
    %v215 = vpop.f32.mrb[0].mxu0
    %v216 = vadd.f32 %v131, %v215
    %v217 = vpop.f32.mrb[0].mxu0
    %v218 = vpop.f32.mrb[0].mxu0
    %v219 = vadd.f32 %v131, %v218
    %v220 = vpop.f32.mrb[0].mxu0
    %221 = vdwg.mxu0
    %v222 = vmax.f32 %v216, 0.0
    %v223 = vmax.f32 %v219, 0.0
    %v224 = vpack.c.bf16 %v223, %v222
    %v225 = vld [vmem:[#allocation8] sm:$0xff]
    %v226 = vld [vmem:[#allocation8 + $0x8] sm:$0xf]
    %v227 = vld [vmem:[#allocation8 + $0xc] sm:$0xff]
    %v228 = vld [vmem:[#allocation8 + $0x14] sm:$0xf]
    %v229 = vld [vmem:[#allocation8 + $0x18] sm:$0xff]
    %v230 = vld [vmem:[#allocation8 + $0x20] sm:$0xf]
    %v231 = vld [vmem:[#allocation8 + $0x24] sm:$0xff]
    %v232 = vld [vmem:[#allocation8 + $0x2c] sm:$0xf]
    %v233 = vld [vmem:[#allocation8 + $0x30] sm:$0xff]
    %v234 = vld [vmem:[#allocation8 + $0x38] sm:$0xf]
    %v235 = vld [vmem:[#allocation8 + $0x3c] sm:$0xff]
    %v236 = vld [vmem:[#allocation8 + $0x44] sm:$0xf]
    %v237 = vld [vmem:[#allocation8 + $0x48] sm:$0xff]
    %v238 = vld [vmem:[#allocation8 + $0x50] sm:$0xf]
    %v239 = vld [vmem:[#allocation8 + $0x54] sm:$0xff]
    %v240 = vld [vmem:[#allocation8 + $0x5c] sm:$0xf]
    %v241 = vld [vmem:[#allocation8 + $0x60] sm:$0xff]
    %v242 = vld [vmem:[#allocation8 + $0x68] sm:$0xf]
    %v243 = vld [vmem:[#allocation8 + $0x6c] sm:$0xff]
    %v244 = vld [vmem:[#allocation8 + $0x74] sm:$0xf]
    %v245 = vld [vmem:[#allocation8 + $0x78] sm:$0xff]
    %v246 = vld [vmem:[#allocation8 + $0x80] sm:$0xf]
    %v247 = vld [vmem:[#allocation8 + $0x84] sm:$0xff]
    %v248 = vld [vmem:[#allocation8 + $0x8c] sm:$0xf]
    %v249 = vld [vmem:[#allocation8 + $0x90] sm:$0xff]
    %v250 = vld [vmem:[#allocation8 + $0x98] sm:$0xf]
    %v251 = vld [vmem:[#allocation8 + $0x9c] sm:$0xff]
    %v252 = vld [vmem:[#allocation8 + $0xa4] sm:$0xf]
    %v253 = vld [vmem:[#allocation8 + $0xa8] sm:$0xff]
    %v254 = vld [vmem:[#allocation8 + $0xb0] sm:$0xf]
    %v255 = vld [vmem:[#allocation8 + $0xb4] sm:$0xff]
    %v256 = vld [vmem:[#allocation8 + $0xbc] sm:$0xf]
    %v257 = vld [vmem:[#allocation9] sm:$0x7]
    %v259 = vlaneseq
    %v260 = vshrl.u32 %v259, 7
    %v261 = vsub.s32 0, %v260
    %v262 = vrot.slane %v257, %v261
    %v263 = vlaneseq
    %v264 = vshrl.u32 %v263, 7
    %v265 = vsub.s32 1, %v264
    %v266 = vrot.slane %v257, %v265
    %v267 = vlaneseq
    %v268 = vshrl.u32 %v267, 7
    %v269 = vsub.s32 2, %v268
    %v270 = vrot.slane %v257, %v269
    %v306 = vunpack.c.l.b16 %v225
    %v307 = vunpack.c.h.b16 %v225
    %v308 = vunpack.c.l.b16 %v226
    %v309 = vunpack.c.l.b16 %v227
    %v310 = vunpack.c.h.b16 %v227
    %v311 = vunpack.c.l.b16 %v228
    %v312 = vunpack.c.l.b16 %v229
    %v313 = vunpack.c.h.b16 %v229
    %v314 = vunpack.c.l.b16 %v230
    %v315 = vunpack.c.l.b16 %v231
    %v316 = vunpack.c.h.b16 %v231
    %v317 = vunpack.c.l.b16 %v232
    %v318 = vunpack.c.l.b16 %v233
    %v319 = vunpack.c.h.b16 %v233
    %v320 = vunpack.c.l.b16 %v234
    %v321 = vunpack.c.l.b16 %v235
    %v322 = vunpack.c.h.b16 %v235
    %v323 = vunpack.c.l.b16 %v236
    %v324 = vunpack.c.l.b16 %v237
    %v325 = vunpack.c.h.b16 %v237
    %v326 = vunpack.c.l.b16 %v238
    %v327 = vunpack.c.l.b16 %v239
    %v328 = vunpack.c.h.b16 %v239
    %v329 = vunpack.c.l.b16 %v240
    %v330 = vunpack.c.l.b16 %v241
    %v331 = vunpack.c.h.b16 %v241
    %v332 = vunpack.c.l.b16 %v242
    %v333 = vunpack.c.l.b16 %v243
    %v334 = vunpack.c.h.b16 %v243
    %v335 = vunpack.c.l.b16 %v244
    %v336 = vunpack.c.l.b16 %v245
    %v337 = vunpack.c.h.b16 %v245
    %v338 = vunpack.c.l.b16 %v246
    %v339 = vunpack.c.l.b16 %v247
    %v340 = vunpack.c.h.b16 %v247
    %v341 = vunpack.c.l.b16 %v248
    %v342 = vunpack.c.l.b16 %v249
    %v343 = vunpack.c.h.b16 %v249
    %v344 = vunpack.c.l.b16 %v250
    %v345 = vunpack.c.l.b16 %v251
    %v346 = vunpack.c.h.b16 %v251
    %v347 = vunpack.c.l.b16 %v252
    %v348 = vunpack.c.l.b16 %v253
    %v349 = vunpack.c.h.b16 %v253
    %v350 = vunpack.c.l.b16 %v254
    %v351 = vunpack.c.l.b16 %v255
    %v352 = vunpack.c.h.b16 %v255
    %v353 = vunpack.c.l.b16 %v256
    %v354 = vpack.c.b16 %v309, %v306
    %v355 = vpack.c.b16 %v310, %v307
    %v356 = vpack.c.b16 %v311, %v308
    %v357 = vpack.c.b16 %v315, %v312
    %v358 = vpack.c.b16 %v316, %v313
    %v359 = vpack.c.b16 %v317, %v314
    %v360 = vpack.c.b16 %v321, %v318
    %v361 = vpack.c.b16 %v322, %v319
    %v362 = vpack.c.b16 %v323, %v320
    %v363 = vpack.c.b16 %v327, %v324
    %v364 = vpack.c.b16 %v328, %v325
    %v365 = vpack.c.b16 %v329, %v326
    %v366 = vpack.c.b16 %v333, %v330
    %v367 = vpack.c.b16 %v334, %v331
    %v368 = vpack.c.b16 %v335, %v332
    %v369 = vpack.c.b16 %v339, %v336
    %v370 = vpack.c.b16 %v340, %v337
    %v371 = vpack.c.b16 %v341, %v338
    %v372 = vpack.c.b16 %v345, %v342
    %v373 = vpack.c.b16 %v346, %v343
    %v374 = vpack.c.b16 %v347, %v344
    %v375 = vpack.c.b16 %v351, %v348
    %v376 = vpack.c.b16 %v352, %v349
    %v377 = vpack.c.b16 %v353, %v350
    %402 = vmatprep.subr.bf16.mxu0 %v355
    %403 = vmatpush1.bf16.msra.mxu0 %v354
    %404 = vmatprep.subr.bf16.mxu0 %v358
    %405 = vmatpush1.bf16.msra.mxu0 %v357
    %406 = vmatprep.subr.bf16.mxu0 %v361
    %407 = vmatpush1.bf16.msra.mxu0 %v360
    %408 = vmatprep.subr.bf16.mxu0 %v364
    %409 = vmatpush1.bf16.msra.mxu0 %v363
    %410 = vmatprep.subr.bf16.mxu0 %v367
    %411 = vmatpush1.bf16.msra.mxu0 %v366
    %412 = vmatprep.subr.bf16.mxu0 %v370
    %413 = vmatpush1.bf16.msra.mxu0 %v369
    %414 = vmatprep.subr.bf16.mxu0 %v373
    %415 = vmatpush1.bf16.msra.mxu0 %v372
    %416 = vmatprep.subr.bf16.mxu0 %v376
    %417 = vmatpush1.bf16.msra.mxu0 %v375
    %418 = vmatprep.subr.bf16.mxu0 0
    %419 = vmatpush1.bf16.msra.mxu0 0
    %420 = vmatprep.subr.bf16.mxu0 0
    %421 = vmatpush1.bf16.msra.mxu0 0
    %422 = vmatprep.subr.bf16.mxu0 0
    %423 = vmatpush1.bf16.msra.mxu0 0
    %424 = vmatprep.subr.bf16.mxu0 0
    %425 = vmatpush1.bf16.msra.mxu0 0
    %426 = vmatprep.subr.bf16.mxu0 0
    %427 = vmatpush1.bf16.msra.mxu0 0
    %428 = vmatprep.subr.bf16.mxu0 0
    %429 = vmatpush1.bf16.msra.mxu0 0
    %430 = vmatprep.subr.bf16.mxu0 0
    %431 = vmatpush1.bf16.msra.mxu0 0
    %432 = vmatprep.subr.bf16.mxu0 0
    %433 = vmatpush1.bf16.msra.mxu0 0
    %434 = vmatprep.mubr.bf16.mxu0 0
    %435 = vmatmul.mubr.bf16.gmra.mrb[0].mxu0 %v224
    %v436 = vpop.f32.mrb[0].mxu0
    %v437 = vadd.f32 %v262, %v436
    %v438 = vpop.f32.mrb[0].mxu0
    %v439 = vadd.f32 %v266, %v438
    %v440 = vpop.f32.mrb[0].mxu0
    %v441 = vadd.f32 %v262, %v440
    %v442 = vpop.f32.mrb[0].mxu0
    %v443 = vadd.f32 %v266, %v442
    %444 = vdwg.mxu0
    %445 = vmatprep.subr.bf16.mxu0 0
    %446 = vmatpush1.bf16.msra.mxu0 %v356
    %447 = vmatprep.subr.bf16.mxu0 0
    %448 = vmatpush1.bf16.msra.mxu0 %v359
    %449 = vmatprep.subr.bf16.mxu0 0
    %450 = vmatpush1.bf16.msra.mxu0 %v362
    %451 = vmatprep.subr.bf16.mxu0 0
    %452 = vmatpush1.bf16.msra.mxu0 %v365
    %453 = vmatprep.subr.bf16.mxu0 0
    %454 = vmatpush1.bf16.msra.mxu0 %v368
    %455 = vmatprep.subr.bf16.mxu0 0
    %456 = vmatpush1.bf16.msra.mxu0 %v371
    %457 = vmatprep.subr.bf16.mxu0 0
    %458 = vmatpush1.bf16.msra.mxu0 %v374
    %459 = vmatprep.subr.bf16.mxu0 0
    %460 = vmatpush1.bf16.msra.mxu0 %v377
    %461 = vmatprep.subr.bf16.mxu0 0
    %462 = vmatpush1.bf16.msra.mxu0 0
    %463 = vmatprep.subr.bf16.mxu0 0
    %464 = vmatpush1.bf16.msra.mxu0 0
    %465 = vmatprep.subr.bf16.mxu0 0
    %466 = vmatpush1.bf16.msra.mxu0 0
    %467 = vmatprep.subr.bf16.mxu0 0
    %468 = vmatpush1.bf16.msra.mxu0 0
    %469 = vmatprep.subr.bf16.mxu0 0
    %470 = vmatpush1.bf16.msra.mxu0 0
    %471 = vmatprep.subr.bf16.mxu0 0
    %472 = vmatpush1.bf16.msra.mxu0 0
    %473 = vmatprep.subr.bf16.mxu0 0
    %474 = vmatpush1.bf16.msra.mxu0 0
    %475 = vmatprep.subr.bf16.mxu0 0
    %476 = vmatpush1.bf16.msra.mxu0 0
    %477 = vmatprep.mubr.bf16.mxu0 0
    %478 = vmatmul.mubr.bf16.gmra.mrb[0].mxu0 %v224
    %v479 = vpop.f32.mrb[0].mxu0
    %v480 = vadd.f32 %v270, %v479
    %v481 = vpop.f32.mrb[0].mxu0
    %v482 = vpop.f32.mrb[0].mxu0
    %v483 = vadd.f32 %v270, %v482
    %v484 = vpop.f32.mrb[0].mxu0
    %485 = vdwg.mxu0
    %v486 = vmax.f32 %v437, 0.0
    %v487 = vmax.f32 %v439, 0.0
    %v488 = vmax.f32 %v480, 0.0
    %v489 = vmax.f32 %v441, 0.0
    %v490 = vmax.f32 %v443, 0.0
    %v491 = vmax.f32 %v483, 0.0
    %v492 = vpack.c.bf16 %v489, %v486
    %v493 = vpack.c.bf16 %v490, %v487
    %v494 = vpack.c.bf16 %v491, %v488
    %v495 = vld [vmem:[#allocation11] sm:$0xff]
    %v496 = vld [vmem:[#allocation11 + $0x8] sm:$0xff]
    %v497 = vld [vmem:[#allocation11 + $0x10] sm:$0xff]
    %v498 = vld [vmem:[#allocation11 + $0x18] sm:$0xf]
    %v499 = vld [vmem:[#allocation11 + $0x1c] sm:$0xff]
    %v500 = vld [vmem:[#allocation11 + $0x24] sm:$0xff]
    %v501 = vld [vmem:[#allocation11 + $0x2c] sm:$0xff]
    %v502 = vld [vmem:[#allocation11 + $0x34] sm:$0xf]
    %v503 = vld [vmem:[#allocation11 + $0x38] sm:$0xff]
    %v504 = vld [vmem:[#allocation11 + $0x40] sm:$0xff]
    %v505 = vld [vmem:[#allocation11 + $0x48] sm:$0xff]
    %v506 = vld [vmem:[#allocation11 + $0x50] sm:$0xf]
    %v507 = vld [vmem:[#allocation11 + $0x54] sm:$0xff]
    %v508 = vld [vmem:[#allocation11 + $0x5c] sm:$0xff]
    %v509 = vld [vmem:[#allocation11 + $0x64] sm:$0xff]
    %v510 = vld [vmem:[#allocation11 + $0x6c] sm:$0xf]
    %v511 = vld [vmem:[#allocation11 + $0x70] sm:$0xff]
    %v512 = vld [vmem:[#allocation11 + $0x78] sm:$0xff]
    %v513 = vld [vmem:[#allocation11 + $0x80] sm:$0xff]
    %v514 = vld [vmem:[#allocation11 + $0x88] sm:$0xf]
    %v515 = vld [vmem:[#allocation11 + $0x8c] sm:$0xff]
    %v516 = vld [vmem:[#allocation11 + $0x94] sm:$0xff]
    %v517 = vld [vmem:[#allocation11 + $0x9c] sm:$0xff]
    %v518 = vld [vmem:[#allocation11 + $0xa4] sm:$0xf]
    %v519 = vld [vmem:[#allocation11 + $0xa8] sm:$0xff]
    %v520 = vld [vmem:[#allocation11 + $0xb0] sm:$0xff]
    %v521 = vld [vmem:[#allocation11 + $0xb8] sm:$0xff]
    %v522 = vld [vmem:[#allocation11 + $0xc0] sm:$0xf]
    %v523 = vld [vmem:[#allocation11 + $0xc4] sm:$0xff]
    %v524 = vld [vmem:[#allocation11 + $0xcc] sm:$0xff]
    %v525 = vld [vmem:[#allocation11 + $0xd4] sm:$0xff]
    %v526 = vld [vmem:[#allocation11 + $0xdc] sm:$0xf]
    %v527 = vld [vmem:[#allocation11 + $0xe0] sm:$0xff]
    %v528 = vld [vmem:[#allocation11 + $0xe8] sm:$0xff]
    %v529 = vld [vmem:[#allocation11 + $0xf0] sm:$0xff]
    %v530 = vld [vmem:[#allocation11 + $0xf8] sm:$0xf]
    %v531 = vld [vmem:[#allocation11 + $0xfc] sm:$0xff]
    %v532 = vld [vmem:[#allocation11 + $0x104] sm:$0xff]
    %v533 = vld [vmem:[#allocation11 + $0x10c] sm:$0xff]
    %v534 = vld [vmem:[#allocation11 + $0x114] sm:$0xf]
    %v535 = vld [vmem:[#allocation11 + $0x118] sm:$0xff]
    %v536 = vld [vmem:[#allocation11 + $0x120] sm:$0xff]
    %v537 = vld [vmem:[#allocation11 + $0x128] sm:$0xff]
    %v538 = vld [vmem:[#allocation11 + $0x130] sm:$0xf]
    %v539 = vld [vmem:[#allocation11 + $0x134] sm:$0xff]
    %v540 = vld [vmem:[#allocation11 + $0x13c] sm:$0xff]
    %v541 = vld [vmem:[#allocation11 + $0x144] sm:$0xff]
    %v542 = vld [vmem:[#allocation11 + $0x14c] sm:$0xf]
    %v543 = vld [vmem:[#allocation11 + $0x150] sm:$0xff]
    %v544 = vld [vmem:[#allocation11 + $0x158] sm:$0xff]
    %v545 = vld [vmem:[#allocation11 + $0x160] sm:$0xff]
    %v546 = vld [vmem:[#allocation11 + $0x168] sm:$0xf]
    %v547 = vld [vmem:[#allocation11 + $0x16c] sm:$0xff]
    %v548 = vld [vmem:[#allocation11 + $0x174] sm:$0xff]
    %v549 = vld [vmem:[#allocation11 + $0x17c] sm:$0xff]
    %v550 = vld [vmem:[#allocation11 + $0x184] sm:$0xf]
    %v551 = vld [vmem:[#allocation11 + $0x188] sm:$0xff]
    %v552 = vld [vmem:[#allocation11 + $0x190] sm:$0xff]
    %v553 = vld [vmem:[#allocation11 + $0x198] sm:$0xff]
    %v554 = vld [vmem:[#allocation11 + $0x1a0] sm:$0xf]
    %v555 = vld [vmem:[#allocation11 + $0x1a4] sm:$0xff]
    %v556 = vld [vmem:[#allocation11 + $0x1ac] sm:$0xff]
    %v557 = vld [vmem:[#allocation11 + $0x1b4] sm:$0xff]
    %v558 = vld [vmem:[#allocation11 + $0x1bc] sm:$0xf]
    %v559 = vld [vmem:[#allocation11 + $0x1c0] sm:$0xff]
    %v560 = vld [vmem:[#allocation11 + $0x1c8] sm:$0xff]
    %v561 = vld [vmem:[#allocation11 + $0x1d0] sm:$0xff]
    %v562 = vld [vmem:[#allocation11 + $0x1d8] sm:$0xf]
    %v563 = vld [vmem:[#allocation11 + $0x1dc] sm:$0xff]
    %v564 = vld [vmem:[#allocation11 + $0x1e4] sm:$0xff]
    %v565 = vld [vmem:[#allocation11 + $0x1ec] sm:$0xff]
    %v566 = vld [vmem:[#allocation11 + $0x1f4] sm:$0xf]
    %v567 = vld [vmem:[#allocation11 + $0x1f8] sm:$0xff]
    %v568 = vld [vmem:[#allocation11 + $0x200] sm:$0xff]
    %v569 = vld [vmem:[#allocation11 + $0x208] sm:$0xff]
    %v570 = vld [vmem:[#allocation11 + $0x210] sm:$0xf]
    %v571 = vld [vmem:[#allocation11 + $0x214] sm:$0xff]
    %v572 = vld [vmem:[#allocation11 + $0x21c] sm:$0xff]
    %v573 = vld [vmem:[#allocation11 + $0x224] sm:$0xff]
    %v574 = vld [vmem:[#allocation11 + $0x22c] sm:$0xf]
    %v575 = vld [vmem:[#allocation11 + $0x230] sm:$0xff]
    %v576 = vld [vmem:[#allocation11 + $0x238] sm:$0xff]
    %v577 = vld [vmem:[#allocation11 + $0x240] sm:$0xff]
    %v578 = vld [vmem:[#allocation11 + $0x248] sm:$0xf]
    %v579 = vld [vmem:[#allocation11 + $0x24c] sm:$0xff]
    %v580 = vld [vmem:[#allocation11 + $0x254] sm:$0xff]
    %v581 = vld [vmem:[#allocation11 + $0x25c] sm:$0xff]
    %v582 = vld [vmem:[#allocation11 + $0x264] sm:$0xf]
    %v583 = vld [vmem:[#allocation11 + $0x268] sm:$0xff]
    %v584 = vld [vmem:[#allocation11 + $0x270] sm:$0xff]
    %v585 = vld [vmem:[#allocation11 + $0x278] sm:$0xff]
    %v586 = vld [vmem:[#allocation11 + $0x280] sm:$0xf]
    %v587 = vld [vmem:[#allocation11 + $0x284] sm:$0xff]
    %v588 = vld [vmem:[#allocation11 + $0x28c] sm:$0xff]
    %v589 = vld [vmem:[#allocation11 + $0x294] sm:$0xff]
    %v590 = vld [vmem:[#allocation11 + $0x29c] sm:$0xf]
    %v591 = vld [vmem:[#allocation11 + $0x2a0] sm:$0xff]
    %v592 = vld [vmem:[#allocation11 + $0x2a8] sm:$0xff]
    %v593 = vld [vmem:[#allocation11 + $0x2b0] sm:$0xff]
    %v594 = vld [vmem:[#allocation11 + $0x2b8] sm:$0xf]
    %v595 = vld [vmem:[#allocation11 + $0x2bc] sm:$0xff]
    %v596 = vld [vmem:[#allocation11 + $0x2c4] sm:$0xff]
    %v597 = vld [vmem:[#allocation11 + $0x2cc] sm:$0xff]
    %v598 = vld [vmem:[#allocation11 + $0x2d4] sm:$0xf]
    %v599 = vld [vmem:[#allocation11 + $0x2d8] sm:$0xff]
    %v600 = vld [vmem:[#allocation11 + $0x2e0] sm:$0xff]
    %v601 = vld [vmem:[#allocation11 + $0x2e8] sm:$0xff]
    %v602 = vld [vmem:[#allocation11 + $0x2f0] sm:$0xf]
    %v603 = vld [vmem:[#allocation11 + $0x2f4] sm:$0xff]
    %v604 = vld [vmem:[#allocation11 + $0x2fc] sm:$0xff]
    %v605 = vld [vmem:[#allocation11 + $0x304] sm:$0xff]
    %v606 = vld [vmem:[#allocation11 + $0x30c] sm:$0xf]
    %v607 = vld [vmem:[#allocation11 + $0x310] sm:$0xff]
    %v608 = vld [vmem:[#allocation11 + $0x318] sm:$0xff]
    %v609 = vld [vmem:[#allocation11 + $0x320] sm:$0xff]
    %v610 = vld [vmem:[#allocation11 + $0x328] sm:$0xf]
    %v611 = vld [vmem:[#allocation11 + $0x32c] sm:$0xff]
    %v612 = vld [vmem:[#allocation11 + $0x334] sm:$0xff]
    %v613 = vld [vmem:[#allocation11 + $0x33c] sm:$0xff]
    %v614 = vld [vmem:[#allocation11 + $0x344] sm:$0xf]
    %v615 = vld [vmem:[#allocation11 + $0x348] sm:$0xff]
    %v616 = vld [vmem:[#allocation11 + $0x350] sm:$0xff]
    %v617 = vld [vmem:[#allocation11 + $0x358] sm:$0xff]
    %v618 = vld [vmem:[#allocation11 + $0x360] sm:$0xf]
    %v619 = vld [vmem:[#allocation11 + $0x364] sm:$0xff]
    %v620 = vld [vmem:[#allocation11 + $0x36c] sm:$0xff]
    %v621 = vld [vmem:[#allocation11 + $0x374] sm:$0xff]
    %v622 = vld [vmem:[#allocation11 + $0x37c] sm:$0xf]
    %v623 = vld [vmem:[#allocation11 + $0x380] sm:$0xff]
    %v624 = vld [vmem:[#allocation11 + $0x388] sm:$0xff]
    %v625 = vld [vmem:[#allocation11 + $0x390] sm:$0xff]
    %v626 = vld [vmem:[#allocation11 + $0x398] sm:$0xf]
    %v627 = vld [vmem:[#allocation11 + $0x39c] sm:$0xff]
    %v628 = vld [vmem:[#allocation11 + $0x3a4] sm:$0xff]
    %v629 = vld [vmem:[#allocation11 + $0x3ac] sm:$0xff]
    %v630 = vld [vmem:[#allocation11 + $0x3b4] sm:$0xf]
    %v631 = vld [vmem:[#allocation11 + $0x3b8] sm:$0xff]
    %v632 = vld [vmem:[#allocation11 + $0x3c0] sm:$0xff]
    %v633 = vld [vmem:[#allocation11 + $0x3c8] sm:$0xff]
    %v634 = vld [vmem:[#allocation11 + $0x3d0] sm:$0xf]
    %v635 = vld [vmem:[#allocation11 + $0x3d4] sm:$0xff]
    %v636 = vld [vmem:[#allocation11 + $0x3dc] sm:$0xff]
    %v637 = vld [vmem:[#allocation11 + $0x3e4] sm:$0xff]
    %v638 = vld [vmem:[#allocation11 + $0x3ec] sm:$0xf]
    %v639 = vld [vmem:[#allocation11 + $0x3f0] sm:$0xff]
    %v640 = vld [vmem:[#allocation11 + $0x3f8] sm:$0xff]
    %v641 = vld [vmem:[#allocation11 + $0x400] sm:$0xff]
    %v642 = vld [vmem:[#allocation11 + $0x408] sm:$0xf]
    %v643 = vld [vmem:[#allocation11 + $0x40c] sm:$0xff]
    %v644 = vld [vmem:[#allocation11 + $0x414] sm:$0xff]
    %v645 = vld [vmem:[#allocation11 + $0x41c] sm:$0xff]
    %v646 = vld [vmem:[#allocation11 + $0x424] sm:$0xf]
    %v647 = vld [vmem:[#allocation11 + $0x428] sm:$0xff]
    %v648 = vld [vmem:[#allocation11 + $0x430] sm:$0xff]
    %v649 = vld [vmem:[#allocation11 + $0x438] sm:$0xff]
    %v650 = vld [vmem:[#allocation11 + $0x440] sm:$0xf]
    %v651 = vld [vmem:[#allocation11 + $0x444] sm:$0xff]
    %v652 = vld [vmem:[#allocation11 + $0x44c] sm:$0xff]
    %v653 = vld [vmem:[#allocation11 + $0x454] sm:$0xff]
    %v654 = vld [vmem:[#allocation11 + $0x45c] sm:$0xf]
    %v655 = vld [vmem:[#allocation11 + $0x460] sm:$0xff]
    %v656 = vld [vmem:[#allocation11 + $0x468] sm:$0xff]
    %v657 = vld [vmem:[#allocation11 + $0x470] sm:$0xff]
    %v658 = vld [vmem:[#allocation11 + $0x478] sm:$0xf]
    %v659 = vld [vmem:[#allocation11 + $0x47c] sm:$0xff]
    %v660 = vld [vmem:[#allocation11 + $0x484] sm:$0xff]
    %v661 = vld [vmem:[#allocation11 + $0x48c] sm:$0xff]
    %v662 = vld [vmem:[#allocation11 + $0x494] sm:$0xf]
    %v663 = vld [vmem:[#allocation11 + $0x498] sm:$0xff]
    %v664 = vld [vmem:[#allocation11 + $0x4a0] sm:$0xff]
    %v665 = vld [vmem:[#allocation11 + $0x4a8] sm:$0xff]
    %v666 = vld [vmem:[#allocation11 + $0x4b0] sm:$0xf]
    %v667 = vld [vmem:[#allocation11 + $0x4b4] sm:$0xff]
    %v668 = vld [vmem:[#allocation11 + $0x4bc] sm:$0xff]
    %v669 = vld [vmem:[#allocation11 + $0x4c4] sm:$0xff]
    %v670 = vld [vmem:[#allocation11 + $0x4cc] sm:$0xf]
    %v671 = vld [vmem:[#allocation11 + $0x4d0] sm:$0xff]
    %v672 = vld [vmem:[#allocation11 + $0x4d8] sm:$0xff]
    %v673 = vld [vmem:[#allocation11 + $0x4e0] sm:$0xff]
    %v674 = vld [vmem:[#allocation11 + $0x4e8] sm:$0xf]
    %v675 = vld [vmem:[#allocation11 + $0x4ec] sm:$0xff]
    %v676 = vld [vmem:[#allocation11 + $0x4f4] sm:$0xff]
    %v677 = vld [vmem:[#allocation11 + $0x4fc] sm:$0xff]
    %v678 = vld [vmem:[#allocation11 + $0x504] sm:$0xf]
    %v679 = vld [vmem:[#allocation11 + $0x508] sm:$0xff]
    %v680 = vld [vmem:[#allocation11 + $0x510] sm:$0xff]
    %v681 = vld [vmem:[#allocation11 + $0x518] sm:$0xff]
    %v682 = vld [vmem:[#allocation11 + $0x520] sm:$0xf]
    %v683 = vld [vmem:[#allocation11 + $0x524] sm:$0xff]
    %v684 = vld [vmem:[#allocation11 + $0x52c] sm:$0xff]
    %v685 = vld [vmem:[#allocation11 + $0x534] sm:$0xff]
    %v686 = vld [vmem:[#allocation11 + $0x53c] sm:$0xf]
    %v687 = vld [vmem:[#allocation12] sm:$0xff]
    %v689 = vlaneseq
    %v690 = vshrl.u32 %v689, 7
    %v691 = vsub.s32 0, %v690
    %v692 = vrot.slane %v687, %v691
    %v693 = vlaneseq
    %v694 = vshrl.u32 %v693, 7
    %v695 = vsub.s32 1, %v694
    %v696 = vrot.slane %v687, %v695
    %v697 = vlaneseq
    %v698 = vshrl.u32 %v697, 7
    %v699 = vsub.s32 2, %v698
    %v700 = vrot.slane %v687, %v699
    %v701 = vlaneseq
    %v702 = vshrl.u32 %v701, 7
    %v703 = vsub.s32 3, %v702
    %v704 = vrot.slane %v687, %v703
    %v705 = vlaneseq
    %v706 = vshrl.u32 %v705, 7
    %v707 = vsub.s32 4, %v706
    %v708 = vrot.slane %v687, %v707
    %v709 = vlaneseq
    %v710 = vshrl.u32 %v709, 7
    %v711 = vsub.s32 5, %v710
    %v712 = vrot.slane %v687, %v711
    %v713 = vlaneseq
    %v714 = vshrl.u32 %v713, 7
    %v715 = vsub.s32 6, %v714
    %v716 = vrot.slane %v687, %v715
    %v916 = vunpack.c.l.b16 %v495
    %v917 = vunpack.c.h.b16 %v495
    %v918 = vunpack.c.l.b16 %v496
    %v919 = vunpack.c.h.b16 %v496
    %v920 = vunpack.c.l.b16 %v497
    %v921 = vunpack.c.h.b16 %v497
    %v922 = vunpack.c.l.b16 %v498
    %v923 = vunpack.c.l.b16 %v499
    %v924 = vunpack.c.h.b16 %v499
    %v925 = vunpack.c.l.b16 %v500
    %v926 = vunpack.c.h.b16 %v500
    %v927 = vunpack.c.l.b16 %v501
    %v928 = vunpack.c.h.b16 %v501
    %v929 = vunpack.c.l.b16 %v502
    %v930 = vunpack.c.l.b16 %v503
    %v931 = vunpack.c.h.b16 %v503
    %v932 = vunpack.c.l.b16 %v504
    %v933 = vunpack.c.h.b16 %v504
    %v934 = vunpack.c.l.b16 %v505
    %v935 = vunpack.c.h.b16 %v505
    %v936 = vunpack.c.l.b16 %v506
    %v937 = vunpack.c.l.b16 %v507
    %v938 = vunpack.c.h.b16 %v507
    %v939 = vunpack.c.l.b16 %v508
    %v940 = vunpack.c.h.b16 %v508
    %v941 = vunpack.c.l.b16 %v509
    %v942 = vunpack.c.h.b16 %v509
    %v943 = vunpack.c.l.b16 %v510
    %v944 = vunpack.c.l.b16 %v511
    %v945 = vunpack.c.h.b16 %v511
    %v946 = vunpack.c.l.b16 %v512
    %v947 = vunpack.c.h.b16 %v512
    %v948 = vunpack.c.l.b16 %v513
    %v949 = vunpack.c.h.b16 %v513
    %v950 = vunpack.c.l.b16 %v514
    %v951 = vunpack.c.l.b16 %v515
    %v952 = vunpack.c.h.b16 %v515
    %v953 = vunpack.c.l.b16 %v516
    %v954 = vunpack.c.h.b16 %v516
    %v955 = vunpack.c.l.b16 %v517
    %v956 = vunpack.c.h.b16 %v517
    %v957 = vunpack.c.l.b16 %v518
    %v958 = vunpack.c.l.b16 %v519
    %v959 = vunpack.c.h.b16 %v519
    %v960 = vunpack.c.l.b16 %v520
    %v961 = vunpack.c.h.b16 %v520
    %v962 = vunpack.c.l.b16 %v521
    %v963 = vunpack.c.h.b16 %v521
    %v964 = vunpack.c.l.b16 %v522
    %v965 = vunpack.c.l.b16 %v523
    %v966 = vunpack.c.h.b16 %v523
    %v967 = vunpack.c.l.b16 %v524
    %v968 = vunpack.c.h.b16 %v524
    %v969 = vunpack.c.l.b16 %v525
    %v970 = vunpack.c.h.b16 %v525
    %v971 = vunpack.c.l.b16 %v526
    %v972 = vunpack.c.l.b16 %v527
    %v973 = vunpack.c.h.b16 %v527
    %v974 = vunpack.c.l.b16 %v528
    %v975 = vunpack.c.h.b16 %v528
    %v976 = vunpack.c.l.b16 %v529
    %v977 = vunpack.c.h.b16 %v529
    %v978 = vunpack.c.l.b16 %v530
    %v979 = vunpack.c.l.b16 %v531
    %v980 = vunpack.c.h.b16 %v531
    %v981 = vunpack.c.l.b16 %v532
    %v982 = vunpack.c.h.b16 %v532
    %v983 = vunpack.c.l.b16 %v533
    %v984 = vunpack.c.h.b16 %v533
    %v985 = vunpack.c.l.b16 %v534
    %v986 = vunpack.c.l.b16 %v535
    %v987 = vunpack.c.h.b16 %v535
    %v988 = vunpack.c.l.b16 %v536
    %v989 = vunpack.c.h.b16 %v536
    %v990 = vunpack.c.l.b16 %v537
    %v991 = vunpack.c.h.b16 %v537
    %v992 = vunpack.c.l.b16 %v538
    %v993 = vunpack.c.l.b16 %v539
    %v994 = vunpack.c.h.b16 %v539
    %v995 = vunpack.c.l.b16 %v540
    %v996 = vunpack.c.h.b16 %v540
    %v997 = vunpack.c.l.b16 %v541
    %v998 = vunpack.c.h.b16 %v541
    %v999 = vunpack.c.l.b16 %v542
    %v1000 = vunpack.c.l.b16 %v543
    %v1001 = vunpack.c.h.b16 %v543
    %v1002 = vunpack.c.l.b16 %v544
    %v1003 = vunpack.c.h.b16 %v544
    %v1004 = vunpack.c.l.b16 %v545
    %v1005 = vunpack.c.h.b16 %v545
    %v1006 = vunpack.c.l.b16 %v546
    %v1007 = vunpack.c.l.b16 %v547
    %v1008 = vunpack.c.h.b16 %v547
    %v1009 = vunpack.c.l.b16 %v548
    %v1010 = vunpack.c.h.b16 %v548
    %v1011 = vunpack.c.l.b16 %v549
    %v1012 = vunpack.c.h.b16 %v549
    %v1013 = vunpack.c.l.b16 %v550
    %v1014 = vunpack.c.l.b16 %v551
    %v1015 = vunpack.c.h.b16 %v551
    %v1016 = vunpack.c.l.b16 %v552
    %v1017 = vunpack.c.h.b16 %v552
    %v1018 = vunpack.c.l.b16 %v553
    %v1019 = vunpack.c.h.b16 %v553
    %v1020 = vunpack.c.l.b16 %v554
    %v1021 = vunpack.c.l.b16 %v555
    %v1022 = vunpack.c.h.b16 %v555
    %v1023 = vunpack.c.l.b16 %v556
    %v1024 = vunpack.c.h.b16 %v556
    %v1025 = vunpack.c.l.b16 %v557
    %v1026 = vunpack.c.h.b16 %v557
    %v1027 = vunpack.c.l.b16 %v558
    %v1028 = vunpack.c.l.b16 %v559
    %v1029 = vunpack.c.h.b16 %v559
    %v1030 = vunpack.c.l.b16 %v560
    %v1031 = vunpack.c.h.b16 %v560
    %v1032 = vunpack.c.l.b16 %v561
    %v1033 = vunpack.c.h.b16 %v561
    %v1034 = vunpack.c.l.b16 %v562
    %v1035 = vunpack.c.l.b16 %v563
    %v1036 = vunpack.c.h.b16 %v563
    %v1037 = vunpack.c.l.b16 %v564
    %v1038 = vunpack.c.h.b16 %v564
    %v1039 = vunpack.c.l.b16 %v565
    %v1040 = vunpack.c.h.b16 %v565
    %v1041 = vunpack.c.l.b16 %v566
    %v1042 = vunpack.c.l.b16 %v567
    %v1043 = vunpack.c.h.b16 %v567
    %v1044 = vunpack.c.l.b16 %v568
    %v1045 = vunpack.c.h.b16 %v568
    %v1046 = vunpack.c.l.b16 %v569
    %v1047 = vunpack.c.h.b16 %v569
    %v1048 = vunpack.c.l.b16 %v570
    %v1049 = vunpack.c.l.b16 %v571
    %v1050 = vunpack.c.h.b16 %v571
    %v1051 = vunpack.c.l.b16 %v572
    %v1052 = vunpack.c.h.b16 %v572
    %v1053 = vunpack.c.l.b16 %v573
    %v1054 = vunpack.c.h.b16 %v573
    %v1055 = vunpack.c.l.b16 %v574
    %v1056 = vunpack.c.l.b16 %v575
    %v1057 = vunpack.c.h.b16 %v575
    %v1058 = vunpack.c.l.b16 %v576
    %v1059 = vunpack.c.h.b16 %v576
    %v1060 = vunpack.c.l.b16 %v577
    %v1061 = vunpack.c.h.b16 %v577
    %v1062 = vunpack.c.l.b16 %v578
    %v1063 = vunpack.c.l.b16 %v579
    %v1064 = vunpack.c.h.b16 %v579
    %v1065 = vunpack.c.l.b16 %v580
    %v1066 = vunpack.c.h.b16 %v580
    %v1067 = vunpack.c.l.b16 %v581
    %v1068 = vunpack.c.h.b16 %v581
    %v1069 = vunpack.c.l.b16 %v582
    %v1070 = vunpack.c.l.b16 %v583
    %v1071 = vunpack.c.h.b16 %v583
    %v1072 = vunpack.c.l.b16 %v584
    %v1073 = vunpack.c.h.b16 %v584
    %v1074 = vunpack.c.l.b16 %v585
    %v1075 = vunpack.c.h.b16 %v585
    %v1076 = vunpack.c.l.b16 %v586
    %v1077 = vunpack.c.l.b16 %v587
    %v1078 = vunpack.c.h.b16 %v587
    %v1079 = vunpack.c.l.b16 %v588
    %v1080 = vunpack.c.h.b16 %v588
    %v1081 = vunpack.c.l.b16 %v589
    %v1082 = vunpack.c.h.b16 %v589
    %v1083 = vunpack.c.l.b16 %v590
    %v1084 = vunpack.c.l.b16 %v591
    %v1085 = vunpack.c.h.b16 %v591
    %v1086 = vunpack.c.l.b16 %v592
    %v1087 = vunpack.c.h.b16 %v592
    %v1088 = vunpack.c.l.b16 %v593
    %v1089 = vunpack.c.h.b16 %v593
    %v1090 = vunpack.c.l.b16 %v594
    %v1091 = vunpack.c.l.b16 %v595
    %v1092 = vunpack.c.h.b16 %v595
    %v1093 = vunpack.c.l.b16 %v596
    %v1094 = vunpack.c.h.b16 %v596
    %v1095 = vunpack.c.l.b16 %v597
    %v1096 = vunpack.c.h.b16 %v597
    %v1097 = vunpack.c.l.b16 %v598
    %v1098 = vunpack.c.l.b16 %v599
    %v1099 = vunpack.c.h.b16 %v599
    %v1100 = vunpack.c.l.b16 %v600
    %v1101 = vunpack.c.h.b16 %v600
    %v1102 = vunpack.c.l.b16 %v601
    %v1103 = vunpack.c.h.b16 %v601
    %v1104 = vunpack.c.l.b16 %v602
    %v1105 = vunpack.c.l.b16 %v603
    %v1106 = vunpack.c.h.b16 %v603
    %v1107 = vunpack.c.l.b16 %v604
    %v1108 = vunpack.c.h.b16 %v604
    %v1109 = vunpack.c.l.b16 %v605
    %v1110 = vunpack.c.h.b16 %v605
    %v1111 = vunpack.c.l.b16 %v606
    %v1112 = vunpack.c.l.b16 %v607
    %v1113 = vunpack.c.h.b16 %v607
    %v1114 = vunpack.c.l.b16 %v608
    %v1115 = vunpack.c.h.b16 %v608
    %v1116 = vunpack.c.l.b16 %v609
    %v1117 = vunpack.c.h.b16 %v609
    %v1118 = vunpack.c.l.b16 %v610
    %v1119 = vunpack.c.l.b16 %v611
    %v1120 = vunpack.c.h.b16 %v611
    %v1121 = vunpack.c.l.b16 %v612
    %v1122 = vunpack.c.h.b16 %v612
    %v1123 = vunpack.c.l.b16 %v613
    %v1124 = vunpack.c.h.b16 %v613
    %v1125 = vunpack.c.l.b16 %v614
    %v1126 = vunpack.c.l.b16 %v615
    %v1127 = vunpack.c.h.b16 %v615
    %v1128 = vunpack.c.l.b16 %v616
    %v1129 = vunpack.c.h.b16 %v616
    %v1130 = vunpack.c.l.b16 %v617
    %v1131 = vunpack.c.h.b16 %v617
    %v1132 = vunpack.c.l.b16 %v618
    %v1133 = vunpack.c.l.b16 %v619
    %v1134 = vunpack.c.h.b16 %v619
    %v1135 = vunpack.c.l.b16 %v620
    %v1136 = vunpack.c.h.b16 %v620
    %v1137 = vunpack.c.l.b16 %v621
    %v1138 = vunpack.c.h.b16 %v621
    %v1139 = vunpack.c.l.b16 %v622
    %v1140 = vunpack.c.l.b16 %v623
    %v1141 = vunpack.c.h.b16 %v623
    %v1142 = vunpack.c.l.b16 %v624
    %v1143 = vunpack.c.h.b16 %v624
    %v1144 = vunpack.c.l.b16 %v625
    %v1145 = vunpack.c.h.b16 %v625
    %v1146 = vunpack.c.l.b16 %v626
    %v1147 = vunpack.c.l.b16 %v627
    %v1148 = vunpack.c.h.b16 %v627
    %v1149 = vunpack.c.l.b16 %v628
    %v1150 = vunpack.c.h.b16 %v628
    %v1151 = vunpack.c.l.b16 %v629
    %v1152 = vunpack.c.h.b16 %v629
    %v1153 = vunpack.c.l.b16 %v630
    %v1154 = vunpack.c.l.b16 %v631
    %v1155 = vunpack.c.h.b16 %v631
    %v1156 = vunpack.c.l.b16 %v632
    %v1157 = vunpack.c.h.b16 %v632
    %v1158 = vunpack.c.l.b16 %v633
    %v1159 = vunpack.c.h.b16 %v633
    %v1160 = vunpack.c.l.b16 %v634
    %v1161 = vunpack.c.l.b16 %v635
    %v1162 = vunpack.c.h.b16 %v635
    %v1163 = vunpack.c.l.b16 %v636
    %v1164 = vunpack.c.h.b16 %v636
    %v1165 = vunpack.c.l.b16 %v637
    %v1166 = vunpack.c.h.b16 %v637
    %v1167 = vunpack.c.l.b16 %v638
    %v1168 = vunpack.c.l.b16 %v639
    %v1169 = vunpack.c.h.b16 %v639
    %v1170 = vunpack.c.l.b16 %v640
    %v1171 = vunpack.c.h.b16 %v640
    %v1172 = vunpack.c.l.b16 %v641
    %v1173 = vunpack.c.h.b16 %v641
    %v1174 = vunpack.c.l.b16 %v642
    %v1175 = vunpack.c.l.b16 %v643
    %v1176 = vunpack.c.h.b16 %v643
    %v1177 = vunpack.c.l.b16 %v644
    %v1178 = vunpack.c.h.b16 %v644
    %v1179 = vunpack.c.l.b16 %v645
    %v1180 = vunpack.c.h.b16 %v645
    %v1181 = vunpack.c.l.b16 %v646
    %v1182 = vunpack.c.l.b16 %v647
    %v1183 = vunpack.c.h.b16 %v647
    %v1184 = vunpack.c.l.b16 %v648
    %v1185 = vunpack.c.h.b16 %v648
    %v1186 = vunpack.c.l.b16 %v649
    %v1187 = vunpack.c.h.b16 %v649
    %v1188 = vunpack.c.l.b16 %v650
    %v1189 = vunpack.c.l.b16 %v651
    %v1190 = vunpack.c.h.b16 %v651
    %v1191 = vunpack.c.l.b16 %v652
    %v1192 = vunpack.c.h.b16 %v652
    %v1193 = vunpack.c.l.b16 %v653
    %v1194 = vunpack.c.h.b16 %v653
    %v1195 = vunpack.c.l.b16 %v654
    %v1196 = vunpack.c.l.b16 %v655
    %v1197 = vunpack.c.h.b16 %v655
    %v1198 = vunpack.c.l.b16 %v656
    %v1199 = vunpack.c.h.b16 %v656
    %v1200 = vunpack.c.l.b16 %v657
    %v1201 = vunpack.c.h.b16 %v657
    %v1202 = vunpack.c.l.b16 %v658
    %v1203 = vunpack.c.l.b16 %v659
    %v1204 = vunpack.c.h.b16 %v659
    %v1205 = vunpack.c.l.b16 %v660
    %v1206 = vunpack.c.h.b16 %v660
    %v1207 = vunpack.c.l.b16 %v661
    %v1208 = vunpack.c.h.b16 %v661
    %v1209 = vunpack.c.l.b16 %v662
    %v1210 = vunpack.c.l.b16 %v663
    %v1211 = vunpack.c.h.b16 %v663
    %v1212 = vunpack.c.l.b16 %v664
    %v1213 = vunpack.c.h.b16 %v664
    %v1214 = vunpack.c.l.b16 %v665
    %v1215 = vunpack.c.h.b16 %v665
    %v1216 = vunpack.c.l.b16 %v666
    %v1217 = vunpack.c.l.b16 %v667
    %v1218 = vunpack.c.h.b16 %v667
    %v1219 = vunpack.c.l.b16 %v668
    %v1220 = vunpack.c.h.b16 %v668
    %v1221 = vunpack.c.l.b16 %v669
    %v1222 = vunpack.c.h.b16 %v669
    %v1223 = vunpack.c.l.b16 %v670
    %v1224 = vunpack.c.l.b16 %v671
    %v1225 = vunpack.c.h.b16 %v671
    %v1226 = vunpack.c.l.b16 %v672
    %v1227 = vunpack.c.h.b16 %v672
    %v1228 = vunpack.c.l.b16 %v673
    %v1229 = vunpack.c.h.b16 %v673
    %v1230 = vunpack.c.l.b16 %v674
    %v1231 = vunpack.c.l.b16 %v675
    %v1232 = vunpack.c.h.b16 %v675
    %v1233 = vunpack.c.l.b16 %v676
    %v1234 = vunpack.c.h.b16 %v676
    %v1235 = vunpack.c.l.b16 %v677
    %v1236 = vunpack.c.h.b16 %v677
    %v1237 = vunpack.c.l.b16 %v678
    %v1238 = vunpack.c.l.b16 %v679
    %v1239 = vunpack.c.h.b16 %v679
    %v1240 = vunpack.c.l.b16 %v680
    %v1241 = vunpack.c.h.b16 %v680
    %v1242 = vunpack.c.l.b16 %v681
    %v1243 = vunpack.c.h.b16 %v681
    %v1244 = vunpack.c.l.b16 %v682
    %v1245 = vunpack.c.l.b16 %v683
    %v1246 = vunpack.c.h.b16 %v683
    %v1247 = vunpack.c.l.b16 %v684
    %v1248 = vunpack.c.h.b16 %v684
    %v1249 = vunpack.c.l.b16 %v685
    %v1250 = vunpack.c.h.b16 %v685
    %v1251 = vunpack.c.l.b16 %v686
    %v1252 = vpack.c.b16 %v923, %v916
    %v1253 = vpack.c.b16 %v924, %v917
    %v1254 = vpack.c.b16 %v925, %v918
    %v1255 = vpack.c.b16 %v926, %v919
    %v1256 = vpack.c.b16 %v927, %v920
    %v1257 = vpack.c.b16 %v928, %v921
    %v1258 = vpack.c.b16 %v929, %v922
    %v1259 = vpack.c.b16 %v937, %v930
    %v1260 = vpack.c.b16 %v938, %v931
    %v1261 = vpack.c.b16 %v939, %v932
    %v1262 = vpack.c.b16 %v940, %v933
    %v1263 = vpack.c.b16 %v941, %v934
    %v1264 = vpack.c.b16 %v942, %v935
    %v1265 = vpack.c.b16 %v943, %v936
    %v1266 = vpack.c.b16 %v951, %v944
    %v1267 = vpack.c.b16 %v952, %v945
    %v1268 = vpack.c.b16 %v953, %v946
    %v1269 = vpack.c.b16 %v954, %v947
    %v1270 = vpack.c.b16 %v955, %v948
    %v1271 = vpack.c.b16 %v956, %v949
    %v1272 = vpack.c.b16 %v957, %v950
    %v1273 = vpack.c.b16 %v965, %v958
    %v1274 = vpack.c.b16 %v966, %v959
    %v1275 = vpack.c.b16 %v967, %v960
    %v1276 = vpack.c.b16 %v968, %v961
    %v1277 = vpack.c.b16 %v969, %v962
    %v1278 = vpack.c.b16 %v970, %v963
    %v1279 = vpack.c.b16 %v971, %v964
    %v1280 = vpack.c.b16 %v979, %v972
    %v1281 = vpack.c.b16 %v980, %v973
    %v1282 = vpack.c.b16 %v981, %v974
    %v1283 = vpack.c.b16 %v982, %v975
    %v1284 = vpack.c.b16 %v983, %v976
    %v1285 = vpack.c.b16 %v984, %v977
    %v1286 = vpack.c.b16 %v985, %v978
    %v1287 = vpack.c.b16 %v993, %v986
    %v1288 = vpack.c.b16 %v994, %v987
    %v1289 = vpack.c.b16 %v995, %v988
    %v1290 = vpack.c.b16 %v996, %v989
    %v1291 = vpack.c.b16 %v997, %v990
    %v1292 = vpack.c.b16 %v998, %v991
    %v1293 = vpack.c.b16 %v999, %v992
    %v1294 = vpack.c.b16 %v1007, %v1000
    %v1295 = vpack.c.b16 %v1008, %v1001
    %v1296 = vpack.c.b16 %v1009, %v1002
    %v1297 = vpack.c.b16 %v1010, %v1003
    %v1298 = vpack.c.b16 %v1011, %v1004
    %v1299 = vpack.c.b16 %v1012, %v1005
    %v1300 = vpack.c.b16 %v1013, %v1006
    %v1301 = vpack.c.b16 %v1021, %v1014
    %v1302 = vpack.c.b16 %v1022, %v1015
    %v1303 = vpack.c.b16 %v1023, %v1016
    %v1304 = vpack.c.b16 %v1024, %v1017
    %v1305 = vpack.c.b16 %v1025, %v1018
    %v1306 = vpack.c.b16 %v1026, %v1019
    %v1307 = vpack.c.b16 %v1027, %v1020
    %v1308 = vpack.c.b16 %v1035, %v1028
    %v1309 = vpack.c.b16 %v1036, %v1029
    %v1310 = vpack.c.b16 %v1037, %v1030
    %v1311 = vpack.c.b16 %v1038, %v1031
    %v1312 = vpack.c.b16 %v1039, %v1032
    %v1313 = vpack.c.b16 %v1040, %v1033
    %v1314 = vpack.c.b16 %v1041, %v1034
    %v1315 = vpack.c.b16 %v1049, %v1042
    %v1316 = vpack.c.b16 %v1050, %v1043
    %v1317 = vpack.c.b16 %v1051, %v1044
    %v1318 = vpack.c.b16 %v1052, %v1045
    %v1319 = vpack.c.b16 %v1053, %v1046
    %v1320 = vpack.c.b16 %v1054, %v1047
    %v1321 = vpack.c.b16 %v1055, %v1048
    %v1322 = vpack.c.b16 %v1063, %v1056
    %v1323 = vpack.c.b16 %v1064, %v1057
    %v1324 = vpack.c.b16 %v1065, %v1058
    %v1325 = vpack.c.b16 %v1066, %v1059
    %v1326 = vpack.c.b16 %v1067, %v1060
    %v1327 = vpack.c.b16 %v1068, %v1061
    %v1328 = vpack.c.b16 %v1069, %v1062
    %v1329 = vpack.c.b16 %v1077, %v1070
    %v1330 = vpack.c.b16 %v1078, %v1071
    %v1331 = vpack.c.b16 %v1079, %v1072
    %v1332 = vpack.c.b16 %v1080, %v1073
    %v1333 = vpack.c.b16 %v1081, %v1074
    %v1334 = vpack.c.b16 %v1082, %v1075
    %v1335 = vpack.c.b16 %v1083, %v1076
    %v1336 = vpack.c.b16 %v1091, %v1084
    %v1337 = vpack.c.b16 %v1092, %v1085
    %v1338 = vpack.c.b16 %v1093, %v1086
    %v1339 = vpack.c.b16 %v1094, %v1087
    %v1340 = vpack.c.b16 %v1095, %v1088
    %v1341 = vpack.c.b16 %v1096, %v1089
    %v1342 = vpack.c.b16 %v1097, %v1090
    %v1343 = vpack.c.b16 %v1105, %v1098
    %v1344 = vpack.c.b16 %v1106, %v1099
    %v1345 = vpack.c.b16 %v1107, %v1100
    %v1346 = vpack.c.b16 %v1108, %v1101
    %v1347 = vpack.c.b16 %v1109, %v1102
    %v1348 = vpack.c.b16 %v1110, %v1103
    %v1349 = vpack.c.b16 %v1111, %v1104
    %v1350 = vpack.c.b16 %v1119, %v1112
    %v1351 = vpack.c.b16 %v1120, %v1113
    %v1352 = vpack.c.b16 %v1121, %v1114
    %v1353 = vpack.c.b16 %v1122, %v1115
    %v1354 = vpack.c.b16 %v1123, %v1116
    %v1355 = vpack.c.b16 %v1124, %v1117
    %v1356 = vpack.c.b16 %v1125, %v1118
    %v1357 = vpack.c.b16 %v1133, %v1126
    %v1358 = vpack.c.b16 %v1134, %v1127
    %v1359 = vpack.c.b16 %v1135, %v1128
    %v1360 = vpack.c.b16 %v1136, %v1129
    %v1361 = vpack.c.b16 %v1137, %v1130
    %v1362 = vpack.c.b16 %v1138, %v1131
    %v1363 = vpack.c.b16 %v1139, %v1132
    %v1364 = vpack.c.b16 %v1147, %v1140
    %v1365 = vpack.c.b16 %v1148, %v1141
    %v1366 = vpack.c.b16 %v1149, %v1142
    %v1367 = vpack.c.b16 %v1150, %v1143
    %v1368 = vpack.c.b16 %v1151, %v1144
    %v1369 = vpack.c.b16 %v1152, %v1145
    %v1370 = vpack.c.b16 %v1153, %v1146
    %v1371 = vpack.c.b16 %v1161, %v1154
    %v1372 = vpack.c.b16 %v1162, %v1155
    %v1373 = vpack.c.b16 %v1163, %v1156
    %v1374 = vpack.c.b16 %v1164, %v1157
    %v1375 = vpack.c.b16 %v1165, %v1158
    %v1376 = vpack.c.b16 %v1166, %v1159
    %v1377 = vpack.c.b16 %v1167, %v1160
    %v1378 = vpack.c.b16 %v1175, %v1168
    %v1379 = vpack.c.b16 %v1176, %v1169
    %v1380 = vpack.c.b16 %v1177, %v1170
    %v1381 = vpack.c.b16 %v1178, %v1171
    %v1382 = vpack.c.b16 %v1179, %v1172
    %v1383 = vpack.c.b16 %v1180, %v1173
    %v1384 = vpack.c.b16 %v1181, %v1174
    %v1385 = vpack.c.b16 %v1189, %v1182
    %v1386 = vpack.c.b16 %v1190, %v1183
    %v1387 = vpack.c.b16 %v1191, %v1184
    %v1388 = vpack.c.b16 %v1192, %v1185
    %v1389 = vpack.c.b16 %v1193, %v1186
    %v1390 = vpack.c.b16 %v1194, %v1187
    %v1391 = vpack.c.b16 %v1195, %v1188
    %v1392 = vpack.c.b16 %v1203, %v1196
    %v1393 = vpack.c.b16 %v1204, %v1197
    %v1394 = vpack.c.b16 %v1205, %v1198
    %v1395 = vpack.c.b16 %v1206, %v1199
    %v1396 = vpack.c.b16 %v1207, %v1200
    %v1397 = vpack.c.b16 %v1208, %v1201
    %v1398 = vpack.c.b16 %v1209, %v1202
    %v1399 = vpack.c.b16 %v1217, %v1210
    %v1400 = vpack.c.b16 %v1218, %v1211
    %v1401 = vpack.c.b16 %v1219, %v1212
    %v1402 = vpack.c.b16 %v1220, %v1213
    %v1403 = vpack.c.b16 %v1221, %v1214
    %v1404 = vpack.c.b16 %v1222, %v1215
    %v1405 = vpack.c.b16 %v1223, %v1216
    %v1406 = vpack.c.b16 %v1231, %v1224
    %v1407 = vpack.c.b16 %v1232, %v1225
    %v1408 = vpack.c.b16 %v1233, %v1226
    %v1409 = vpack.c.b16 %v1234, %v1227
    %v1410 = vpack.c.b16 %v1235, %v1228
    %v1411 = vpack.c.b16 %v1236, %v1229
    %v1412 = vpack.c.b16 %v1237, %v1230
    %v1413 = vpack.c.b16 %v1245, %v1238
    %v1414 = vpack.c.b16 %v1246, %v1239
    %v1415 = vpack.c.b16 %v1247, %v1240
    %v1416 = vpack.c.b16 %v1248, %v1241
    %v1417 = vpack.c.b16 %v1249, %v1242
    %v1418 = vpack.c.b16 %v1250, %v1243
    %v1419 = vpack.c.b16 %v1251, %v1244
    %1588 = vmatprep.subr.bf16.mxu0 %v1253
    %1589 = vmatpush1.bf16.msra.mxu0 %v1252
    %1590 = vmatprep.subr.bf16.mxu0 %v1260
    %1591 = vmatpush1.bf16.msra.mxu0 %v1259
    %1592 = vmatprep.subr.bf16.mxu0 %v1267
    %1593 = vmatpush1.bf16.msra.mxu0 %v1266
    %1594 = vmatprep.subr.bf16.mxu0 %v1274
    %1595 = vmatpush1.bf16.msra.mxu0 %v1273
    %1596 = vmatprep.subr.bf16.mxu0 %v1281
    %1597 = vmatpush1.bf16.msra.mxu0 %v1280
    %1598 = vmatprep.subr.bf16.mxu0 %v1288
    %1599 = vmatpush1.bf16.msra.mxu0 %v1287
    %1600 = vmatprep.subr.bf16.mxu0 %v1295
    %1601 = vmatpush1.bf16.msra.mxu0 %v1294
    %1602 = vmatprep.subr.bf16.mxu0 %v1302
    %1603 = vmatpush1.bf16.msra.mxu0 %v1301
    %1604 = vmatprep.subr.bf16.mxu0 %v1309
    %1605 = vmatpush1.bf16.msra.mxu0 %v1308
    %1606 = vmatprep.subr.bf16.mxu0 %v1316
    %1607 = vmatpush1.bf16.msra.mxu0 %v1315
    %1608 = vmatprep.subr.bf16.mxu0 %v1323
    %1609 = vmatpush1.bf16.msra.mxu0 %v1322
    %1610 = vmatprep.subr.bf16.mxu0 %v1330
    %1611 = vmatpush1.bf16.msra.mxu0 %v1329
    %1612 = vmatprep.subr.bf16.mxu0 %v1337
    %1613 = vmatpush1.bf16.msra.mxu0 %v1336
    %1614 = vmatprep.subr.bf16.mxu0 %v1344
    %1615 = vmatpush1.bf16.msra.mxu0 %v1343
    %1616 = vmatprep.subr.bf16.mxu0 %v1351
    %1617 = vmatpush1.bf16.msra.mxu0 %v1350
    %1618 = vmatprep.subr.bf16.mxu0 %v1358
    %1619 = vmatpush1.bf16.msra.mxu0 %v1357
    %1620 = vmatprep.mubr.bf16.mxu0 %v493
    %1621 = vmatmul.mubr.bf16.gmra.mrb[0].mxu0 %v492
    %v1622 = vpop.f32.mrb[0].mxu0
    %v1623 = vadd.f32 %v692, %v1622
    %v1624 = vpop.f32.mrb[0].mxu0
    %v1625 = vadd.f32 %v696, %v1624
    %v1626 = vpop.f32.mrb[0].mxu0
    %v1627 = vadd.f32 %v692, %v1626
    %v1628 = vpop.f32.mrb[0].mxu0
    %v1629 = vadd.f32 %v696, %v1628
    %1630 = vdwg.mxu0
    %1631 = vmatprep.subr.bf16.mxu0 %v1365
    %1632 = vmatpush1.bf16.msra.mxu0 %v1364
    %1633 = vmatprep.subr.bf16.mxu0 %v1372
    %1634 = vmatpush1.bf16.msra.mxu0 %v1371
    %1635 = vmatprep.subr.bf16.mxu0 %v1379
    %1636 = vmatpush1.bf16.msra.mxu0 %v1378
    %1637 = vmatprep.subr.bf16.mxu0 %v1386
    %1638 = vmatpush1.bf16.msra.mxu0 %v1385
    %1639 = vmatprep.subr.bf16.mxu0 %v1393
    %1640 = vmatpush1.bf16.msra.mxu0 %v1392
    %1641 = vmatprep.subr.bf16.mxu0 %v1400
    %1642 = vmatpush1.bf16.msra.mxu0 %v1399
    %1643 = vmatprep.subr.bf16.mxu0 %v1407
    %1644 = vmatpush1.bf16.msra.mxu0 %v1406
    %1645 = vmatprep.subr.bf16.mxu0 %v1414
    %1646 = vmatpush1.bf16.msra.mxu0 %v1413
    %1647 = vmatprep.subr.bf16.mxu0 0
    %1648 = vmatpush1.bf16.msra.mxu0 0
    %1649 = vmatprep.subr.bf16.mxu0 0
    %1650 = vmatpush1.bf16.msra.mxu0 0
    %1651 = vmatprep.subr.bf16.mxu0 0
    %1652 = vmatpush1.bf16.msra.mxu0 0
    %1653 = vmatprep.subr.bf16.mxu0 0
    %1654 = vmatpush1.bf16.msra.mxu0 0
    %1655 = vmatprep.subr.bf16.mxu0 0
    %1656 = vmatpush1.bf16.msra.mxu0 0
    %1657 = vmatprep.subr.bf16.mxu0 0
    %1658 = vmatpush1.bf16.msra.mxu0 0
    %1659 = vmatprep.subr.bf16.mxu0 0
    %1660 = vmatpush1.bf16.msra.mxu0 0
    %1661 = vmatprep.subr.bf16.mxu0 0
    %1662 = vmatpush1.bf16.msra.mxu0 0
    %1663 = vmatprep.mubr.bf16.mxu0 0
    %1664 = vmatmul.mubr.bf16.gmra.mrb[0].mxu0 %v494
    %v1665 = vpop.f32.mrb[0].mxu0
    %v1666 = vadd.f32 %v1623, %v1665
    %v1667 = vpop.f32.mrb[0].mxu0
    %v1668 = vadd.f32 %v1625, %v1667
    %v1669 = vpop.f32.mrb[0].mxu0
    %v1670 = vadd.f32 %v1627, %v1669
    %v1671 = vpop.f32.mrb[0].mxu0
    %v1672 = vadd.f32 %v1629, %v1671
    %1673 = vdwg.mxu0
    %1674 = vmatprep.subr.bf16.mxu0 %v1255
    %1675 = vmatpush1.bf16.msra.mxu0 %v1254
    %1676 = vmatprep.subr.bf16.mxu0 %v1262
    %1677 = vmatpush1.bf16.msra.mxu0 %v1261
    %1678 = vmatprep.subr.bf16.mxu0 %v1269
    %1679 = vmatpush1.bf16.msra.mxu0 %v1268
    %1680 = vmatprep.subr.bf16.mxu0 %v1276
    %1681 = vmatpush1.bf16.msra.mxu0 %v1275
    %1682 = vmatprep.subr.bf16.mxu0 %v1283
    %1683 = vmatpush1.bf16.msra.mxu0 %v1282
    %1684 = vmatprep.subr.bf16.mxu0 %v1290
    %1685 = vmatpush1.bf16.msra.mxu0 %v1289
    %1686 = vmatprep.subr.bf16.mxu0 %v1297
    %1687 = vmatpush1.bf16.msra.mxu0 %v1296
    %1688 = vmatprep.subr.bf16.mxu0 %v1304
    %1689 = vmatpush1.bf16.msra.mxu0 %v1303
    %1690 = vmatprep.subr.bf16.mxu0 %v1311
    %1691 = vmatpush1.bf16.msra.mxu0 %v1310
    %1692 = vmatprep.subr.bf16.mxu0 %v1318
    %1693 = vmatpush1.bf16.msra.mxu0 %v1317
    %1694 = vmatprep.subr.bf16.mxu0 %v1325
    %1695 = vmatpush1.bf16.msra.mxu0 %v1324
    %1696 = vmatprep.subr.bf16.mxu0 %v1332
    %1697 = vmatpush1.bf16.msra.mxu0 %v1331
    %1698 = vmatprep.subr.bf16.mxu0 %v1339
    %1699 = vmatpush1.bf16.msra.mxu0 %v1338
    %1700 = vmatprep.subr.bf16.mxu0 %v1346
    %1701 = vmatpush1.bf16.msra.mxu0 %v1345
    %1702 = vmatprep.subr.bf16.mxu0 %v1353
    %1703 = vmatpush1.bf16.msra.mxu0 %v1352
    %1704 = vmatprep.subr.bf16.mxu0 %v1360
    %1705 = vmatpush1.bf16.msra.mxu0 %v1359
    %1706 = vmatprep.mubr.bf16.mxu0 %v493
    %1707 = vmatmul.mubr.bf16.gmra.mrb[0].mxu0 %v492
    %v1708 = vpop.f32.mrb[0].mxu0
    %v1709 = vadd.f32 %v700, %v1708
    %v1710 = vpop.f32.mrb[0].mxu0
    %v1711 = vadd.f32 %v704, %v1710
    %v1712 = vpop.f32.mrb[0].mxu0
    %v1713 = vadd.f32 %v700, %v1712
    %v1714 = vpop.f32.mrb[0].mxu0
    %v1715 = vadd.f32 %v704, %v1714
    %1716 = vdwg.mxu0
    %1717 = vmatprep.subr.bf16.mxu0 %v1367
    %1718 = vmatpush1.bf16.msra.mxu0 %v1366
    %1719 = vmatprep.subr.bf16.mxu0 %v1374
    %1720 = vmatpush1.bf16.msra.mxu0 %v1373
    %1721 = vmatprep.subr.bf16.mxu0 %v1381
    %1722 = vmatpush1.bf16.msra.mxu0 %v1380
    %1723 = vmatprep.subr.bf16.mxu0 %v1388
    %1724 = vmatpush1.bf16.msra.mxu0 %v1387
    %1725 = vmatprep.subr.bf16.mxu0 %v1395
    %1726 = vmatpush1.bf16.msra.mxu0 %v1394
    %1727 = vmatprep.subr.bf16.mxu0 %v1402
    %1728 = vmatpush1.bf16.msra.mxu0 %v1401
    %1729 = vmatprep.subr.bf16.mxu0 %v1409
    %1730 = vmatpush1.bf16.msra.mxu0 %v1408
    %1731 = vmatprep.subr.bf16.mxu0 %v1416
    %1732 = vmatpush1.bf16.msra.mxu0 %v1415
    %1733 = vmatprep.subr.bf16.mxu0 0
    %1734 = vmatpush1.bf16.msra.mxu0 0
    %1735 = vmatprep.subr.bf16.mxu0 0
    %1736 = vmatpush1.bf16.msra.mxu0 0
    %1737 = vmatprep.subr.bf16.mxu0 0
    %1738 = vmatpush1.bf16.msra.mxu0 0
    %1739 = vmatprep.subr.bf16.mxu0 0
    %1740 = vmatpush1.bf16.msra.mxu0 0
    %1741 = vmatprep.subr.bf16.mxu0 0
    %1742 = vmatpush1.bf16.msra.mxu0 0
    %1743 = vmatprep.subr.bf16.mxu0 0
    %1744 = vmatpush1.bf16.msra.mxu0 0
    %1745 = vmatprep.subr.bf16.mxu0 0
    %1746 = vmatpush1.bf16.msra.mxu0 0
    %1747 = vmatprep.subr.bf16.mxu0 0
    %1748 = vmatpush1.bf16.msra.mxu0 0
    %1749 = vmatprep.mubr.bf16.mxu0 0
    %1750 = vmatmul.mubr.bf16.gmra.mrb[0].mxu0 %v494
    %v1751 = vpop.f32.mrb[0].mxu0
    %v1752 = vadd.f32 %v1709, %v1751
    %v1753 = vpop.f32.mrb[0].mxu0
    %v1754 = vadd.f32 %v1711, %v1753
    %v1755 = vpop.f32.mrb[0].mxu0
    %v1756 = vadd.f32 %v1713, %v1755
    %v1757 = vpop.f32.mrb[0].mxu0
    %v1758 = vadd.f32 %v1715, %v1757
    %1759 = vdwg.mxu0
    %1760 = vmatprep.subr.bf16.mxu0 %v1257
    %1761 = vmatpush1.bf16.msra.mxu0 %v1256
    %1762 = vmatprep.subr.bf16.mxu0 %v1264
    %1763 = vmatpush1.bf16.msra.mxu0 %v1263
    %1764 = vmatprep.subr.bf16.mxu0 %v1271
    %1765 = vmatpush1.bf16.msra.mxu0 %v1270
    %1766 = vmatprep.subr.bf16.mxu0 %v1278
    %1767 = vmatpush1.bf16.msra.mxu0 %v1277
    %1768 = vmatprep.subr.bf16.mxu0 %v1285
    %1769 = vmatpush1.bf16.msra.mxu0 %v1284
    %1770 = vmatprep.subr.bf16.mxu0 %v1292
    %1771 = vmatpush1.bf16.msra.mxu0 %v1291
    %1772 = vmatprep.subr.bf16.mxu0 %v1299
    %1773 = vmatpush1.bf16.msra.mxu0 %v1298
    %1774 = vmatprep.subr.bf16.mxu0 %v1306
    %1775 = vmatpush1.bf16.msra.mxu0 %v1305
    %1776 = vmatprep.subr.bf16.mxu0 %v1313
    %1777 = vmatpush1.bf16.msra.mxu0 %v1312
    %1778 = vmatprep.subr.bf16.mxu0 %v1320
    %1779 = vmatpush1.bf16.msra.mxu0 %v1319
    %1780 = vmatprep.subr.bf16.mxu0 %v1327
    %1781 = vmatpush1.bf16.msra.mxu0 %v1326
    %1782 = vmatprep.subr.bf16.mxu0 %v1334
    %1783 = vmatpush1.bf16.msra.mxu0 %v1333
    %1784 = vmatprep.subr.bf16.mxu0 %v1341
    %1785 = vmatpush1.bf16.msra.mxu0 %v1340
    %1786 = vmatprep.subr.bf16.mxu0 %v1348
    %1787 = vmatpush1.bf16.msra.mxu0 %v1347
    %1788 = vmatprep.subr.bf16.mxu0 %v1355
    %1789 = vmatpush1.bf16.msra.mxu0 %v1354
    %1790 = vmatprep.subr.bf16.mxu0 %v1362
    %1791 = vmatpush1.bf16.msra.mxu0 %v1361
    %1792 = vmatprep.mubr.bf16.mxu0 %v493
    %1793 = vmatmul.mubr.bf16.gmra.mrb[0].mxu0 %v492
    %v1794 = vpop.f32.mrb[0].mxu0
    %v1795 = vadd.f32 %v708, %v1794
    %v1796 = vpop.f32.mrb[0].mxu0
    %v1797 = vadd.f32 %v712, %v1796
    %v1798 = vpop.f32.mrb[0].mxu0
    %v1799 = vadd.f32 %v708, %v1798
    %v1800 = vpop.f32.mrb[0].mxu0
    %v1801 = vadd.f32 %v712, %v1800
    %1802 = vdwg.mxu0
    %1803 = vmatprep.subr.bf16.mxu0 %v1369
    %1804 = vmatpush1.bf16.msra.mxu0 %v1368
    %1805 = vmatprep.subr.bf16.mxu0 %v1376
    %1806 = vmatpush1.bf16.msra.mxu0 %v1375
    %1807 = vmatprep.subr.bf16.mxu0 %v1383
    %1808 = vmatpush1.bf16.msra.mxu0 %v1382
    %1809 = vmatprep.subr.bf16.mxu0 %v1390
    %1810 = vmatpush1.bf16.msra.mxu0 %v1389
    %1811 = vmatprep.subr.bf16.mxu0 %v1397
    %1812 = vmatpush1.bf16.msra.mxu0 %v1396
    %1813 = vmatprep.subr.bf16.mxu0 %v1404
    %1814 = vmatpush1.bf16.msra.mxu0 %v1403
    %1815 = vmatprep.subr.bf16.mxu0 %v1411
    %1816 = vmatpush1.bf16.msra.mxu0 %v1410
    %1817 = vmatprep.subr.bf16.mxu0 %v1418
    %1818 = vmatpush1.bf16.msra.mxu0 %v1417
    %1819 = vmatprep.subr.bf16.mxu0 0
    %1820 = vmatpush1.bf16.msra.mxu0 0
    %1821 = vmatprep.subr.bf16.mxu0 0
    %1822 = vmatpush1.bf16.msra.mxu0 0
    %1823 = vmatprep.subr.bf16.mxu0 0
    %1824 = vmatpush1.bf16.msra.mxu0 0
    %1825 = vmatprep.subr.bf16.mxu0 0
    %1826 = vmatpush1.bf16.msra.mxu0 0
    %1827 = vmatprep.subr.bf16.mxu0 0
    %1828 = vmatpush1.bf16.msra.mxu0 0
    %1829 = vmatprep.subr.bf16.mxu0 0
    %1830 = vmatpush1.bf16.msra.mxu0 0
    %1831 = vmatprep.subr.bf16.mxu0 0
    %1832 = vmatpush1.bf16.msra.mxu0 0
    %1833 = vmatprep.subr.bf16.mxu0 0
    %1834 = vmatpush1.bf16.msra.mxu0 0
    %1835 = vmatprep.mubr.bf16.mxu0 0
    %1836 = vmatmul.mubr.bf16.gmra.mrb[0].mxu0 %v494
    %v1837 = vpop.f32.mrb[0].mxu0
    %v1838 = vadd.f32 %v1795, %v1837
    %v1839 = vpop.f32.mrb[0].mxu0
    %v1840 = vadd.f32 %v1797, %v1839
    %v1841 = vpop.f32.mrb[0].mxu0
    %v1842 = vadd.f32 %v1799, %v1841
    %v1843 = vpop.f32.mrb[0].mxu0
    %v1844 = vadd.f32 %v1801, %v1843
    %1845 = vdwg.mxu0
    %1846 = vmatprep.subr.bf16.mxu0 0
    %1847 = vmatpush1.bf16.msra.mxu0 %v1258
    %1848 = vmatprep.subr.bf16.mxu0 0
    %1849 = vmatpush1.bf16.msra.mxu0 %v1265
    %1850 = vmatprep.subr.bf16.mxu0 0
    %1851 = vmatpush1.bf16.msra.mxu0 %v1272
    %1852 = vmatprep.subr.bf16.mxu0 0
    %1853 = vmatpush1.bf16.msra.mxu0 %v1279
    %1854 = vmatprep.subr.bf16.mxu0 0
    %1855 = vmatpush1.bf16.msra.mxu0 %v1286
    %1856 = vmatprep.subr.bf16.mxu0 0
    %1857 = vmatpush1.bf16.msra.mxu0 %v1293
    %1858 = vmatprep.subr.bf16.mxu0 0
    %1859 = vmatpush1.bf16.msra.mxu0 %v1300
    %1860 = vmatprep.subr.bf16.mxu0 0
    %1861 = vmatpush1.bf16.msra.mxu0 %v1307
    %1862 = vmatprep.subr.bf16.mxu0 0
    %1863 = vmatpush1.bf16.msra.mxu0 %v1314
    %1864 = vmatprep.subr.bf16.mxu0 0
    %1865 = vmatpush1.bf16.msra.mxu0 %v1321
    %1866 = vmatprep.subr.bf16.mxu0 0
    %1867 = vmatpush1.bf16.msra.mxu0 %v1328
    %1868 = vmatprep.subr.bf16.mxu0 0
    %1869 = vmatpush1.bf16.msra.mxu0 %v1335
    %1870 = vmatprep.subr.bf16.mxu0 0
    %1871 = vmatpush1.bf16.msra.mxu0 %v1342
    %1872 = vmatprep.subr.bf16.mxu0 0
    %1873 = vmatpush1.bf16.msra.mxu0 %v1349
    %1874 = vmatprep.subr.bf16.mxu0 0
    %1875 = vmatpush1.bf16.msra.mxu0 %v1356
    %1876 = vmatprep.subr.bf16.mxu0 0
    %1877 = vmatpush1.bf16.msra.mxu0 %v1363
    %1878 = vmatprep.mubr.bf16.mxu0 %v493
    %1879 = vmatmul.mubr.bf16.gmra.mrb[0].mxu0 %v492
    %v1880 = vpop.f32.mrb[0].mxu0
    %v1881 = vadd.f32 %v716, %v1880
    %v1882 = vpop.f32.mrb[0].mxu0
    %v1883 = vpop.f32.mrb[0].mxu0
    %v1884 = vadd.f32 %v716, %v1883
    %v1885 = vpop.f32.mrb[0].mxu0
    %1886 = vdwg.mxu0
    %1887 = vmatprep.subr.bf16.mxu0 0
    %1888 = vmatpush1.bf16.msra.mxu0 %v1370
    %1889 = vmatprep.subr.bf16.mxu0 0
    %1890 = vmatpush1.bf16.msra.mxu0 %v1377
    %1891 = vmatprep.subr.bf16.mxu0 0
    %1892 = vmatpush1.bf16.msra.mxu0 %v1384
    %1893 = vmatprep.subr.bf16.mxu0 0
    %1894 = vmatpush1.bf16.msra.mxu0 %v1391
    %1895 = vmatprep.subr.bf16.mxu0 0
    %1896 = vmatpush1.bf16.msra.mxu0 %v1398
    %1897 = vmatprep.subr.bf16.mxu0 0
    %1898 = vmatpush1.bf16.msra.mxu0 %v1405
    %1899 = vmatprep.subr.bf16.mxu0 0
    %1900 = vmatpush1.bf16.msra.mxu0 %v1412
    %1901 = vmatprep.subr.bf16.mxu0 0
    %1902 = vmatpush1.bf16.msra.mxu0 %v1419
    %1903 = vmatprep.subr.bf16.mxu0 0
    %1904 = vmatpush1.bf16.msra.mxu0 0
    %1905 = vmatprep.subr.bf16.mxu0 0
    %1906 = vmatpush1.bf16.msra.mxu0 0
    %1907 = vmatprep.subr.bf16.mxu0 0
    %1908 = vmatpush1.bf16.msra.mxu0 0
    %1909 = vmatprep.subr.bf16.mxu0 0
    %1910 = vmatpush1.bf16.msra.mxu0 0
    %1911 = vmatprep.subr.bf16.mxu0 0
    %1912 = vmatpush1.bf16.msra.mxu0 0
    %1913 = vmatprep.subr.bf16.mxu0 0
    %1914 = vmatpush1.bf16.msra.mxu0 0
    %1915 = vmatprep.subr.bf16.mxu0 0
    %1916 = vmatpush1.bf16.msra.mxu0 0
    %1917 = vmatprep.subr.bf16.mxu0 0
    %1918 = vmatpush1.bf16.msra.mxu0 0
    %1919 = vmatprep.mubr.bf16.mxu0 0
    %1920 = vmatmul.mubr.bf16.gmra.mrb[0].mxu0 %v494
    %v1921 = vpop.f32.mrb[0].mxu0
    %v1922 = vadd.f32 %v1881, %v1921
    %v1923 = vpop.f32.mrb[0].mxu0
    %v1924 = vpop.f32.mrb[0].mxu0
    %v1925 = vadd.f32 %v1884, %v1924
    %v1926 = vpop.f32.mrb[0].mxu0
    %1927 = vdwg.mxu0
    %1928 = vst [vmem:[%s8] sm:$0xff] %v1666
    %1929 = vst [vmem:[%s8 + $0x8] sm:$0xff] %v1668
    %1930 = vst [vmem:[%s8 + $0x10] sm:$0xff] %v1752
    %1931 = vst [vmem:[%s8 + $0x18] sm:$0xff] %v1754
    %1932 = vst [vmem:[%s8 + $0x20] sm:$0xff] %v1838
    %1933 = vst [vmem:[%s8 + $0x28] sm:$0xff] %v1840
    %1934 = vst [vmem:[%s8 + $0x30] sm:$0xff] %v1922
    %1935 = vst [vmem:[%s8 + $0x38] sm:$0xff] %v1670
    %1936 = vst [vmem:[%s8 + $0x40] sm:$0xff] %v1672
    %1937 = vst [vmem:[%s8 + $0x48] sm:$0xff] %v1756
    %1938 = vst [vmem:[%s8 + $0x50] sm:$0xff] %v1758
    %1939 = vst [vmem:[%s8 + $0x58] sm:$0xff] %v1842
    %1940 = vst [vmem:[%s8 + $0x60] sm:$0xff] %v1844
    %1941 = vst [vmem:[%s8 + $0x68] sm:$0xff] %v1925
    %v1942 = vlaneseq
    %v1943 = vshrl.u32 %v1942, 7
    %v1944 = vadd.s32 %v1943, 8
    %s1945 = smul.u32 0, 16
    %v1946 = vstv %s1945
    %v1947 = vadd.s32 %v1943, %v1946
    %v1948 = vadd.s32 %v1944, %v1946
    %s1949 = sld [smem:[#allocation3]]
    %v1950 = vstv %s1949
    %vm1951 = vcmp.lt.s32.totalorder %v1947, %v1950
    %vm1952 = vcmp.lt.s32.totalorder %v1948, %v1950
    %v1953 = vsel %vm1951, 1, 0
    %v1954 = vsel %vm1952, 1, 0
    %v1955 = vcvt.s32.f32 %v1953
    %v1956 = vcvt.s32.f32 %v1954
    %v1957 = vmul.f32 %v1666, %v1955
    %v1958 = vmul.f32 %v1668, %v1955
    %v1959 = vmul.f32 %v1752, %v1955
    %v1960 = vmul.f32 %v1754, %v1955
    %v1961 = vmul.f32 %v1838, %v1955
    %v1962 = vmul.f32 %v1840, %v1955
    %v1963 = vmul.f32 %v1922, %v1955
    %v1964 = vmul.f32 %v1670, %v1956
    %v1965 = vmul.f32 %v1672, %v1956
    %v1966 = vmul.f32 %v1756, %v1956
    %v1967 = vmul.f32 %v1758, %v1956
    %v1968 = vmul.f32 %v1842, %v1956
    %v1969 = vmul.f32 %v1844, %v1956
    %v1970 = vmul.f32 %v1925, %v1956
    %v1971 = vadd.f32 %v1957, %v1964
    %v1972 = vrot.slane %v1971, 4
    %v1973 = vadd.f32 %v1971, %v1972
    %v1974 = vrot.slane %v1973, 2
    %v1975 = vadd.f32 %v1973, %v1974
    %v1976 = vrot.slane %v1975, 1
    %v1977 = vadd.f32 %v1975, %v1976
    %v1978 = vadd.f32 %v1958, %v1965
    %v1979 = vrot.slane %v1978, 4
    %v1980 = vadd.f32 %v1978, %v1979
    %v1981 = vrot.slane %v1980, 2
    %v1982 = vadd.f32 %v1980, %v1981
    %v1983 = vrot.slane %v1982, 1
    %v1984 = vadd.f32 %v1982, %v1983
    %v1985 = vadd.f32 %v1959, %v1966
    %v1986 = vrot.slane %v1985, 4
    %v1987 = vadd.f32 %v1985, %v1986
    %v1988 = vrot.slane %v1987, 2
    %v1989 = vadd.f32 %v1987, %v1988
    %v1990 = vrot.slane %v1989, 1
    %v1991 = vadd.f32 %v1989, %v1990
    %v1992 = vadd.f32 %v1960, %v1967
    %v1993 = vrot.slane %v1992, 4
    %v1994 = vadd.f32 %v1992, %v1993
    %v1995 = vrot.slane %v1994, 2
    %v1996 = vadd.f32 %v1994, %v1995
    %v1997 = vrot.slane %v1996, 1
    %v1998 = vadd.f32 %v1996, %v1997
    %v1999 = vadd.f32 %v1961, %v1968
    %v2000 = vrot.slane %v1999, 4
    %v2001 = vadd.f32 %v1999, %v2000
    %v2002 = vrot.slane %v2001, 2
    %v2003 = vadd.f32 %v2001, %v2002
    %v2004 = vrot.slane %v2003, 1
    %v2005 = vadd.f32 %v2003, %v2004
    %v2006 = vadd.f32 %v1962, %v1969
    %v2007 = vrot.slane %v2006, 4
    %v2008 = vadd.f32 %v2006, %v2007
    %v2009 = vrot.slane %v2008, 2
    %v2010 = vadd.f32 %v2008, %v2009
    %v2011 = vrot.slane %v2010, 1
    %v2012 = vadd.f32 %v2010, %v2011
    %v2013 = vadd.f32 %v1963, %v1970
    %v2014 = vrot.slane %v2013, 4
    %v2015 = vadd.f32 %v2013, %v2014
    %v2016 = vrot.slane %v2015, 2
    %v2017 = vadd.f32 %v2015, %v2016
    %v2018 = vrot.slane %v2017, 1
    %v2019 = vadd.f32 %v2017, %v2018
    %v2020 = vmul.f32 %v1957, %v1957
    %v2021 = vmul.f32 %v1958, %v1958
    %v2022 = vmul.f32 %v1959, %v1959
    %v2023 = vmul.f32 %v1960, %v1960
    %v2024 = vmul.f32 %v1961, %v1961
    %v2025 = vmul.f32 %v1962, %v1962
    %v2026 = vmul.f32 %v1963, %v1963
    %v2027 = vmul.f32 %v1964, %v1964
    %v2028 = vmul.f32 %v1965, %v1965
    %v2029 = vmul.f32 %v1966, %v1966
    %v2030 = vmul.f32 %v1967, %v1967
    %v2031 = vmul.f32 %v1968, %v1968
    %v2032 = vmul.f32 %v1969, %v1969
    %v2033 = vmul.f32 %v1970, %v1970
    %v2034 = vadd.f32 %v2020, %v2027
    %v2035 = vrot.slane %v2034, 4
    %v2036 = vadd.f32 %v2034, %v2035
    %v2037 = vrot.slane %v2036, 2
    %v2038 = vadd.f32 %v2036, %v2037
    %v2039 = vrot.slane %v2038, 1
    %v2040 = vadd.f32 %v2038, %v2039
    %v2041 = vadd.f32 %v2021, %v2028
    %v2042 = vrot.slane %v2041, 4
    %v2043 = vadd.f32 %v2041, %v2042
    %v2044 = vrot.slane %v2043, 2
    %v2045 = vadd.f32 %v2043, %v2044
    %v2046 = vrot.slane %v2045, 1
    %v2047 = vadd.f32 %v2045, %v2046
    %v2048 = vadd.f32 %v2022, %v2029
    %v2049 = vrot.slane %v2048, 4
    %v2050 = vadd.f32 %v2048, %v2049
    %v2051 = vrot.slane %v2050, 2
    %v2052 = vadd.f32 %v2050, %v2051
    %v2053 = vrot.slane %v2052, 1
    %v2054 = vadd.f32 %v2052, %v2053
    %v2055 = vadd.f32 %v2023, %v2030
    %v2056 = vrot.slane %v2055, 4
    %v2057 = vadd.f32 %v2055, %v2056
    %v2058 = vrot.slane %v2057, 2
    %v2059 = vadd.f32 %v2057, %v2058
    %v2060 = vrot.slane %v2059, 1
    %v2061 = vadd.f32 %v2059, %v2060
    %v2062 = vadd.f32 %v2024, %v2031
    %v2063 = vrot.slane %v2062, 4
    %v2064 = vadd.f32 %v2062, %v2063
    %v2065 = vrot.slane %v2064, 2
    %v2066 = vadd.f32 %v2064, %v2065
    %v2067 = vrot.slane %v2066, 1
    %v2068 = vadd.f32 %v2066, %v2067
    %v2069 = vadd.f32 %v2025, %v2032
    %v2070 = vrot.slane %v2069, 4
    %v2071 = vadd.f32 %v2069, %v2070
    %v2072 = vrot.slane %v2071, 2
    %v2073 = vadd.f32 %v2071, %v2072
    %v2074 = vrot.slane %v2073, 1
    %v2075 = vadd.f32 %v2073, %v2074
    %v2076 = vadd.f32 %v2026, %v2033
    %v2077 = vrot.slane %v2076, 4
    %v2078 = vadd.f32 %v2076, %v2077
    %v2079 = vrot.slane %v2078, 2
    %v2080 = vadd.f32 %v2078, %v2079
    %v2081 = vrot.slane %v2080, 1
    %v2082 = vadd.f32 %v2080, %v2081
    %vm2083 = vcmask 1040384
    %v2084 = vsel %vm2083, %v1977, %v2040
    %v2085 = vsel %vm2083, %v1984, %v2047
    %v2086 = vsel %vm2083, %v1991, %v2054
    %v2087 = vsel %vm2083, %v1998, %v2061
    %v2088 = vsel %vm2083, %v2005, %v2068
    %v2089 = vsel %vm2083, %v2012, %v2075
    %v2090 = vsel %vm2083, %v2019, %v2082
    %v2098 = vcombine.low %v2084, %v2085
    %v2099 = vcombine.low %v2086, %v2087
    %v2101 = vunpack.c.l.s4 1983009808
    %v2102 = vunpack.c.0.s8 %v2101
    %v2103 = vlaneseq
    %v2104 = vshrl.u32 %v2103, 7
    %v2105 = vsub.s32 %v2102, %v2104
    %v2106 = vrot.slane %v2098, %v2105
    %v2108 = vunpack.c.l.s4 1983009808
    %v2109 = vunpack.c.0.s8 %v2108
    %v2110 = vlaneseq
    %v2111 = vshrl.u32 %v2110, 7
    %v2112 = vsub.s32 %v2109, %v2111
    %v2113 = vrot.slane %v2099, %v2112
    %v2114 = vcombine.low %v2106, %v2113
    %v2115 = vcombine.low %v2088, %v2089
    %v2117 = vunpack.c.l.s4 1983009808
    %v2118 = vunpack.c.0.s8 %v2117
    %v2119 = vlaneseq
    %v2120 = vshrl.u32 %v2119, 7
    %v2121 = vsub.s32 %v2118, %v2120
    %v2122 = vrot.slane %v2115, %v2121
    %v2124 = vunpack.c.l.s4 1983009808
    %v2125 = vunpack.c.0.s8 %v2124
    %v2126 = vlaneseq
    %v2127 = vshrl.u32 %v2126, 7
    %v2128 = vsub.s32 %v2125, %v2127
    %v2129 = vrot.slane %v2090, %v2128
    %v2130 = vcombine.low %v2122, %v2129
    %2133 = vst [vmem:[%s9] sm:$0xff] %v2114
    %2134 = vst [vmem:[%s9 + $0x8] sm:$0x3f] %v2130
    // Predicated region
    $region54: #{_forward.3} parent=1 // pred_check
      _
    $region55: #{_forward.3} parent=1 // pred_check_branch
      %2136 = sbr.rel (0) target = $region57
    $region56: #{_forward.3} parent=1 // pred_region
      _
    $region57: #{_forward.3} parent=1 // pred_fallthru
      _
    // Predicated region
    $region58: #{_forward.3} parent=1 // pred_check
      _
    $region59: #{_forward.3} parent=1 // pred_check_branch
      %2138 = sbr.rel (0) target = $region61
    $region60: #{_forward.3} parent=1 // pred_region
      _
    $region61: #{_forward.3} parent=1 // pred_fallthru
      _
    // Predicated region
    $region62: #{_forward.3} parent=1 // pred_check
      _
    $region63: #{_forward.3} parent=1 // pred_check_branch
      %2140 = sbr.rel (0) target = $region65
    $region64: #{_forward.3} parent=1 // pred_region
      _
    $region65: #{_forward.3} parent=1 // pred_fallthru
      _
    // Predicated region
    $region66: #{_forward.3} parent=1 // pred_check
      _
    $region67: #{_forward.3} parent=1 // pred_check_branch
      %2142 = sbr.rel (0) target = $region69
    $region68: #{_forward.3} parent=1 // pred_region
      _
    $region69: #{_forward.3} parent=1 // pred_fallthru
      _
    %2143 = vsyncpa [#allocation5], 1
    %2144 = vsyncpa [#allocation7], 1
    %2145 = vsyncpa [#allocation10], 1
    %2146 = vsyncpa [#allocation13], 1

// kernel: _forward.4
$region0: #{_forward.4}
  #allocation0 [shape = 'u32[]', space=smem, size = 0x4, offset = 0x4, fixed_abs, tag = 'smem constant byte address 0x4 - core index']
  #allocation1 [shape = 'u32[144,128]{1,0:T(1,128)}', space=vmem, size = 0x12000, scoped, tag = 'internal scratch']
  #allocation2 [shape = 's32[1]{0}', space=sflag, size = 0x4, scoped, tag = 'scoped memory for _forward.4']
  #allocation3 [shape = 's32[1]{0:T(128)S(6)}', space=smem, size = 0x200, scoped, tag = 'prefetched SMEM operand 0']
  %s0 = inlined_call_operand.<no memory space> [shape: s32[1], index: 0, kind: input, shape index: {}]
  %s1 = inlined_call_operand.vmem [shape: f32[16,896], index: 1, kind: input, shape index: {}]
  %s2 = inlined_call_operand.vmem [shape: f32[1,896], index: 2, kind: input, shape index: {}]
  %s3 = inlined_call_operand.vmem [shape: f32[1,896], index: 3, kind: input, shape index: {}]
  %s4 = inlined_call_operand.hbm [shape: bf16[896,1664], index: 4, kind: input, shape index: {}]
  %s5 = inlined_call_operand.hbm [shape: f32[1,1664], index: 5, kind: input, shape index: {}]
  %s6 = inlined_call_operand.vmem [shape: f32[16,1664], index: 6, kind: output, shape index: {0}]
  %s7 = inlined_call_operand.vmem [shape: f32[1,2,1664], index: 7, kind: output, shape index: {1}]
  %8 = xla_tuple %s6, %s7
  %s9 = sld [smem:[#allocation0]]
  $region46: #{_forward.4} parent=0
    _
  %s11 = ssub.s32 1, %s9
  %s12 = scalar_select 0, %s11, %s9
  %13 = sst [smem:[#allocation3]] %s0
  $region1: #{_forward.4} parent=0
    #allocation4 [shape = 'u8[2981888]{0}', space=vmem, size = 0x2d8000, scoped, tag = 'input window, operand 4, single buffered']
    #allocation5 [shape = 's32[1]{0}', space=sflag, size = 0x4, scoped, tag = 'scoped memory for _forward.4']
    #allocation6 [shape = 'u8[6656]{0}', space=vmem, size = 0x1c00, scoped, tag = 'input window, operand 5, single buffered']
    #allocation7 [shape = 's32[1]{0}', space=sflag, size = 0x4, scoped, tag = 'scoped memory for _forward.4']
    %14 = vsyncpa [#allocation5], 0
    %15 = vsyncpa [#allocation7], 0
    // Predicated region
    $region2: #{_forward.4} parent=1 // pred_check
      _
    $region3: #{_forward.4} parent=1 // pred_check_branch
      %17 = sbr.rel (0) target = $region5
    $region4: #{_forward.4} parent=1 // pred_region
      _
    $region5: #{_forward.4} parent=1 // pred_fallthru
      _
    // Predicated region
    $region6: #{_forward.4} parent=1 // pred_check
      _
    $region7: #{_forward.4} parent=1 // pred_check_branch
      %19 = sbr.rel (0) target = $region9
    $region8: #{_forward.4} parent=1 // pred_region
      _
    $region9: #{_forward.4} parent=1 // pred_fallthru
      _
    // Predicated region
    $region10: #{_forward.4} parent=1 // pred_check
      _
    $region11: #{_forward.4} parent=1 // pred_check_branch
      %21 = sbr.rel (0) target = $region13
    $region12: #{_forward.4} parent=1 // pred_region
      _
    $region13: #{_forward.4} parent=1 // pred_fallthru
      _
    // Predicated region
    $region14: #{_forward.4} parent=1 // pred_check
      _
    $region15: #{_forward.4} parent=1 // pred_check_branch
      %23 = sbr.rel (0) target = $region17
    $region16: #{_forward.4} parent=1 // pred_region
      %s25 = ssub.s32 93184, 93184
      %26 = vsyncadd [#allocation5], %s25
      %s27 = sshll.u32 [#allocation4], 4
      %s28 = int_to_ptr.vmem [resolvable:$true] %s27
      %33 = dma.hbm_to_vmem [thread:$0]  %s4, 93184, %s28, [#allocation5], 832, 832, 52
    $region17: #{_forward.4} parent=1 // pred_fallthru
      _
    // Predicated region
    $region18: #{_forward.4} parent=1 // pred_check
      _
    $region19: #{_forward.4} parent=1 // pred_check_branch
      %35 = sbr.rel (0) target = $region21
    $region20: #{_forward.4} parent=1 // pred_region
      %s37 = ssub.s32 208, 208
      %38 = vsyncadd [#allocation7], %s37
      %s40 = sshll.u32 [#allocation6], 4
      %s41 = int_to_ptr.vmem [resolvable:$true] %s40
      %43 = dma.hbm_to_vmem [thread:$0]  %s5, 208, %s41, [#allocation7]
    $region21: #{_forward.4} parent=1 // pred_fallthru
      _
    // Predicated region
    $region22: #{_forward.4} parent=1 // pred_check
      _
    $region23: #{_forward.4} parent=1 // pred_check_branch
      %45 = sbr.rel (0) target = $region25
    $region24: #{_forward.4} parent=1 // pred_region
      %46 = dma.done [#allocation5], 93184
    $region25: #{_forward.4} parent=1 // pred_fallthru
      _
    // Predicated region
    $region26: #{_forward.4} parent=1 // pred_check
      _
    $region27: #{_forward.4} parent=1 // pred_check_branch
      %48 = sbr.rel (0) target = $region29
    $region28: #{_forward.4} parent=1 // pred_region
      %49 = dma.done [#allocation7], 208
    $region29: #{_forward.4} parent=1 // pred_fallthru
      _
    %v51 = vld [vmem:[%s1] sm:$0xff]
    %v52 = vld [vmem:[%s1 + $0x8] sm:$0xff]
    %v53 = vld [vmem:[%s1 + $0x10] sm:$0xff]
    %v54 = vld [vmem:[%s1 + $0x18] sm:$0xff]
    %v55 = vld [vmem:[%s1 + $0x20] sm:$0xff]
    %v56 = vld [vmem:[%s1 + $0x28] sm:$0xff]
    %v57 = vld [vmem:[%s1 + $0x30] sm:$0xff]
    %v58 = vld [vmem:[%s1 + $0x38] sm:$0xff]
    %v59 = vld [vmem:[%s1 + $0x40] sm:$0xff]
    %v60 = vld [vmem:[%s1 + $0x48] sm:$0xff]
    %v61 = vld [vmem:[%s1 + $0x50] sm:$0xff]
    %v62 = vld [vmem:[%s1 + $0x58] sm:$0xff]
    %v63 = vld [vmem:[%s1 + $0x60] sm:$0xff]
    %v64 = vld [vmem:[%s1 + $0x68] sm:$0xff]
    %v65 = vld [vmem:[%s2] sm:$0xff]
    %v67 = vlaneseq
    %v68 = vshrl.u32 %v67, 7
    %v69 = vsub.s32 0, %v68
    %v70 = vrot.slane %v65, %v69
    %v71 = vlaneseq
    %v72 = vshrl.u32 %v71, 7
    %v73 = vsub.s32 1, %v72
    %v74 = vrot.slane %v65, %v73
    %v75 = vlaneseq
    %v76 = vshrl.u32 %v75, 7
    %v77 = vsub.s32 2, %v76
    %v78 = vrot.slane %v65, %v77
    %v79 = vlaneseq
    %v80 = vshrl.u32 %v79, 7
    %v81 = vsub.s32 3, %v80
    %v82 = vrot.slane %v65, %v81
    %v83 = vlaneseq
    %v84 = vshrl.u32 %v83, 7
    %v85 = vsub.s32 4, %v84
    %v86 = vrot.slane %v65, %v85
    %v87 = vlaneseq
    %v88 = vshrl.u32 %v87, 7
    %v89 = vsub.s32 5, %v88
    %v90 = vrot.slane %v65, %v89
    %v91 = vlaneseq
    %v92 = vshrl.u32 %v91, 7
    %v93 = vsub.s32 6, %v92
    %v94 = vrot.slane %v65, %v93
    %v102 = vmul.f32 %v51, %v70
    %v103 = vmul.f32 %v52, %v74
    %v104 = vmul.f32 %v53, %v78
    %v105 = vmul.f32 %v54, %v82
    %v106 = vmul.f32 %v55, %v86
    %v107 = vmul.f32 %v56, %v90
    %v108 = vmul.f32 %v57, %v94
    %v109 = vmul.f32 %v58, %v70
    %v110 = vmul.f32 %v59, %v74
    %v111 = vmul.f32 %v60, %v78
    %v112 = vmul.f32 %v61, %v82
    %v113 = vmul.f32 %v62, %v86
    %v114 = vmul.f32 %v63, %v90
    %v115 = vmul.f32 %v64, %v94
    %v116 = vld [vmem:[%s3] sm:$0xff]
    %v118 = vlaneseq
    %v119 = vshrl.u32 %v118, 7
    %v120 = vsub.s32 0, %v119
    %v121 = vrot.slane %v116, %v120
    %v122 = vlaneseq
    %v123 = vshrl.u32 %v122, 7
    %v124 = vsub.s32 1, %v123
    %v125 = vrot.slane %v116, %v124
    %v126 = vlaneseq
    %v127 = vshrl.u32 %v126, 7
    %v128 = vsub.s32 2, %v127
    %v129 = vrot.slane %v116, %v128
    %v130 = vlaneseq
    %v131 = vshrl.u32 %v130, 7
    %v132 = vsub.s32 3, %v131
    %v133 = vrot.slane %v116, %v132
    %v134 = vlaneseq
    %v135 = vshrl.u32 %v134, 7
    %v136 = vsub.s32 4, %v135
    %v137 = vrot.slane %v116, %v136
    %v138 = vlaneseq
    %v139 = vshrl.u32 %v138, 7
    %v140 = vsub.s32 5, %v139
    %v141 = vrot.slane %v116, %v140
    %v142 = vlaneseq
    %v143 = vshrl.u32 %v142, 7
    %v144 = vsub.s32 6, %v143
    %v145 = vrot.slane %v116, %v144
    %v153 = vadd.f32 %v102, %v121
    %v154 = vadd.f32 %v103, %v125
    %v155 = vadd.f32 %v104, %v129
    %v156 = vadd.f32 %v105, %v133
    %v157 = vadd.f32 %v106, %v137
    %v158 = vadd.f32 %v107, %v141
    %v159 = vadd.f32 %v108, %v145
    %v160 = vadd.f32 %v109, %v121
    %v161 = vadd.f32 %v110, %v125
    %v162 = vadd.f32 %v111, %v129
    %v163 = vadd.f32 %v112, %v133
    %v164 = vadd.f32 %v113, %v137
    %v165 = vadd.f32 %v114, %v141
    %v166 = vadd.f32 %v115, %v145
    %v167 = vmax.f32 %v153, 0.0
    %v168 = vmax.f32 %v154, 0.0
    %v169 = vmax.f32 %v155, 0.0
    %v170 = vmax.f32 %v156, 0.0
    %v171 = vmax.f32 %v157, 0.0
    %v172 = vmax.f32 %v158, 0.0
    %v173 = vmax.f32 %v159, 0.0
    %v174 = vmax.f32 %v160, 0.0
    %v175 = vmax.f32 %v161, 0.0
    %v176 = vmax.f32 %v162, 0.0
    %v177 = vmax.f32 %v163, 0.0
    %v178 = vmax.f32 %v164, 0.0
    %v179 = vmax.f32 %v165, 0.0
    %v180 = vmax.f32 %v166, 0.0
    %v181 = vpack.c.bf16 %v174, %v167
    %v182 = vpack.c.bf16 %v175, %v168
    %v183 = vpack.c.bf16 %v176, %v169
    %v184 = vpack.c.bf16 %v177, %v170
    %v185 = vpack.c.bf16 %v178, %v171
    %v186 = vpack.c.bf16 %v179, %v172
    %v187 = vpack.c.bf16 %v180, %v173
    %v188 = vld [vmem:[#allocation4] sm:$0xff]
    %v189 = vld [vmem:[#allocation4 + $0x8] sm:$0xff]
    %v190 = vld [vmem:[#allocation4 + $0x10] sm:$0xff]
    %v191 = vld [vmem:[#allocation4 + $0x18] sm:$0xff]
    %v192 = vld [vmem:[#allocation4 + $0x20] sm:$0xff]
    %v193 = vld [vmem:[#allocation4 + $0x28] sm:$0xff]
    %v194 = vld [vmem:[#allocation4 + $0x30] sm:$0xf]
    %v195 = vld [vmem:[#allocation4 + $0x34] sm:$0xff]
    %v196 = vld [vmem:[#allocation4 + $0x3c] sm:$0xff]
    %v197 = vld [vmem:[#allocation4 + $0x44] sm:$0xff]
    %v198 = vld [vmem:[#allocation4 + $0x4c] sm:$0xff]
    %v199 = vld [vmem:[#allocation4 + $0x54] sm:$0xff]
    %v200 = vld [vmem:[#allocation4 + $0x5c] sm:$0xff]
    %v201 = vld [vmem:[#allocation4 + $0x64] sm:$0xf]
    %v202 = vld [vmem:[#allocation4 + $0x68] sm:$0xff]
    %v203 = vld [vmem:[#allocation4 + $0x70] sm:$0xff]
    %v204 = vld [vmem:[#allocation4 + $0x78] sm:$0xff]
    %v205 = vld [vmem:[#allocation4 + $0x80] sm:$0xff]
    %v206 = vld [vmem:[#allocation4 + $0x88] sm:$0xff]
    %v207 = vld [vmem:[#allocation4 + $0x90] sm:$0xff]
    %v208 = vld [vmem:[#allocation4 + $0x98] sm:$0xf]
    %v209 = vld [vmem:[#allocation4 + $0x9c] sm:$0xff]
    %v210 = vld [vmem:[#allocation4 + $0xa4] sm:$0xff]
    %v211 = vld [vmem:[#allocation4 + $0xac] sm:$0xff]
    %v212 = vld [vmem:[#allocation4 + $0xb4] sm:$0xff]
    %v213 = vld [vmem:[#allocation4 + $0xbc] sm:$0xff]
    %v214 = vld [vmem:[#allocation4 + $0xc4] sm:$0xff]
    %v215 = vld [vmem:[#allocation4 + $0xcc] sm:$0xf]
    %v216 = vld [vmem:[#allocation4 + $0xd0] sm:$0xff]
    %v217 = vld [vmem:[#allocation4 + $0xd8] sm:$0xff]
    %v218 = vld [vmem:[#allocation4 + $0xe0] sm:$0xff]
    %v219 = vld [vmem:[#allocation4 + $0xe8] sm:$0xff]
    %v220 = vld [vmem:[#allocation4 + $0xf0] sm:$0xff]
    %v221 = vld [vmem:[#allocation4 + $0xf8] sm:$0xff]
    %v222 = vld [vmem:[#allocation4 + $0x100] sm:$0xf]
    %v223 = vld [vmem:[#allocation4 + $0x104] sm:$0xff]
    %v224 = vld [vmem:[#allocation4 + $0x10c] sm:$0xff]
    %v225 = vld [vmem:[#allocation4 + $0x114] sm:$0xff]
    %v226 = vld [vmem:[#allocation4 + $0x11c] sm:$0xff]
    %v227 = vld [vmem:[#allocation4 + $0x124] sm:$0xff]
    %v228 = vld [vmem:[#allocation4 + $0x12c] sm:$0xff]
    %v229 = vld [vmem:[#allocation4 + $0x134] sm:$0xf]
    %v230 = vld [vmem:[#allocation4 + $0x138] sm:$0xff]
    %v231 = vld [vmem:[#allocation4 + $0x140] sm:$0xff]
    %v232 = vld [vmem:[#allocation4 + $0x148] sm:$0xff]
    %v233 = vld [vmem:[#allocation4 + $0x150] sm:$0xff]
    %v234 = vld [vmem:[#allocation4 + $0x158] sm:$0xff]
    %v235 = vld [vmem:[#allocation4 + $0x160] sm:$0xff]
    %v236 = vld [vmem:[#allocation4 + $0x168] sm:$0xf]
    %v237 = vld [vmem:[#allocation4 + $0x16c] sm:$0xff]
    %v238 = vld [vmem:[#allocation4 + $0x174] sm:$0xff]
    %v239 = vld [vmem:[#allocation4 + $0x17c] sm:$0xff]
    %v240 = vld [vmem:[#allocation4 + $0x184] sm:$0xff]
    %v241 = vld [vmem:[#allocation4 + $0x18c] sm:$0xff]
    %v242 = vld [vmem:[#allocation4 + $0x194] sm:$0xff]
    %v243 = vld [vmem:[#allocation4 + $0x19c] sm:$0xf]
    %v244 = vld [vmem:[#allocation4 + $0x1a0] sm:$0xff]
    %v245 = vld [vmem:[#allocation4 + $0x1a8] sm:$0xff]
    %v246 = vld [vmem:[#allocation4 + $0x1b0] sm:$0xff]
    %v247 = vld [vmem:[#allocation4 + $0x1b8] sm:$0xff]
    %v248 = vld [vmem:[#allocation4 + $0x1c0] sm:$0xff]
    %v249 = vld [vmem:[#allocation4 + $0x1c8] sm:$0xff]
    %v250 = vld [vmem:[#allocation4 + $0x1d0] sm:$0xf]
    %v251 = vld [vmem:[#allocation4 + $0x1d4] sm:$0xff]
    %v252 = vld [vmem:[#allocation4 + $0x1dc] sm:$0xff]
    %v253 = vld [vmem:[#allocation4 + $0x1e4] sm:$0xff]
    %v254 = vld [vmem:[#allocation4 + $0x1ec] sm:$0xff]
    %v255 = vld [vmem:[#allocation4 + $0x1f4] sm:$0xff]
    %v256 = vld [vmem:[#allocation4 + $0x1fc] sm:$0xff]
    %v257 = vld [vmem:[#allocation4 + $0x204] sm:$0xf]
    %v258 = vld [vmem:[#allocation4 + $0x208] sm:$0xff]
    %v259 = vld [vmem:[#allocation4 + $0x210] sm:$0xff]
    %v260 = vld [vmem:[#allocation4 + $0x218] sm:$0xff]
    %v261 = vld [vmem:[#allocation4 + $0x220] sm:$0xff]
    %v262 = vld [vmem:[#allocation4 + $0x228] sm:$0xff]
    %v263 = vld [vmem:[#allocation4 + $0x230] sm:$0xff]
    %v264 = vld [vmem:[#allocation4 + $0x238] sm:$0xf]
    %v265 = vld [vmem:[#allocation4 + $0x23c] sm:$0xff]
    %v266 = vld [vmem:[#allocation4 + $0x244] sm:$0xff]
    %v267 = vld [vmem:[#allocation4 + $0x24c] sm:$0xff]
    %v268 = vld [vmem:[#allocation4 + $0x254] sm:$0xff]
    %v269 = vld [vmem:[#allocation4 + $0x25c] sm:$0xff]
    %v270 = vld [vmem:[#allocation4 + $0x264] sm:$0xff]
    %v271 = vld [vmem:[#allocation4 + $0x26c] sm:$0xf]
    %v272 = vld [vmem:[#allocation4 + $0x270] sm:$0xff]
    %v273 = vld [vmem:[#allocation4 + $0x278] sm:$0xff]
    %v274 = vld [vmem:[#allocation4 + $0x280] sm:$0xff]
    %v275 = vld [vmem:[#allocation4 + $0x288] sm:$0xff]
    %v276 = vld [vmem:[#allocation4 + $0x290] sm:$0xff]
    %v277 = vld [vmem:[#allocation4 + $0x298] sm:$0xff]
    %v278 = vld [vmem:[#allocation4 + $0x2a0] sm:$0xf]
    %v279 = vld [vmem:[#allocation4 + $0x2a4] sm:$0xff]
    %v280 = vld [vmem:[#allocation4 + $0x2ac] sm:$0xff]
    %v281 = vld [vmem:[#allocation4 + $0x2b4] sm:$0xff]
    %v282 = vld [vmem:[#allocation4 + $0x2bc] sm:$0xff]
    %v283 = vld [vmem:[#allocation4 + $0x2c4] sm:$0xff]
    %v284 = vld [vmem:[#allocation4 + $0x2cc] sm:$0xff]
    %v285 = vld [vmem:[#allocation4 + $0x2d4] sm:$0xf]
    %v286 = vld [vmem:[#allocation4 + $0x2d8] sm:$0xff]
    %v287 = vld [vmem:[#allocation4 + $0x2e0] sm:$0xff]
    %v288 = vld [vmem:[#allocation4 + $0x2e8] sm:$0xff]
    %v289 = vld [vmem:[#allocation4 + $0x2f0] sm:$0xff]
    %v290 = vld [vmem:[#allocation4 + $0x2f8] sm:$0xff]
    %v291 = vld [vmem:[#allocation4 + $0x300] sm:$0xff]
    %v292 = vld [vmem:[#allocation4 + $0x308] sm:$0xf]
    %v293 = vld [vmem:[#allocation4 + $0x30c] sm:$0xff]
    %v294 = vld [vmem:[#allocation4 + $0x314] sm:$0xff]
    %v295 = vld [vmem:[#allocation4 + $0x31c] sm:$0xff]
    %v296 = vld [vmem:[#allocation4 + $0x324] sm:$0xff]
    %v297 = vld [vmem:[#allocation4 + $0x32c] sm:$0xff]
    %v298 = vld [vmem:[#allocation4 + $0x334] sm:$0xff]
    %v299 = vld [vmem:[#allocation4 + $0x33c] sm:$0xf]
    %v300 = vld [vmem:[#allocation4 + $0x340] sm:$0xff]
    %v301 = vld [vmem:[#allocation4 + $0x348] sm:$0xff]
    %v302 = vld [vmem:[#allocation4 + $0x350] sm:$0xff]
    %v303 = vld [vmem:[#allocation4 + $0x358] sm:$0xff]
    %v304 = vld [vmem:[#allocation4 + $0x360] sm:$0xff]
    %v305 = vld [vmem:[#allocation4 + $0x368] sm:$0xff]
    %v306 = vld [vmem:[#allocation4 + $0x370] sm:$0xf]
    %v307 = vld [vmem:[#allocation4 + $0x374] sm:$0xff]
    %v308 = vld [vmem:[#allocation4 + $0x37c] sm:$0xff]
    %v309 = vld [vmem:[#allocation4 + $0x384] sm:$0xff]
    %v310 = vld [vmem:[#allocation4 + $0x38c] sm:$0xff]
    %v311 = vld [vmem:[#allocation4 + $0x394] sm:$0xff]
    %v312 = vld [vmem:[#allocation4 + $0x39c] sm:$0xff]
    %v313 = vld [vmem:[#allocation4 + $0x3a4] sm:$0xf]
    %v314 = vld [vmem:[#allocation4 + $0x3a8] sm:$0xff]
    %v315 = vld [vmem:[#allocation4 + $0x3b0] sm:$0xff]
    %v316 = vld [vmem:[#allocation4 + $0x3b8] sm:$0xff]
    %v317 = vld [vmem:[#allocation4 + $0x3c0] sm:$0xff]
    %v318 = vld [vmem:[#allocation4 + $0x3c8] sm:$0xff]
    %v319 = vld [vmem:[#allocation4 + $0x3d0] sm:$0xff]
    %v320 = vld [vmem:[#allocation4 + $0x3d8] sm:$0xf]
    %v321 = vld [vmem:[#allocation4 + $0x3dc] sm:$0xff]
    %v322 = vld [vmem:[#allocation4 + $0x3e4] sm:$0xff]
    %v323 = vld [vmem:[#allocation4 + $0x3ec] sm:$0xff]
    %v324 = vld [vmem:[#allocation4 + $0x3f4] sm:$0xff]
    %v325 = vld [vmem:[#allocation4 + $0x3fc] sm:$0xff]
    %v326 = vld [vmem:[#allocation4 + $0x404] sm:$0xff]
    %v327 = vld [vmem:[#allocation4 + $0x40c] sm:$0xf]
    %v328 = vld [vmem:[#allocation4 + $0x410] sm:$0xff]
    %v329 = vld [vmem:[#allocation4 + $0x418] sm:$0xff]
    %v330 = vld [vmem:[#allocation4 + $0x420] sm:$0xff]
    %v331 = vld [vmem:[#allocation4 + $0x428] sm:$0xff]
    %v332 = vld [vmem:[#allocation4 + $0x430] sm:$0xff]
    %v333 = vld [vmem:[#allocation4 + $0x438] sm:$0xff]
    %v334 = vld [vmem:[#allocation4 + $0x440] sm:$0xf]
    %v335 = vld [vmem:[#allocation4 + $0x444] sm:$0xff]
    %v336 = vld [vmem:[#allocation4 + $0x44c] sm:$0xff]
    %v337 = vld [vmem:[#allocation4 + $0x454] sm:$0xff]
    %v338 = vld [vmem:[#allocation4 + $0x45c] sm:$0xff]
    %v339 = vld [vmem:[#allocation4 + $0x464] sm:$0xff]
    %v340 = vld [vmem:[#allocation4 + $0x46c] sm:$0xff]
    %v341 = vld [vmem:[#allocation4 + $0x474] sm:$0xf]
    %v342 = vld [vmem:[#allocation4 + $0x478] sm:$0xff]
    %v343 = vld [vmem:[#allocation4 + $0x480] sm:$0xff]
    %v344 = vld [vmem:[#allocation4 + $0x488] sm:$0xff]
    %v345 = vld [vmem:[#allocation4 + $0x490] sm:$0xff]
    %v346 = vld [vmem:[#allocation4 + $0x498] sm:$0xff]
    %v347 = vld [vmem:[#allocation4 + $0x4a0] sm:$0xff]
    %v348 = vld [vmem:[#allocation4 + $0x4a8] sm:$0xf]
    %v349 = vld [vmem:[#allocation4 + $0x4ac] sm:$0xff]
    %v350 = vld [vmem:[#allocation4 + $0x4b4] sm:$0xff]
    %v351 = vld [vmem:[#allocation4 + $0x4bc] sm:$0xff]
    %v352 = vld [vmem:[#allocation4 + $0x4c4] sm:$0xff]
    %v353 = vld [vmem:[#allocation4 + $0x4cc] sm:$0xff]
    %v354 = vld [vmem:[#allocation4 + $0x4d4] sm:$0xff]
    %v355 = vld [vmem:[#allocation4 + $0x4dc] sm:$0xf]
    %v356 = vld [vmem:[#allocation4 + $0x4e0] sm:$0xff]
    %v357 = vld [vmem:[#allocation4 + $0x4e8] sm:$0xff]
    %v358 = vld [vmem:[#allocation4 + $0x4f0] sm:$0xff]
    %v359 = vld [vmem:[#allocation4 + $0x4f8] sm:$0xff]
    %v360 = vld [vmem:[#allocation4 + $0x500] sm:$0xff]
    %v361 = vld [vmem:[#allocation4 + $0x508] sm:$0xff]
    %v362 = vld [vmem:[#allocation4 + $0x510] sm:$0xf]
    %v363 = vld [vmem:[#allocation4 + $0x514] sm:$0xff]
    %v364 = vld [vmem:[#allocation4 + $0x51c] sm:$0xff]
    %v365 = vld [vmem:[#allocation4 + $0x524] sm:$0xff]
    %v366 = vld [vmem:[#allocation4 + $0x52c] sm:$0xff]
    %v367 = vld [vmem:[#allocation4 + $0x534] sm:$0xff]
    %v368 = vld [vmem:[#allocation4 + $0x53c] sm:$0xff]
    %v369 = vld [vmem:[#allocation4 + $0x544] sm:$0xf]
    %v370 = vld [vmem:[#allocation4 + $0x548] sm:$0xff]
    %v371 = vld [vmem:[#allocation4 + $0x550] sm:$0xff]
    %v372 = vld [vmem:[#allocation4 + $0x558] sm:$0xff]
    %v373 = vld [vmem:[#allocation4 + $0x560] sm:$0xff]
    %v374 = vld [vmem:[#allocation4 + $0x568] sm:$0xff]
    %v375 = vld [vmem:[#allocation4 + $0x570] sm:$0xff]
    %v376 = vld [vmem:[#allocation4 + $0x578] sm:$0xf]
    %v377 = vld [vmem:[#allocation4 + $0x57c] sm:$0xff]
    %v378 = vld [vmem:[#allocation4 + $0x584] sm:$0xff]
    %v379 = vld [vmem:[#allocation4 + $0x58c] sm:$0xff]
    %v380 = vld [vmem:[#allocation4 + $0x594] sm:$0xff]
    %v381 = vld [vmem:[#allocation4 + $0x59c] sm:$0xff]
    %v382 = vld [vmem:[#allocation4 + $0x5a4] sm:$0xff]
    %v383 = vld [vmem:[#allocation4 + $0x5ac] sm:$0xf]
    %v384 = vld [vmem:[#allocation4 + $0x5b0] sm:$0xff]
    %v385 = vld [vmem:[#allocation4 + $0x5b8] sm:$0xff]
    %v386 = vld [vmem:[#allocation4 + $0x5c0] sm:$0xff]
    %v387 = vld [vmem:[#allocation4 + $0x5c8] sm:$0xff]
    %v388 = vld [vmem:[#allocation4 + $0x5d0] sm:$0xff]
    %v389 = vld [vmem:[#allocation4 + $0x5d8] sm:$0xff]
    %v390 = vld [vmem:[#allocation4 + $0x5e0] sm:$0xf]
    %v391 = vld [vmem:[#allocation4 + $0x5e4] sm:$0xff]
    %v392 = vld [vmem:[#allocation4 + $0x5ec] sm:$0xff]
    %v393 = vld [vmem:[#allocation4 + $0x5f4] sm:$0xff]
    %v394 = vld [vmem:[#allocation4 + $0x5fc] sm:$0xff]
    %v395 = vld [vmem:[#allocation4 + $0x604] sm:$0xff]
    %v396 = vld [vmem:[#allocation4 + $0x60c] sm:$0xff]
    %v397 = vld [vmem:[#allocation4 + $0x614] sm:$0xf]
    %v398 = vld [vmem:[#allocation4 + $0x618] sm:$0xff]
    %v399 = vld [vmem:[#allocation4 + $0x620] sm:$0xff]
    %v400 = vld [vmem:[#allocation4 + $0x628] sm:$0xff]
    %v401 = vld [vmem:[#allocation4 + $0x630] sm:$0xff]
    %v402 = vld [vmem:[#allocation4 + $0x638] sm:$0xff]
    %v403 = vld [vmem:[#allocation4 + $0x640] sm:$0xff]
    %v404 = vld [vmem:[#allocation4 + $0x648] sm:$0xf]
    %v405 = vld [vmem:[#allocation4 + $0x64c] sm:$0xff]
    %v406 = vld [vmem:[#allocation4 + $0x654] sm:$0xff]
    %v407 = vld [vmem:[#allocation4 + $0x65c] sm:$0xff]
    %v408 = vld [vmem:[#allocation4 + $0x664] sm:$0xff]
    %v409 = vld [vmem:[#allocation4 + $0x66c] sm:$0xff]
    %v410 = vld [vmem:[#allocation4 + $0x674] sm:$0xff]
    %v411 = vld [vmem:[#allocation4 + $0x67c] sm:$0xf]
    %v412 = vld [vmem:[#allocation4 + $0x680] sm:$0xff]
    %v413 = vld [vmem:[#allocation4 + $0x688] sm:$0xff]
    %v414 = vld [vmem:[#allocation4 + $0x690] sm:$0xff]
    %v415 = vld [vmem:[#allocation4 + $0x698] sm:$0xff]
    %v416 = vld [vmem:[#allocation4 + $0x6a0] sm:$0xff]
    %v417 = vld [vmem:[#allocation4 + $0x6a8] sm:$0xff]
    %v418 = vld [vmem:[#allocation4 + $0x6b0] sm:$0xf]
    %v419 = vld [vmem:[#allocation4 + $0x6b4] sm:$0xff]
    %v420 = vld [vmem:[#allocation4 + $0x6bc] sm:$0xff]
    %v421 = vld [vmem:[#allocation4 + $0x6c4] sm:$0xff]
    %v422 = vld [vmem:[#allocation4 + $0x6cc] sm:$0xff]
    %v423 = vld [vmem:[#allocation4 + $0x6d4] sm:$0xff]
    %v424 = vld [vmem:[#allocation4 + $0x6dc] sm:$0xff]
    %v425 = vld [vmem:[#allocation4 + $0x6e4] sm:$0xf]
    %v426 = vld [vmem:[#allocation4 + $0x6e8] sm:$0xff]
    %v427 = vld [vmem:[#allocation4 + $0x6f0] sm:$0xff]
    %v428 = vld [vmem:[#allocation4 + $0x6f8] sm:$0xff]
    %v429 = vld [vmem:[#allocation4 + $0x700] sm:$0xff]
    %v430 = vld [vmem:[#allocation4 + $0x708] sm:$0xff]
    %v431 = vld [vmem:[#allocation4 + $0x710] sm:$0xff]
    %v432 = vld [vmem:[#allocation4 + $0x718] sm:$0xf]
    %v433 = vld [vmem:[#allocation4 + $0x71c] sm:$0xff]
    %v434 = vld [vmem:[#allocation4 + $0x724] sm:$0xff]
    %v435 = vld [vmem:[#allocation4 + $0x72c] sm:$0xff]
    %v436 = vld [vmem:[#allocation4 + $0x734] sm:$0xff]
    %v437 = vld [vmem:[#allocation4 + $0x73c] sm:$0xff]
    %v438 = vld [vmem:[#allocation4 + $0x744] sm:$0xff]
    %v439 = vld [vmem:[#allocation4 + $0x74c] sm:$0xf]
    %v440 = vld [vmem:[#allocation4 + $0x750] sm:$0xff]
    %v441 = vld [vmem:[#allocation4 + $0x758] sm:$0xff]
    %v442 = vld [vmem:[#allocation4 + $0x760] sm:$0xff]
    %v443 = vld [vmem:[#allocation4 + $0x768] sm:$0xff]
    %v444 = vld [vmem:[#allocation4 + $0x770] sm:$0xff]
    %v445 = vld [vmem:[#allocation4 + $0x778] sm:$0xff]
    %v446 = vld [vmem:[#allocation4 + $0x780] sm:$0xf]
    %v447 = vld [vmem:[#allocation4 + $0x784] sm:$0xff]
    %v448 = vld [vmem:[#allocation4 + $0x78c] sm:$0xff]
    %v449 = vld [vmem:[#allocation4 + $0x794] sm:$0xff]
    %v450 = vld [vmem:[#allocation4 + $0x79c] sm:$0xff]
    %v451 = vld [vmem:[#allocation4 + $0x7a4] sm:$0xff]
    %v452 = vld [vmem:[#allocation4 + $0x7ac] sm:$0xff]
    %v453 = vld [vmem:[#allocation4 + $0x7b4] sm:$0xf]
    %v454 = vld [vmem:[#allocation4 + $0x7b8] sm:$0xff]
    %v455 = vld [vmem:[#allocation4 + $0x7c0] sm:$0xff]
    %v456 = vld [vmem:[#allocation4 + $0x7c8] sm:$0xff]
    %v457 = vld [vmem:[#allocation4 + $0x7d0] sm:$0xff]
    %v458 = vld [vmem:[#allocation4 + $0x7d8] sm:$0xff]
    %v459 = vld [vmem:[#allocation4 + $0x7e0] sm:$0xff]
    %v460 = vld [vmem:[#allocation4 + $0x7e8] sm:$0xf]
    %v461 = vld [vmem:[#allocation4 + $0x7ec] sm:$0xff]
    %v462 = vld [vmem:[#allocation4 + $0x7f4] sm:$0xff]
    %v463 = vld [vmem:[#allocation4 + $0x7fc] sm:$0xff]
    %v464 = vld [vmem:[#allocation4 + $0x804] sm:$0xff]
    %v465 = vld [vmem:[#allocation4 + $0x80c] sm:$0xff]
    %v466 = vld [vmem:[#allocation4 + $0x814] sm:$0xff]
    %v467 = vld [vmem:[#allocation4 + $0x81c] sm:$0xf]
    %v468 = vld [vmem:[#allocation4 + $0x820] sm:$0xff]
    %v469 = vld [vmem:[#allocation4 + $0x828] sm:$0xff]
    %v470 = vld [vmem:[#allocation4 + $0x830] sm:$0xff]
    %v471 = vld [vmem:[#allocation4 + $0x838] sm:$0xff]
    %v472 = vld [vmem:[#allocation4 + $0x840] sm:$0xff]
    %v473 = vld [vmem:[#allocation4 + $0x848] sm:$0xff]
    %v474 = vld [vmem:[#allocation4 + $0x850] sm:$0xf]
    %v475 = vld [vmem:[#allocation4 + $0x854] sm:$0xff]
    %v476 = vld [vmem:[#allocation4 + $0x85c] sm:$0xff]
    %v477 = vld [vmem:[#allocation4 + $0x864] sm:$0xff]
    %v478 = vld [vmem:[#allocation4 + $0x86c] sm:$0xff]
    %v479 = vld [vmem:[#allocation4 + $0x874] sm:$0xff]
    %v480 = vld [vmem:[#allocation4 + $0x87c] sm:$0xff]
    %v481 = vld [vmem:[#allocation4 + $0x884] sm:$0xf]
    %v482 = vld [vmem:[#allocation4 + $0x888] sm:$0xff]
    %v483 = vld [vmem:[#allocation4 + $0x890] sm:$0xff]
    %v484 = vld [vmem:[#allocation4 + $0x898] sm:$0xff]
    %v485 = vld [vmem:[#allocation4 + $0x8a0] sm:$0xff]
    %v486 = vld [vmem:[#allocation4 + $0x8a8] sm:$0xff]
    %v487 = vld [vmem:[#allocation4 + $0x8b0] sm:$0xff]
    %v488 = vld [vmem:[#allocation4 + $0x8b8] sm:$0xf]
    %v489 = vld [vmem:[#allocation4 + $0x8bc] sm:$0xff]
    %v490 = vld [vmem:[#allocation4 + $0x8c4] sm:$0xff]
    %v491 = vld [vmem:[#allocation4 + $0x8cc] sm:$0xff]
    %v492 = vld [vmem:[#allocation4 + $0x8d4] sm:$0xff]
    %v493 = vld [vmem:[#allocation4 + $0x8dc] sm:$0xff]
    %v494 = vld [vmem:[#allocation4 + $0x8e4] sm:$0xff]
    %v495 = vld [vmem:[#allocation4 + $0x8ec] sm:$0xf]
    %v496 = vld [vmem:[#allocation4 + $0x8f0] sm:$0xff]
    %v497 = vld [vmem:[#allocation4 + $0x8f8] sm:$0xff]
    %v498 = vld [vmem:[#allocation4 + $0x900] sm:$0xff]
    %v499 = vld [vmem:[#allocation4 + $0x908] sm:$0xff]
    %v500 = vld [vmem:[#allocation4 + $0x910] sm:$0xff]
    %v501 = vld [vmem:[#allocation4 + $0x918] sm:$0xff]
    %v502 = vld [vmem:[#allocation4 + $0x920] sm:$0xf]
    %v503 = vld [vmem:[#allocation4 + $0x924] sm:$0xff]
    %v504 = vld [vmem:[#allocation4 + $0x92c] sm:$0xff]
    %v505 = vld [vmem:[#allocation4 + $0x934] sm:$0xff]
    %v506 = vld [vmem:[#allocation4 + $0x93c] sm:$0xff]
    %v507 = vld [vmem:[#allocation4 + $0x944] sm:$0xff]
    %v508 = vld [vmem:[#allocation4 + $0x94c] sm:$0xff]
    %v509 = vld [vmem:[#allocation4 + $0x954] sm:$0xf]
    %v510 = vld [vmem:[#allocation4 + $0x958] sm:$0xff]
    %v511 = vld [vmem:[#allocation4 + $0x960] sm:$0xff]
    %v512 = vld [vmem:[#allocation4 + $0x968] sm:$0xff]
    %v513 = vld [vmem:[#allocation4 + $0x970] sm:$0xff]
    %v514 = vld [vmem:[#allocation4 + $0x978] sm:$0xff]
    %v515 = vld [vmem:[#allocation4 + $0x980] sm:$0xff]
    %v516 = vld [vmem:[#allocation4 + $0x988] sm:$0xf]
    %v517 = vld [vmem:[#allocation4 + $0x98c] sm:$0xff]
    %v518 = vld [vmem:[#allocation4 + $0x994] sm:$0xff]
    %v519 = vld [vmem:[#allocation4 + $0x99c] sm:$0xff]
    %v520 = vld [vmem:[#allocation4 + $0x9a4] sm:$0xff]
    %v521 = vld [vmem:[#allocation4 + $0x9ac] sm:$0xff]
    %v522 = vld [vmem:[#allocation4 + $0x9b4] sm:$0xff]
    %v523 = vld [vmem:[#allocation4 + $0x9bc] sm:$0xf]
    %v524 = vld [vmem:[#allocation4 + $0x9c0] sm:$0xff]
    %v525 = vld [vmem:[#allocation4 + $0x9c8] sm:$0xff]
    %v526 = vld [vmem:[#allocation4 + $0x9d0] sm:$0xff]
    %v527 = vld [vmem:[#allocation4 + $0x9d8] sm:$0xff]
    %v528 = vld [vmem:[#allocation4 + $0x9e0] sm:$0xff]
    %v529 = vld [vmem:[#allocation4 + $0x9e8] sm:$0xff]
    %v530 = vld [vmem:[#allocation4 + $0x9f0] sm:$0xf]
    %v531 = vld [vmem:[#allocation4 + $0x9f4] sm:$0xff]
    %v532 = vld [vmem:[#allocation4 + $0x9fc] sm:$0xff]
    %v533 = vld [vmem:[#allocation4 + $0xa04] sm:$0xff]
    %v534 = vld [vmem:[#allocation4 + $0xa0c] sm:$0xff]
    %v535 = vld [vmem:[#allocation4 + $0xa14] sm:$0xff]
    %v536 = vld [vmem:[#allocation4 + $0xa1c] sm:$0xff]
    %v537 = vld [vmem:[#allocation4 + $0xa24] sm:$0xf]
    %v538 = vld [vmem:[#allocation4 + $0xa28] sm:$0xff]
    %v539 = vld [vmem:[#allocation4 + $0xa30] sm:$0xff]
    %v540 = vld [vmem:[#allocation4 + $0xa38] sm:$0xff]
    %v541 = vld [vmem:[#allocation4 + $0xa40] sm:$0xff]
    %v542 = vld [vmem:[#allocation4 + $0xa48] sm:$0xff]
    %v543 = vld [vmem:[#allocation4 + $0xa50] sm:$0xff]
    %v544 = vld [vmem:[#allocation4 + $0xa58] sm:$0xf]
    %v545 = vld [vmem:[#allocation4 + $0xa5c] sm:$0xff]
    %v546 = vld [vmem:[#allocation4 + $0xa64] sm:$0xff]
    %v547 = vld [vmem:[#allocation4 + $0xa6c] sm:$0xff]
    %v548 = vld [vmem:[#allocation4 + $0xa74] sm:$0xff]
    %v549 = vld [vmem:[#allocation4 + $0xa7c] sm:$0xff]
    %v550 = vld [vmem:[#allocation4 + $0xa84] sm:$0xff]
    %v551 = vld [vmem:[#allocation4 + $0xa8c] sm:$0xf]
    %v552 = vld [vmem:[#allocation4 + $0xa90] sm:$0xff]
    %v553 = vld [vmem:[#allocation4 + $0xa98] sm:$0xff]
    %v554 = vld [vmem:[#allocation4 + $0xaa0] sm:$0xff]
    %v555 = vld [vmem:[#allocation4 + $0xaa8] sm:$0xff]
    %v556 = vld [vmem:[#allocation4 + $0xab0] sm:$0xff]
    %v557 = vld [vmem:[#allocation4 + $0xab8] sm:$0xff]
    %v558 = vld [vmem:[#allocation4 + $0xac0] sm:$0xf]
    %v559 = vld [vmem:[#allocation4 + $0xac4] sm:$0xff]
    %v560 = vld [vmem:[#allocation4 + $0xacc] sm:$0xff]
    %v561 = vld [vmem:[#allocation4 + $0xad4] sm:$0xff]
    %v562 = vld [vmem:[#allocation4 + $0xadc] sm:$0xff]
    %v563 = vld [vmem:[#allocation4 + $0xae4] sm:$0xff]
    %v564 = vld [vmem:[#allocation4 + $0xaec] sm:$0xff]
    %v565 = vld [vmem:[#allocation4 + $0xaf4] sm:$0xf]
    %v566 = vld [vmem:[#allocation4 + $0xaf8] sm:$0xff]
    %v567 = vld [vmem:[#allocation4 + $0xb00] sm:$0xff]
    %v568 = vld [vmem:[#allocation4 + $0xb08] sm:$0xff]
    %v569 = vld [vmem:[#allocation4 + $0xb10] sm:$0xff]
    %v570 = vld [vmem:[#allocation4 + $0xb18] sm:$0xff]
    %v571 = vld [vmem:[#allocation4 + $0xb20] sm:$0xff]
    %v572 = vld [vmem:[#allocation4 + $0xb28] sm:$0xf]
    %v573 = vld [vmem:[#allocation4 + $0xb2c] sm:$0xff]
    %v574 = vld [vmem:[#allocation4 + $0xb34] sm:$0xff]
    %v575 = vld [vmem:[#allocation4 + $0xb3c] sm:$0xff]
    %v576 = vld [vmem:[#allocation4 + $0xb44] sm:$0xff]
    %v577 = vld [vmem:[#allocation4 + $0xb4c] sm:$0xff]
    %v578 = vld [vmem:[#allocation4 + $0xb54] sm:$0xff]
    %v579 = vld [vmem:[#allocation4 + $0xb5c] sm:$0xf]
    %v580 = vld [vmem:[#allocation4 + $0xb60] sm:$0xff]
    %v581 = vld [vmem:[#allocation4 + $0xb68] sm:$0xff]
    %v582 = vld [vmem:[#allocation4 + $0xb70] sm:$0xff]
    %v583 = vld [vmem:[#allocation4 + $0xb78] sm:$0xff]
    %v584 = vld [vmem:[#allocation4 + $0xb80] sm:$0xff]
    %v585 = vld [vmem:[#allocation4 + $0xb88] sm:$0xff]
    %v586 = vld [vmem:[#allocation4 + $0xb90] sm:$0xf]
    %v587 = vld [vmem:[#allocation4 + $0xb94] sm:$0xff]
    %v588 = vld [vmem:[#allocation4 + $0xb9c] sm:$0xff]
    %v589 = vld [vmem:[#allocation4 + $0xba4] sm:$0xff]
    %v590 = vld [vmem:[#allocation4 + $0xbac] sm:$0xff]
    %v591 = vld [vmem:[#allocation4 + $0xbb4] sm:$0xff]
    %v592 = vld [vmem:[#allocation4 + $0xbbc] sm:$0xff]
    %v593 = vld [vmem:[#allocation4 + $0xbc4] sm:$0xf]
    %v594 = vld [vmem:[#allocation4 + $0xbc8] sm:$0xff]
    %v595 = vld [vmem:[#allocation4 + $0xbd0] sm:$0xff]
    %v596 = vld [vmem:[#allocation4 + $0xbd8] sm:$0xff]
    %v597 = vld [vmem:[#allocation4 + $0xbe0] sm:$0xff]
    %v598 = vld [vmem:[#allocation4 + $0xbe8] sm:$0xff]
    %v599 = vld [vmem:[#allocation4 + $0xbf0] sm:$0xff]
    %v600 = vld [vmem:[#allocation4 + $0xbf8] sm:$0xf]
    %v601 = vld [vmem:[#allocation4 + $0xbfc] sm:$0xff]
    %v602 = vld [vmem:[#allocation4 + $0xc04] sm:$0xff]
    %v603 = vld [vmem:[#allocation4 + $0xc0c] sm:$0xff]
    %v604 = vld [vmem:[#allocation4 + $0xc14] sm:$0xff]
    %v605 = vld [vmem:[#allocation4 + $0xc1c] sm:$0xff]
    %v606 = vld [vmem:[#allocation4 + $0xc24] sm:$0xff]
    %v607 = vld [vmem:[#allocation4 + $0xc2c] sm:$0xf]
    %v608 = vld [vmem:[#allocation4 + $0xc30] sm:$0xff]
    %v609 = vld [vmem:[#allocation4 + $0xc38] sm:$0xff]
    %v610 = vld [vmem:[#allocation4 + $0xc40] sm:$0xff]
    %v611 = vld [vmem:[#allocation4 + $0xc48] sm:$0xff]
    %v612 = vld [vmem:[#allocation4 + $0xc50] sm:$0xff]
    %v613 = vld [vmem:[#allocation4 + $0xc58] sm:$0xff]
    %v614 = vld [vmem:[#allocation4 + $0xc60] sm:$0xf]
    %v615 = vld [vmem:[#allocation4 + $0xc64] sm:$0xff]
    %v616 = vld [vmem:[#allocation4 + $0xc6c] sm:$0xff]
    %v617 = vld [vmem:[#allocation4 + $0xc74] sm:$0xff]
    %v618 = vld [vmem:[#allocation4 + $0xc7c] sm:$0xff]
    %v619 = vld [vmem:[#allocation4 + $0xc84] sm:$0xff]
    %v620 = vld [vmem:[#allocation4 + $0xc8c] sm:$0xff]
    %v621 = vld [vmem:[#allocation4 + $0xc94] sm:$0xf]
    %v622 = vld [vmem:[#allocation4 + $0xc98] sm:$0xff]
    %v623 = vld [vmem:[#allocation4 + $0xca0] sm:$0xff]
    %v624 = vld [vmem:[#allocation4 + $0xca8] sm:$0xff]
    %v625 = vld [vmem:[#allocation4 + $0xcb0] sm:$0xff]
    %v626 = vld [vmem:[#allocation4 + $0xcb8] sm:$0xff]
    %v627 = vld [vmem:[#allocation4 + $0xcc0] sm:$0xff]
    %v628 = vld [vmem:[#allocation4 + $0xcc8] sm:$0xf]
    %v629 = vld [vmem:[#allocation4 + $0xccc] sm:$0xff]
    %v630 = vld [vmem:[#allocation4 + $0xcd4] sm:$0xff]
    %v631 = vld [vmem:[#allocation4 + $0xcdc] sm:$0xff]
    %v632 = vld [vmem:[#allocation4 + $0xce4] sm:$0xff]
    %v633 = vld [vmem:[#allocation4 + $0xcec] sm:$0xff]
    %v634 = vld [vmem:[#allocation4 + $0xcf4] sm:$0xff]
    %v635 = vld [vmem:[#allocation4 + $0xcfc] sm:$0xf]
    %v636 = vld [vmem:[#allocation4 + $0xd00] sm:$0xff]
    %v637 = vld [vmem:[#allocation4 + $0xd08] sm:$0xff]
    %v638 = vld [vmem:[#allocation4 + $0xd10] sm:$0xff]
    %v639 = vld [vmem:[#allocation4 + $0xd18] sm:$0xff]
    %v640 = vld [vmem:[#allocation4 + $0xd20] sm:$0xff]
    %v641 = vld [vmem:[#allocation4 + $0xd28] sm:$0xff]
    %v642 = vld [vmem:[#allocation4 + $0xd30] sm:$0xf]
    %v643 = vld [vmem:[#allocation4 + $0xd34] sm:$0xff]
    %v644 = vld [vmem:[#allocation4 + $0xd3c] sm:$0xff]
    %v645 = vld [vmem:[#allocation4 + $0xd44] sm:$0xff]
    %v646 = vld [vmem:[#allocation4 + $0xd4c] sm:$0xff]
    %v647 = vld [vmem:[#allocation4 + $0xd54] sm:$0xff]
    %v648 = vld [vmem:[#allocation4 + $0xd5c] sm:$0xff]
    %v649 = vld [vmem:[#allocation4 + $0xd64] sm:$0xf]
    %v650 = vld [vmem:[#allocation4 + $0xd68] sm:$0xff]
    %v651 = vld [vmem:[#allocation4 + $0xd70] sm:$0xff]
    %v652 = vld [vmem:[#allocation4 + $0xd78] sm:$0xff]
    %v653 = vld [vmem:[#allocation4 + $0xd80] sm:$0xff]
    %v654 = vld [vmem:[#allocation4 + $0xd88] sm:$0xff]
    %v655 = vld [vmem:[#allocation4 + $0xd90] sm:$0xff]
    %v656 = vld [vmem:[#allocation4 + $0xd98] sm:$0xf]
    %v657 = vld [vmem:[#allocation4 + $0xd9c] sm:$0xff]
    %v658 = vld [vmem:[#allocation4 + $0xda4] sm:$0xff]
    %v659 = vld [vmem:[#allocation4 + $0xdac] sm:$0xff]
    %v660 = vld [vmem:[#allocation4 + $0xdb4] sm:$0xff]
    %v661 = vld [vmem:[#allocation4 + $0xdbc] sm:$0xff]
    %v662 = vld [vmem:[#allocation4 + $0xdc4] sm:$0xff]
    %v663 = vld [vmem:[#allocation4 + $0xdcc] sm:$0xf]
    %v664 = vld [vmem:[#allocation4 + $0xdd0] sm:$0xff]
    %v665 = vld [vmem:[#allocation4 + $0xdd8] sm:$0xff]
    %v666 = vld [vmem:[#allocation4 + $0xde0] sm:$0xff]
    %v667 = vld [vmem:[#allocation4 + $0xde8] sm:$0xff]
    %v668 = vld [vmem:[#allocation4 + $0xdf0] sm:$0xff]
    %v669 = vld [vmem:[#allocation4 + $0xdf8] sm:$0xff]
    %v670 = vld [vmem:[#allocation4 + $0xe00] sm:$0xf]
    %v671 = vld [vmem:[#allocation4 + $0xe04] sm:$0xff]
    %v672 = vld [vmem:[#allocation4 + $0xe0c] sm:$0xff]
    %v673 = vld [vmem:[#allocation4 + $0xe14] sm:$0xff]
    %v674 = vld [vmem:[#allocation4 + $0xe1c] sm:$0xff]
    %v675 = vld [vmem:[#allocation4 + $0xe24] sm:$0xff]
    %v676 = vld [vmem:[#allocation4 + $0xe2c] sm:$0xff]
    %v677 = vld [vmem:[#allocation4 + $0xe34] sm:$0xf]
    %v678 = vld [vmem:[#allocation4 + $0xe38] sm:$0xff]
    %v679 = vld [vmem:[#allocation4 + $0xe40] sm:$0xff]
    %v680 = vld [vmem:[#allocation4 + $0xe48] sm:$0xff]
    %v681 = vld [vmem:[#allocation4 + $0xe50] sm:$0xff]
    %v682 = vld [vmem:[#allocation4 + $0xe58] sm:$0xff]
    %v683 = vld [vmem:[#allocation4 + $0xe60] sm:$0xff]
    %v684 = vld [vmem:[#allocation4 + $0xe68] sm:$0xf]
    %v685 = vld [vmem:[#allocation4 + $0xe6c] sm:$0xff]
    %v686 = vld [vmem:[#allocation4 + $0xe74] sm:$0xff]
    %v687 = vld [vmem:[#allocation4 + $0xe7c] sm:$0xff]
    %v688 = vld [vmem:[#allocation4 + $0xe84] sm:$0xff]
    %v689 = vld [vmem:[#allocation4 + $0xe8c] sm:$0xff]
    %v690 = vld [vmem:[#allocation4 + $0xe94] sm:$0xff]
    %v691 = vld [vmem:[#allocation4 + $0xe9c] sm:$0xf]
    %v692 = vld [vmem:[#allocation4 + $0xea0] sm:$0xff]
    %v693 = vld [vmem:[#allocation4 + $0xea8] sm:$0xff]
    %v694 = vld [vmem:[#allocation4 + $0xeb0] sm:$0xff]
    %v695 = vld [vmem:[#allocation4 + $0xeb8] sm:$0xff]
    %v696 = vld [vmem:[#allocation4 + $0xec0] sm:$0xff]
    %v697 = vld [vmem:[#allocation4 + $0xec8] sm:$0xff]
    %v698 = vld [vmem:[#allocation4 + $0xed0] sm:$0xf]
    %v699 = vld [vmem:[#allocation4 + $0xed4] sm:$0xff]
    %v700 = vld [vmem:[#allocation4 + $0xedc] sm:$0xff]
    %v701 = vld [vmem:[#allocation4 + $0xee4] sm:$0xff]
    %v702 = vld [vmem:[#allocation4 + $0xeec] sm:$0xff]
    %v703 = vld [vmem:[#allocation4 + $0xef4] sm:$0xff]
    %v704 = vld [vmem:[#allocation4 + $0xefc] sm:$0xff]
    %v705 = vld [vmem:[#allocation4 + $0xf04] sm:$0xf]
    %v706 = vld [vmem:[#allocation4 + $0xf08] sm:$0xff]
    %v707 = vld [vmem:[#allocation4 + $0xf10] sm:$0xff]
    %v708 = vld [vmem:[#allocation4 + $0xf18] sm:$0xff]
    %v709 = vld [vmem:[#allocation4 + $0xf20] sm:$0xff]
    %v710 = vld [vmem:[#allocation4 + $0xf28] sm:$0xff]
    %v711 = vld [vmem:[#allocation4 + $0xf30] sm:$0xff]
    %v712 = vld [vmem:[#allocation4 + $0xf38] sm:$0xf]
    %v713 = vld [vmem:[#allocation4 + $0xf3c] sm:$0xff]
    %v714 = vld [vmem:[#allocation4 + $0xf44] sm:$0xff]
    %v715 = vld [vmem:[#allocation4 + $0xf4c] sm:$0xff]
    %v716 = vld [vmem:[#allocation4 + $0xf54] sm:$0xff]
    %v717 = vld [vmem:[#allocation4 + $0xf5c] sm:$0xff]
    %v718 = vld [vmem:[#allocation4 + $0xf64] sm:$0xff]
    %v719 = vld [vmem:[#allocation4 + $0xf6c] sm:$0xf]
    %v720 = vld [vmem:[#allocation4 + $0xf70] sm:$0xff]
    %v721 = vld [vmem:[#allocation4 + $0xf78] sm:$0xff]
    %v722 = vld [vmem:[#allocation4 + $0xf80] sm:$0xff]
    %v723 = vld [vmem:[#allocation4 + $0xf88] sm:$0xff]
    %v724 = vld [vmem:[#allocation4 + $0xf90] sm:$0xff]
    %v725 = vld [vmem:[#allocation4 + $0xf98] sm:$0xff]
    %v726 = vld [vmem:[#allocation4 + $0xfa0] sm:$0xf]
    %v727 = vld [vmem:[#allocation4 + $0xfa4] sm:$0xff]
    %v728 = vld [vmem:[#allocation4 + $0xfac] sm:$0xff]
    %v729 = vld [vmem:[#allocation4 + $0xfb4] sm:$0xff]
    %v730 = vld [vmem:[#allocation4 + $0xfbc] sm:$0xff]
    %v731 = vld [vmem:[#allocation4 + $0xfc4] sm:$0xff]
    %v732 = vld [vmem:[#allocation4 + $0xfcc] sm:$0xff]
    %v733 = vld [vmem:[#allocation4 + $0xfd4] sm:$0xf]
    %v734 = vld [vmem:[#allocation4 + $0xfd8] sm:$0xff]
    %v735 = vld [vmem:[#allocation4 + $0xfe0] sm:$0xff]
    %v736 = vld [vmem:[#allocation4 + $0xfe8] sm:$0xff]
    %v737 = vld [vmem:[#allocation4 + $0xff0] sm:$0xff]
    %v738 = vld [vmem:[#allocation4 + $0xff8] sm:$0xff]
    %v739 = vld [vmem:[#allocation4 + $0x1000] sm:$0xff]
    %v740 = vld [vmem:[#allocation4 + $0x1008] sm:$0xf]
    %v741 = vld [vmem:[#allocation4 + $0x100c] sm:$0xff]
    %v742 = vld [vmem:[#allocation4 + $0x1014] sm:$0xff]
    %v743 = vld [vmem:[#allocation4 + $0x101c] sm:$0xff]
    %v744 = vld [vmem:[#allocation4 + $0x1024] sm:$0xff]
    %v745 = vld [vmem:[#allocation4 + $0x102c] sm:$0xff]
    %v746 = vld [vmem:[#allocation4 + $0x1034] sm:$0xff]
    %v747 = vld [vmem:[#allocation4 + $0x103c] sm:$0xf]
    %v748 = vld [vmem:[#allocation4 + $0x1040] sm:$0xff]
    %v749 = vld [vmem:[#allocation4 + $0x1048] sm:$0xff]
    %v750 = vld [vmem:[#allocation4 + $0x1050] sm:$0xff]
    %v751 = vld [vmem:[#allocation4 + $0x1058] sm:$0xff]
    %v752 = vld [vmem:[#allocation4 + $0x1060] sm:$0xff]
    %v753 = vld [vmem:[#allocation4 + $0x1068] sm:$0xff]
    %v754 = vld [vmem:[#allocation4 + $0x1070] sm:$0xf]
    %v755 = vld [vmem:[#allocation4 + $0x1074] sm:$0xff]
    %v756 = vld [vmem:[#allocation4 + $0x107c] sm:$0xff]
    %v757 = vld [vmem:[#allocation4 + $0x1084] sm:$0xff]
    %v758 = vld [vmem:[#allocation4 + $0x108c] sm:$0xff]
    %v759 = vld [vmem:[#allocation4 + $0x1094] sm:$0xff]
    %v760 = vld [vmem:[#allocation4 + $0x109c] sm:$0xff]
    %v761 = vld [vmem:[#allocation4 + $0x10a4] sm:$0xf]
    %v762 = vld [vmem:[#allocation4 + $0x10a8] sm:$0xff]
    %v763 = vld [vmem:[#allocation4 + $0x10b0] sm:$0xff]
    %v764 = vld [vmem:[#allocation4 + $0x10b8] sm:$0xff]
    %v765 = vld [vmem:[#allocation4 + $0x10c0] sm:$0xff]
    %v766 = vld [vmem:[#allocation4 + $0x10c8] sm:$0xff]
    %v767 = vld [vmem:[#allocation4 + $0x10d0] sm:$0xff]
    %v768 = vld [vmem:[#allocation4 + $0x10d8] sm:$0xf]
    %v769 = vld [vmem:[#allocation4 + $0x10dc] sm:$0xff]
    %v770 = vld [vmem:[#allocation4 + $0x10e4] sm:$0xff]
    %v771 = vld [vmem:[#allocation4 + $0x10ec] sm:$0xff]
    %v772 = vld [vmem:[#allocation4 + $0x10f4] sm:$0xff]
    %v773 = vld [vmem:[#allocation4 + $0x10fc] sm:$0xff]
    %v774 = vld [vmem:[#allocation4 + $0x1104] sm:$0xff]
    %v775 = vld [vmem:[#allocation4 + $0x110c] sm:$0xf]
    %v776 = vld [vmem:[#allocation4 + $0x1110] sm:$0xff]
    %v777 = vld [vmem:[#allocation4 + $0x1118] sm:$0xff]
    %v778 = vld [vmem:[#allocation4 + $0x1120] sm:$0xff]
    %v779 = vld [vmem:[#allocation4 + $0x1128] sm:$0xff]
    %v780 = vld [vmem:[#allocation4 + $0x1130] sm:$0xff]
    %v781 = vld [vmem:[#allocation4 + $0x1138] sm:$0xff]
    %v782 = vld [vmem:[#allocation4 + $0x1140] sm:$0xf]
    %v783 = vld [vmem:[#allocation4 + $0x1144] sm:$0xff]
    %v784 = vld [vmem:[#allocation4 + $0x114c] sm:$0xff]
    %v785 = vld [vmem:[#allocation4 + $0x1154] sm:$0xff]
    %v786 = vld [vmem:[#allocation4 + $0x115c] sm:$0xff]
    %v787 = vld [vmem:[#allocation4 + $0x1164] sm:$0xff]
    %v788 = vld [vmem:[#allocation4 + $0x116c] sm:$0xff]
    %v789 = vld [vmem:[#allocation4 + $0x1174] sm:$0xf]
    %v790 = vld [vmem:[#allocation4 + $0x1178] sm:$0xff]
    %v791 = vld [vmem:[#allocation4 + $0x1180] sm:$0xff]
    %v792 = vld [vmem:[#allocation4 + $0x1188] sm:$0xff]
    %v793 = vld [vmem:[#allocation4 + $0x1190] sm:$0xff]
    %v794 = vld [vmem:[#allocation4 + $0x1198] sm:$0xff]
    %v795 = vld [vmem:[#allocation4 + $0x11a0] sm:$0xff]
    %v796 = vld [vmem:[#allocation4 + $0x11a8] sm:$0xf]
    %v797 = vld [vmem:[#allocation4 + $0x11ac] sm:$0xff]
    %v798 = vld [vmem:[#allocation4 + $0x11b4] sm:$0xff]
    %v799 = vld [vmem:[#allocation4 + $0x11bc] sm:$0xff]
    %v800 = vld [vmem:[#allocation4 + $0x11c4] sm:$0xff]
    %v801 = vld [vmem:[#allocation4 + $0x11cc] sm:$0xff]
    %v802 = vld [vmem:[#allocation4 + $0x11d4] sm:$0xff]
    %v803 = vld [vmem:[#allocation4 + $0x11dc] sm:$0xf]
    %v804 = vld [vmem:[#allocation4 + $0x11e0] sm:$0xff]
    %v805 = vld [vmem:[#allocation4 + $0x11e8] sm:$0xff]
    %v806 = vld [vmem:[#allocation4 + $0x11f0] sm:$0xff]
    %v807 = vld [vmem:[#allocation4 + $0x11f8] sm:$0xff]
    %v808 = vld [vmem:[#allocation4 + $0x1200] sm:$0xff]
    %v809 = vld [vmem:[#allocation4 + $0x1208] sm:$0xff]
    %v810 = vld [vmem:[#allocation4 + $0x1210] sm:$0xf]
    %v811 = vld [vmem:[#allocation4 + $0x1214] sm:$0xff]
    %v812 = vld [vmem:[#allocation4 + $0x121c] sm:$0xff]
    %v813 = vld [vmem:[#allocation4 + $0x1224] sm:$0xff]
    %v814 = vld [vmem:[#allocation4 + $0x122c] sm:$0xff]
    %v815 = vld [vmem:[#allocation4 + $0x1234] sm:$0xff]
    %v816 = vld [vmem:[#allocation4 + $0x123c] sm:$0xff]
    %v817 = vld [vmem:[#allocation4 + $0x1244] sm:$0xf]
    %v818 = vld [vmem:[#allocation4 + $0x1248] sm:$0xff]
    %v819 = vld [vmem:[#allocation4 + $0x1250] sm:$0xff]
    %v820 = vld [vmem:[#allocation4 + $0x1258] sm:$0xff]
    %v821 = vld [vmem:[#allocation4 + $0x1260] sm:$0xff]
    %v822 = vld [vmem:[#allocation4 + $0x1268] sm:$0xff]
    %v823 = vld [vmem:[#allocation4 + $0x1270] sm:$0xff]
    %v824 = vld [vmem:[#allocation4 + $0x1278] sm:$0xf]
    %v825 = vld [vmem:[#allocation4 + $0x127c] sm:$0xff]
    %v826 = vld [vmem:[#allocation4 + $0x1284] sm:$0xff]
    %v827 = vld [vmem:[#allocation4 + $0x128c] sm:$0xff]
    %v828 = vld [vmem:[#allocation4 + $0x1294] sm:$0xff]
    %v829 = vld [vmem:[#allocation4 + $0x129c] sm:$0xff]
    %v830 = vld [vmem:[#allocation4 + $0x12a4] sm:$0xff]
    %v831 = vld [vmem:[#allocation4 + $0x12ac] sm:$0xf]
    %v832 = vld [vmem:[#allocation4 + $0x12b0] sm:$0xff]
    %v833 = vld [vmem:[#allocation4 + $0x12b8] sm:$0xff]
    %v834 = vld [vmem:[#allocation4 + $0x12c0] sm:$0xff]
    %v835 = vld [vmem:[#allocation4 + $0x12c8] sm:$0xff]
    %v836 = vld [vmem:[#allocation4 + $0x12d0] sm:$0xff]
    %v837 = vld [vmem:[#allocation4 + $0x12d8] sm:$0xff]
    %v838 = vld [vmem:[#allocation4 + $0x12e0] sm:$0xf]
    %v839 = vld [vmem:[#allocation4 + $0x12e4] sm:$0xff]
    %v840 = vld [vmem:[#allocation4 + $0x12ec] sm:$0xff]
    %v841 = vld [vmem:[#allocation4 + $0x12f4] sm:$0xff]
    %v842 = vld [vmem:[#allocation4 + $0x12fc] sm:$0xff]
    %v843 = vld [vmem:[#allocation4 + $0x1304] sm:$0xff]
    %v844 = vld [vmem:[#allocation4 + $0x130c] sm:$0xff]
    %v845 = vld [vmem:[#allocation4 + $0x1314] sm:$0xf]
    %v846 = vld [vmem:[#allocation4 + $0x1318] sm:$0xff]
    %v847 = vld [vmem:[#allocation4 + $0x1320] sm:$0xff]
    %v848 = vld [vmem:[#allocation4 + $0x1328] sm:$0xff]
    %v849 = vld [vmem:[#allocation4 + $0x1330] sm:$0xff]
    %v850 = vld [vmem:[#allocation4 + $0x1338] sm:$0xff]
    %v851 = vld [vmem:[#allocation4 + $0x1340] sm:$0xff]
    %v852 = vld [vmem:[#allocation4 + $0x1348] sm:$0xf]
    %v853 = vld [vmem:[#allocation4 + $0x134c] sm:$0xff]
    %v854 = vld [vmem:[#allocation4 + $0x1354] sm:$0xff]
    %v855 = vld [vmem:[#allocation4 + $0x135c] sm:$0xff]
    %v856 = vld [vmem:[#allocation4 + $0x1364] sm:$0xff]
    %v857 = vld [vmem:[#allocation4 + $0x136c] sm:$0xff]
    %v858 = vld [vmem:[#allocation4 + $0x1374] sm:$0xff]
    %v859 = vld [vmem:[#allocation4 + $0x137c] sm:$0xf]
    %v860 = vld [vmem:[#allocation4 + $0x1380] sm:$0xff]
    %v861 = vld [vmem:[#allocation4 + $0x1388] sm:$0xff]
    %v862 = vld [vmem:[#allocation4 + $0x1390] sm:$0xff]
    %v863 = vld [vmem:[#allocation4 + $0x1398] sm:$0xff]
    %v864 = vld [vmem:[#allocation4 + $0x13a0] sm:$0xff]
    %v865 = vld [vmem:[#allocation4 + $0x13a8] sm:$0xff]
    %v866 = vld [vmem:[#allocation4 + $0x13b0] sm:$0xf]
    %v867 = vld [vmem:[#allocation4 + $0x13b4] sm:$0xff]
    %v868 = vld [vmem:[#allocation4 + $0x13bc] sm:$0xff]
    %v869 = vld [vmem:[#allocation4 + $0x13c4] sm:$0xff]
    %v870 = vld [vmem:[#allocation4 + $0x13cc] sm:$0xff]
    %v871 = vld [vmem:[#allocation4 + $0x13d4] sm:$0xff]
    %v872 = vld [vmem:[#allocation4 + $0x13dc] sm:$0xff]
    %v873 = vld [vmem:[#allocation4 + $0x13e4] sm:$0xf]
    %v874 = vld [vmem:[#allocation4 + $0x13e8] sm:$0xff]
    %v875 = vld [vmem:[#allocation4 + $0x13f0] sm:$0xff]
    %v876 = vld [vmem:[#allocation4 + $0x13f8] sm:$0xff]
    %v877 = vld [vmem:[#allocation4 + $0x1400] sm:$0xff]
    %v878 = vld [vmem:[#allocation4 + $0x1408] sm:$0xff]
    %v879 = vld [vmem:[#allocation4 + $0x1410] sm:$0xff]
    %v880 = vld [vmem:[#allocation4 + $0x1418] sm:$0xf]
    %v881 = vld [vmem:[#allocation4 + $0x141c] sm:$0xff]
    %v882 = vld [vmem:[#allocation4 + $0x1424] sm:$0xff]
    %v883 = vld [vmem:[#allocation4 + $0x142c] sm:$0xff]
    %v884 = vld [vmem:[#allocation4 + $0x1434] sm:$0xff]
    %v885 = vld [vmem:[#allocation4 + $0x143c] sm:$0xff]
    %v886 = vld [vmem:[#allocation4 + $0x1444] sm:$0xff]
    %v887 = vld [vmem:[#allocation4 + $0x144c] sm:$0xf]
    %v888 = vld [vmem:[#allocation4 + $0x1450] sm:$0xff]
    %v889 = vld [vmem:[#allocation4 + $0x1458] sm:$0xff]
    %v890 = vld [vmem:[#allocation4 + $0x1460] sm:$0xff]
    %v891 = vld [vmem:[#allocation4 + $0x1468] sm:$0xff]
    %v892 = vld [vmem:[#allocation4 + $0x1470] sm:$0xff]
    %v893 = vld [vmem:[#allocation4 + $0x1478] sm:$0xff]
    %v894 = vld [vmem:[#allocation4 + $0x1480] sm:$0xf]
    %v895 = vld [vmem:[#allocation4 + $0x1484] sm:$0xff]
    %v896 = vld [vmem:[#allocation4 + $0x148c] sm:$0xff]
    %v897 = vld [vmem:[#allocation4 + $0x1494] sm:$0xff]
    %v898 = vld [vmem:[#allocation4 + $0x149c] sm:$0xff]
    %v899 = vld [vmem:[#allocation4 + $0x14a4] sm:$0xff]
    %v900 = vld [vmem:[#allocation4 + $0x14ac] sm:$0xff]
    %v901 = vld [vmem:[#allocation4 + $0x14b4] sm:$0xf]
    %v902 = vld [vmem:[#allocation4 + $0x14b8] sm:$0xff]
    %v903 = vld [vmem:[#allocation4 + $0x14c0] sm:$0xff]
    %v904 = vld [vmem:[#allocation4 + $0x14c8] sm:$0xff]
    %v905 = vld [vmem:[#allocation4 + $0x14d0] sm:$0xff]
    %v906 = vld [vmem:[#allocation4 + $0x14d8] sm:$0xff]
    %v907 = vld [vmem:[#allocation4 + $0x14e0] sm:$0xff]
    %v908 = vld [vmem:[#allocation4 + $0x14e8] sm:$0xf]
    %v909 = vld [vmem:[#allocation4 + $0x14ec] sm:$0xff]
    %v910 = vld [vmem:[#allocation4 + $0x14f4] sm:$0xff]
    %v911 = vld [vmem:[#allocation4 + $0x14fc] sm:$0xff]
    %v912 = vld [vmem:[#allocation4 + $0x1504] sm:$0xff]
    %v913 = vld [vmem:[#allocation4 + $0x150c] sm:$0xff]
    %v914 = vld [vmem:[#allocation4 + $0x1514] sm:$0xff]
    %v915 = vld [vmem:[#allocation4 + $0x151c] sm:$0xf]
    %v916 = vld [vmem:[#allocation4 + $0x1520] sm:$0xff]
    %v917 = vld [vmem:[#allocation4 + $0x1528] sm:$0xff]
    %v918 = vld [vmem:[#allocation4 + $0x1530] sm:$0xff]
    %v919 = vld [vmem:[#allocation4 + $0x1538] sm:$0xff]
    %v920 = vld [vmem:[#allocation4 + $0x1540] sm:$0xff]
    %v921 = vld [vmem:[#allocation4 + $0x1548] sm:$0xff]
    %v922 = vld [vmem:[#allocation4 + $0x1550] sm:$0xf]
    %v923 = vld [vmem:[#allocation4 + $0x1554] sm:$0xff]
    %v924 = vld [vmem:[#allocation4 + $0x155c] sm:$0xff]
    %v925 = vld [vmem:[#allocation4 + $0x1564] sm:$0xff]
    %v926 = vld [vmem:[#allocation4 + $0x156c] sm:$0xff]
    %v927 = vld [vmem:[#allocation4 + $0x1574] sm:$0xff]
    %v928 = vld [vmem:[#allocation4 + $0x157c] sm:$0xff]
    %v929 = vld [vmem:[#allocation4 + $0x1584] sm:$0xf]
    %v930 = vld [vmem:[#allocation4 + $0x1588] sm:$0xff]
    %v931 = vld [vmem:[#allocation4 + $0x1590] sm:$0xff]
    %v932 = vld [vmem:[#allocation4 + $0x1598] sm:$0xff]
    %v933 = vld [vmem:[#allocation4 + $0x15a0] sm:$0xff]
    %v934 = vld [vmem:[#allocation4 + $0x15a8] sm:$0xff]
    %v935 = vld [vmem:[#allocation4 + $0x15b0] sm:$0xff]
    %v936 = vld [vmem:[#allocation4 + $0x15b8] sm:$0xf]
    %v937 = vld [vmem:[#allocation4 + $0x15bc] sm:$0xff]
    %v938 = vld [vmem:[#allocation4 + $0x15c4] sm:$0xff]
    %v939 = vld [vmem:[#allocation4 + $0x15cc] sm:$0xff]
    %v940 = vld [vmem:[#allocation4 + $0x15d4] sm:$0xff]
    %v941 = vld [vmem:[#allocation4 + $0x15dc] sm:$0xff]
    %v942 = vld [vmem:[#allocation4 + $0x15e4] sm:$0xff]
    %v943 = vld [vmem:[#allocation4 + $0x15ec] sm:$0xf]
    %v944 = vld [vmem:[#allocation4 + $0x15f0] sm:$0xff]
    %v945 = vld [vmem:[#allocation4 + $0x15f8] sm:$0xff]
    %v946 = vld [vmem:[#allocation4 + $0x1600] sm:$0xff]
    %v947 = vld [vmem:[#allocation4 + $0x1608] sm:$0xff]
    %v948 = vld [vmem:[#allocation4 + $0x1610] sm:$0xff]
    %v949 = vld [vmem:[#allocation4 + $0x1618] sm:$0xff]
    %v950 = vld [vmem:[#allocation4 + $0x1620] sm:$0xf]
    %v951 = vld [vmem:[#allocation4 + $0x1624] sm:$0xff]
    %v952 = vld [vmem:[#allocation4 + $0x162c] sm:$0xff]
    %v953 = vld [vmem:[#allocation4 + $0x1634] sm:$0xff]
    %v954 = vld [vmem:[#allocation4 + $0x163c] sm:$0xff]
    %v955 = vld [vmem:[#allocation4 + $0x1644] sm:$0xff]
    %v956 = vld [vmem:[#allocation4 + $0x164c] sm:$0xff]
    %v957 = vld [vmem:[#allocation4 + $0x1654] sm:$0xf]
    %v958 = vld [vmem:[#allocation4 + $0x1658] sm:$0xff]
    %v959 = vld [vmem:[#allocation4 + $0x1660] sm:$0xff]
    %v960 = vld [vmem:[#allocation4 + $0x1668] sm:$0xff]
    %v961 = vld [vmem:[#allocation4 + $0x1670] sm:$0xff]
    %v962 = vld [vmem:[#allocation4 + $0x1678] sm:$0xff]
    %v963 = vld [vmem:[#allocation4 + $0x1680] sm:$0xff]
    %v964 = vld [vmem:[#allocation4 + $0x1688] sm:$0xf]
    %v965 = vld [vmem:[#allocation4 + $0x168c] sm:$0xff]
    %v966 = vld [vmem:[#allocation4 + $0x1694] sm:$0xff]
    %v967 = vld [vmem:[#allocation4 + $0x169c] sm:$0xff]
    %v968 = vld [vmem:[#allocation4 + $0x16a4] sm:$0xff]
    %v969 = vld [vmem:[#allocation4 + $0x16ac] sm:$0xff]
    %v970 = vld [vmem:[#allocation4 + $0x16b4] sm:$0xff]
    %v971 = vld [vmem:[#allocation4 + $0x16bc] sm:$0xf]
    %v972 = vld [vmem:[#allocation6] sm:$0xff]
    %v973 = vld [vmem:[#allocation6 + $0x8] sm:$0x1f]
    %v976 = vlaneseq
    %v977 = vshrl.u32 %v976, 7
    %v978 = vsub.s32 0, %v977
    %v979 = vrot.slane %v972, %v978
    %v980 = vlaneseq
    %v981 = vshrl.u32 %v980, 7
    %v982 = vsub.s32 1, %v981
    %v983 = vrot.slane %v972, %v982
    %v984 = vlaneseq
    %v985 = vshrl.u32 %v984, 7
    %v986 = vsub.s32 2, %v985
    %v987 = vrot.slane %v972, %v986
    %v988 = vlaneseq
    %v989 = vshrl.u32 %v988, 7
    %v990 = vsub.s32 3, %v989
    %v991 = vrot.slane %v972, %v990
    %v992 = vlaneseq
    %v993 = vshrl.u32 %v992, 7
    %v994 = vsub.s32 4, %v993
    %v995 = vrot.slane %v972, %v994
    %v996 = vlaneseq
    %v997 = vshrl.u32 %v996, 7
    %v998 = vsub.s32 5, %v997
    %v999 = vrot.slane %v972, %v998
    %v1000 = vlaneseq
    %v1001 = vshrl.u32 %v1000, 7
    %v1002 = vsub.s32 6, %v1001
    %v1003 = vrot.slane %v972, %v1002
    %v1004 = vlaneseq
    %v1005 = vshrl.u32 %v1004, 7
    %v1006 = vsub.s32 7, %v1005
    %v1007 = vrot.slane %v972, %v1006
    %v1008 = vlaneseq
    %v1009 = vshrl.u32 %v1008, 7
    %v1010 = vsub.s32 0, %v1009
    %v1011 = vrot.slane %v973, %v1010
    %v1012 = vlaneseq
    %v1013 = vshrl.u32 %v1012, 7
    %v1014 = vsub.s32 1, %v1013
    %v1015 = vrot.slane %v973, %v1014
    %v1016 = vlaneseq
    %v1017 = vshrl.u32 %v1016, 7
    %v1018 = vsub.s32 2, %v1017
    %v1019 = vrot.slane %v973, %v1018
    %v1020 = vlaneseq
    %v1021 = vshrl.u32 %v1020, 7
    %v1022 = vsub.s32 3, %v1021
    %v1023 = vrot.slane %v973, %v1022
    %v1024 = vlaneseq
    %v1025 = vshrl.u32 %v1024, 7
    %v1026 = vsub.s32 4, %v1025
    %v1027 = vrot.slane %v973, %v1026
    %v1825 = vunpack.c.l.b16 %v188
    %v1826 = vunpack.c.h.b16 %v188
    %v1827 = vunpack.c.l.b16 %v189
    %v1828 = vunpack.c.h.b16 %v189
    %v1829 = vunpack.c.l.b16 %v190
    %v1830 = vunpack.c.h.b16 %v190
    %v1831 = vunpack.c.l.b16 %v191
    %v1832 = vunpack.c.h.b16 %v191
    %v1833 = vunpack.c.l.b16 %v192
    %v1834 = vunpack.c.h.b16 %v192
    %v1835 = vunpack.c.l.b16 %v193
    %v1836 = vunpack.c.h.b16 %v193
    %v1837 = vunpack.c.l.b16 %v194
    %v1838 = vunpack.c.l.b16 %v195
    %v1839 = vunpack.c.h.b16 %v195
    %v1840 = vunpack.c.l.b16 %v196
    %v1841 = vunpack.c.h.b16 %v196
    %v1842 = vunpack.c.l.b16 %v197
    %v1843 = vunpack.c.h.b16 %v197
    %v1844 = vunpack.c.l.b16 %v198
    %v1845 = vunpack.c.h.b16 %v198
    %v1846 = vunpack.c.l.b16 %v199
    %v1847 = vunpack.c.h.b16 %v199
    %v1848 = vunpack.c.l.b16 %v200
    %v1849 = vunpack.c.h.b16 %v200
    %v1850 = vunpack.c.l.b16 %v201
    %v1851 = vunpack.c.l.b16 %v202
    %v1852 = vunpack.c.h.b16 %v202
    %v1853 = vunpack.c.l.b16 %v203
    %v1854 = vunpack.c.h.b16 %v203
    %v1855 = vunpack.c.l.b16 %v204
    %v1856 = vunpack.c.h.b16 %v204
    %v1857 = vunpack.c.l.b16 %v205
    %v1858 = vunpack.c.h.b16 %v205
    %v1859 = vunpack.c.l.b16 %v206
    %v1860 = vunpack.c.h.b16 %v206
    %v1861 = vunpack.c.l.b16 %v207
    %v1862 = vunpack.c.h.b16 %v207
    %v1863 = vunpack.c.l.b16 %v208
    %v1864 = vunpack.c.l.b16 %v209
    %v1865 = vunpack.c.h.b16 %v209
    %v1866 = vunpack.c.l.b16 %v210
    %v1867 = vunpack.c.h.b16 %v210
    %v1868 = vunpack.c.l.b16 %v211
    %v1869 = vunpack.c.h.b16 %v211
    %v1870 = vunpack.c.l.b16 %v212
    %v1871 = vunpack.c.h.b16 %v212
    %v1872 = vunpack.c.l.b16 %v213
    %v1873 = vunpack.c.h.b16 %v213
    %v1874 = vunpack.c.l.b16 %v214
    %v1875 = vunpack.c.h.b16 %v214
    %v1876 = vunpack.c.l.b16 %v215
    %v1877 = vunpack.c.l.b16 %v216
    %v1878 = vunpack.c.h.b16 %v216
    %v1879 = vunpack.c.l.b16 %v217
    %v1880 = vunpack.c.h.b16 %v217
    %v1881 = vunpack.c.l.b16 %v218
    %v1882 = vunpack.c.h.b16 %v218
    %v1883 = vunpack.c.l.b16 %v219
    %v1884 = vunpack.c.h.b16 %v219
    %v1885 = vunpack.c.l.b16 %v220
    %v1886 = vunpack.c.h.b16 %v220
    %v1887 = vunpack.c.l.b16 %v221
    %v1888 = vunpack.c.h.b16 %v221
    %v1889 = vunpack.c.l.b16 %v222
    %v1890 = vunpack.c.l.b16 %v223
    %v1891 = vunpack.c.h.b16 %v223
    %v1892 = vunpack.c.l.b16 %v224
    %v1893 = vunpack.c.h.b16 %v224
    %v1894 = vunpack.c.l.b16 %v225
    %v1895 = vunpack.c.h.b16 %v225
    %v1896 = vunpack.c.l.b16 %v226
    %v1897 = vunpack.c.h.b16 %v226
    %v1898 = vunpack.c.l.b16 %v227
    %v1899 = vunpack.c.h.b16 %v227
    %v1900 = vunpack.c.l.b16 %v228
    %v1901 = vunpack.c.h.b16 %v228
    %v1902 = vunpack.c.l.b16 %v229
    %v1903 = vunpack.c.l.b16 %v230
    %v1904 = vunpack.c.h.b16 %v230
    %v1905 = vunpack.c.l.b16 %v231
    %v1906 = vunpack.c.h.b16 %v231
    %v1907 = vunpack.c.l.b16 %v232
    %v1908 = vunpack.c.h.b16 %v232
    %v1909 = vunpack.c.l.b16 %v233
    %v1910 = vunpack.c.h.b16 %v233
    %v1911 = vunpack.c.l.b16 %v234
    %v1912 = vunpack.c.h.b16 %v234
    %v1913 = vunpack.c.l.b16 %v235
    %v1914 = vunpack.c.h.b16 %v235
    %v1915 = vunpack.c.l.b16 %v236
    %v1916 = vunpack.c.l.b16 %v237
    %v1917 = vunpack.c.h.b16 %v237
    %v1918 = vunpack.c.l.b16 %v238
    %v1919 = vunpack.c.h.b16 %v238
    %v1920 = vunpack.c.l.b16 %v239
    %v1921 = vunpack.c.h.b16 %v239
    %v1922 = vunpack.c.l.b16 %v240
    %v1923 = vunpack.c.h.b16 %v240
    %v1924 = vunpack.c.l.b16 %v241
    %v1925 = vunpack.c.h.b16 %v241
    %v1926 = vunpack.c.l.b16 %v242
    %v1927 = vunpack.c.h.b16 %v242
    %v1928 = vunpack.c.l.b16 %v243
    %v1929 = vunpack.c.l.b16 %v244
    %v1930 = vunpack.c.h.b16 %v244
    %v1931 = vunpack.c.l.b16 %v245
    %v1932 = vunpack.c.h.b16 %v245
    %v1933 = vunpack.c.l.b16 %v246
    %v1934 = vunpack.c.h.b16 %v246
    %v1935 = vunpack.c.l.b16 %v247
    %v1936 = vunpack.c.h.b16 %v247
    %v1937 = vunpack.c.l.b16 %v248
    %v1938 = vunpack.c.h.b16 %v248
    %v1939 = vunpack.c.l.b16 %v249
    %v1940 = vunpack.c.h.b16 %v249
    %v1941 = vunpack.c.l.b16 %v250
    %v1942 = vunpack.c.l.b16 %v251
    %v1943 = vunpack.c.h.b16 %v251
    %v1944 = vunpack.c.l.b16 %v252
    %v1945 = vunpack.c.h.b16 %v252
    %v1946 = vunpack.c.l.b16 %v253
    %v1947 = vunpack.c.h.b16 %v253
    %v1948 = vunpack.c.l.b16 %v254
    %v1949 = vunpack.c.h.b16 %v254
    %v1950 = vunpack.c.l.b16 %v255
    %v1951 = vunpack.c.h.b16 %v255
    %v1952 = vunpack.c.l.b16 %v256
    %v1953 = vunpack.c.h.b16 %v256
    %v1954 = vunpack.c.l.b16 %v257
    %v1955 = vunpack.c.l.b16 %v258
    %v1956 = vunpack.c.h.b16 %v258
    %v1957 = vunpack.c.l.b16 %v259
    %v1958 = vunpack.c.h.b16 %v259
    %v1959 = vunpack.c.l.b16 %v260
    %v1960 = vunpack.c.h.b16 %v260
    %v1961 = vunpack.c.l.b16 %v261
    %v1962 = vunpack.c.h.b16 %v261
    %v1963 = vunpack.c.l.b16 %v262
    %v1964 = vunpack.c.h.b16 %v262
    %v1965 = vunpack.c.l.b16 %v263
    %v1966 = vunpack.c.h.b16 %v263
    %v1967 = vunpack.c.l.b16 %v264
    %v1968 = vunpack.c.l.b16 %v265
    %v1969 = vunpack.c.h.b16 %v265
    %v1970 = vunpack.c.l.b16 %v266
    %v1971 = vunpack.c.h.b16 %v266
    %v1972 = vunpack.c.l.b16 %v267
    %v1973 = vunpack.c.h.b16 %v267
    %v1974 = vunpack.c.l.b16 %v268
    %v1975 = vunpack.c.h.b16 %v268
    %v1976 = vunpack.c.l.b16 %v269
    %v1977 = vunpack.c.h.b16 %v269
    %v1978 = vunpack.c.l.b16 %v270
    %v1979 = vunpack.c.h.b16 %v270
    %v1980 = vunpack.c.l.b16 %v271
    %v1981 = vunpack.c.l.b16 %v272
    %v1982 = vunpack.c.h.b16 %v272
    %v1983 = vunpack.c.l.b16 %v273
    %v1984 = vunpack.c.h.b16 %v273
    %v1985 = vunpack.c.l.b16 %v274
    %v1986 = vunpack.c.h.b16 %v274
    %v1987 = vunpack.c.l.b16 %v275
    %v1988 = vunpack.c.h.b16 %v275
    %v1989 = vunpack.c.l.b16 %v276
    %v1990 = vunpack.c.h.b16 %v276
    %v1991 = vunpack.c.l.b16 %v277
    %v1992 = vunpack.c.h.b16 %v277
    %v1993 = vunpack.c.l.b16 %v278
    %v1994 = vunpack.c.l.b16 %v279
    %v1995 = vunpack.c.h.b16 %v279
    %v1996 = vunpack.c.l.b16 %v280
    %v1997 = vunpack.c.h.b16 %v280
    %v1998 = vunpack.c.l.b16 %v281
    %v1999 = vunpack.c.h.b16 %v281
    %v2000 = vunpack.c.l.b16 %v282
    %v2001 = vunpack.c.h.b16 %v282
    %v2002 = vunpack.c.l.b16 %v283
    %v2003 = vunpack.c.h.b16 %v283
    %v2004 = vunpack.c.l.b16 %v284
    %v2005 = vunpack.c.h.b16 %v284
    %v2006 = vunpack.c.l.b16 %v285
    %v2007 = vunpack.c.l.b16 %v286
    %v2008 = vunpack.c.h.b16 %v286
    %v2009 = vunpack.c.l.b16 %v287
    %v2010 = vunpack.c.h.b16 %v287
    %v2011 = vunpack.c.l.b16 %v288
    %v2012 = vunpack.c.h.b16 %v288
    %v2013 = vunpack.c.l.b16 %v289
    %v2014 = vunpack.c.h.b16 %v289
    %v2015 = vunpack.c.l.b16 %v290
    %v2016 = vunpack.c.h.b16 %v290
    %v2017 = vunpack.c.l.b16 %v291
    %v2018 = vunpack.c.h.b16 %v291
    %v2019 = vunpack.c.l.b16 %v292
    %v2020 = vunpack.c.l.b16 %v293
    %v2021 = vunpack.c.h.b16 %v293
    %v2022 = vunpack.c.l.b16 %v294
    %v2023 = vunpack.c.h.b16 %v294
    %v2024 = vunpack.c.l.b16 %v295
    %v2025 = vunpack.c.h.b16 %v295
    %v2026 = vunpack.c.l.b16 %v296
    %v2027 = vunpack.c.h.b16 %v296
    %v2028 = vunpack.c.l.b16 %v297
    %v2029 = vunpack.c.h.b16 %v297
    %v2030 = vunpack.c.l.b16 %v298
    %v2031 = vunpack.c.h.b16 %v298
    %v2032 = vunpack.c.l.b16 %v299
    %v2033 = vunpack.c.l.b16 %v300
    %v2034 = vunpack.c.h.b16 %v300
    %v2035 = vunpack.c.l.b16 %v301
    %v2036 = vunpack.c.h.b16 %v301
    %v2037 = vunpack.c.l.b16 %v302
    %v2038 = vunpack.c.h.b16 %v302
    %v2039 = vunpack.c.l.b16 %v303
    %v2040 = vunpack.c.h.b16 %v303
    %v2041 = vunpack.c.l.b16 %v304
    %v2042 = vunpack.c.h.b16 %v304
    %v2043 = vunpack.c.l.b16 %v305
    %v2044 = vunpack.c.h.b16 %v305
    %v2045 = vunpack.c.l.b16 %v306
    %v2046 = vunpack.c.l.b16 %v307
    %v2047 = vunpack.c.h.b16 %v307
    %v2048 = vunpack.c.l.b16 %v308
    %v2049 = vunpack.c.h.b16 %v308
    %v2050 = vunpack.c.l.b16 %v309
    %v2051 = vunpack.c.h.b16 %v309
    %v2052 = vunpack.c.l.b16 %v310
    %v2053 = vunpack.c.h.b16 %v310
    %v2054 = vunpack.c.l.b16 %v311
    %v2055 = vunpack.c.h.b16 %v311
    %v2056 = vunpack.c.l.b16 %v312
    %v2057 = vunpack.c.h.b16 %v312
    %v2058 = vunpack.c.l.b16 %v313
    %v2059 = vunpack.c.l.b16 %v314
    %v2060 = vunpack.c.h.b16 %v314
    %v2061 = vunpack.c.l.b16 %v315
    %v2062 = vunpack.c.h.b16 %v315
    %v2063 = vunpack.c.l.b16 %v316
    %v2064 = vunpack.c.h.b16 %v316
    %v2065 = vunpack.c.l.b16 %v317
    %v2066 = vunpack.c.h.b16 %v317
    %v2067 = vunpack.c.l.b16 %v318
    %v2068 = vunpack.c.h.b16 %v318
    %v2069 = vunpack.c.l.b16 %v319
    %v2070 = vunpack.c.h.b16 %v319
    %v2071 = vunpack.c.l.b16 %v320
    %v2072 = vunpack.c.l.b16 %v321
    %v2073 = vunpack.c.h.b16 %v321
    %v2074 = vunpack.c.l.b16 %v322
    %v2075 = vunpack.c.h.b16 %v322
    %v2076 = vunpack.c.l.b16 %v323
    %v2077 = vunpack.c.h.b16 %v323
    %v2078 = vunpack.c.l.b16 %v324
    %v2079 = vunpack.c.h.b16 %v324
    %v2080 = vunpack.c.l.b16 %v325
    %v2081 = vunpack.c.h.b16 %v325
    %v2082 = vunpack.c.l.b16 %v326
    %v2083 = vunpack.c.h.b16 %v326
    %v2084 = vunpack.c.l.b16 %v327
    %v2085 = vunpack.c.l.b16 %v328
    %v2086 = vunpack.c.h.b16 %v328
    %v2087 = vunpack.c.l.b16 %v329
    %v2088 = vunpack.c.h.b16 %v329
    %v2089 = vunpack.c.l.b16 %v330
    %v2090 = vunpack.c.h.b16 %v330
    %v2091 = vunpack.c.l.b16 %v331
    %v2092 = vunpack.c.h.b16 %v331
    %v2093 = vunpack.c.l.b16 %v332
    %v2094 = vunpack.c.h.b16 %v332
    %v2095 = vunpack.c.l.b16 %v333
    %v2096 = vunpack.c.h.b16 %v333
    %v2097 = vunpack.c.l.b16 %v334
    %v2098 = vunpack.c.l.b16 %v335
    %v2099 = vunpack.c.h.b16 %v335
    %v2100 = vunpack.c.l.b16 %v336
    %v2101 = vunpack.c.h.b16 %v336
    %v2102 = vunpack.c.l.b16 %v337
    %v2103 = vunpack.c.h.b16 %v337
    %v2104 = vunpack.c.l.b16 %v338
    %v2105 = vunpack.c.h.b16 %v338
    %v2106 = vunpack.c.l.b16 %v339
    %v2107 = vunpack.c.h.b16 %v339
    %v2108 = vunpack.c.l.b16 %v340
    %v2109 = vunpack.c.h.b16 %v340
    %v2110 = vunpack.c.l.b16 %v341
    %v2111 = vunpack.c.l.b16 %v342
    %v2112 = vunpack.c.h.b16 %v342
    %v2113 = vunpack.c.l.b16 %v343
    %v2114 = vunpack.c.h.b16 %v343
    %v2115 = vunpack.c.l.b16 %v344
    %v2116 = vunpack.c.h.b16 %v344
    %v2117 = vunpack.c.l.b16 %v345
    %v2118 = vunpack.c.h.b16 %v345
    %v2119 = vunpack.c.l.b16 %v346
    %v2120 = vunpack.c.h.b16 %v346
    %v2121 = vunpack.c.l.b16 %v347
    %v2122 = vunpack.c.h.b16 %v347
    %v2123 = vunpack.c.l.b16 %v348
    %v2124 = vunpack.c.l.b16 %v349
    %v2125 = vunpack.c.h.b16 %v349
    %v2126 = vunpack.c.l.b16 %v350
    %v2127 = vunpack.c.h.b16 %v350
    %v2128 = vunpack.c.l.b16 %v351
    %v2129 = vunpack.c.h.b16 %v351
    %v2130 = vunpack.c.l.b16 %v352
    %v2131 = vunpack.c.h.b16 %v352
    %v2132 = vunpack.c.l.b16 %v353
    %v2133 = vunpack.c.h.b16 %v353
    %v2134 = vunpack.c.l.b16 %v354
    %v2135 = vunpack.c.h.b16 %v354
    %v2136 = vunpack.c.l.b16 %v355
    %v2137 = vunpack.c.l.b16 %v356
    %v2138 = vunpack.c.h.b16 %v356
    %v2139 = vunpack.c.l.b16 %v357
    %v2140 = vunpack.c.h.b16 %v357
    %v2141 = vunpack.c.l.b16 %v358
    %v2142 = vunpack.c.h.b16 %v358
    %v2143 = vunpack.c.l.b16 %v359
    %v2144 = vunpack.c.h.b16 %v359
    %v2145 = vunpack.c.l.b16 %v360
    %v2146 = vunpack.c.h.b16 %v360
    %v2147 = vunpack.c.l.b16 %v361
    %v2148 = vunpack.c.h.b16 %v361
    %v2149 = vunpack.c.l.b16 %v362
    %v2150 = vunpack.c.l.b16 %v363
    %v2151 = vunpack.c.h.b16 %v363
    %v2152 = vunpack.c.l.b16 %v364
    %v2153 = vunpack.c.h.b16 %v364
    %v2154 = vunpack.c.l.b16 %v365
    %v2155 = vunpack.c.h.b16 %v365
    %v2156 = vunpack.c.l.b16 %v366
    %v2157 = vunpack.c.h.b16 %v366
    %v2158 = vunpack.c.l.b16 %v367
    %v2159 = vunpack.c.h.b16 %v367
    %v2160 = vunpack.c.l.b16 %v368
    %v2161 = vunpack.c.h.b16 %v368
    %v2162 = vunpack.c.l.b16 %v369
    %v2163 = vunpack.c.l.b16 %v370
    %v2164 = vunpack.c.h.b16 %v370
    %v2165 = vunpack.c.l.b16 %v371
    %v2166 = vunpack.c.h.b16 %v371
    %v2167 = vunpack.c.l.b16 %v372
    %v2168 = vunpack.c.h.b16 %v372
    %v2169 = vunpack.c.l.b16 %v373
    %v2170 = vunpack.c.h.b16 %v373
    %v2171 = vunpack.c.l.b16 %v374
    %v2172 = vunpack.c.h.b16 %v374
    %v2173 = vunpack.c.l.b16 %v375
    %v2174 = vunpack.c.h.b16 %v375
    %v2175 = vunpack.c.l.b16 %v376
    %v2176 = vunpack.c.l.b16 %v377
    %v2177 = vunpack.c.h.b16 %v377
    %v2178 = vunpack.c.l.b16 %v378
    %v2179 = vunpack.c.h.b16 %v378
    %v2180 = vunpack.c.l.b16 %v379
    %v2181 = vunpack.c.h.b16 %v379
    %v2182 = vunpack.c.l.b16 %v380
    %v2183 = vunpack.c.h.b16 %v380
    %v2184 = vunpack.c.l.b16 %v381
    %v2185 = vunpack.c.h.b16 %v381
    %v2186 = vunpack.c.l.b16 %v382
    %v2187 = vunpack.c.h.b16 %v382
    %v2188 = vunpack.c.l.b16 %v383
    %v2189 = vunpack.c.l.b16 %v384
    %v2190 = vunpack.c.h.b16 %v384
    %v2191 = vunpack.c.l.b16 %v385
    %v2192 = vunpack.c.h.b16 %v385
    %v2193 = vunpack.c.l.b16 %v386
    %v2194 = vunpack.c.h.b16 %v386
    %v2195 = vunpack.c.l.b16 %v387
    %v2196 = vunpack.c.h.b16 %v387
    %v2197 = vunpack.c.l.b16 %v388
    %v2198 = vunpack.c.h.b16 %v388
    %v2199 = vunpack.c.l.b16 %v389
    %v2200 = vunpack.c.h.b16 %v389
    %v2201 = vunpack.c.l.b16 %v390
    %v2202 = vunpack.c.l.b16 %v391
    %v2203 = vunpack.c.h.b16 %v391
    %v2204 = vunpack.c.l.b16 %v392
    %v2205 = vunpack.c.h.b16 %v392
    %v2206 = vunpack.c.l.b16 %v393
    %v2207 = vunpack.c.h.b16 %v393
    %v2208 = vunpack.c.l.b16 %v394
    %v2209 = vunpack.c.h.b16 %v394
    %v2210 = vunpack.c.l.b16 %v395
    %v2211 = vunpack.c.h.b16 %v395
    %v2212 = vunpack.c.l.b16 %v396
    %v2213 = vunpack.c.h.b16 %v396
    %v2214 = vunpack.c.l.b16 %v397
    %v2215 = vunpack.c.l.b16 %v398
    %v2216 = vunpack.c.h.b16 %v398
    %v2217 = vunpack.c.l.b16 %v399
    %v2218 = vunpack.c.h.b16 %v399
    %v2219 = vunpack.c.l.b16 %v400
    %v2220 = vunpack.c.h.b16 %v400
    %v2221 = vunpack.c.l.b16 %v401
    %v2222 = vunpack.c.h.b16 %v401
    %v2223 = vunpack.c.l.b16 %v402
    %v2224 = vunpack.c.h.b16 %v402
    %v2225 = vunpack.c.l.b16 %v403
    %v2226 = vunpack.c.h.b16 %v403
    %v2227 = vunpack.c.l.b16 %v404
    %v2228 = vunpack.c.l.b16 %v405
    %v2229 = vunpack.c.h.b16 %v405
    %v2230 = vunpack.c.l.b16 %v406
    %v2231 = vunpack.c.h.b16 %v406
    %v2232 = vunpack.c.l.b16 %v407
    %v2233 = vunpack.c.h.b16 %v407
    %v2234 = vunpack.c.l.b16 %v408
    %v2235 = vunpack.c.h.b16 %v408
    %v2236 = vunpack.c.l.b16 %v409
    %v2237 = vunpack.c.h.b16 %v409
    %v2238 = vunpack.c.l.b16 %v410
    %v2239 = vunpack.c.h.b16 %v410
    %v2240 = vunpack.c.l.b16 %v411
    %v2241 = vunpack.c.l.b16 %v412
    %v2242 = vunpack.c.h.b16 %v412
    %v2243 = vunpack.c.l.b16 %v413
    %v2244 = vunpack.c.h.b16 %v413
    %v2245 = vunpack.c.l.b16 %v414
    %v2246 = vunpack.c.h.b16 %v414
    %v2247 = vunpack.c.l.b16 %v415
    %v2248 = vunpack.c.h.b16 %v415
    %v2249 = vunpack.c.l.b16 %v416
    %v2250 = vunpack.c.h.b16 %v416
    %v2251 = vunpack.c.l.b16 %v417
    %v2252 = vunpack.c.h.b16 %v417
    %v2253 = vunpack.c.l.b16 %v418
    %v2254 = vunpack.c.l.b16 %v419
    %v2255 = vunpack.c.h.b16 %v419
    %v2256 = vunpack.c.l.b16 %v420
    %v2257 = vunpack.c.h.b16 %v420
    %v2258 = vunpack.c.l.b16 %v421
    %v2259 = vunpack.c.h.b16 %v421
    %v2260 = vunpack.c.l.b16 %v422
    %v2261 = vunpack.c.h.b16 %v422
    %v2262 = vunpack.c.l.b16 %v423
    %v2263 = vunpack.c.h.b16 %v423
    %v2264 = vunpack.c.l.b16 %v424
    %v2265 = vunpack.c.h.b16 %v424
    %v2266 = vunpack.c.l.b16 %v425
    %v2267 = vunpack.c.l.b16 %v426
    %v2268 = vunpack.c.h.b16 %v426
    %v2269 = vunpack.c.l.b16 %v427
    %v2270 = vunpack.c.h.b16 %v427
    %v2271 = vunpack.c.l.b16 %v428
    %v2272 = vunpack.c.h.b16 %v428
    %v2273 = vunpack.c.l.b16 %v429
    %v2274 = vunpack.c.h.b16 %v429
    %v2275 = vunpack.c.l.b16 %v430
    %v2276 = vunpack.c.h.b16 %v430
    %v2277 = vunpack.c.l.b16 %v431
    %v2278 = vunpack.c.h.b16 %v431
    %v2279 = vunpack.c.l.b16 %v432
    %v2280 = vunpack.c.l.b16 %v433
    %v2281 = vunpack.c.h.b16 %v433
    %v2282 = vunpack.c.l.b16 %v434
    %v2283 = vunpack.c.h.b16 %v434
    %v2284 = vunpack.c.l.b16 %v435
    %v2285 = vunpack.c.h.b16 %v435
    %v2286 = vunpack.c.l.b16 %v436
    %v2287 = vunpack.c.h.b16 %v436
    %v2288 = vunpack.c.l.b16 %v437
    %v2289 = vunpack.c.h.b16 %v437
    %v2290 = vunpack.c.l.b16 %v438
    %v2291 = vunpack.c.h.b16 %v438
    %v2292 = vunpack.c.l.b16 %v439
    %v2293 = vunpack.c.l.b16 %v440
    %v2294 = vunpack.c.h.b16 %v440
    %v2295 = vunpack.c.l.b16 %v441
    %v2296 = vunpack.c.h.b16 %v441
    %v2297 = vunpack.c.l.b16 %v442
    %v2298 = vunpack.c.h.b16 %v442
    %v2299 = vunpack.c.l.b16 %v443
    %v2300 = vunpack.c.h.b16 %v443
    %v2301 = vunpack.c.l.b16 %v444
    %v2302 = vunpack.c.h.b16 %v444
    %v2303 = vunpack.c.l.b16 %v445
    %v2304 = vunpack.c.h.b16 %v445
    %v2305 = vunpack.c.l.b16 %v446
    %v2306 = vunpack.c.l.b16 %v447
    %v2307 = vunpack.c.h.b16 %v447
    %v2308 = vunpack.c.l.b16 %v448
    %v2309 = vunpack.c.h.b16 %v448
    %v2310 = vunpack.c.l.b16 %v449
    %v2311 = vunpack.c.h.b16 %v449
    %v2312 = vunpack.c.l.b16 %v450
    %v2313 = vunpack.c.h.b16 %v450
    %v2314 = vunpack.c.l.b16 %v451
    %v2315 = vunpack.c.h.b16 %v451
    %v2316 = vunpack.c.l.b16 %v452
    %v2317 = vunpack.c.h.b16 %v452
    %v2318 = vunpack.c.l.b16 %v453
    %v2319 = vunpack.c.l.b16 %v454
    %v2320 = vunpack.c.h.b16 %v454
    %v2321 = vunpack.c.l.b16 %v455
    %v2322 = vunpack.c.h.b16 %v455
    %v2323 = vunpack.c.l.b16 %v456
    %v2324 = vunpack.c.h.b16 %v456
    %v2325 = vunpack.c.l.b16 %v457
    %v2326 = vunpack.c.h.b16 %v457
    %v2327 = vunpack.c.l.b16 %v458
    %v2328 = vunpack.c.h.b16 %v458
    %v2329 = vunpack.c.l.b16 %v459
    %v2330 = vunpack.c.h.b16 %v459
    %v2331 = vunpack.c.l.b16 %v460
    %v2332 = vunpack.c.l.b16 %v461
    %v2333 = vunpack.c.h.b16 %v461
    %v2334 = vunpack.c.l.b16 %v462
    %v2335 = vunpack.c.h.b16 %v462
    %v2336 = vunpack.c.l.b16 %v463
    %v2337 = vunpack.c.h.b16 %v463
    %v2338 = vunpack.c.l.b16 %v464
    %v2339 = vunpack.c.h.b16 %v464
    %v2340 = vunpack.c.l.b16 %v465
    %v2341 = vunpack.c.h.b16 %v465
    %v2342 = vunpack.c.l.b16 %v466
    %v2343 = vunpack.c.h.b16 %v466
    %v2344 = vunpack.c.l.b16 %v467
    %v2345 = vunpack.c.l.b16 %v468
    %v2346 = vunpack.c.h.b16 %v468
    %v2347 = vunpack.c.l.b16 %v469
    %v2348 = vunpack.c.h.b16 %v469
    %v2349 = vunpack.c.l.b16 %v470
    %v2350 = vunpack.c.h.b16 %v470
    %v2351 = vunpack.c.l.b16 %v471
    %v2352 = vunpack.c.h.b16 %v471
    %v2353 = vunpack.c.l.b16 %v472
    %v2354 = vunpack.c.h.b16 %v472
    %v2355 = vunpack.c.l.b16 %v473
    %v2356 = vunpack.c.h.b16 %v473
    %v2357 = vunpack.c.l.b16 %v474
    %v2358 = vunpack.c.l.b16 %v475
    %v2359 = vunpack.c.h.b16 %v475
    %v2360 = vunpack.c.l.b16 %v476
    %v2361 = vunpack.c.h.b16 %v476
    %v2362 = vunpack.c.l.b16 %v477
    %v2363 = vunpack.c.h.b16 %v477
    %v2364 = vunpack.c.l.b16 %v478
    %v2365 = vunpack.c.h.b16 %v478
    %v2366 = vunpack.c.l.b16 %v479
    %v2367 = vunpack.c.h.b16 %v479
    %v2368 = vunpack.c.l.b16 %v480
    %v2369 = vunpack.c.h.b16 %v480
    %v2370 = vunpack.c.l.b16 %v481
    %v2371 = vunpack.c.l.b16 %v482
    %v2372 = vunpack.c.h.b16 %v482
    %v2373 = vunpack.c.l.b16 %v483
    %v2374 = vunpack.c.h.b16 %v483
    %v2375 = vunpack.c.l.b16 %v484
    %v2376 = vunpack.c.h.b16 %v484
    %v2377 = vunpack.c.l.b16 %v485
    %v2378 = vunpack.c.h.b16 %v485
    %v2379 = vunpack.c.l.b16 %v486
    %v2380 = vunpack.c.h.b16 %v486
    %v2381 = vunpack.c.l.b16 %v487
    %v2382 = vunpack.c.h.b16 %v487
    %v2383 = vunpack.c.l.b16 %v488
    %v2384 = vunpack.c.l.b16 %v489
    %v2385 = vunpack.c.h.b16 %v489
    %v2386 = vunpack.c.l.b16 %v490
    %v2387 = vunpack.c.h.b16 %v490
    %v2388 = vunpack.c.l.b16 %v491
    %v2389 = vunpack.c.h.b16 %v491
    %v2390 = vunpack.c.l.b16 %v492
    %v2391 = vunpack.c.h.b16 %v492
    %v2392 = vunpack.c.l.b16 %v493
    %v2393 = vunpack.c.h.b16 %v493
    %v2394 = vunpack.c.l.b16 %v494
    %v2395 = vunpack.c.h.b16 %v494
    %v2396 = vunpack.c.l.b16 %v495
    %v2397 = vunpack.c.l.b16 %v496
    %v2398 = vunpack.c.h.b16 %v496
    %v2399 = vunpack.c.l.b16 %v497
    %v2400 = vunpack.c.h.b16 %v497
    %v2401 = vunpack.c.l.b16 %v498
    %v2402 = vunpack.c.h.b16 %v498
    %v2403 = vunpack.c.l.b16 %v499
    %v2404 = vunpack.c.h.b16 %v499
    %v2405 = vunpack.c.l.b16 %v500
    %v2406 = vunpack.c.h.b16 %v500
    %v2407 = vunpack.c.l.b16 %v501
    %v2408 = vunpack.c.h.b16 %v501
    %v2409 = vunpack.c.l.b16 %v502
    %v2410 = vunpack.c.l.b16 %v503
    %v2411 = vunpack.c.h.b16 %v503
    %v2412 = vunpack.c.l.b16 %v504
    %v2413 = vunpack.c.h.b16 %v504
    %v2414 = vunpack.c.l.b16 %v505
    %v2415 = vunpack.c.h.b16 %v505
    %v2416 = vunpack.c.l.b16 %v506
    %v2417 = vunpack.c.h.b16 %v506
    %v2418 = vunpack.c.l.b16 %v507
    %v2419 = vunpack.c.h.b16 %v507
    %v2420 = vunpack.c.l.b16 %v508
    %v2421 = vunpack.c.h.b16 %v508
    %v2422 = vunpack.c.l.b16 %v509
    %v2423 = vunpack.c.l.b16 %v510
    %v2424 = vunpack.c.h.b16 %v510
    %v2425 = vunpack.c.l.b16 %v511
    %v2426 = vunpack.c.h.b16 %v511
    %v2427 = vunpack.c.l.b16 %v512
    %v2428 = vunpack.c.h.b16 %v512
    %v2429 = vunpack.c.l.b16 %v513
    %v2430 = vunpack.c.h.b16 %v513
    %v2431 = vunpack.c.l.b16 %v514
    %v2432 = vunpack.c.h.b16 %v514
    %v2433 = vunpack.c.l.b16 %v515
    %v2434 = vunpack.c.h.b16 %v515
    %v2435 = vunpack.c.l.b16 %v516
    %v2436 = vunpack.c.l.b16 %v517
    %v2437 = vunpack.c.h.b16 %v517
    %v2438 = vunpack.c.l.b16 %v518
    %v2439 = vunpack.c.h.b16 %v518
    %v2440 = vunpack.c.l.b16 %v519
    %v2441 = vunpack.c.h.b16 %v519
    %v2442 = vunpack.c.l.b16 %v520
    %v2443 = vunpack.c.h.b16 %v520
    %v2444 = vunpack.c.l.b16 %v521
    %v2445 = vunpack.c.h.b16 %v521
    %v2446 = vunpack.c.l.b16 %v522
    %v2447 = vunpack.c.h.b16 %v522
    %v2448 = vunpack.c.l.b16 %v523
    %v2449 = vunpack.c.l.b16 %v524
    %v2450 = vunpack.c.h.b16 %v524
    %v2451 = vunpack.c.l.b16 %v525
    %v2452 = vunpack.c.h.b16 %v525
    %v2453 = vunpack.c.l.b16 %v526
    %v2454 = vunpack.c.h.b16 %v526
    %v2455 = vunpack.c.l.b16 %v527
    %v2456 = vunpack.c.h.b16 %v527
    %v2457 = vunpack.c.l.b16 %v528
    %v2458 = vunpack.c.h.b16 %v528
    %v2459 = vunpack.c.l.b16 %v529
    %v2460 = vunpack.c.h.b16 %v529
    %v2461 = vunpack.c.l.b16 %v530
    %v2462 = vunpack.c.l.b16 %v531
    %v2463 = vunpack.c.h.b16 %v531
    %v2464 = vunpack.c.l.b16 %v532
    %v2465 = vunpack.c.h.b16 %v532
    %v2466 = vunpack.c.l.b16 %v533
    %v2467 = vunpack.c.h.b16 %v533
    %v2468 = vunpack.c.l.b16 %v534
    %v2469 = vunpack.c.h.b16 %v534
    %v2470 = vunpack.c.l.b16 %v535
    %v2471 = vunpack.c.h.b16 %v535
    %v2472 = vunpack.c.l.b16 %v536
    %v2473 = vunpack.c.h.b16 %v536
    %v2474 = vunpack.c.l.b16 %v537
    %v2475 = vunpack.c.l.b16 %v538
    %v2476 = vunpack.c.h.b16 %v538
    %v2477 = vunpack.c.l.b16 %v539
    %v2478 = vunpack.c.h.b16 %v539
    %v2479 = vunpack.c.l.b16 %v540
    %v2480 = vunpack.c.h.b16 %v540
    %v2481 = vunpack.c.l.b16 %v541
    %v2482 = vunpack.c.h.b16 %v541
    %v2483 = vunpack.c.l.b16 %v542
    %v2484 = vunpack.c.h.b16 %v542
    %v2485 = vunpack.c.l.b16 %v543
    %v2486 = vunpack.c.h.b16 %v543
    %v2487 = vunpack.c.l.b16 %v544
    %v2488 = vunpack.c.l.b16 %v545
    %v2489 = vunpack.c.h.b16 %v545
    %v2490 = vunpack.c.l.b16 %v546
    %v2491 = vunpack.c.h.b16 %v546
    %v2492 = vunpack.c.l.b16 %v547
    %v2493 = vunpack.c.h.b16 %v547
    %v2494 = vunpack.c.l.b16 %v548
    %v2495 = vunpack.c.h.b16 %v548
    %v2496 = vunpack.c.l.b16 %v549
    %v2497 = vunpack.c.h.b16 %v549
    %v2498 = vunpack.c.l.b16 %v550
    %v2499 = vunpack.c.h.b16 %v550
    %v2500 = vunpack.c.l.b16 %v551
    %v2501 = vunpack.c.l.b16 %v552
    %v2502 = vunpack.c.h.b16 %v552
    %v2503 = vunpack.c.l.b16 %v553
    %v2504 = vunpack.c.h.b16 %v553
    %v2505 = vunpack.c.l.b16 %v554
    %v2506 = vunpack.c.h.b16 %v554
    %v2507 = vunpack.c.l.b16 %v555
    %v2508 = vunpack.c.h.b16 %v555
    %v2509 = vunpack.c.l.b16 %v556
    %v2510 = vunpack.c.h.b16 %v556
    %v2511 = vunpack.c.l.b16 %v557
    %v2512 = vunpack.c.h.b16 %v557
    %v2513 = vunpack.c.l.b16 %v558
    %v2514 = vunpack.c.l.b16 %v559
    %v2515 = vunpack.c.h.b16 %v559
    %v2516 = vunpack.c.l.b16 %v560
    %v2517 = vunpack.c.h.b16 %v560
    %v2518 = vunpack.c.l.b16 %v561
    %v2519 = vunpack.c.h.b16 %v561
    %v2520 = vunpack.c.l.b16 %v562
    %v2521 = vunpack.c.h.b16 %v562
    %v2522 = vunpack.c.l.b16 %v563
    %v2523 = vunpack.c.h.b16 %v563
    %v2524 = vunpack.c.l.b16 %v564
    %v2525 = vunpack.c.h.b16 %v564
    %v2526 = vunpack.c.l.b16 %v565
    %v2527 = vunpack.c.l.b16 %v566
    %v2528 = vunpack.c.h.b16 %v566
    %v2529 = vunpack.c.l.b16 %v567
    %v2530 = vunpack.c.h.b16 %v567
    %v2531 = vunpack.c.l.b16 %v568
    %v2532 = vunpack.c.h.b16 %v568
    %v2533 = vunpack.c.l.b16 %v569
    %v2534 = vunpack.c.h.b16 %v569
    %v2535 = vunpack.c.l.b16 %v570
    %v2536 = vunpack.c.h.b16 %v570
    %v2537 = vunpack.c.l.b16 %v571
    %v2538 = vunpack.c.h.b16 %v571
    %v2539 = vunpack.c.l.b16 %v572
    %v2540 = vunpack.c.l.b16 %v573
    %v2541 = vunpack.c.h.b16 %v573
    %v2542 = vunpack.c.l.b16 %v574
    %v2543 = vunpack.c.h.b16 %v574
    %v2544 = vunpack.c.l.b16 %v575
    %v2545 = vunpack.c.h.b16 %v575
    %v2546 = vunpack.c.l.b16 %v576
    %v2547 = vunpack.c.h.b16 %v576
    %v2548 = vunpack.c.l.b16 %v577
    %v2549 = vunpack.c.h.b16 %v577
    %v2550 = vunpack.c.l.b16 %v578
    %v2551 = vunpack.c.h.b16 %v578
    %v2552 = vunpack.c.l.b16 %v579
    %v2553 = vunpack.c.l.b16 %v580
    %v2554 = vunpack.c.h.b16 %v580
    %v2555 = vunpack.c.l.b16 %v581
    %v2556 = vunpack.c.h.b16 %v581
    %v2557 = vunpack.c.l.b16 %v582
    %v2558 = vunpack.c.h.b16 %v582
    %v2559 = vunpack.c.l.b16 %v583
    %v2560 = vunpack.c.h.b16 %v583
    %v2561 = vunpack.c.l.b16 %v584
    %v2562 = vunpack.c.h.b16 %v584
    %v2563 = vunpack.c.l.b16 %v585
    %v2564 = vunpack.c.h.b16 %v585
    %v2565 = vunpack.c.l.b16 %v586
    %v2566 = vunpack.c.l.b16 %v587
    %v2567 = vunpack.c.h.b16 %v587
    %v2568 = vunpack.c.l.b16 %v588
    %v2569 = vunpack.c.h.b16 %v588
    %v2570 = vunpack.c.l.b16 %v589
    %v2571 = vunpack.c.h.b16 %v589
    %v2572 = vunpack.c.l.b16 %v590
    %v2573 = vunpack.c.h.b16 %v590
    %v2574 = vunpack.c.l.b16 %v591
    %v2575 = vunpack.c.h.b16 %v591
    %v2576 = vunpack.c.l.b16 %v592
    %v2577 = vunpack.c.h.b16 %v592
    %v2578 = vunpack.c.l.b16 %v593
    %v2579 = vunpack.c.l.b16 %v594
    %v2580 = vunpack.c.h.b16 %v594
    %v2581 = vunpack.c.l.b16 %v595
    %v2582 = vunpack.c.h.b16 %v595
    %v2583 = vunpack.c.l.b16 %v596
    %v2584 = vunpack.c.h.b16 %v596
    %v2585 = vunpack.c.l.b16 %v597
    %v2586 = vunpack.c.h.b16 %v597
    %v2587 = vunpack.c.l.b16 %v598
    %v2588 = vunpack.c.h.b16 %v598
    %v2589 = vunpack.c.l.b16 %v599
    %v2590 = vunpack.c.h.b16 %v599
    %v2591 = vunpack.c.l.b16 %v600
    %v2592 = vunpack.c.l.b16 %v601
    %v2593 = vunpack.c.h.b16 %v601
    %v2594 = vunpack.c.l.b16 %v602
    %v2595 = vunpack.c.h.b16 %v602
    %v2596 = vunpack.c.l.b16 %v603
    %v2597 = vunpack.c.h.b16 %v603
    %v2598 = vunpack.c.l.b16 %v604
    %v2599 = vunpack.c.h.b16 %v604
    %v2600 = vunpack.c.l.b16 %v605
    %v2601 = vunpack.c.h.b16 %v605
    %v2602 = vunpack.c.l.b16 %v606
    %v2603 = vunpack.c.h.b16 %v606
    %v2604 = vunpack.c.l.b16 %v607
    %v2605 = vunpack.c.l.b16 %v608
    %v2606 = vunpack.c.h.b16 %v608
    %v2607 = vunpack.c.l.b16 %v609
    %v2608 = vunpack.c.h.b16 %v609
    %v2609 = vunpack.c.l.b16 %v610
    %v2610 = vunpack.c.h.b16 %v610
    %v2611 = vunpack.c.l.b16 %v611
    %v2612 = vunpack.c.h.b16 %v611
    %v2613 = vunpack.c.l.b16 %v612
    %v2614 = vunpack.c.h.b16 %v612
    %v2615 = vunpack.c.l.b16 %v613
    %v2616 = vunpack.c.h.b16 %v613
    %v2617 = vunpack.c.l.b16 %v614
    %v2618 = vunpack.c.l.b16 %v615
    %v2619 = vunpack.c.h.b16 %v615
    %v2620 = vunpack.c.l.b16 %v616
    %v2621 = vunpack.c.h.b16 %v616
    %v2622 = vunpack.c.l.b16 %v617
    %v2623 = vunpack.c.h.b16 %v617
    %v2624 = vunpack.c.l.b16 %v618
    %v2625 = vunpack.c.h.b16 %v618
    %v2626 = vunpack.c.l.b16 %v619
    %v2627 = vunpack.c.h.b16 %v619
    %v2628 = vunpack.c.l.b16 %v620
    %v2629 = vunpack.c.h.b16 %v620
    %v2630 = vunpack.c.l.b16 %v621
    %v2631 = vunpack.c.l.b16 %v622
    %v2632 = vunpack.c.h.b16 %v622
    %v2633 = vunpack.c.l.b16 %v623
    %v2634 = vunpack.c.h.b16 %v623
    %v2635 = vunpack.c.l.b16 %v624
    %v2636 = vunpack.c.h.b16 %v624
    %v2637 = vunpack.c.l.b16 %v625
    %v2638 = vunpack.c.h.b16 %v625
    %v2639 = vunpack.c.l.b16 %v626
    %v2640 = vunpack.c.h.b16 %v626
    %v2641 = vunpack.c.l.b16 %v627
    %v2642 = vunpack.c.h.b16 %v627
    %v2643 = vunpack.c.l.b16 %v628
    %v2644 = vunpack.c.l.b16 %v629
    %v2645 = vunpack.c.h.b16 %v629
    %v2646 = vunpack.c.l.b16 %v630
    %v2647 = vunpack.c.h.b16 %v630
    %v2648 = vunpack.c.l.b16 %v631
    %v2649 = vunpack.c.h.b16 %v631
    %v2650 = vunpack.c.l.b16 %v632
    %v2651 = vunpack.c.h.b16 %v632
    %v2652 = vunpack.c.l.b16 %v633
    %v2653 = vunpack.c.h.b16 %v633
    %v2654 = vunpack.c.l.b16 %v634
    %v2655 = vunpack.c.h.b16 %v634
    %v2656 = vunpack.c.l.b16 %v635
    %v2657 = vunpack.c.l.b16 %v636
    %v2658 = vunpack.c.h.b16 %v636
    %v2659 = vunpack.c.l.b16 %v637
    %v2660 = vunpack.c.h.b16 %v637
    %v2661 = vunpack.c.l.b16 %v638
    %v2662 = vunpack.c.h.b16 %v638
    %v2663 = vunpack.c.l.b16 %v639
    %v2664 = vunpack.c.h.b16 %v639
    %v2665 = vunpack.c.l.b16 %v640
    %v2666 = vunpack.c.h.b16 %v640
    %v2667 = vunpack.c.l.b16 %v641
    %v2668 = vunpack.c.h.b16 %v641
    %v2669 = vunpack.c.l.b16 %v642
    %v2670 = vunpack.c.l.b16 %v643
    %v2671 = vunpack.c.h.b16 %v643
    %v2672 = vunpack.c.l.b16 %v644
    %v2673 = vunpack.c.h.b16 %v644
    %v2674 = vunpack.c.l.b16 %v645
    %v2675 = vunpack.c.h.b16 %v645
    %v2676 = vunpack.c.l.b16 %v646
    %v2677 = vunpack.c.h.b16 %v646
    %v2678 = vunpack.c.l.b16 %v647
    %v2679 = vunpack.c.h.b16 %v647
    %v2680 = vunpack.c.l.b16 %v648
    %v2681 = vunpack.c.h.b16 %v648
    %v2682 = vunpack.c.l.b16 %v649
    %v2683 = vunpack.c.l.b16 %v650
    %v2684 = vunpack.c.h.b16 %v650
    %v2685 = vunpack.c.l.b16 %v651
    %v2686 = vunpack.c.h.b16 %v651
    %v2687 = vunpack.c.l.b16 %v652
    %v2688 = vunpack.c.h.b16 %v652
    %v2689 = vunpack.c.l.b16 %v653
    %v2690 = vunpack.c.h.b16 %v653
    %v2691 = vunpack.c.l.b16 %v654
    %v2692 = vunpack.c.h.b16 %v654
    %v2693 = vunpack.c.l.b16 %v655
    %v2694 = vunpack.c.h.b16 %v655
    %v2695 = vunpack.c.l.b16 %v656
    %v2696 = vunpack.c.l.b16 %v657
    %v2697 = vunpack.c.h.b16 %v657
    %v2698 = vunpack.c.l.b16 %v658
    %v2699 = vunpack.c.h.b16 %v658
    %v2700 = vunpack.c.l.b16 %v659
    %v2701 = vunpack.c.h.b16 %v659
    %v2702 = vunpack.c.l.b16 %v660
    %v2703 = vunpack.c.h.b16 %v660
    %v2704 = vunpack.c.l.b16 %v661
    %v2705 = vunpack.c.h.b16 %v661
    %v2706 = vunpack.c.l.b16 %v662
    %v2707 = vunpack.c.h.b16 %v662
    %v2708 = vunpack.c.l.b16 %v663
    %v2709 = vunpack.c.l.b16 %v664
    %v2710 = vunpack.c.h.b16 %v664
    %v2711 = vunpack.c.l.b16 %v665
    %v2712 = vunpack.c.h.b16 %v665
    %v2713 = vunpack.c.l.b16 %v666
    %v2714 = vunpack.c.h.b16 %v666
    %v2715 = vunpack.c.l.b16 %v667
    %v2716 = vunpack.c.h.b16 %v667
    %v2717 = vunpack.c.l.b16 %v668
    %v2718 = vunpack.c.h.b16 %v668
    %v2719 = vunpack.c.l.b16 %v669
    %v2720 = vunpack.c.h.b16 %v669
    %v2721 = vunpack.c.l.b16 %v670
    %v2722 = vunpack.c.l.b16 %v671
    %v2723 = vunpack.c.h.b16 %v671
    %v2724 = vunpack.c.l.b16 %v672
    %v2725 = vunpack.c.h.b16 %v672
    %v2726 = vunpack.c.l.b16 %v673
    %v2727 = vunpack.c.h.b16 %v673
    %v2728 = vunpack.c.l.b16 %v674
    %v2729 = vunpack.c.h.b16 %v674
    %v2730 = vunpack.c.l.b16 %v675
    %v2731 = vunpack.c.h.b16 %v675
    %v2732 = vunpack.c.l.b16 %v676
    %v2733 = vunpack.c.h.b16 %v676
    %v2734 = vunpack.c.l.b16 %v677
    %v2735 = vunpack.c.l.b16 %v678
    %v2736 = vunpack.c.h.b16 %v678
    %v2737 = vunpack.c.l.b16 %v679
    %v2738 = vunpack.c.h.b16 %v679
    %v2739 = vunpack.c.l.b16 %v680
    %v2740 = vunpack.c.h.b16 %v680
    %v2741 = vunpack.c.l.b16 %v681
    %v2742 = vunpack.c.h.b16 %v681
    %v2743 = vunpack.c.l.b16 %v682
    %v2744 = vunpack.c.h.b16 %v682
    %v2745 = vunpack.c.l.b16 %v683
    %v2746 = vunpack.c.h.b16 %v683
    %v2747 = vunpack.c.l.b16 %v684
    %v2748 = vunpack.c.l.b16 %v685
    %v2749 = vunpack.c.h.b16 %v685
    %v2750 = vunpack.c.l.b16 %v686
    %v2751 = vunpack.c.h.b16 %v686
    %v2752 = vunpack.c.l.b16 %v687
    %v2753 = vunpack.c.h.b16 %v687
    %v2754 = vunpack.c.l.b16 %v688
    %v2755 = vunpack.c.h.b16 %v688
    %v2756 = vunpack.c.l.b16 %v689
    %v2757 = vunpack.c.h.b16 %v689
    %v2758 = vunpack.c.l.b16 %v690
    %v2759 = vunpack.c.h.b16 %v690
    %v2760 = vunpack.c.l.b16 %v691
    %v2761 = vunpack.c.l.b16 %v692
    %v2762 = vunpack.c.h.b16 %v692
    %v2763 = vunpack.c.l.b16 %v693
    %v2764 = vunpack.c.h.b16 %v693
    %v2765 = vunpack.c.l.b16 %v694
    %v2766 = vunpack.c.h.b16 %v694
    %v2767 = vunpack.c.l.b16 %v695
    %v2768 = vunpack.c.h.b16 %v695
    %v2769 = vunpack.c.l.b16 %v696
    %v2770 = vunpack.c.h.b16 %v696
    %v2771 = vunpack.c.l.b16 %v697
    %v2772 = vunpack.c.h.b16 %v697
    %v2773 = vunpack.c.l.b16 %v698
    %v2774 = vunpack.c.l.b16 %v699
    %v2775 = vunpack.c.h.b16 %v699
    %v2776 = vunpack.c.l.b16 %v700
    %v2777 = vunpack.c.h.b16 %v700
    %v2778 = vunpack.c.l.b16 %v701
    %v2779 = vunpack.c.h.b16 %v701
    %v2780 = vunpack.c.l.b16 %v702
    %v2781 = vunpack.c.h.b16 %v702
    %v2782 = vunpack.c.l.b16 %v703
    %v2783 = vunpack.c.h.b16 %v703
    %v2784 = vunpack.c.l.b16 %v704
    %v2785 = vunpack.c.h.b16 %v704
    %v2786 = vunpack.c.l.b16 %v705
    %v2787 = vunpack.c.l.b16 %v706
    %v2788 = vunpack.c.h.b16 %v706
    %v2789 = vunpack.c.l.b16 %v707
    %v2790 = vunpack.c.h.b16 %v707
    %v2791 = vunpack.c.l.b16 %v708
    %v2792 = vunpack.c.h.b16 %v708
    %v2793 = vunpack.c.l.b16 %v709
    %v2794 = vunpack.c.h.b16 %v709
    %v2795 = vunpack.c.l.b16 %v710
    %v2796 = vunpack.c.h.b16 %v710
    %v2797 = vunpack.c.l.b16 %v711
    %v2798 = vunpack.c.h.b16 %v711
    %v2799 = vunpack.c.l.b16 %v712
    %v2800 = vunpack.c.l.b16 %v713
    %v2801 = vunpack.c.h.b16 %v713
    %v2802 = vunpack.c.l.b16 %v714
    %v2803 = vunpack.c.h.b16 %v714
    %v2804 = vunpack.c.l.b16 %v715
    %v2805 = vunpack.c.h.b16 %v715
    %v2806 = vunpack.c.l.b16 %v716
    %v2807 = vunpack.c.h.b16 %v716
    %v2808 = vunpack.c.l.b16 %v717
    %v2809 = vunpack.c.h.b16 %v717
    %v2810 = vunpack.c.l.b16 %v718
    %v2811 = vunpack.c.h.b16 %v718
    %v2812 = vunpack.c.l.b16 %v719
    %v2813 = vunpack.c.l.b16 %v720
    %v2814 = vunpack.c.h.b16 %v720
    %v2815 = vunpack.c.l.b16 %v721
    %v2816 = vunpack.c.h.b16 %v721
    %v2817 = vunpack.c.l.b16 %v722
    %v2818 = vunpack.c.h.b16 %v722
    %v2819 = vunpack.c.l.b16 %v723
    %v2820 = vunpack.c.h.b16 %v723
    %v2821 = vunpack.c.l.b16 %v724
    %v2822 = vunpack.c.h.b16 %v724
    %v2823 = vunpack.c.l.b16 %v725
    %v2824 = vunpack.c.h.b16 %v725
    %v2825 = vunpack.c.l.b16 %v726
    %v2826 = vunpack.c.l.b16 %v727
    %v2827 = vunpack.c.h.b16 %v727
    %v2828 = vunpack.c.l.b16 %v728
    %v2829 = vunpack.c.h.b16 %v728
    %v2830 = vunpack.c.l.b16 %v729
    %v2831 = vunpack.c.h.b16 %v729
    %v2832 = vunpack.c.l.b16 %v730
    %v2833 = vunpack.c.h.b16 %v730
    %v2834 = vunpack.c.l.b16 %v731
    %v2835 = vunpack.c.h.b16 %v731
    %v2836 = vunpack.c.l.b16 %v732
    %v2837 = vunpack.c.h.b16 %v732
    %v2838 = vunpack.c.l.b16 %v733
    %v2839 = vunpack.c.l.b16 %v734
    %v2840 = vunpack.c.h.b16 %v734
    %v2841 = vunpack.c.l.b16 %v735
    %v2842 = vunpack.c.h.b16 %v735
    %v2843 = vunpack.c.l.b16 %v736
    %v2844 = vunpack.c.h.b16 %v736
    %v2845 = vunpack.c.l.b16 %v737
    %v2846 = vunpack.c.h.b16 %v737
    %v2847 = vunpack.c.l.b16 %v738
    %v2848 = vunpack.c.h.b16 %v738
    %v2849 = vunpack.c.l.b16 %v739
    %v2850 = vunpack.c.h.b16 %v739
    %v2851 = vunpack.c.l.b16 %v740
    %v2852 = vunpack.c.l.b16 %v741
    %v2853 = vunpack.c.h.b16 %v741
    %v2854 = vunpack.c.l.b16 %v742
    %v2855 = vunpack.c.h.b16 %v742
    %v2856 = vunpack.c.l.b16 %v743
    %v2857 = vunpack.c.h.b16 %v743
    %v2858 = vunpack.c.l.b16 %v744
    %v2859 = vunpack.c.h.b16 %v744
    %v2860 = vunpack.c.l.b16 %v745
    %v2861 = vunpack.c.h.b16 %v745
    %v2862 = vunpack.c.l.b16 %v746
    %v2863 = vunpack.c.h.b16 %v746
    %v2864 = vunpack.c.l.b16 %v747
    %v2865 = vunpack.c.l.b16 %v748
    %v2866 = vunpack.c.h.b16 %v748
    %v2867 = vunpack.c.l.b16 %v749
    %v2868 = vunpack.c.h.b16 %v749
    %v2869 = vunpack.c.l.b16 %v750
    %v2870 = vunpack.c.h.b16 %v750
    %v2871 = vunpack.c.l.b16 %v751
    %v2872 = vunpack.c.h.b16 %v751
    %v2873 = vunpack.c.l.b16 %v752
    %v2874 = vunpack.c.h.b16 %v752
    %v2875 = vunpack.c.l.b16 %v753
    %v2876 = vunpack.c.h.b16 %v753
    %v2877 = vunpack.c.l.b16 %v754
    %v2878 = vunpack.c.l.b16 %v755
    %v2879 = vunpack.c.h.b16 %v755
    %v2880 = vunpack.c.l.b16 %v756
    %v2881 = vunpack.c.h.b16 %v756
    %v2882 = vunpack.c.l.b16 %v757
    %v2883 = vunpack.c.h.b16 %v757
    %v2884 = vunpack.c.l.b16 %v758
    %v2885 = vunpack.c.h.b16 %v758
    %v2886 = vunpack.c.l.b16 %v759
    %v2887 = vunpack.c.h.b16 %v759
    %v2888 = vunpack.c.l.b16 %v760
    %v2889 = vunpack.c.h.b16 %v760
    %v2890 = vunpack.c.l.b16 %v761
    %v2891 = vunpack.c.l.b16 %v762
    %v2892 = vunpack.c.h.b16 %v762
    %v2893 = vunpack.c.l.b16 %v763
    %v2894 = vunpack.c.h.b16 %v763
    %v2895 = vunpack.c.l.b16 %v764
    %v2896 = vunpack.c.h.b16 %v764
    %v2897 = vunpack.c.l.b16 %v765
    %v2898 = vunpack.c.h.b16 %v765
    %v2899 = vunpack.c.l.b16 %v766
    %v2900 = vunpack.c.h.b16 %v766
    %v2901 = vunpack.c.l.b16 %v767
    %v2902 = vunpack.c.h.b16 %v767
    %v2903 = vunpack.c.l.b16 %v768
    %v2904 = vunpack.c.l.b16 %v769
    %v2905 = vunpack.c.h.b16 %v769
    %v2906 = vunpack.c.l.b16 %v770
    %v2907 = vunpack.c.h.b16 %v770
    %v2908 = vunpack.c.l.b16 %v771
    %v2909 = vunpack.c.h.b16 %v771
    %v2910 = vunpack.c.l.b16 %v772
    %v2911 = vunpack.c.h.b16 %v772
    %v2912 = vunpack.c.l.b16 %v773
    %v2913 = vunpack.c.h.b16 %v773
    %v2914 = vunpack.c.l.b16 %v774
    %v2915 = vunpack.c.h.b16 %v774
    %v2916 = vunpack.c.l.b16 %v775
    %v2917 = vunpack.c.l.b16 %v776
    %v2918 = vunpack.c.h.b16 %v776
    %v2919 = vunpack.c.l.b16 %v777
    %v2920 = vunpack.c.h.b16 %v777
    %v2921 = vunpack.c.l.b16 %v778
    %v2922 = vunpack.c.h.b16 %v778
    %v2923 = vunpack.c.l.b16 %v779
    %v2924 = vunpack.c.h.b16 %v779
    %v2925 = vunpack.c.l.b16 %v780
    %v2926 = vunpack.c.h.b16 %v780
    %v2927 = vunpack.c.l.b16 %v781
    %v2928 = vunpack.c.h.b16 %v781
    %v2929 = vunpack.c.l.b16 %v782
    %v2930 = vunpack.c.l.b16 %v783
    %v2931 = vunpack.c.h.b16 %v783
    %v2932 = vunpack.c.l.b16 %v784
    %v2933 = vunpack.c.h.b16 %v784
    %v2934 = vunpack.c.l.b16 %v785
    %v2935 = vunpack.c.h.b16 %v785
    %v2936 = vunpack.c.l.b16 %v786
    %v2937 = vunpack.c.h.b16 %v786
    %v2938 = vunpack.c.l.b16 %v787
    %v2939 = vunpack.c.h.b16 %v787
    %v2940 = vunpack.c.l.b16 %v788
    %v2941 = vunpack.c.h.b16 %v788
    %v2942 = vunpack.c.l.b16 %v789
    %v2943 = vunpack.c.l.b16 %v790
    %v2944 = vunpack.c.h.b16 %v790
    %v2945 = vunpack.c.l.b16 %v791
    %v2946 = vunpack.c.h.b16 %v791
    %v2947 = vunpack.c.l.b16 %v792
    %v2948 = vunpack.c.h.b16 %v792
    %v2949 = vunpack.c.l.b16 %v793
    %v2950 = vunpack.c.h.b16 %v793
    %v2951 = vunpack.c.l.b16 %v794
    %v2952 = vunpack.c.h.b16 %v794
    %v2953 = vunpack.c.l.b16 %v795
    %v2954 = vunpack.c.h.b16 %v795
    %v2955 = vunpack.c.l.b16 %v796
    %v2956 = vunpack.c.l.b16 %v797
    %v2957 = vunpack.c.h.b16 %v797
    %v2958 = vunpack.c.l.b16 %v798
    %v2959 = vunpack.c.h.b16 %v798
    %v2960 = vunpack.c.l.b16 %v799
    %v2961 = vunpack.c.h.b16 %v799
    %v2962 = vunpack.c.l.b16 %v800
    %v2963 = vunpack.c.h.b16 %v800
    %v2964 = vunpack.c.l.b16 %v801
    %v2965 = vunpack.c.h.b16 %v801
    %v2966 = vunpack.c.l.b16 %v802
    %v2967 = vunpack.c.h.b16 %v802
    %v2968 = vunpack.c.l.b16 %v803
    %v2969 = vunpack.c.l.b16 %v804
    %v2970 = vunpack.c.h.b16 %v804
    %v2971 = vunpack.c.l.b16 %v805
    %v2972 = vunpack.c.h.b16 %v805
    %v2973 = vunpack.c.l.b16 %v806
    %v2974 = vunpack.c.h.b16 %v806
    %v2975 = vunpack.c.l.b16 %v807
    %v2976 = vunpack.c.h.b16 %v807
    %v2977 = vunpack.c.l.b16 %v808
    %v2978 = vunpack.c.h.b16 %v808
    %v2979 = vunpack.c.l.b16 %v809
    %v2980 = vunpack.c.h.b16 %v809
    %v2981 = vunpack.c.l.b16 %v810
    %v2982 = vunpack.c.l.b16 %v811
    %v2983 = vunpack.c.h.b16 %v811
    %v2984 = vunpack.c.l.b16 %v812
    %v2985 = vunpack.c.h.b16 %v812
    %v2986 = vunpack.c.l.b16 %v813
    %v2987 = vunpack.c.h.b16 %v813
    %v2988 = vunpack.c.l.b16 %v814
    %v2989 = vunpack.c.h.b16 %v814
    %v2990 = vunpack.c.l.b16 %v815
    %v2991 = vunpack.c.h.b16 %v815
    %v2992 = vunpack.c.l.b16 %v816
    %v2993 = vunpack.c.h.b16 %v816
    %v2994 = vunpack.c.l.b16 %v817
    %v2995 = vunpack.c.l.b16 %v818
    %v2996 = vunpack.c.h.b16 %v818
    %v2997 = vunpack.c.l.b16 %v819
    %v2998 = vunpack.c.h.b16 %v819
    %v2999 = vunpack.c.l.b16 %v820
    %v3000 = vunpack.c.h.b16 %v820
    %v3001 = vunpack.c.l.b16 %v821
    %v3002 = vunpack.c.h.b16 %v821
    %v3003 = vunpack.c.l.b16 %v822
    %v3004 = vunpack.c.h.b16 %v822
    %v3005 = vunpack.c.l.b16 %v823
    %v3006 = vunpack.c.h.b16 %v823
    %v3007 = vunpack.c.l.b16 %v824
    %v3008 = vunpack.c.l.b16 %v825
    %v3009 = vunpack.c.h.b16 %v825
    %v3010 = vunpack.c.l.b16 %v826
    %v3011 = vunpack.c.h.b16 %v826
    %v3012 = vunpack.c.l.b16 %v827
    %v3013 = vunpack.c.h.b16 %v827
    %v3014 = vunpack.c.l.b16 %v828
    %v3015 = vunpack.c.h.b16 %v828
    %v3016 = vunpack.c.l.b16 %v829
    %v3017 = vunpack.c.h.b16 %v829
    %v3018 = vunpack.c.l.b16 %v830
    %v3019 = vunpack.c.h.b16 %v830
    %v3020 = vunpack.c.l.b16 %v831
    %v3021 = vunpack.c.l.b16 %v832
    %v3022 = vunpack.c.h.b16 %v832
    %v3023 = vunpack.c.l.b16 %v833
    %v3024 = vunpack.c.h.b16 %v833
    %v3025 = vunpack.c.l.b16 %v834
    %v3026 = vunpack.c.h.b16 %v834
    %v3027 = vunpack.c.l.b16 %v835
    %v3028 = vunpack.c.h.b16 %v835
    %v3029 = vunpack.c.l.b16 %v836
    %v3030 = vunpack.c.h.b16 %v836
    %v3031 = vunpack.c.l.b16 %v837
    %v3032 = vunpack.c.h.b16 %v837
    %v3033 = vunpack.c.l.b16 %v838
    %v3034 = vunpack.c.l.b16 %v839
    %v3035 = vunpack.c.h.b16 %v839
    %v3036 = vunpack.c.l.b16 %v840
    %v3037 = vunpack.c.h.b16 %v840
    %v3038 = vunpack.c.l.b16 %v841
    %v3039 = vunpack.c.h.b16 %v841
    %v3040 = vunpack.c.l.b16 %v842
    %v3041 = vunpack.c.h.b16 %v842
    %v3042 = vunpack.c.l.b16 %v843
    %v3043 = vunpack.c.h.b16 %v843
    %v3044 = vunpack.c.l.b16 %v844
    %v3045 = vunpack.c.h.b16 %v844
    %v3046 = vunpack.c.l.b16 %v845
    %v3047 = vunpack.c.l.b16 %v846
    %v3048 = vunpack.c.h.b16 %v846
    %v3049 = vunpack.c.l.b16 %v847
    %v3050 = vunpack.c.h.b16 %v847
    %v3051 = vunpack.c.l.b16 %v848
    %v3052 = vunpack.c.h.b16 %v848
    %v3053 = vunpack.c.l.b16 %v849
    %v3054 = vunpack.c.h.b16 %v849
    %v3055 = vunpack.c.l.b16 %v850
    %v3056 = vunpack.c.h.b16 %v850
    %v3057 = vunpack.c.l.b16 %v851
    %v3058 = vunpack.c.h.b16 %v851
    %v3059 = vunpack.c.l.b16 %v852
    %v3060 = vunpack.c.l.b16 %v853
    %v3061 = vunpack.c.h.b16 %v853
    %v3062 = vunpack.c.l.b16 %v854
    %v3063 = vunpack.c.h.b16 %v854
    %v3064 = vunpack.c.l.b16 %v855
    %v3065 = vunpack.c.h.b16 %v855
    %v3066 = vunpack.c.l.b16 %v856
    %v3067 = vunpack.c.h.b16 %v856
    %v3068 = vunpack.c.l.b16 %v857
    %v3069 = vunpack.c.h.b16 %v857
    %v3070 = vunpack.c.l.b16 %v858
    %v3071 = vunpack.c.h.b16 %v858
    %v3072 = vunpack.c.l.b16 %v859
    %v3073 = vunpack.c.l.b16 %v860
    %v3074 = vunpack.c.h.b16 %v860
    %v3075 = vunpack.c.l.b16 %v861
    %v3076 = vunpack.c.h.b16 %v861
    %v3077 = vunpack.c.l.b16 %v862
    %v3078 = vunpack.c.h.b16 %v862
    %v3079 = vunpack.c.l.b16 %v863
    %v3080 = vunpack.c.h.b16 %v863
    %v3081 = vunpack.c.l.b16 %v864
    %v3082 = vunpack.c.h.b16 %v864
    %v3083 = vunpack.c.l.b16 %v865
    %v3084 = vunpack.c.h.b16 %v865
    %v3085 = vunpack.c.l.b16 %v866
    %v3086 = vunpack.c.l.b16 %v867
    %v3087 = vunpack.c.h.b16 %v867
    %v3088 = vunpack.c.l.b16 %v868
    %v3089 = vunpack.c.h.b16 %v868
    %v3090 = vunpack.c.l.b16 %v869
    %v3091 = vunpack.c.h.b16 %v869
    %v3092 = vunpack.c.l.b16 %v870
    %v3093 = vunpack.c.h.b16 %v870
    %v3094 = vunpack.c.l.b16 %v871
    %v3095 = vunpack.c.h.b16 %v871
    %v3096 = vunpack.c.l.b16 %v872
    %v3097 = vunpack.c.h.b16 %v872
    %v3098 = vunpack.c.l.b16 %v873
    %v3099 = vunpack.c.l.b16 %v874
    %v3100 = vunpack.c.h.b16 %v874
    %v3101 = vunpack.c.l.b16 %v875
    %v3102 = vunpack.c.h.b16 %v875
    %v3103 = vunpack.c.l.b16 %v876
    %v3104 = vunpack.c.h.b16 %v876
    %v3105 = vunpack.c.l.b16 %v877
    %v3106 = vunpack.c.h.b16 %v877
    %v3107 = vunpack.c.l.b16 %v878
    %v3108 = vunpack.c.h.b16 %v878
    %v3109 = vunpack.c.l.b16 %v879
    %v3110 = vunpack.c.h.b16 %v879
    %v3111 = vunpack.c.l.b16 %v880
    %v3112 = vunpack.c.l.b16 %v881
    %v3113 = vunpack.c.h.b16 %v881
    %v3114 = vunpack.c.l.b16 %v882
    %v3115 = vunpack.c.h.b16 %v882
    %v3116 = vunpack.c.l.b16 %v883
    %v3117 = vunpack.c.h.b16 %v883
    %v3118 = vunpack.c.l.b16 %v884
    %v3119 = vunpack.c.h.b16 %v884
    %v3120 = vunpack.c.l.b16 %v885
    %v3121 = vunpack.c.h.b16 %v885
    %v3122 = vunpack.c.l.b16 %v886
    %v3123 = vunpack.c.h.b16 %v886
    %v3124 = vunpack.c.l.b16 %v887
    %v3125 = vunpack.c.l.b16 %v888
    %v3126 = vunpack.c.h.b16 %v888
    %v3127 = vunpack.c.l.b16 %v889
    %v3128 = vunpack.c.h.b16 %v889
    %v3129 = vunpack.c.l.b16 %v890
    %v3130 = vunpack.c.h.b16 %v890
    %v3131 = vunpack.c.l.b16 %v891
    %v3132 = vunpack.c.h.b16 %v891
    %v3133 = vunpack.c.l.b16 %v892
    %v3134 = vunpack.c.h.b16 %v892
    %v3135 = vunpack.c.l.b16 %v893
    %v3136 = vunpack.c.h.b16 %v893
    %v3137 = vunpack.c.l.b16 %v894
    %v3138 = vunpack.c.l.b16 %v895
    %v3139 = vunpack.c.h.b16 %v895
    %v3140 = vunpack.c.l.b16 %v896
    %v3141 = vunpack.c.h.b16 %v896
    %v3142 = vunpack.c.l.b16 %v897
    %v3143 = vunpack.c.h.b16 %v897
    %v3144 = vunpack.c.l.b16 %v898
    %v3145 = vunpack.c.h.b16 %v898
    %v3146 = vunpack.c.l.b16 %v899
    %v3147 = vunpack.c.h.b16 %v899
    %v3148 = vunpack.c.l.b16 %v900
    %v3149 = vunpack.c.h.b16 %v900
    %v3150 = vunpack.c.l.b16 %v901
    %v3151 = vunpack.c.l.b16 %v902
    %v3152 = vunpack.c.h.b16 %v902
    %v3153 = vunpack.c.l.b16 %v903
    %v3154 = vunpack.c.h.b16 %v903
    %v3155 = vunpack.c.l.b16 %v904
    %v3156 = vunpack.c.h.b16 %v904
    %v3157 = vunpack.c.l.b16 %v905
    %v3158 = vunpack.c.h.b16 %v905
    %v3159 = vunpack.c.l.b16 %v906
    %v3160 = vunpack.c.h.b16 %v906
    %v3161 = vunpack.c.l.b16 %v907
    %v3162 = vunpack.c.h.b16 %v907
    %v3163 = vunpack.c.l.b16 %v908
    %v3164 = vunpack.c.l.b16 %v909
    %v3165 = vunpack.c.h.b16 %v909
    %v3166 = vunpack.c.l.b16 %v910
    %v3167 = vunpack.c.h.b16 %v910
    %v3168 = vunpack.c.l.b16 %v911
    %v3169 = vunpack.c.h.b16 %v911
    %v3170 = vunpack.c.l.b16 %v912
    %v3171 = vunpack.c.h.b16 %v912
    %v3172 = vunpack.c.l.b16 %v913
    %v3173 = vunpack.c.h.b16 %v913
    %v3174 = vunpack.c.l.b16 %v914
    %v3175 = vunpack.c.h.b16 %v914
    %v3176 = vunpack.c.l.b16 %v915
    %v3177 = vunpack.c.l.b16 %v916
    %v3178 = vunpack.c.h.b16 %v916
    %v3179 = vunpack.c.l.b16 %v917
    %v3180 = vunpack.c.h.b16 %v917
    %v3181 = vunpack.c.l.b16 %v918
    %v3182 = vunpack.c.h.b16 %v918
    %v3183 = vunpack.c.l.b16 %v919
    %v3184 = vunpack.c.h.b16 %v919
    %v3185 = vunpack.c.l.b16 %v920
    %v3186 = vunpack.c.h.b16 %v920
    %v3187 = vunpack.c.l.b16 %v921
    %v3188 = vunpack.c.h.b16 %v921
    %v3189 = vunpack.c.l.b16 %v922
    %v3190 = vunpack.c.l.b16 %v923
    %v3191 = vunpack.c.h.b16 %v923
    %v3192 = vunpack.c.l.b16 %v924
    %v3193 = vunpack.c.h.b16 %v924
    %v3194 = vunpack.c.l.b16 %v925
    %v3195 = vunpack.c.h.b16 %v925
    %v3196 = vunpack.c.l.b16 %v926
    %v3197 = vunpack.c.h.b16 %v926
    %v3198 = vunpack.c.l.b16 %v927
    %v3199 = vunpack.c.h.b16 %v927
    %v3200 = vunpack.c.l.b16 %v928
    %v3201 = vunpack.c.h.b16 %v928
    %v3202 = vunpack.c.l.b16 %v929
    %v3203 = vunpack.c.l.b16 %v930
    %v3204 = vunpack.c.h.b16 %v930
    %v3205 = vunpack.c.l.b16 %v931
    %v3206 = vunpack.c.h.b16 %v931
    %v3207 = vunpack.c.l.b16 %v932
    %v3208 = vunpack.c.h.b16 %v932
    %v3209 = vunpack.c.l.b16 %v933
    %v3210 = vunpack.c.h.b16 %v933
    %v3211 = vunpack.c.l.b16 %v934
    %v3212 = vunpack.c.h.b16 %v934
    %v3213 = vunpack.c.l.b16 %v935
    %v3214 = vunpack.c.h.b16 %v935
    %v3215 = vunpack.c.l.b16 %v936
    %v3216 = vunpack.c.l.b16 %v937
    %v3217 = vunpack.c.h.b16 %v937
    %v3218 = vunpack.c.l.b16 %v938
    %v3219 = vunpack.c.h.b16 %v938
    %v3220 = vunpack.c.l.b16 %v939
    %v3221 = vunpack.c.h.b16 %v939
    %v3222 = vunpack.c.l.b16 %v940
    %v3223 = vunpack.c.h.b16 %v940
    %v3224 = vunpack.c.l.b16 %v941
    %v3225 = vunpack.c.h.b16 %v941
    %v3226 = vunpack.c.l.b16 %v942
    %v3227 = vunpack.c.h.b16 %v942
    %v3228 = vunpack.c.l.b16 %v943
    %v3229 = vunpack.c.l.b16 %v944
    %v3230 = vunpack.c.h.b16 %v944
    %v3231 = vunpack.c.l.b16 %v945
    %v3232 = vunpack.c.h.b16 %v945
    %v3233 = vunpack.c.l.b16 %v946
    %v3234 = vunpack.c.h.b16 %v946
    %v3235 = vunpack.c.l.b16 %v947
    %v3236 = vunpack.c.h.b16 %v947
    %v3237 = vunpack.c.l.b16 %v948
    %v3238 = vunpack.c.h.b16 %v948
    %v3239 = vunpack.c.l.b16 %v949
    %v3240 = vunpack.c.h.b16 %v949
    %v3241 = vunpack.c.l.b16 %v950
    %v3242 = vunpack.c.l.b16 %v951
    %v3243 = vunpack.c.h.b16 %v951
    %v3244 = vunpack.c.l.b16 %v952
    %v3245 = vunpack.c.h.b16 %v952
    %v3246 = vunpack.c.l.b16 %v953
    %v3247 = vunpack.c.h.b16 %v953
    %v3248 = vunpack.c.l.b16 %v954
    %v3249 = vunpack.c.h.b16 %v954
    %v3250 = vunpack.c.l.b16 %v955
    %v3251 = vunpack.c.h.b16 %v955
    %v3252 = vunpack.c.l.b16 %v956
    %v3253 = vunpack.c.h.b16 %v956
    %v3254 = vunpack.c.l.b16 %v957
    %v3255 = vunpack.c.l.b16 %v958
    %v3256 = vunpack.c.h.b16 %v958
    %v3257 = vunpack.c.l.b16 %v959
    %v3258 = vunpack.c.h.b16 %v959
    %v3259 = vunpack.c.l.b16 %v960
    %v3260 = vunpack.c.h.b16 %v960
    %v3261 = vunpack.c.l.b16 %v961
    %v3262 = vunpack.c.h.b16 %v961
    %v3263 = vunpack.c.l.b16 %v962
    %v3264 = vunpack.c.h.b16 %v962
    %v3265 = vunpack.c.l.b16 %v963
    %v3266 = vunpack.c.h.b16 %v963
    %v3267 = vunpack.c.l.b16 %v964
    %v3268 = vunpack.c.l.b16 %v965
    %v3269 = vunpack.c.h.b16 %v965
    %v3270 = vunpack.c.l.b16 %v966
    %v3271 = vunpack.c.h.b16 %v966
    %v3272 = vunpack.c.l.b16 %v967
    %v3273 = vunpack.c.h.b16 %v967
    %v3274 = vunpack.c.l.b16 %v968
    %v3275 = vunpack.c.h.b16 %v968
    %v3276 = vunpack.c.l.b16 %v969
    %v3277 = vunpack.c.h.b16 %v969
    %v3278 = vunpack.c.l.b16 %v970
    %v3279 = vunpack.c.h.b16 %v970
    %v3280 = vunpack.c.l.b16 %v971
    %v3281 = vpack.c.b16 %v1838, %v1825
    %v3282 = vpack.c.b16 %v1839, %v1826
    %v3283 = vpack.c.b16 %v1840, %v1827
    %v3284 = vpack.c.b16 %v1841, %v1828
    %v3285 = vpack.c.b16 %v1842, %v1829
    %v3286 = vpack.c.b16 %v1843, %v1830
    %v3287 = vpack.c.b16 %v1844, %v1831
    %v3288 = vpack.c.b16 %v1845, %v1832
    %v3289 = vpack.c.b16 %v1846, %v1833
    %v3290 = vpack.c.b16 %v1847, %v1834
    %v3291 = vpack.c.b16 %v1848, %v1835
    %v3292 = vpack.c.b16 %v1849, %v1836
    %v3293 = vpack.c.b16 %v1850, %v1837
    %v3294 = vpack.c.b16 %v1864, %v1851
    %v3295 = vpack.c.b16 %v1865, %v1852
    %v3296 = vpack.c.b16 %v1866, %v1853
    %v3297 = vpack.c.b16 %v1867, %v1854
    %v3298 = vpack.c.b16 %v1868, %v1855
    %v3299 = vpack.c.b16 %v1869, %v1856
    %v3300 = vpack.c.b16 %v1870, %v1857
    %v3301 = vpack.c.b16 %v1871, %v1858
    %v3302 = vpack.c.b16 %v1872, %v1859
    %v3303 = vpack.c.b16 %v1873, %v1860
    %v3304 = vpack.c.b16 %v1874, %v1861
    %v3305 = vpack.c.b16 %v1875, %v1862
    %v3306 = vpack.c.b16 %v1876, %v1863
    %v3307 = vpack.c.b16 %v1890, %v1877
    %v3308 = vpack.c.b16 %v1891, %v1878
    %v3309 = vpack.c.b16 %v1892, %v1879
    %v3310 = vpack.c.b16 %v1893, %v1880
    %v3311 = vpack.c.b16 %v1894, %v1881
    %v3312 = vpack.c.b16 %v1895, %v1882
    %v3313 = vpack.c.b16 %v1896, %v1883
    %v3314 = vpack.c.b16 %v1897, %v1884
    %v3315 = vpack.c.b16 %v1898, %v1885
    %v3316 = vpack.c.b16 %v1899, %v1886
    %v3317 = vpack.c.b16 %v1900, %v1887
    %v3318 = vpack.c.b16 %v1901, %v1888
    %v3319 = vpack.c.b16 %v1902, %v1889
    %v3320 = vpack.c.b16 %v1916, %v1903
    %v3321 = vpack.c.b16 %v1917, %v1904
    %v3322 = vpack.c.b16 %v1918, %v1905
    %v3323 = vpack.c.b16 %v1919, %v1906
    %v3324 = vpack.c.b16 %v1920, %v1907
    %v3325 = vpack.c.b16 %v1921, %v1908
    %v3326 = vpack.c.b16 %v1922, %v1909
    %v3327 = vpack.c.b16 %v1923, %v1910
    %v3328 = vpack.c.b16 %v1924, %v1911
    %v3329 = vpack.c.b16 %v1925, %v1912
    %v3330 = vpack.c.b16 %v1926, %v1913
    %v3331 = vpack.c.b16 %v1927, %v1914
    %v3332 = vpack.c.b16 %v1928, %v1915
    %v3333 = vpack.c.b16 %v1942, %v1929
    %v3334 = vpack.c.b16 %v1943, %v1930
    %v3335 = vpack.c.b16 %v1944, %v1931
    %v3336 = vpack.c.b16 %v1945, %v1932
    %v3337 = vpack.c.b16 %v1946, %v1933
    %v3338 = vpack.c.b16 %v1947, %v1934
    %v3339 = vpack.c.b16 %v1948, %v1935
    %v3340 = vpack.c.b16 %v1949, %v1936
    %v3341 = vpack.c.b16 %v1950, %v1937
    %v3342 = vpack.c.b16 %v1951, %v1938
    %v3343 = vpack.c.b16 %v1952, %v1939
    %v3344 = vpack.c.b16 %v1953, %v1940
    %v3345 = vpack.c.b16 %v1954, %v1941
    %v3346 = vpack.c.b16 %v1968, %v1955
    %v3347 = vpack.c.b16 %v1969, %v1956
    %v3348 = vpack.c.b16 %v1970, %v1957
    %v3349 = vpack.c.b16 %v1971, %v1958
    %v3350 = vpack.c.b16 %v1972, %v1959
    %v3351 = vpack.c.b16 %v1973, %v1960
    %v3352 = vpack.c.b16 %v1974, %v1961
    %v3353 = vpack.c.b16 %v1975, %v1962
    %v3354 = vpack.c.b16 %v1976, %v1963
    %v3355 = vpack.c.b16 %v1977, %v1964
    %v3356 = vpack.c.b16 %v1978, %v1965
    %v3357 = vpack.c.b16 %v1979, %v1966
    %v3358 = vpack.c.b16 %v1980, %v1967
    %v3359 = vpack.c.b16 %v1994, %v1981
    %v3360 = vpack.c.b16 %v1995, %v1982
    %v3361 = vpack.c.b16 %v1996, %v1983
    %v3362 = vpack.c.b16 %v1997, %v1984
    %v3363 = vpack.c.b16 %v1998, %v1985
    %v3364 = vpack.c.b16 %v1999, %v1986
    %v3365 = vpack.c.b16 %v2000, %v1987
    %v3366 = vpack.c.b16 %v2001, %v1988
    %v3367 = vpack.c.b16 %v2002, %v1989
    %v3368 = vpack.c.b16 %v2003, %v1990
    %v3369 = vpack.c.b16 %v2004, %v1991
    %v3370 = vpack.c.b16 %v2005, %v1992
    %v3371 = vpack.c.b16 %v2006, %v1993
    %v3372 = vpack.c.b16 %v2020, %v2007
    %v3373 = vpack.c.b16 %v2021, %v2008
    %v3374 = vpack.c.b16 %v2022, %v2009
    %v3375 = vpack.c.b16 %v2023, %v2010
    %v3376 = vpack.c.b16 %v2024, %v2011
    %v3377 = vpack.c.b16 %v2025, %v2012
    %v3378 = vpack.c.b16 %v2026, %v2013
    %v3379 = vpack.c.b16 %v2027, %v2014
    %v3380 = vpack.c.b16 %v2028, %v2015
    %v3381 = vpack.c.b16 %v2029, %v2016
    %v3382 = vpack.c.b16 %v2030, %v2017
    %v3383 = vpack.c.b16 %v2031, %v2018
    %v3384 = vpack.c.b16 %v2032, %v2019
    %v3385 = vpack.c.b16 %v2046, %v2033
    %v3386 = vpack.c.b16 %v2047, %v2034
    %v3387 = vpack.c.b16 %v2048, %v2035
    %v3388 = vpack.c.b16 %v2049, %v2036
    %v3389 = vpack.c.b16 %v2050, %v2037
    %v3390 = vpack.c.b16 %v2051, %v2038
    %v3391 = vpack.c.b16 %v2052, %v2039
    %v3392 = vpack.c.b16 %v2053, %v2040
    %v3393 = vpack.c.b16 %v2054, %v2041
    %v3394 = vpack.c.b16 %v2055, %v2042
    %v3395 = vpack.c.b16 %v2056, %v2043
    %v3396 = vpack.c.b16 %v2057, %v2044
    %v3397 = vpack.c.b16 %v2058, %v2045
    %v3398 = vpack.c.b16 %v2072, %v2059
    %v3399 = vpack.c.b16 %v2073, %v2060
    %v3400 = vpack.c.b16 %v2074, %v2061
    %v3401 = vpack.c.b16 %v2075, %v2062
    %v3402 = vpack.c.b16 %v2076, %v2063
    %v3403 = vpack.c.b16 %v2077, %v2064
    %v3404 = vpack.c.b16 %v2078, %v2065
    %v3405 = vpack.c.b16 %v2079, %v2066
    %v3406 = vpack.c.b16 %v2080, %v2067
    %v3407 = vpack.c.b16 %v2081, %v2068
    %v3408 = vpack.c.b16 %v2082, %v2069
    %v3409 = vpack.c.b16 %v2083, %v2070
    %v3410 = vpack.c.b16 %v2084, %v2071
    %v3411 = vpack.c.b16 %v2098, %v2085
    %v3412 = vpack.c.b16 %v2099, %v2086
    %v3413 = vpack.c.b16 %v2100, %v2087
    %v3414 = vpack.c.b16 %v2101, %v2088
    %v3415 = vpack.c.b16 %v2102, %v2089
    %v3416 = vpack.c.b16 %v2103, %v2090
    %v3417 = vpack.c.b16 %v2104, %v2091
    %v3418 = vpack.c.b16 %v2105, %v2092
    %v3419 = vpack.c.b16 %v2106, %v2093
    %v3420 = vpack.c.b16 %v2107, %v2094
    %v3421 = vpack.c.b16 %v2108, %v2095
    %v3422 = vpack.c.b16 %v2109, %v2096
    %v3423 = vpack.c.b16 %v2110, %v2097
    %v3424 = vpack.c.b16 %v2124, %v2111
    %v3425 = vpack.c.b16 %v2125, %v2112
    %v3426 = vpack.c.b16 %v2126, %v2113
    %v3427 = vpack.c.b16 %v2127, %v2114
    %v3428 = vpack.c.b16 %v2128, %v2115
    %v3429 = vpack.c.b16 %v2129, %v2116
    %v3430 = vpack.c.b16 %v2130, %v2117
    %v3431 = vpack.c.b16 %v2131, %v2118
    %v3432 = vpack.c.b16 %v2132, %v2119
    %v3433 = vpack.c.b16 %v2133, %v2120
    %v3434 = vpack.c.b16 %v2134, %v2121
    %v3435 = vpack.c.b16 %v2135, %v2122
    %v3436 = vpack.c.b16 %v2136, %v2123
    %v3437 = vpack.c.b16 %v2150, %v2137
    %v3438 = vpack.c.b16 %v2151, %v2138
    %v3439 = vpack.c.b16 %v2152, %v2139
    %v3440 = vpack.c.b16 %v2153, %v2140
    %v3441 = vpack.c.b16 %v2154, %v2141
    %v3442 = vpack.c.b16 %v2155, %v2142
    %v3443 = vpack.c.b16 %v2156, %v2143
    %v3444 = vpack.c.b16 %v2157, %v2144
    %v3445 = vpack.c.b16 %v2158, %v2145
    %v3446 = vpack.c.b16 %v2159, %v2146
    %v3447 = vpack.c.b16 %v2160, %v2147
    %v3448 = vpack.c.b16 %v2161, %v2148
    %v3449 = vpack.c.b16 %v2162, %v2149
    %v3450 = vpack.c.b16 %v2176, %v2163
    %v3451 = vpack.c.b16 %v2177, %v2164
    %v3452 = vpack.c.b16 %v2178, %v2165
    %v3453 = vpack.c.b16 %v2179, %v2166
    %v3454 = vpack.c.b16 %v2180, %v2167
    %v3455 = vpack.c.b16 %v2181, %v2168
    %v3456 = vpack.c.b16 %v2182, %v2169
    %v3457 = vpack.c.b16 %v2183, %v2170
    %v3458 = vpack.c.b16 %v2184, %v2171
    %v3459 = vpack.c.b16 %v2185, %v2172
    %v3460 = vpack.c.b16 %v2186, %v2173
    %v3461 = vpack.c.b16 %v2187, %v2174
    %v3462 = vpack.c.b16 %v2188, %v2175
    %v3463 = vpack.c.b16 %v2202, %v2189
    %v3464 = vpack.c.b16 %v2203, %v2190
    %v3465 = vpack.c.b16 %v2204, %v2191
    %v3466 = vpack.c.b16 %v2205, %v2192
    %v3467 = vpack.c.b16 %v2206, %v2193
    %v3468 = vpack.c.b16 %v2207, %v2194
    %v3469 = vpack.c.b16 %v2208, %v2195
    %v3470 = vpack.c.b16 %v2209, %v2196
    %v3471 = vpack.c.b16 %v2210, %v2197
    %v3472 = vpack.c.b16 %v2211, %v2198
    %v3473 = vpack.c.b16 %v2212, %v2199
    %v3474 = vpack.c.b16 %v2213, %v2200
    %v3475 = vpack.c.b16 %v2214, %v2201
    %v3476 = vpack.c.b16 %v2228, %v2215
    %v3477 = vpack.c.b16 %v2229, %v2216
    %v3478 = vpack.c.b16 %v2230, %v2217
    %v3479 = vpack.c.b16 %v2231, %v2218
    %v3480 = vpack.c.b16 %v2232, %v2219
    %v3481 = vpack.c.b16 %v2233, %v2220
    %v3482 = vpack.c.b16 %v2234, %v2221
    %v3483 = vpack.c.b16 %v2235, %v2222
    %v3484 = vpack.c.b16 %v2236, %v2223
    %v3485 = vpack.c.b16 %v2237, %v2224
    %v3486 = vpack.c.b16 %v2238, %v2225
    %v3487 = vpack.c.b16 %v2239, %v2226
    %v3488 = vpack.c.b16 %v2240, %v2227
    %v3489 = vpack.c.b16 %v2254, %v2241
    %v3490 = vpack.c.b16 %v2255, %v2242
    %v3491 = vpack.c.b16 %v2256, %v2243
    %v3492 = vpack.c.b16 %v2257, %v2244
    %v3493 = vpack.c.b16 %v2258, %v2245
    %v3494 = vpack.c.b16 %v2259, %v2246
    %v3495 = vpack.c.b16 %v2260, %v2247
    %v3496 = vpack.c.b16 %v2261, %v2248
    %v3497 = vpack.c.b16 %v2262, %v2249
    %v3498 = vpack.c.b16 %v2263, %v2250
    %v3499 = vpack.c.b16 %v2264, %v2251
    %v3500 = vpack.c.b16 %v2265, %v2252
    %v3501 = vpack.c.b16 %v2266, %v2253
    %v3502 = vpack.c.b16 %v2280, %v2267
    %v3503 = vpack.c.b16 %v2281, %v2268
    %v3504 = vpack.c.b16 %v2282, %v2269
    %v3505 = vpack.c.b16 %v2283, %v2270
    %v3506 = vpack.c.b16 %v2284, %v2271
    %v3507 = vpack.c.b16 %v2285, %v2272
    %v3508 = vpack.c.b16 %v2286, %v2273
    %v3509 = vpack.c.b16 %v2287, %v2274
    %v3510 = vpack.c.b16 %v2288, %v2275
    %v3511 = vpack.c.b16 %v2289, %v2276
    %v3512 = vpack.c.b16 %v2290, %v2277
    %v3513 = vpack.c.b16 %v2291, %v2278
    %v3514 = vpack.c.b16 %v2292, %v2279
    %v3515 = vpack.c.b16 %v2306, %v2293
    %v3516 = vpack.c.b16 %v2307, %v2294
    %v3517 = vpack.c.b16 %v2308, %v2295
    %v3518 = vpack.c.b16 %v2309, %v2296
    %v3519 = vpack.c.b16 %v2310, %v2297
    %v3520 = vpack.c.b16 %v2311, %v2298
    %v3521 = vpack.c.b16 %v2312, %v2299
    %v3522 = vpack.c.b16 %v2313, %v2300
    %v3523 = vpack.c.b16 %v2314, %v2301
    %v3524 = vpack.c.b16 %v2315, %v2302
    %v3525 = vpack.c.b16 %v2316, %v2303
    %v3526 = vpack.c.b16 %v2317, %v2304
    %v3527 = vpack.c.b16 %v2318, %v2305
    %v3528 = vpack.c.b16 %v2332, %v2319
    %v3529 = vpack.c.b16 %v2333, %v2320
    %v3530 = vpack.c.b16 %v2334, %v2321
    %v3531 = vpack.c.b16 %v2335, %v2322
    %v3532 = vpack.c.b16 %v2336, %v2323
    %v3533 = vpack.c.b16 %v2337, %v2324
    %v3534 = vpack.c.b16 %v2338, %v2325
    %v3535 = vpack.c.b16 %v2339, %v2326
    %v3536 = vpack.c.b16 %v2340, %v2327
    %v3537 = vpack.c.b16 %v2341, %v2328
    %v3538 = vpack.c.b16 %v2342, %v2329
    %v3539 = vpack.c.b16 %v2343, %v2330
    %v3540 = vpack.c.b16 %v2344, %v2331
    %v3541 = vpack.c.b16 %v2358, %v2345
    %v3542 = vpack.c.b16 %v2359, %v2346
    %v3543 = vpack.c.b16 %v2360, %v2347
    %v3544 = vpack.c.b16 %v2361, %v2348
    %v3545 = vpack.c.b16 %v2362, %v2349
    %v3546 = vpack.c.b16 %v2363, %v2350
    %v3547 = vpack.c.b16 %v2364, %v2351
    %v3548 = vpack.c.b16 %v2365, %v2352
    %v3549 = vpack.c.b16 %v2366, %v2353
    %v3550 = vpack.c.b16 %v2367, %v2354
    %v3551 = vpack.c.b16 %v2368, %v2355
    %v3552 = vpack.c.b16 %v2369, %v2356
    %v3553 = vpack.c.b16 %v2370, %v2357
    %v3554 = vpack.c.b16 %v2384, %v2371
    %v3555 = vpack.c.b16 %v2385, %v2372
    %v3556 = vpack.c.b16 %v2386, %v2373
    %v3557 = vpack.c.b16 %v2387, %v2374
    %v3558 = vpack.c.b16 %v2388, %v2375
    %v3559 = vpack.c.b16 %v2389, %v2376
    %v3560 = vpack.c.b16 %v2390, %v2377
    %v3561 = vpack.c.b16 %v2391, %v2378
    %v3562 = vpack.c.b16 %v2392, %v2379
    %v3563 = vpack.c.b16 %v2393, %v2380
    %v3564 = vpack.c.b16 %v2394, %v2381
    %v3565 = vpack.c.b16 %v2395, %v2382
    %v3566 = vpack.c.b16 %v2396, %v2383
    %v3567 = vpack.c.b16 %v2410, %v2397
    %v3568 = vpack.c.b16 %v2411, %v2398
    %v3569 = vpack.c.b16 %v2412, %v2399
    %v3570 = vpack.c.b16 %v2413, %v2400
    %v3571 = vpack.c.b16 %v2414, %v2401
    %v3572 = vpack.c.b16 %v2415, %v2402
    %v3573 = vpack.c.b16 %v2416, %v2403
    %v3574 = vpack.c.b16 %v2417, %v2404
    %v3575 = vpack.c.b16 %v2418, %v2405
    %v3576 = vpack.c.b16 %v2419, %v2406
    %v3577 = vpack.c.b16 %v2420, %v2407
    %v3578 = vpack.c.b16 %v2421, %v2408
    %v3579 = vpack.c.b16 %v2422, %v2409
    %v3580 = vpack.c.b16 %v2436, %v2423
    %v3581 = vpack.c.b16 %v2437, %v2424
    %v3582 = vpack.c.b16 %v2438, %v2425
    %v3583 = vpack.c.b16 %v2439, %v2426
    %v3584 = vpack.c.b16 %v2440, %v2427
    %v3585 = vpack.c.b16 %v2441, %v2428
    %v3586 = vpack.c.b16 %v2442, %v2429
    %v3587 = vpack.c.b16 %v2443, %v2430
    %v3588 = vpack.c.b16 %v2444, %v2431
    %v3589 = vpack.c.b16 %v2445, %v2432
    %v3590 = vpack.c.b16 %v2446, %v2433
    %v3591 = vpack.c.b16 %v2447, %v2434
    %v3592 = vpack.c.b16 %v2448, %v2435
    %v3593 = vpack.c.b16 %v2462, %v2449
    %v3594 = vpack.c.b16 %v2463, %v2450
    %v3595 = vpack.c.b16 %v2464, %v2451
    %v3596 = vpack.c.b16 %v2465, %v2452
    %v3597 = vpack.c.b16 %v2466, %v2453
    %v3598 = vpack.c.b16 %v2467, %v2454
    %v3599 = vpack.c.b16 %v2468, %v2455
    %v3600 = vpack.c.b16 %v2469, %v2456
    %v3601 = vpack.c.b16 %v2470, %v2457
    %v3602 = vpack.c.b16 %v2471, %v2458
    %v3603 = vpack.c.b16 %v2472, %v2459
    %v3604 = vpack.c.b16 %v2473, %v2460
    %v3605 = vpack.c.b16 %v2474, %v2461
    %v3606 = vpack.c.b16 %v2488, %v2475
    %v3607 = vpack.c.b16 %v2489, %v2476
    %v3608 = vpack.c.b16 %v2490, %v2477
    %v3609 = vpack.c.b16 %v2491, %v2478
    %v3610 = vpack.c.b16 %v2492, %v2479
    %v3611 = vpack.c.b16 %v2493, %v2480
    %v3612 = vpack.c.b16 %v2494, %v2481
    %v3613 = vpack.c.b16 %v2495, %v2482
    %v3614 = vpack.c.b16 %v2496, %v2483
    %v3615 = vpack.c.b16 %v2497, %v2484
    %v3616 = vpack.c.b16 %v2498, %v2485
    %v3617 = vpack.c.b16 %v2499, %v2486
    %v3618 = vpack.c.b16 %v2500, %v2487
    %v3619 = vpack.c.b16 %v2514, %v2501
    %v3620 = vpack.c.b16 %v2515, %v2502
    %v3621 = vpack.c.b16 %v2516, %v2503
    %v3622 = vpack.c.b16 %v2517, %v2504
    %v3623 = vpack.c.b16 %v2518, %v2505
    %v3624 = vpack.c.b16 %v2519, %v2506
    %v3625 = vpack.c.b16 %v2520, %v2507
    %v3626 = vpack.c.b16 %v2521, %v2508
    %v3627 = vpack.c.b16 %v2522, %v2509
    %v3628 = vpack.c.b16 %v2523, %v2510
    %v3629 = vpack.c.b16 %v2524, %v2511
    %v3630 = vpack.c.b16 %v2525, %v2512
    %v3631 = vpack.c.b16 %v2526, %v2513
    %v3632 = vpack.c.b16 %v2540, %v2527
    %v3633 = vpack.c.b16 %v2541, %v2528
    %v3634 = vpack.c.b16 %v2542, %v2529
    %v3635 = vpack.c.b16 %v2543, %v2530
    %v3636 = vpack.c.b16 %v2544, %v2531
    %v3637 = vpack.c.b16 %v2545, %v2532
    %v3638 = vpack.c.b16 %v2546, %v2533
    %v3639 = vpack.c.b16 %v2547, %v2534
    %v3640 = vpack.c.b16 %v2548, %v2535
    %v3641 = vpack.c.b16 %v2549, %v2536
    %v3642 = vpack.c.b16 %v2550, %v2537
    %v3643 = vpack.c.b16 %v2551, %v2538
    %v3644 = vpack.c.b16 %v2552, %v2539
    %v3645 = vpack.c.b16 %v2566, %v2553
    %v3646 = vpack.c.b16 %v2567, %v2554
    %v3647 = vpack.c.b16 %v2568, %v2555
    %v3648 = vpack.c.b16 %v2569, %v2556
    %v3649 = vpack.c.b16 %v2570, %v2557
    %v3650 = vpack.c.b16 %v2571, %v2558
    %v3651 = vpack.c.b16 %v2572, %v2559
    %v3652 = vpack.c.b16 %v2573, %v2560
    %v3653 = vpack.c.b16 %v2574, %v2561
    %v3654 = vpack.c.b16 %v2575, %v2562
    %v3655 = vpack.c.b16 %v2576, %v2563
    %v3656 = vpack.c.b16 %v2577, %v2564
    %v3657 = vpack.c.b16 %v2578, %v2565
    %v3658 = vpack.c.b16 %v2592, %v2579
    %v3659 = vpack.c.b16 %v2593, %v2580
    %v3660 = vpack.c.b16 %v2594, %v2581
    %v3661 = vpack.c.b16 %v2595, %v2582
    %v3662 = vpack.c.b16 %v2596, %v2583
    %v3663 = vpack.c.b16 %v2597, %v2584
    %v3664 = vpack.c.b16 %v2598, %v2585
    %v3665 = vpack.c.b16 %v2599, %v2586
    %v3666 = vpack.c.b16 %v2600, %v2587
    %v3667 = vpack.c.b16 %v2601, %v2588
    %v3668 = vpack.c.b16 %v2602, %v2589
    %v3669 = vpack.c.b16 %v2603, %v2590
    %v3670 = vpack.c.b16 %v2604, %v2591
    %v3671 = vpack.c.b16 %v2618, %v2605
    %v3672 = vpack.c.b16 %v2619, %v2606
    %v3673 = vpack.c.b16 %v2620, %v2607
    %v3674 = vpack.c.b16 %v2621, %v2608
    %v3675 = vpack.c.b16 %v2622, %v2609
    %v3676 = vpack.c.b16 %v2623, %v2610
    %v3677 = vpack.c.b16 %v2624, %v2611
    %v3678 = vpack.c.b16 %v2625, %v2612
    %v3679 = vpack.c.b16 %v2626, %v2613
    %v3680 = vpack.c.b16 %v2627, %v2614
    %v3681 = vpack.c.b16 %v2628, %v2615
    %v3682 = vpack.c.b16 %v2629, %v2616
    %v3683 = vpack.c.b16 %v2630, %v2617
    %v3684 = vpack.c.b16 %v2644, %v2631
    %v3685 = vpack.c.b16 %v2645, %v2632
    %v3686 = vpack.c.b16 %v2646, %v2633
    %v3687 = vpack.c.b16 %v2647, %v2634
    %v3688 = vpack.c.b16 %v2648, %v2635
    %v3689 = vpack.c.b16 %v2649, %v2636
    %v3690 = vpack.c.b16 %v2650, %v2637
    %v3691 = vpack.c.b16 %v2651, %v2638
    %v3692 = vpack.c.b16 %v2652, %v2639
    %v3693 = vpack.c.b16 %v2653, %v2640
    %v3694 = vpack.c.b16 %v2654, %v2641
    %v3695 = vpack.c.b16 %v2655, %v2642
    %v3696 = vpack.c.b16 %v2656, %v2643
    %v3697 = vpack.c.b16 %v2670, %v2657
    %v3698 = vpack.c.b16 %v2671, %v2658
    %v3699 = vpack.c.b16 %v2672, %v2659
    %v3700 = vpack.c.b16 %v2673, %v2660
    %v3701 = vpack.c.b16 %v2674, %v2661
    %v3702 = vpack.c.b16 %v2675, %v2662
    %v3703 = vpack.c.b16 %v2676, %v2663
    %v3704 = vpack.c.b16 %v2677, %v2664
    %v3705 = vpack.c.b16 %v2678, %v2665
    %v3706 = vpack.c.b16 %v2679, %v2666
    %v3707 = vpack.c.b16 %v2680, %v2667
    %v3708 = vpack.c.b16 %v2681, %v2668
    %v3709 = vpack.c.b16 %v2682, %v2669
    %v3710 = vpack.c.b16 %v2696, %v2683
    %v3711 = vpack.c.b16 %v2697, %v2684
    %v3712 = vpack.c.b16 %v2698, %v2685
    %v3713 = vpack.c.b16 %v2699, %v2686
    %v3714 = vpack.c.b16 %v2700, %v2687
    %v3715 = vpack.c.b16 %v2701, %v2688
    %v3716 = vpack.c.b16 %v2702, %v2689
    %v3717 = vpack.c.b16 %v2703, %v2690
    %v3718 = vpack.c.b16 %v2704, %v2691
    %v3719 = vpack.c.b16 %v2705, %v2692
    %v3720 = vpack.c.b16 %v2706, %v2693
    %v3721 = vpack.c.b16 %v2707, %v2694
    %v3722 = vpack.c.b16 %v2708, %v2695
    %v3723 = vpack.c.b16 %v2722, %v2709
    %v3724 = vpack.c.b16 %v2723, %v2710
    %v3725 = vpack.c.b16 %v2724, %v2711
    %v3726 = vpack.c.b16 %v2725, %v2712
    %v3727 = vpack.c.b16 %v2726, %v2713
    %v3728 = vpack.c.b16 %v2727, %v2714
    %v3729 = vpack.c.b16 %v2728, %v2715
    %v3730 = vpack.c.b16 %v2729, %v2716
    %v3731 = vpack.c.b16 %v2730, %v2717
    %v3732 = vpack.c.b16 %v2731, %v2718
    %v3733 = vpack.c.b16 %v2732, %v2719
    %v3734 = vpack.c.b16 %v2733, %v2720
    %v3735 = vpack.c.b16 %v2734, %v2721
    %v3736 = vpack.c.b16 %v2748, %v2735
    %v3737 = vpack.c.b16 %v2749, %v2736
    %v3738 = vpack.c.b16 %v2750, %v2737
    %v3739 = vpack.c.b16 %v2751, %v2738
    %v3740 = vpack.c.b16 %v2752, %v2739
    %v3741 = vpack.c.b16 %v2753, %v2740
    %v3742 = vpack.c.b16 %v2754, %v2741
    %v3743 = vpack.c.b16 %v2755, %v2742
    %v3744 = vpack.c.b16 %v2756, %v2743
    %v3745 = vpack.c.b16 %v2757, %v2744
    %v3746 = vpack.c.b16 %v2758, %v2745
    %v3747 = vpack.c.b16 %v2759, %v2746
    %v3748 = vpack.c.b16 %v2760, %v2747
    %v3749 = vpack.c.b16 %v2774, %v2761
    %v3750 = vpack.c.b16 %v2775, %v2762
    %v3751 = vpack.c.b16 %v2776, %v2763
    %v3752 = vpack.c.b16 %v2777, %v2764
    %v3753 = vpack.c.b16 %v2778, %v2765
    %v3754 = vpack.c.b16 %v2779, %v2766
    %v3755 = vpack.c.b16 %v2780, %v2767
    %v3756 = vpack.c.b16 %v2781, %v2768
    %v3757 = vpack.c.b16 %v2782, %v2769
    %v3758 = vpack.c.b16 %v2783, %v2770
    %v3759 = vpack.c.b16 %v2784, %v2771
    %v3760 = vpack.c.b16 %v2785, %v2772
    %v3761 = vpack.c.b16 %v2786, %v2773
    %v3762 = vpack.c.b16 %v2800, %v2787
    %v3763 = vpack.c.b16 %v2801, %v2788
    %v3764 = vpack.c.b16 %v2802, %v2789
    %v3765 = vpack.c.b16 %v2803, %v2790
    %v3766 = vpack.c.b16 %v2804, %v2791
    %v3767 = vpack.c.b16 %v2805, %v2792
    %v3768 = vpack.c.b16 %v2806, %v2793
    %v3769 = vpack.c.b16 %v2807, %v2794
    %v3770 = vpack.c.b16 %v2808, %v2795
    %v3771 = vpack.c.b16 %v2809, %v2796
    %v3772 = vpack.c.b16 %v2810, %v2797
    %v3773 = vpack.c.b16 %v2811, %v2798
    %v3774 = vpack.c.b16 %v2812, %v2799
    %v3775 = vpack.c.b16 %v2826, %v2813
    %v3776 = vpack.c.b16 %v2827, %v2814
    %v3777 = vpack.c.b16 %v2828, %v2815
    %v3778 = vpack.c.b16 %v2829, %v2816
    %v3779 = vpack.c.b16 %v2830, %v2817
    %v3780 = vpack.c.b16 %v2831, %v2818
    %v3781 = vpack.c.b16 %v2832, %v2819
    %v3782 = vpack.c.b16 %v2833, %v2820
    %v3783 = vpack.c.b16 %v2834, %v2821
    %v3784 = vpack.c.b16 %v2835, %v2822
    %v3785 = vpack.c.b16 %v2836, %v2823
    %v3786 = vpack.c.b16 %v2837, %v2824
    %v3787 = vpack.c.b16 %v2838, %v2825
    %v3788 = vpack.c.b16 %v2852, %v2839
    %v3789 = vpack.c.b16 %v2853, %v2840
    %v3790 = vpack.c.b16 %v2854, %v2841
    %v3791 = vpack.c.b16 %v2855, %v2842
    %v3792 = vpack.c.b16 %v2856, %v2843
    %v3793 = vpack.c.b16 %v2857, %v2844
    %v3794 = vpack.c.b16 %v2858, %v2845
    %v3795 = vpack.c.b16 %v2859, %v2846
    %v3796 = vpack.c.b16 %v2860, %v2847
    %v3797 = vpack.c.b16 %v2861, %v2848
    %v3798 = vpack.c.b16 %v2862, %v2849
    %v3799 = vpack.c.b16 %v2863, %v2850
    %v3800 = vpack.c.b16 %v2864, %v2851
    %v3801 = vpack.c.b16 %v2878, %v2865
    %v3802 = vpack.c.b16 %v2879, %v2866
    %v3803 = vpack.c.b16 %v2880, %v2867
    %v3804 = vpack.c.b16 %v2881, %v2868
    %v3805 = vpack.c.b16 %v2882, %v2869
    %v3806 = vpack.c.b16 %v2883, %v2870
    %v3807 = vpack.c.b16 %v2884, %v2871
    %v3808 = vpack.c.b16 %v2885, %v2872
    %v3809 = vpack.c.b16 %v2886, %v2873
    %v3810 = vpack.c.b16 %v2887, %v2874
    %v3811 = vpack.c.b16 %v2888, %v2875
    %v3812 = vpack.c.b16 %v2889, %v2876
    %v3813 = vpack.c.b16 %v2890, %v2877
    %v3814 = vpack.c.b16 %v2904, %v2891
    %v3815 = vpack.c.b16 %v2905, %v2892
    %v3816 = vpack.c.b16 %v2906, %v2893
    %v3817 = vpack.c.b16 %v2907, %v2894
    %v3818 = vpack.c.b16 %v2908, %v2895
    %v3819 = vpack.c.b16 %v2909, %v2896
    %v3820 = vpack.c.b16 %v2910, %v2897
    %v3821 = vpack.c.b16 %v2911, %v2898
    %v3822 = vpack.c.b16 %v2912, %v2899
    %v3823 = vpack.c.b16 %v2913, %v2900
    %v3824 = vpack.c.b16 %v2914, %v2901
    %v3825 = vpack.c.b16 %v2915, %v2902
    %v3826 = vpack.c.b16 %v2916, %v2903
    %v3827 = vpack.c.b16 %v2930, %v2917
    %v3828 = vpack.c.b16 %v2931, %v2918
    %v3829 = vpack.c.b16 %v2932, %v2919
    %v3830 = vpack.c.b16 %v2933, %v2920
    %v3831 = vpack.c.b16 %v2934, %v2921
    %v3832 = vpack.c.b16 %v2935, %v2922
    %v3833 = vpack.c.b16 %v2936, %v2923
    %v3834 = vpack.c.b16 %v2937, %v2924
    %v3835 = vpack.c.b16 %v2938, %v2925
    %v3836 = vpack.c.b16 %v2939, %v2926
    %v3837 = vpack.c.b16 %v2940, %v2927
    %v3838 = vpack.c.b16 %v2941, %v2928
    %v3839 = vpack.c.b16 %v2942, %v2929
    %v3840 = vpack.c.b16 %v2956, %v2943
    %v3841 = vpack.c.b16 %v2957, %v2944
    %v3842 = vpack.c.b16 %v2958, %v2945
    %v3843 = vpack.c.b16 %v2959, %v2946
    %v3844 = vpack.c.b16 %v2960, %v2947
    %v3845 = vpack.c.b16 %v2961, %v2948
    %v3846 = vpack.c.b16 %v2962, %v2949
    %v3847 = vpack.c.b16 %v2963, %v2950
    %v3848 = vpack.c.b16 %v2964, %v2951
    %v3849 = vpack.c.b16 %v2965, %v2952
    %v3850 = vpack.c.b16 %v2966, %v2953
    %v3851 = vpack.c.b16 %v2967, %v2954
    %v3852 = vpack.c.b16 %v2968, %v2955
    %v3853 = vpack.c.b16 %v2982, %v2969
    %v3854 = vpack.c.b16 %v2983, %v2970
    %v3855 = vpack.c.b16 %v2984, %v2971
    %v3856 = vpack.c.b16 %v2985, %v2972
    %v3857 = vpack.c.b16 %v2986, %v2973
    %v3858 = vpack.c.b16 %v2987, %v2974
    %v3859 = vpack.c.b16 %v2988, %v2975
    %v3860 = vpack.c.b16 %v2989, %v2976
    %v3861 = vpack.c.b16 %v2990, %v2977
    %v3862 = vpack.c.b16 %v2991, %v2978
    %v3863 = vpack.c.b16 %v2992, %v2979
    %v3864 = vpack.c.b16 %v2993, %v2980
    %v3865 = vpack.c.b16 %v2994, %v2981
    %v3866 = vpack.c.b16 %v3008, %v2995
    %v3867 = vpack.c.b16 %v3009, %v2996
    %v3868 = vpack.c.b16 %v3010, %v2997
    %v3869 = vpack.c.b16 %v3011, %v2998
    %v3870 = vpack.c.b16 %v3012, %v2999
    %v3871 = vpack.c.b16 %v3013, %v3000
    %v3872 = vpack.c.b16 %v3014, %v3001
    %v3873 = vpack.c.b16 %v3015, %v3002
    %v3874 = vpack.c.b16 %v3016, %v3003
    %v3875 = vpack.c.b16 %v3017, %v3004
    %v3876 = vpack.c.b16 %v3018, %v3005
    %v3877 = vpack.c.b16 %v3019, %v3006
    %v3878 = vpack.c.b16 %v3020, %v3007
    %v3879 = vpack.c.b16 %v3034, %v3021
    %v3880 = vpack.c.b16 %v3035, %v3022
    %v3881 = vpack.c.b16 %v3036, %v3023
    %v3882 = vpack.c.b16 %v3037, %v3024
    %v3883 = vpack.c.b16 %v3038, %v3025
    %v3884 = vpack.c.b16 %v3039, %v3026
    %v3885 = vpack.c.b16 %v3040, %v3027
    %v3886 = vpack.c.b16 %v3041, %v3028
    %v3887 = vpack.c.b16 %v3042, %v3029
    %v3888 = vpack.c.b16 %v3043, %v3030
    %v3889 = vpack.c.b16 %v3044, %v3031
    %v3890 = vpack.c.b16 %v3045, %v3032
    %v3891 = vpack.c.b16 %v3046, %v3033
    %v3892 = vpack.c.b16 %v3060, %v3047
    %v3893 = vpack.c.b16 %v3061, %v3048
    %v3894 = vpack.c.b16 %v3062, %v3049
    %v3895 = vpack.c.b16 %v3063, %v3050
    %v3896 = vpack.c.b16 %v3064, %v3051
    %v3897 = vpack.c.b16 %v3065, %v3052
    %v3898 = vpack.c.b16 %v3066, %v3053
    %v3899 = vpack.c.b16 %v3067, %v3054
    %v3900 = vpack.c.b16 %v3068, %v3055
    %v3901 = vpack.c.b16 %v3069, %v3056
    %v3902 = vpack.c.b16 %v3070, %v3057
    %v3903 = vpack.c.b16 %v3071, %v3058
    %v3904 = vpack.c.b16 %v3072, %v3059
    %v3905 = vpack.c.b16 %v3086, %v3073
    %v3906 = vpack.c.b16 %v3087, %v3074
    %v3907 = vpack.c.b16 %v3088, %v3075
    %v3908 = vpack.c.b16 %v3089, %v3076
    %v3909 = vpack.c.b16 %v3090, %v3077
    %v3910 = vpack.c.b16 %v3091, %v3078
    %v3911 = vpack.c.b16 %v3092, %v3079
    %v3912 = vpack.c.b16 %v3093, %v3080
    %v3913 = vpack.c.b16 %v3094, %v3081
    %v3914 = vpack.c.b16 %v3095, %v3082
    %v3915 = vpack.c.b16 %v3096, %v3083
    %v3916 = vpack.c.b16 %v3097, %v3084
    %v3917 = vpack.c.b16 %v3098, %v3085
    %v3918 = vpack.c.b16 %v3112, %v3099
    %v3919 = vpack.c.b16 %v3113, %v3100
    %v3920 = vpack.c.b16 %v3114, %v3101
    %v3921 = vpack.c.b16 %v3115, %v3102
    %v3922 = vpack.c.b16 %v3116, %v3103
    %v3923 = vpack.c.b16 %v3117, %v3104
    %v3924 = vpack.c.b16 %v3118, %v3105
    %v3925 = vpack.c.b16 %v3119, %v3106
    %v3926 = vpack.c.b16 %v3120, %v3107
    %v3927 = vpack.c.b16 %v3121, %v3108
    %v3928 = vpack.c.b16 %v3122, %v3109
    %v3929 = vpack.c.b16 %v3123, %v3110
    %v3930 = vpack.c.b16 %v3124, %v3111
    %v3931 = vpack.c.b16 %v3138, %v3125
    %v3932 = vpack.c.b16 %v3139, %v3126
    %v3933 = vpack.c.b16 %v3140, %v3127
    %v3934 = vpack.c.b16 %v3141, %v3128
    %v3935 = vpack.c.b16 %v3142, %v3129
    %v3936 = vpack.c.b16 %v3143, %v3130
    %v3937 = vpack.c.b16 %v3144, %v3131
    %v3938 = vpack.c.b16 %v3145, %v3132
    %v3939 = vpack.c.b16 %v3146, %v3133
    %v3940 = vpack.c.b16 %v3147, %v3134
    %v3941 = vpack.c.b16 %v3148, %v3135
    %v3942 = vpack.c.b16 %v3149, %v3136
    %v3943 = vpack.c.b16 %v3150, %v3137
    %v3944 = vpack.c.b16 %v3164, %v3151
    %v3945 = vpack.c.b16 %v3165, %v3152
    %v3946 = vpack.c.b16 %v3166, %v3153
    %v3947 = vpack.c.b16 %v3167, %v3154
    %v3948 = vpack.c.b16 %v3168, %v3155
    %v3949 = vpack.c.b16 %v3169, %v3156
    %v3950 = vpack.c.b16 %v3170, %v3157
    %v3951 = vpack.c.b16 %v3171, %v3158
    %v3952 = vpack.c.b16 %v3172, %v3159
    %v3953 = vpack.c.b16 %v3173, %v3160
    %v3954 = vpack.c.b16 %v3174, %v3161
    %v3955 = vpack.c.b16 %v3175, %v3162
    %v3956 = vpack.c.b16 %v3176, %v3163
    %v3957 = vpack.c.b16 %v3190, %v3177
    %v3958 = vpack.c.b16 %v3191, %v3178
    %v3959 = vpack.c.b16 %v3192, %v3179
    %v3960 = vpack.c.b16 %v3193, %v3180
    %v3961 = vpack.c.b16 %v3194, %v3181
    %v3962 = vpack.c.b16 %v3195, %v3182
    %v3963 = vpack.c.b16 %v3196, %v3183
    %v3964 = vpack.c.b16 %v3197, %v3184
    %v3965 = vpack.c.b16 %v3198, %v3185
    %v3966 = vpack.c.b16 %v3199, %v3186
    %v3967 = vpack.c.b16 %v3200, %v3187
    %v3968 = vpack.c.b16 %v3201, %v3188
    %v3969 = vpack.c.b16 %v3202, %v3189
    %v3970 = vpack.c.b16 %v3216, %v3203
    %v3971 = vpack.c.b16 %v3217, %v3204
    %v3972 = vpack.c.b16 %v3218, %v3205
    %v3973 = vpack.c.b16 %v3219, %v3206
    %v3974 = vpack.c.b16 %v3220, %v3207
    %v3975 = vpack.c.b16 %v3221, %v3208
    %v3976 = vpack.c.b16 %v3222, %v3209
    %v3977 = vpack.c.b16 %v3223, %v3210
    %v3978 = vpack.c.b16 %v3224, %v3211
    %v3979 = vpack.c.b16 %v3225, %v3212
    %v3980 = vpack.c.b16 %v3226, %v3213
    %v3981 = vpack.c.b16 %v3227, %v3214
    %v3982 = vpack.c.b16 %v3228, %v3215
    %v3983 = vpack.c.b16 %v3242, %v3229
    %v3984 = vpack.c.b16 %v3243, %v3230
    %v3985 = vpack.c.b16 %v3244, %v3231
    %v3986 = vpack.c.b16 %v3245, %v3232
    %v3987 = vpack.c.b16 %v3246, %v3233
    %v3988 = vpack.c.b16 %v3247, %v3234
    %v3989 = vpack.c.b16 %v3248, %v3235
    %v3990 = vpack.c.b16 %v3249, %v3236
    %v3991 = vpack.c.b16 %v3250, %v3237
    %v3992 = vpack.c.b16 %v3251, %v3238
    %v3993 = vpack.c.b16 %v3252, %v3239
    %v3994 = vpack.c.b16 %v3253, %v3240
    %v3995 = vpack.c.b16 %v3254, %v3241
    %v3996 = vpack.c.b16 %v3268, %v3255
    %v3997 = vpack.c.b16 %v3269, %v3256
    %v3998 = vpack.c.b16 %v3270, %v3257
    %v3999 = vpack.c.b16 %v3271, %v3258
    %v4000 = vpack.c.b16 %v3272, %v3259
    %v4001 = vpack.c.b16 %v3273, %v3260
    %v4002 = vpack.c.b16 %v3274, %v3261
    %v4003 = vpack.c.b16 %v3275, %v3262
    %v4004 = vpack.c.b16 %v3276, %v3263
    %v4005 = vpack.c.b16 %v3277, %v3264
    %v4006 = vpack.c.b16 %v3278, %v3265
    %v4007 = vpack.c.b16 %v3279, %v3266
    %v4008 = vpack.c.b16 %v3280, %v3267
    %4737 = vmatprep.subr.bf16.mxu0 %v3282
    %4738 = vmatpush1.bf16.msra.mxu0 %v3281
    %4739 = vmatprep.subr.bf16.mxu0 %v3295
    %4740 = vmatpush1.bf16.msra.mxu0 %v3294
    %4741 = vmatprep.subr.bf16.mxu0 %v3308
    %4742 = vmatpush1.bf16.msra.mxu0 %v3307
    %4743 = vmatprep.subr.bf16.mxu0 %v3321
    %4744 = vmatpush1.bf16.msra.mxu0 %v3320
    %4745 = vmatprep.subr.bf16.mxu0 %v3334
    %4746 = vmatpush1.bf16.msra.mxu0 %v3333
    %4747 = vmatprep.subr.bf16.mxu0 %v3347
    %4748 = vmatpush1.bf16.msra.mxu0 %v3346
    %4749 = vmatprep.subr.bf16.mxu0 %v3360
    %4750 = vmatpush1.bf16.msra.mxu0 %v3359
    %4751 = vmatprep.subr.bf16.mxu0 %v3373
    %4752 = vmatpush1.bf16.msra.mxu0 %v3372
    %4753 = vmatprep.subr.bf16.mxu0 %v3386
    %4754 = vmatpush1.bf16.msra.mxu0 %v3385
    %4755 = vmatprep.subr.bf16.mxu0 %v3399
    %4756 = vmatpush1.bf16.msra.mxu0 %v3398
    %4757 = vmatprep.subr.bf16.mxu0 %v3412
    %4758 = vmatpush1.bf16.msra.mxu0 %v3411
    %4759 = vmatprep.subr.bf16.mxu0 %v3425
    %4760 = vmatpush1.bf16.msra.mxu0 %v3424
    %4761 = vmatprep.subr.bf16.mxu0 %v3438
    %4762 = vmatpush1.bf16.msra.mxu0 %v3437
    %4763 = vmatprep.subr.bf16.mxu0 %v3451
    %4764 = vmatpush1.bf16.msra.mxu0 %v3450
    %4765 = vmatprep.subr.bf16.mxu0 %v3464
    %4766 = vmatpush1.bf16.msra.mxu0 %v3463
    %4767 = vmatprep.subr.bf16.mxu0 %v3477
    %4768 = vmatpush1.bf16.msra.mxu0 %v3476
    %4769 = vmatprep.mubr.bf16.mxu0 %v182
    %4770 = vmatmul.mubr.bf16.gmra.mrb[0].mxu0 %v181
    %v4771 = vpop.f32.mrb[0].mxu0
    %v4772 = vadd.f32 %v979, %v4771
    %v4773 = vpop.f32.mrb[0].mxu0
    %v4774 = vadd.f32 %v983, %v4773
    %v4775 = vpop.f32.mrb[0].mxu0
    %v4776 = vadd.f32 %v979, %v4775
    %v4777 = vpop.f32.mrb[0].mxu0
    %v4778 = vadd.f32 %v983, %v4777
    %4779 = vdwg.mxu0
    %4780 = vmatprep.subr.bf16.mxu0 %v3490
    %4781 = vmatpush1.bf16.msra.mxu0 %v3489
    %4782 = vmatprep.subr.bf16.mxu0 %v3503
    %4783 = vmatpush1.bf16.msra.mxu0 %v3502
    %4784 = vmatprep.subr.bf16.mxu0 %v3516
    %4785 = vmatpush1.bf16.msra.mxu0 %v3515
    %4786 = vmatprep.subr.bf16.mxu0 %v3529
    %4787 = vmatpush1.bf16.msra.mxu0 %v3528
    %4788 = vmatprep.subr.bf16.mxu0 %v3542
    %4789 = vmatpush1.bf16.msra.mxu0 %v3541
    %4790 = vmatprep.subr.bf16.mxu0 %v3555
    %4791 = vmatpush1.bf16.msra.mxu0 %v3554
    %4792 = vmatprep.subr.bf16.mxu0 %v3568
    %4793 = vmatpush1.bf16.msra.mxu0 %v3567
    %4794 = vmatprep.subr.bf16.mxu0 %v3581
    %4795 = vmatpush1.bf16.msra.mxu0 %v3580
    %4796 = vmatprep.subr.bf16.mxu0 %v3594
    %4797 = vmatpush1.bf16.msra.mxu0 %v3593
    %4798 = vmatprep.subr.bf16.mxu0 %v3607
    %4799 = vmatpush1.bf16.msra.mxu0 %v3606
    %4800 = vmatprep.subr.bf16.mxu0 %v3620
    %4801 = vmatpush1.bf16.msra.mxu0 %v3619
    %4802 = vmatprep.subr.bf16.mxu0 %v3633
    %4803 = vmatpush1.bf16.msra.mxu0 %v3632
    %4804 = vmatprep.subr.bf16.mxu0 %v3646
    %4805 = vmatpush1.bf16.msra.mxu0 %v3645
    %4806 = vmatprep.subr.bf16.mxu0 %v3659
    %4807 = vmatpush1.bf16.msra.mxu0 %v3658
    %4808 = vmatprep.subr.bf16.mxu0 %v3672
    %4809 = vmatpush1.bf16.msra.mxu0 %v3671
    %4810 = vmatprep.subr.bf16.mxu0 %v3685
    %4811 = vmatpush1.bf16.msra.mxu0 %v3684
    %4812 = vmatprep.mubr.bf16.mxu0 %v184
    %4813 = vmatmul.mubr.bf16.gmra.mrb[0].mxu0 %v183
    %v4814 = vpop.f32.mrb[0].mxu0
    %v4815 = vadd.f32 %v4772, %v4814
    %v4816 = vpop.f32.mrb[0].mxu0
    %v4817 = vadd.f32 %v4774, %v4816
    %v4818 = vpop.f32.mrb[0].mxu0
    %v4819 = vadd.f32 %v4776, %v4818
    %v4820 = vpop.f32.mrb[0].mxu0
    %v4821 = vadd.f32 %v4778, %v4820
    %4822 = vdwg.mxu0
    %4823 = vmatprep.subr.bf16.mxu0 %v3698
    %4824 = vmatpush1.bf16.msra.mxu0 %v3697
    %4825 = vmatprep.subr.bf16.mxu0 %v3711
    %4826 = vmatpush1.bf16.msra.mxu0 %v3710
    %4827 = vmatprep.subr.bf16.mxu0 %v3724
    %4828 = vmatpush1.bf16.msra.mxu0 %v3723
    %4829 = vmatprep.subr.bf16.mxu0 %v3737
    %4830 = vmatpush1.bf16.msra.mxu0 %v3736
    %4831 = vmatprep.subr.bf16.mxu0 %v3750
    %4832 = vmatpush1.bf16.msra.mxu0 %v3749
    %4833 = vmatprep.subr.bf16.mxu0 %v3763
    %4834 = vmatpush1.bf16.msra.mxu0 %v3762
    %4835 = vmatprep.subr.bf16.mxu0 %v3776
    %4836 = vmatpush1.bf16.msra.mxu0 %v3775
    %4837 = vmatprep.subr.bf16.mxu0 %v3789
    %4838 = vmatpush1.bf16.msra.mxu0 %v3788
    %4839 = vmatprep.subr.bf16.mxu0 %v3802
    %4840 = vmatpush1.bf16.msra.mxu0 %v3801
    %4841 = vmatprep.subr.bf16.mxu0 %v3815
    %4842 = vmatpush1.bf16.msra.mxu0 %v3814
    %4843 = vmatprep.subr.bf16.mxu0 %v3828
    %4844 = vmatpush1.bf16.msra.mxu0 %v3827
    %4845 = vmatprep.subr.bf16.mxu0 %v3841
    %4846 = vmatpush1.bf16.msra.mxu0 %v3840
    %4847 = vmatprep.subr.bf16.mxu0 %v3854
    %4848 = vmatpush1.bf16.msra.mxu0 %v3853
    %4849 = vmatprep.subr.bf16.mxu0 %v3867
    %4850 = vmatpush1.bf16.msra.mxu0 %v3866
    %4851 = vmatprep.subr.bf16.mxu0 %v3880
    %4852 = vmatpush1.bf16.msra.mxu0 %v3879
    %4853 = vmatprep.subr.bf16.mxu0 %v3893
    %4854 = vmatpush1.bf16.msra.mxu0 %v3892
    %4855 = vmatprep.mubr.bf16.mxu0 %v186
    %4856 = vmatmul.mubr.bf16.gmra.mrb[0].mxu0 %v185
    %v4857 = vpop.f32.mrb[0].mxu0
    %v4858 = vadd.f32 %v4815, %v4857
    %v4859 = vpop.f32.mrb[0].mxu0
    %v4860 = vadd.f32 %v4817, %v4859
    %v4861 = vpop.f32.mrb[0].mxu0
    %v4862 = vadd.f32 %v4819, %v4861
    %v4863 = vpop.f32.mrb[0].mxu0
    %v4864 = vadd.f32 %v4821, %v4863
    %4865 = vdwg.mxu0
    %4866 = vmatprep.subr.bf16.mxu0 %v3906
    %4867 = vmatpush1.bf16.msra.mxu0 %v3905
    %4868 = vmatprep.subr.bf16.mxu0 %v3919
    %4869 = vmatpush1.bf16.msra.mxu0 %v3918
    %4870 = vmatprep.subr.bf16.mxu0 %v3932
    %4871 = vmatpush1.bf16.msra.mxu0 %v3931
    %4872 = vmatprep.subr.bf16.mxu0 %v3945
    %4873 = vmatpush1.bf16.msra.mxu0 %v3944
    %4874 = vmatprep.subr.bf16.mxu0 %v3958
    %4875 = vmatpush1.bf16.msra.mxu0 %v3957
    %4876 = vmatprep.subr.bf16.mxu0 %v3971
    %4877 = vmatpush1.bf16.msra.mxu0 %v3970
    %4878 = vmatprep.subr.bf16.mxu0 %v3984
    %4879 = vmatpush1.bf16.msra.mxu0 %v3983
    %4880 = vmatprep.subr.bf16.mxu0 %v3997
    %4881 = vmatpush1.bf16.msra.mxu0 %v3996
    %4882 = vmatprep.subr.bf16.mxu0 0
    %4883 = vmatpush1.bf16.msra.mxu0 0
    %4884 = vmatprep.subr.bf16.mxu0 0
    %4885 = vmatpush1.bf16.msra.mxu0 0
    %4886 = vmatprep.subr.bf16.mxu0 0
    %4887 = vmatpush1.bf16.msra.mxu0 0
    %4888 = vmatprep.subr.bf16.mxu0 0
    %4889 = vmatpush1.bf16.msra.mxu0 0
    %4890 = vmatprep.subr.bf16.mxu0 0
    %4891 = vmatpush1.bf16.msra.mxu0 0
    %4892 = vmatprep.subr.bf16.mxu0 0
    %4893 = vmatpush1.bf16.msra.mxu0 0
    %4894 = vmatprep.subr.bf16.mxu0 0
    %4895 = vmatpush1.bf16.msra.mxu0 0
    %4896 = vmatprep.subr.bf16.mxu0 0
    %4897 = vmatpush1.bf16.msra.mxu0 0
    %4898 = vmatprep.mubr.bf16.mxu0 0
    %4899 = vmatmul.mubr.bf16.gmra.mrb[0].mxu0 %v187
    %v4900 = vpop.f32.mrb[0].mxu0
    %v4901 = vadd.f32 %v4858, %v4900
    %v4902 = vpop.f32.mrb[0].mxu0
    %v4903 = vadd.f32 %v4860, %v4902
    %v4904 = vpop.f32.mrb[0].mxu0
    %v4905 = vadd.f32 %v4862, %v4904
    %v4906 = vpop.f32.mrb[0].mxu0
    %v4907 = vadd.f32 %v4864, %v4906
    %4908 = vdwg.mxu0
    %4909 = vmatprep.subr.bf16.mxu0 %v3284
    %4910 = vmatpush1.bf16.msra.mxu0 %v3283
    %4911 = vmatprep.subr.bf16.mxu0 %v3297
    %4912 = vmatpush1.bf16.msra.mxu0 %v3296
    %4913 = vmatprep.subr.bf16.mxu0 %v3310
    %4914 = vmatpush1.bf16.msra.mxu0 %v3309
    %4915 = vmatprep.subr.bf16.mxu0 %v3323
    %4916 = vmatpush1.bf16.msra.mxu0 %v3322
    %4917 = vmatprep.subr.bf16.mxu0 %v3336
    %4918 = vmatpush1.bf16.msra.mxu0 %v3335
    %4919 = vmatprep.subr.bf16.mxu0 %v3349
    %4920 = vmatpush1.bf16.msra.mxu0 %v3348
    %4921 = vmatprep.subr.bf16.mxu0 %v3362
    %4922 = vmatpush1.bf16.msra.mxu0 %v3361
    %4923 = vmatprep.subr.bf16.mxu0 %v3375
    %4924 = vmatpush1.bf16.msra.mxu0 %v3374
    %4925 = vmatprep.subr.bf16.mxu0 %v3388
    %4926 = vmatpush1.bf16.msra.mxu0 %v3387
    %4927 = vmatprep.subr.bf16.mxu0 %v3401
    %4928 = vmatpush1.bf16.msra.mxu0 %v3400
    %4929 = vmatprep.subr.bf16.mxu0 %v3414
    %4930 = vmatpush1.bf16.msra.mxu0 %v3413
    %4931 = vmatprep.subr.bf16.mxu0 %v3427
    %4932 = vmatpush1.bf16.msra.mxu0 %v3426
    %4933 = vmatprep.subr.bf16.mxu0 %v3440
    %4934 = vmatpush1.bf16.msra.mxu0 %v3439
    %4935 = vmatprep.subr.bf16.mxu0 %v3453
    %4936 = vmatpush1.bf16.msra.mxu0 %v3452
    %4937 = vmatprep.subr.bf16.mxu0 %v3466
    %4938 = vmatpush1.bf16.msra.mxu0 %v3465
    %4939 = vmatprep.subr.bf16.mxu0 %v3479
    %4940 = vmatpush1.bf16.msra.mxu0 %v3478
    %4941 = vmatprep.mubr.bf16.mxu0 %v182
    %4942 = vmatmul.mubr.bf16.gmra.mrb[0].mxu0 %v181
    %v4943 = vpop.f32.mrb[0].mxu0
    %v4944 = vadd.f32 %v987, %v4943
    %v4945 = vpop.f32.mrb[0].mxu0
    %v4946 = vadd.f32 %v991, %v4945
    %v4947 = vpop.f32.mrb[0].mxu0
    %v4948 = vadd.f32 %v987, %v4947
    %v4949 = vpop.f32.mrb[0].mxu0
    %v4950 = vadd.f32 %v991, %v4949
    %4951 = vdwg.mxu0
    %4952 = vmatprep.subr.bf16.mxu0 %v3492
    %4953 = vmatpush1.bf16.msra.mxu0 %v3491
    %4954 = vmatprep.subr.bf16.mxu0 %v3505
    %4955 = vmatpush1.bf16.msra.mxu0 %v3504
    %4956 = vmatprep.subr.bf16.mxu0 %v3518
    %4957 = vmatpush1.bf16.msra.mxu0 %v3517
    %4958 = vmatprep.subr.bf16.mxu0 %v3531
    %4959 = vmatpush1.bf16.msra.mxu0 %v3530
    %4960 = vmatprep.subr.bf16.mxu0 %v3544
    %4961 = vmatpush1.bf16.msra.mxu0 %v3543
    %4962 = vmatprep.subr.bf16.mxu0 %v3557
    %4963 = vmatpush1.bf16.msra.mxu0 %v3556
    %4964 = vmatprep.subr.bf16.mxu0 %v3570
    %4965 = vmatpush1.bf16.msra.mxu0 %v3569
    %4966 = vmatprep.subr.bf16.mxu0 %v3583
    %4967 = vmatpush1.bf16.msra.mxu0 %v3582
    %4968 = vmatprep.subr.bf16.mxu0 %v3596
    %4969 = vmatpush1.bf16.msra.mxu0 %v3595
    %4970 = vmatprep.subr.bf16.mxu0 %v3609
    %4971 = vmatpush1.bf16.msra.mxu0 %v3608
    %4972 = vmatprep.subr.bf16.mxu0 %v3622
    %4973 = vmatpush1.bf16.msra.mxu0 %v3621
    %4974 = vmatprep.subr.bf16.mxu0 %v3635
    %4975 = vmatpush1.bf16.msra.mxu0 %v3634
    %4976 = vmatprep.subr.bf16.mxu0 %v3648
    %4977 = vmatpush1.bf16.msra.mxu0 %v3647
    %4978 = vmatprep.subr.bf16.mxu0 %v3661
    %4979 = vmatpush1.bf16.msra.mxu0 %v3660
    %4980 = vmatprep.subr.bf16.mxu0 %v3674
    %4981 = vmatpush1.bf16.msra.mxu0 %v3673
    %4982 = vmatprep.subr.bf16.mxu0 %v3687
    %4983 = vmatpush1.bf16.msra.mxu0 %v3686
    %4984 = vmatprep.mubr.bf16.mxu0 %v184
    %4985 = vmatmul.mubr.bf16.gmra.mrb[0].mxu0 %v183
    %v4986 = vpop.f32.mrb[0].mxu0
    %v4987 = vadd.f32 %v4944, %v4986
    %v4988 = vpop.f32.mrb[0].mxu0
    %v4989 = vadd.f32 %v4946, %v4988
    %v4990 = vpop.f32.mrb[0].mxu0
    %v4991 = vadd.f32 %v4948, %v4990
    %v4992 = vpop.f32.mrb[0].mxu0
    %v4993 = vadd.f32 %v4950, %v4992
    %4994 = vdwg.mxu0
    %4995 = vmatprep.subr.bf16.mxu0 %v3700
    %4996 = vmatpush1.bf16.msra.mxu0 %v3699
    %4997 = vmatprep.subr.bf16.mxu0 %v3713
    %4998 = vmatpush1.bf16.msra.mxu0 %v3712
    %4999 = vmatprep.subr.bf16.mxu0 %v3726
    %5000 = vmatpush1.bf16.msra.mxu0 %v3725
    %5001 = vmatprep.subr.bf16.mxu0 %v3739
    %5002 = vmatpush1.bf16.msra.mxu0 %v3738
    %5003 = vmatprep.subr.bf16.mxu0 %v3752
    %5004 = vmatpush1.bf16.msra.mxu0 %v3751
    %5005 = vmatprep.subr.bf16.mxu0 %v3765
    %5006 = vmatpush1.bf16.msra.mxu0 %v3764
    %5007 = vmatprep.subr.bf16.mxu0 %v3778
    %5008 = vmatpush1.bf16.msra.mxu0 %v3777
    %5009 = vmatprep.subr.bf16.mxu0 %v3791
    %5010 = vmatpush1.bf16.msra.mxu0 %v3790
    %5011 = vmatprep.subr.bf16.mxu0 %v3804
    %5012 = vmatpush1.bf16.msra.mxu0 %v3803
    %5013 = vmatprep.subr.bf16.mxu0 %v3817
    %5014 = vmatpush1.bf16.msra.mxu0 %v3816
    %5015 = vmatprep.subr.bf16.mxu0 %v3830
    %5016 = vmatpush1.bf16.msra.mxu0 %v3829
    %5017 = vmatprep.subr.bf16.mxu0 %v3843
    %5018 = vmatpush1.bf16.msra.mxu0 %v3842
    %5019 = vmatprep.subr.bf16.mxu0 %v3856
    %5020 = vmatpush1.bf16.msra.mxu0 %v3855
    %5021 = vmatprep.subr.bf16.mxu0 %v3869
    %5022 = vmatpush1.bf16.msra.mxu0 %v3868
    %5023 = vmatprep.subr.bf16.mxu0 %v3882
    %5024 = vmatpush1.bf16.msra.mxu0 %v3881
    %5025 = vmatprep.subr.bf16.mxu0 %v3895
    %5026 = vmatpush1.bf16.msra.mxu0 %v3894
    %5027 = vmatprep.mubr.bf16.mxu0 %v186
    %5028 = vmatmul.mubr.bf16.gmra.mrb[0].mxu0 %v185
    %v5029 = vpop.f32.mrb[0].mxu0
    %v5030 = vadd.f32 %v4987, %v5029
    %v5031 = vpop.f32.mrb[0].mxu0
    %v5032 = vadd.f32 %v4989, %v5031
    %v5033 = vpop.f32.mrb[0].mxu0
    %v5034 = vadd.f32 %v4991, %v5033
    %v5035 = vpop.f32.mrb[0].mxu0
    %v5036 = vadd.f32 %v4993, %v5035
    %5037 = vdwg.mxu0
    %5038 = vmatprep.subr.bf16.mxu0 %v3908
    %5039 = vmatpush1.bf16.msra.mxu0 %v3907
    %5040 = vmatprep.subr.bf16.mxu0 %v3921
    %5041 = vmatpush1.bf16.msra.mxu0 %v3920
    %5042 = vmatprep.subr.bf16.mxu0 %v3934
    %5043 = vmatpush1.bf16.msra.mxu0 %v3933
    %5044 = vmatprep.subr.bf16.mxu0 %v3947
    %5045 = vmatpush1.bf16.msra.mxu0 %v3946
    %5046 = vmatprep.subr.bf16.mxu0 %v3960
    %5047 = vmatpush1.bf16.msra.mxu0 %v3959
    %5048 = vmatprep.subr.bf16.mxu0 %v3973
    %5049 = vmatpush1.bf16.msra.mxu0 %v3972
    %5050 = vmatprep.subr.bf16.mxu0 %v3986
    %5051 = vmatpush1.bf16.msra.mxu0 %v3985
    %5052 = vmatprep.subr.bf16.mxu0 %v3999
    %5053 = vmatpush1.bf16.msra.mxu0 %v3998
    %5054 = vmatprep.subr.bf16.mxu0 0
    %5055 = vmatpush1.bf16.msra.mxu0 0
    %5056 = vmatprep.subr.bf16.mxu0 0
    %5057 = vmatpush1.bf16.msra.mxu0 0
    %5058 = vmatprep.subr.bf16.mxu0 0
    %5059 = vmatpush1.bf16.msra.mxu0 0
    %5060 = vmatprep.subr.bf16.mxu0 0
    %5061 = vmatpush1.bf16.msra.mxu0 0
    %5062 = vmatprep.subr.bf16.mxu0 0
    %5063 = vmatpush1.bf16.msra.mxu0 0
    %5064 = vmatprep.subr.bf16.mxu0 0
    %5065 = vmatpush1.bf16.msra.mxu0 0
    %5066 = vmatprep.subr.bf16.mxu0 0
    %5067 = vmatpush1.bf16.msra.mxu0 0
    %5068 = vmatprep.subr.bf16.mxu0 0
    %5069 = vmatpush1.bf16.msra.mxu0 0
    %5070 = vmatprep.mubr.bf16.mxu0 0
    %5071 = vmatmul.mubr.bf16.gmra.mrb[0].mxu0 %v187
    %v5072 = vpop.f32.mrb[0].mxu0
    %v5073 = vadd.f32 %v5030, %v5072
    %v5074 = vpop.f32.mrb[0].mxu0
    %v5075 = vadd.f32 %v5032, %v5074
    %v5076 = vpop.f32.mrb[0].mxu0
    %v5077 = vadd.f32 %v5034, %v5076
    %v5078 = vpop.f32.mrb[0].mxu0
    %v5079 = vadd.f32 %v5036, %v5078
    %5080 = vdwg.mxu0
    %5081 = vmatprep.subr.bf16.mxu0 %v3286
    %5082 = vmatpush1.bf16.msra.mxu0 %v3285
    %5083 = vmatprep.subr.bf16.mxu0 %v3299
    %5084 = vmatpush1.bf16.msra.mxu0 %v3298
    %5085 = vmatprep.subr.bf16.mxu0 %v3312
    %5086 = vmatpush1.bf16.msra.mxu0 %v3311
    %5087 = vmatprep.subr.bf16.mxu0 %v3325
    %5088 = vmatpush1.bf16.msra.mxu0 %v3324
    %5089 = vmatprep.subr.bf16.mxu0 %v3338
    %5090 = vmatpush1.bf16.msra.mxu0 %v3337
    %5091 = vmatprep.subr.bf16.mxu0 %v3351
    %5092 = vmatpush1.bf16.msra.mxu0 %v3350
    %5093 = vmatprep.subr.bf16.mxu0 %v3364
    %5094 = vmatpush1.bf16.msra.mxu0 %v3363
    %5095 = vmatprep.subr.bf16.mxu0 %v3377
    %5096 = vmatpush1.bf16.msra.mxu0 %v3376
    %5097 = vmatprep.subr.bf16.mxu0 %v3390
    %5098 = vmatpush1.bf16.msra.mxu0 %v3389
    %5099 = vmatprep.subr.bf16.mxu0 %v3403
    %5100 = vmatpush1.bf16.msra.mxu0 %v3402
    %5101 = vmatprep.subr.bf16.mxu0 %v3416
    %5102 = vmatpush1.bf16.msra.mxu0 %v3415
    %5103 = vmatprep.subr.bf16.mxu0 %v3429
    %5104 = vmatpush1.bf16.msra.mxu0 %v3428
    %5105 = vmatprep.subr.bf16.mxu0 %v3442
    %5106 = vmatpush1.bf16.msra.mxu0 %v3441
    %5107 = vmatprep.subr.bf16.mxu0 %v3455
    %5108 = vmatpush1.bf16.msra.mxu0 %v3454
    %5109 = vmatprep.subr.bf16.mxu0 %v3468
    %5110 = vmatpush1.bf16.msra.mxu0 %v3467
    %5111 = vmatprep.subr.bf16.mxu0 %v3481
    %5112 = vmatpush1.bf16.msra.mxu0 %v3480
    %5113 = vmatprep.mubr.bf16.mxu0 %v182
    %5114 = vmatmul.mubr.bf16.gmra.mrb[0].mxu0 %v181
    %v5115 = vpop.f32.mrb[0].mxu0
    %v5116 = vadd.f32 %v995, %v5115
    %v5117 = vpop.f32.mrb[0].mxu0
    %v5118 = vadd.f32 %v999, %v5117
    %v5119 = vpop.f32.mrb[0].mxu0
    %v5120 = vadd.f32 %v995, %v5119
    %v5121 = vpop.f32.mrb[0].mxu0
    %v5122 = vadd.f32 %v999, %v5121
    %5123 = vdwg.mxu0
    %5124 = vmatprep.subr.bf16.mxu0 %v3494
    %5125 = vmatpush1.bf16.msra.mxu0 %v3493
    %5126 = vmatprep.subr.bf16.mxu0 %v3507
    %5127 = vmatpush1.bf16.msra.mxu0 %v3506
    %5128 = vmatprep.subr.bf16.mxu0 %v3520
    %5129 = vmatpush1.bf16.msra.mxu0 %v3519
    %5130 = vmatprep.subr.bf16.mxu0 %v3533
    %5131 = vmatpush1.bf16.msra.mxu0 %v3532
    %5132 = vmatprep.subr.bf16.mxu0 %v3546
    %5133 = vmatpush1.bf16.msra.mxu0 %v3545
    %5134 = vmatprep.subr.bf16.mxu0 %v3559
    %5135 = vmatpush1.bf16.msra.mxu0 %v3558
    %5136 = vmatprep.subr.bf16.mxu0 %v3572
    %5137 = vmatpush1.bf16.msra.mxu0 %v3571
    %5138 = vmatprep.subr.bf16.mxu0 %v3585
    %5139 = vmatpush1.bf16.msra.mxu0 %v3584
    %5140 = vmatprep.subr.bf16.mxu0 %v3598
    %5141 = vmatpush1.bf16.msra.mxu0 %v3597
    %5142 = vmatprep.subr.bf16.mxu0 %v3611
    %5143 = vmatpush1.bf16.msra.mxu0 %v3610
    %5144 = vmatprep.subr.bf16.mxu0 %v3624
    %5145 = vmatpush1.bf16.msra.mxu0 %v3623
    %5146 = vmatprep.subr.bf16.mxu0 %v3637
    %5147 = vmatpush1.bf16.msra.mxu0 %v3636
    %5148 = vmatprep.subr.bf16.mxu0 %v3650
    %5149 = vmatpush1.bf16.msra.mxu0 %v3649
    %5150 = vmatprep.subr.bf16.mxu0 %v3663
    %5151 = vmatpush1.bf16.msra.mxu0 %v3662
    %5152 = vmatprep.subr.bf16.mxu0 %v3676
    %5153 = vmatpush1.bf16.msra.mxu0 %v3675
    %5154 = vmatprep.subr.bf16.mxu0 %v3689
    %5155 = vmatpush1.bf16.msra.mxu0 %v3688
    %5156 = vmatprep.mubr.bf16.mxu0 %v184
    %5157 = vmatmul.mubr.bf16.gmra.mrb[0].mxu0 %v183
    %v5158 = vpop.f32.mrb[0].mxu0
    %v5159 = vadd.f32 %v5116, %v5158
    %v5160 = vpop.f32.mrb[0].mxu0
    %v5161 = vadd.f32 %v5118, %v5160
    %v5162 = vpop.f32.mrb[0].mxu0
    %v5163 = vadd.f32 %v5120, %v5162
    %v5164 = vpop.f32.mrb[0].mxu0
    %v5165 = vadd.f32 %v5122, %v5164
    %5166 = vdwg.mxu0
    %5167 = vmatprep.subr.bf16.mxu0 %v3702
    %5168 = vmatpush1.bf16.msra.mxu0 %v3701
    %5169 = vmatprep.subr.bf16.mxu0 %v3715
    %5170 = vmatpush1.bf16.msra.mxu0 %v3714
    %5171 = vmatprep.subr.bf16.mxu0 %v3728
    %5172 = vmatpush1.bf16.msra.mxu0 %v3727
    %5173 = vmatprep.subr.bf16.mxu0 %v3741
    %5174 = vmatpush1.bf16.msra.mxu0 %v3740
    %5175 = vmatprep.subr.bf16.mxu0 %v3754
    %5176 = vmatpush1.bf16.msra.mxu0 %v3753
    %5177 = vmatprep.subr.bf16.mxu0 %v3767
    %5178 = vmatpush1.bf16.msra.mxu0 %v3766
    %5179 = vmatprep.subr.bf16.mxu0 %v3780
    %5180 = vmatpush1.bf16.msra.mxu0 %v3779
    %5181 = vmatprep.subr.bf16.mxu0 %v3793
    %5182 = vmatpush1.bf16.msra.mxu0 %v3792
    %5183 = vmatprep.subr.bf16.mxu0 %v3806
    %5184 = vmatpush1.bf16.msra.mxu0 %v3805
    %5185 = vmatprep.subr.bf16.mxu0 %v3819
    %5186 = vmatpush1.bf16.msra.mxu0 %v3818
    %5187 = vmatprep.subr.bf16.mxu0 %v3832
    %5188 = vmatpush1.bf16.msra.mxu0 %v3831
    %5189 = vmatprep.subr.bf16.mxu0 %v3845
    %5190 = vmatpush1.bf16.msra.mxu0 %v3844
    %5191 = vmatprep.subr.bf16.mxu0 %v3858
    %5192 = vmatpush1.bf16.msra.mxu0 %v3857
    %5193 = vmatprep.subr.bf16.mxu0 %v3871
    %5194 = vmatpush1.bf16.msra.mxu0 %v3870
    %5195 = vmatprep.subr.bf16.mxu0 %v3884
    %5196 = vmatpush1.bf16.msra.mxu0 %v3883
    %5197 = vmatprep.subr.bf16.mxu0 %v3897
    %5198 = vmatpush1.bf16.msra.mxu0 %v3896
    %5199 = vmatprep.mubr.bf16.mxu0 %v186
    %5200 = vmatmul.mubr.bf16.gmra.mrb[0].mxu0 %v185
    %v5201 = vpop.f32.mrb[0].mxu0
    %v5202 = vadd.f32 %v5159, %v5201
    %v5203 = vpop.f32.mrb[0].mxu0
    %v5204 = vadd.f32 %v5161, %v5203
    %v5205 = vpop.f32.mrb[0].mxu0
    %v5206 = vadd.f32 %v5163, %v5205
    %v5207 = vpop.f32.mrb[0].mxu0
    %v5208 = vadd.f32 %v5165, %v5207
    %5209 = vdwg.mxu0
    %5210 = vmatprep.subr.bf16.mxu0 %v3910
    %5211 = vmatpush1.bf16.msra.mxu0 %v3909
    %5212 = vmatprep.subr.bf16.mxu0 %v3923
    %5213 = vmatpush1.bf16.msra.mxu0 %v3922
    %5214 = vmatprep.subr.bf16.mxu0 %v3936
    %5215 = vmatpush1.bf16.msra.mxu0 %v3935
    %5216 = vmatprep.subr.bf16.mxu0 %v3949
    %5217 = vmatpush1.bf16.msra.mxu0 %v3948
    %5218 = vmatprep.subr.bf16.mxu0 %v3962
    %5219 = vmatpush1.bf16.msra.mxu0 %v3961
    %5220 = vmatprep.subr.bf16.mxu0 %v3975
    %5221 = vmatpush1.bf16.msra.mxu0 %v3974
    %5222 = vmatprep.subr.bf16.mxu0 %v3988
    %5223 = vmatpush1.bf16.msra.mxu0 %v3987
    %5224 = vmatprep.subr.bf16.mxu0 %v4001
    %5225 = vmatpush1.bf16.msra.mxu0 %v4000
    %5226 = vmatprep.subr.bf16.mxu0 0
    %5227 = vmatpush1.bf16.msra.mxu0 0
    %5228 = vmatprep.subr.bf16.mxu0 0
    %5229 = vmatpush1.bf16.msra.mxu0 0
    %5230 = vmatprep.subr.bf16.mxu0 0
    %5231 = vmatpush1.bf16.msra.mxu0 0
    %5232 = vmatprep.subr.bf16.mxu0 0
    %5233 = vmatpush1.bf16.msra.mxu0 0
    %5234 = vmatprep.subr.bf16.mxu0 0
    %5235 = vmatpush1.bf16.msra.mxu0 0
    %5236 = vmatprep.subr.bf16.mxu0 0
    %5237 = vmatpush1.bf16.msra.mxu0 0
    %5238 = vmatprep.subr.bf16.mxu0 0
    %5239 = vmatpush1.bf16.msra.mxu0 0
    %5240 = vmatprep.subr.bf16.mxu0 0
    %5241 = vmatpush1.bf16.msra.mxu0 0
    %5242 = vmatprep.mubr.bf16.mxu0 0
    %5243 = vmatmul.mubr.bf16.gmra.mrb[0].mxu0 %v187
    %v5244 = vpop.f32.mrb[0].mxu0
    %v5245 = vadd.f32 %v5202, %v5244
    %v5246 = vpop.f32.mrb[0].mxu0
    %v5247 = vadd.f32 %v5204, %v5246
    %v5248 = vpop.f32.mrb[0].mxu0
    %v5249 = vadd.f32 %v5206, %v5248
    %v5250 = vpop.f32.mrb[0].mxu0
    %v5251 = vadd.f32 %v5208, %v5250
    %5252 = vdwg.mxu0
    %5253 = vmatprep.subr.bf16.mxu0 %v3288
    %5254 = vmatpush1.bf16.msra.mxu0 %v3287
    %5255 = vmatprep.subr.bf16.mxu0 %v3301
    %5256 = vmatpush1.bf16.msra.mxu0 %v3300
    %5257 = vmatprep.subr.bf16.mxu0 %v3314
    %5258 = vmatpush1.bf16.msra.mxu0 %v3313
    %5259 = vmatprep.subr.bf16.mxu0 %v3327
    %5260 = vmatpush1.bf16.msra.mxu0 %v3326
    %5261 = vmatprep.subr.bf16.mxu0 %v3340
    %5262 = vmatpush1.bf16.msra.mxu0 %v3339
    %5263 = vmatprep.subr.bf16.mxu0 %v3353
    %5264 = vmatpush1.bf16.msra.mxu0 %v3352
    %5265 = vmatprep.subr.bf16.mxu0 %v3366
    %5266 = vmatpush1.bf16.msra.mxu0 %v3365
    %5267 = vmatprep.subr.bf16.mxu0 %v3379
    %5268 = vmatpush1.bf16.msra.mxu0 %v3378
    %5269 = vmatprep.subr.bf16.mxu0 %v3392
    %5270 = vmatpush1.bf16.msra.mxu0 %v3391
    %5271 = vmatprep.subr.bf16.mxu0 %v3405
    %5272 = vmatpush1.bf16.msra.mxu0 %v3404
    %5273 = vmatprep.subr.bf16.mxu0 %v3418
    %5274 = vmatpush1.bf16.msra.mxu0 %v3417
    %5275 = vmatprep.subr.bf16.mxu0 %v3431
    %5276 = vmatpush1.bf16.msra.mxu0 %v3430
    %5277 = vmatprep.subr.bf16.mxu0 %v3444
    %5278 = vmatpush1.bf16.msra.mxu0 %v3443
    %5279 = vmatprep.subr.bf16.mxu0 %v3457
    %5280 = vmatpush1.bf16.msra.mxu0 %v3456
    %5281 = vmatprep.subr.bf16.mxu0 %v3470
    %5282 = vmatpush1.bf16.msra.mxu0 %v3469
    %5283 = vmatprep.subr.bf16.mxu0 %v3483
    %5284 = vmatpush1.bf16.msra.mxu0 %v3482
    %5285 = vmatprep.mubr.bf16.mxu0 %v182
    %5286 = vmatmul.mubr.bf16.gmra.mrb[0].mxu0 %v181
    %v5287 = vpop.f32.mrb[0].mxu0
    %v5288 = vadd.f32 %v1003, %v5287
    %v5289 = vpop.f32.mrb[0].mxu0
    %v5290 = vadd.f32 %v1007, %v5289
    %v5291 = vpop.f32.mrb[0].mxu0
    %v5292 = vadd.f32 %v1003, %v5291
    %v5293 = vpop.f32.mrb[0].mxu0
    %v5294 = vadd.f32 %v1007, %v5293
    %5295 = vdwg.mxu0
    %5296 = vmatprep.subr.bf16.mxu0 %v3496
    %5297 = vmatpush1.bf16.msra.mxu0 %v3495
    %5298 = vmatprep.subr.bf16.mxu0 %v3509
    %5299 = vmatpush1.bf16.msra.mxu0 %v3508
    %5300 = vmatprep.subr.bf16.mxu0 %v3522
    %5301 = vmatpush1.bf16.msra.mxu0 %v3521
    %5302 = vmatprep.subr.bf16.mxu0 %v3535
    %5303 = vmatpush1.bf16.msra.mxu0 %v3534
    %5304 = vmatprep.subr.bf16.mxu0 %v3548
    %5305 = vmatpush1.bf16.msra.mxu0 %v3547
    %5306 = vmatprep.subr.bf16.mxu0 %v3561
    %5307 = vmatpush1.bf16.msra.mxu0 %v3560
    %5308 = vmatprep.subr.bf16.mxu0 %v3574
    %5309 = vmatpush1.bf16.msra.mxu0 %v3573
    %5310 = vmatprep.subr.bf16.mxu0 %v3587
    %5311 = vmatpush1.bf16.msra.mxu0 %v3586
    %5312 = vmatprep.subr.bf16.mxu0 %v3600
    %5313 = vmatpush1.bf16.msra.mxu0 %v3599
    %5314 = vmatprep.subr.bf16.mxu0 %v3613
    %5315 = vmatpush1.bf16.msra.mxu0 %v3612
    %5316 = vmatprep.subr.bf16.mxu0 %v3626
    %5317 = vmatpush1.bf16.msra.mxu0 %v3625
    %5318 = vmatprep.subr.bf16.mxu0 %v3639
    %5319 = vmatpush1.bf16.msra.mxu0 %v3638
    %5320 = vmatprep.subr.bf16.mxu0 %v3652
    %5321 = vmatpush1.bf16.msra.mxu0 %v3651
    %5322 = vmatprep.subr.bf16.mxu0 %v3665
    %5323 = vmatpush1.bf16.msra.mxu0 %v3664
    %5324 = vmatprep.subr.bf16.mxu0 %v3678
    %5325 = vmatpush1.bf16.msra.mxu0 %v3677
    %5326 = vmatprep.subr.bf16.mxu0 %v3691
    %5327 = vmatpush1.bf16.msra.mxu0 %v3690
    %5328 = vmatprep.mubr.bf16.mxu0 %v184
    %5329 = vmatmul.mubr.bf16.gmra.mrb[0].mxu0 %v183
    %v5330 = vpop.f32.mrb[0].mxu0
    %v5331 = vadd.f32 %v5288, %v5330
    %v5332 = vpop.f32.mrb[0].mxu0
    %v5333 = vadd.f32 %v5290, %v5332
    %v5334 = vpop.f32.mrb[0].mxu0
    %v5335 = vadd.f32 %v5292, %v5334
    %v5336 = vpop.f32.mrb[0].mxu0
    %v5337 = vadd.f32 %v5294, %v5336
    %5338 = vdwg.mxu0
    %5339 = vmatprep.subr.bf16.mxu0 %v3704
    %5340 = vmatpush1.bf16.msra.mxu0 %v3703
    %5341 = vmatprep.subr.bf16.mxu0 %v3717
    %5342 = vmatpush1.bf16.msra.mxu0 %v3716
    %5343 = vmatprep.subr.bf16.mxu0 %v3730
    %5344 = vmatpush1.bf16.msra.mxu0 %v3729
    %5345 = vmatprep.subr.bf16.mxu0 %v3743
    %5346 = vmatpush1.bf16.msra.mxu0 %v3742
    %5347 = vmatprep.subr.bf16.mxu0 %v3756
    %5348 = vmatpush1.bf16.msra.mxu0 %v3755
    %5349 = vmatprep.subr.bf16.mxu0 %v3769
    %5350 = vmatpush1.bf16.msra.mxu0 %v3768
    %5351 = vmatprep.subr.bf16.mxu0 %v3782
    %5352 = vmatpush1.bf16.msra.mxu0 %v3781
    %5353 = vmatprep.subr.bf16.mxu0 %v3795
    %5354 = vmatpush1.bf16.msra.mxu0 %v3794
    %5355 = vmatprep.subr.bf16.mxu0 %v3808
    %5356 = vmatpush1.bf16.msra.mxu0 %v3807
    %5357 = vmatprep.subr.bf16.mxu0 %v3821
    %5358 = vmatpush1.bf16.msra.mxu0 %v3820
    %5359 = vmatprep.subr.bf16.mxu0 %v3834
    %5360 = vmatpush1.bf16.msra.mxu0 %v3833
    %5361 = vmatprep.subr.bf16.mxu0 %v3847
    %5362 = vmatpush1.bf16.msra.mxu0 %v3846
    %5363 = vmatprep.subr.bf16.mxu0 %v3860
    %5364 = vmatpush1.bf16.msra.mxu0 %v3859
    %5365 = vmatprep.subr.bf16.mxu0 %v3873
    %5366 = vmatpush1.bf16.msra.mxu0 %v3872
    %5367 = vmatprep.subr.bf16.mxu0 %v3886
    %5368 = vmatpush1.bf16.msra.mxu0 %v3885
    %5369 = vmatprep.subr.bf16.mxu0 %v3899
    %5370 = vmatpush1.bf16.msra.mxu0 %v3898
    %5371 = vmatprep.mubr.bf16.mxu0 %v186
    %5372 = vmatmul.mubr.bf16.gmra.mrb[0].mxu0 %v185
    %v5373 = vpop.f32.mrb[0].mxu0
    %v5374 = vadd.f32 %v5331, %v5373
    %v5375 = vpop.f32.mrb[0].mxu0
    %v5376 = vadd.f32 %v5333, %v5375
    %v5377 = vpop.f32.mrb[0].mxu0
    %v5378 = vadd.f32 %v5335, %v5377
    %v5379 = vpop.f32.mrb[0].mxu0
    %v5380 = vadd.f32 %v5337, %v5379
    %5381 = vdwg.mxu0
    %5382 = vmatprep.subr.bf16.mxu0 %v3912
    %5383 = vmatpush1.bf16.msra.mxu0 %v3911
    %5384 = vmatprep.subr.bf16.mxu0 %v3925
    %5385 = vmatpush1.bf16.msra.mxu0 %v3924
    %5386 = vmatprep.subr.bf16.mxu0 %v3938
    %5387 = vmatpush1.bf16.msra.mxu0 %v3937
    %5388 = vmatprep.subr.bf16.mxu0 %v3951
    %5389 = vmatpush1.bf16.msra.mxu0 %v3950
    %5390 = vmatprep.subr.bf16.mxu0 %v3964
    %5391 = vmatpush1.bf16.msra.mxu0 %v3963
    %5392 = vmatprep.subr.bf16.mxu0 %v3977
    %5393 = vmatpush1.bf16.msra.mxu0 %v3976
    %5394 = vmatprep.subr.bf16.mxu0 %v3990
    %5395 = vmatpush1.bf16.msra.mxu0 %v3989
    %5396 = vmatprep.subr.bf16.mxu0 %v4003
    %5397 = vmatpush1.bf16.msra.mxu0 %v4002
    %5398 = vmatprep.subr.bf16.mxu0 0
    %5399 = vmatpush1.bf16.msra.mxu0 0
    %5400 = vmatprep.subr.bf16.mxu0 0
    %5401 = vmatpush1.bf16.msra.mxu0 0
    %5402 = vmatprep.subr.bf16.mxu0 0
    %5403 = vmatpush1.bf16.msra.mxu0 0
    %5404 = vmatprep.subr.bf16.mxu0 0
    %5405 = vmatpush1.bf16.msra.mxu0 0
    %5406 = vmatprep.subr.bf16.mxu0 0
    %5407 = vmatpush1.bf16.msra.mxu0 0
    %5408 = vmatprep.subr.bf16.mxu0 0
    %5409 = vmatpush1.bf16.msra.mxu0 0
    %5410 = vmatprep.subr.bf16.mxu0 0
    %5411 = vmatpush1.bf16.msra.mxu0 0
    %5412 = vmatprep.subr.bf16.mxu0 0
    %5413 = vmatpush1.bf16.msra.mxu0 0
    %5414 = vmatprep.mubr.bf16.mxu0 0
    %5415 = vmatmul.mubr.bf16.gmra.mrb[0].mxu0 %v187
    %v5416 = vpop.f32.mrb[0].mxu0
    %v5417 = vadd.f32 %v5374, %v5416
    %v5418 = vpop.f32.mrb[0].mxu0
    %v5419 = vadd.f32 %v5376, %v5418
    %v5420 = vpop.f32.mrb[0].mxu0
    %v5421 = vadd.f32 %v5378, %v5420
    %v5422 = vpop.f32.mrb[0].mxu0
    %v5423 = vadd.f32 %v5380, %v5422
    %5424 = vdwg.mxu0
    %5425 = vmatprep.subr.bf16.mxu0 %v3290
    %5426 = vmatpush1.bf16.msra.mxu0 %v3289
    %5427 = vmatprep.subr.bf16.mxu0 %v3303
    %5428 = vmatpush1.bf16.msra.mxu0 %v3302
    %5429 = vmatprep.subr.bf16.mxu0 %v3316
    %5430 = vmatpush1.bf16.msra.mxu0 %v3315
    %5431 = vmatprep.subr.bf16.mxu0 %v3329
    %5432 = vmatpush1.bf16.msra.mxu0 %v3328
    %5433 = vmatprep.subr.bf16.mxu0 %v3342
    %5434 = vmatpush1.bf16.msra.mxu0 %v3341
    %5435 = vmatprep.subr.bf16.mxu0 %v3355
    %5436 = vmatpush1.bf16.msra.mxu0 %v3354
    %5437 = vmatprep.subr.bf16.mxu0 %v3368
    %5438 = vmatpush1.bf16.msra.mxu0 %v3367
    %5439 = vmatprep.subr.bf16.mxu0 %v3381
    %5440 = vmatpush1.bf16.msra.mxu0 %v3380
    %5441 = vmatprep.subr.bf16.mxu0 %v3394
    %5442 = vmatpush1.bf16.msra.mxu0 %v3393
    %5443 = vmatprep.subr.bf16.mxu0 %v3407
    %5444 = vmatpush1.bf16.msra.mxu0 %v3406
    %5445 = vmatprep.subr.bf16.mxu0 %v3420
    %5446 = vmatpush1.bf16.msra.mxu0 %v3419
    %5447 = vmatprep.subr.bf16.mxu0 %v3433
    %5448 = vmatpush1.bf16.msra.mxu0 %v3432
    %5449 = vmatprep.subr.bf16.mxu0 %v3446
    %5450 = vmatpush1.bf16.msra.mxu0 %v3445
    %5451 = vmatprep.subr.bf16.mxu0 %v3459
    %5452 = vmatpush1.bf16.msra.mxu0 %v3458
    %5453 = vmatprep.subr.bf16.mxu0 %v3472
    %5454 = vmatpush1.bf16.msra.mxu0 %v3471
    %5455 = vmatprep.subr.bf16.mxu0 %v3485
    %5456 = vmatpush1.bf16.msra.mxu0 %v3484
    %5457 = vmatprep.mubr.bf16.mxu0 %v182
    %5458 = vmatmul.mubr.bf16.gmra.mrb[0].mxu0 %v181
    %v5459 = vpop.f32.mrb[0].mxu0
    %v5460 = vadd.f32 %v1011, %v5459
    %v5461 = vpop.f32.mrb[0].mxu0
    %v5462 = vadd.f32 %v1015, %v5461
    %v5463 = vpop.f32.mrb[0].mxu0
    %v5464 = vadd.f32 %v1011, %v5463
    %v5465 = vpop.f32.mrb[0].mxu0
    %v5466 = vadd.f32 %v1015, %v5465
    %5467 = vdwg.mxu0
    %5468 = vmatprep.subr.bf16.mxu0 %v3498
    %5469 = vmatpush1.bf16.msra.mxu0 %v3497
    %5470 = vmatprep.subr.bf16.mxu0 %v3511
    %5471 = vmatpush1.bf16.msra.mxu0 %v3510
    %5472 = vmatprep.subr.bf16.mxu0 %v3524
    %5473 = vmatpush1.bf16.msra.mxu0 %v3523
    %5474 = vmatprep.subr.bf16.mxu0 %v3537
    %5475 = vmatpush1.bf16.msra.mxu0 %v3536
    %5476 = vmatprep.subr.bf16.mxu0 %v3550
    %5477 = vmatpush1.bf16.msra.mxu0 %v3549
    %5478 = vmatprep.subr.bf16.mxu0 %v3563
    %5479 = vmatpush1.bf16.msra.mxu0 %v3562
    %5480 = vmatprep.subr.bf16.mxu0 %v3576
    %5481 = vmatpush1.bf16.msra.mxu0 %v3575
    %5482 = vmatprep.subr.bf16.mxu0 %v3589
    %5483 = vmatpush1.bf16.msra.mxu0 %v3588
    %5484 = vmatprep.subr.bf16.mxu0 %v3602
    %5485 = vmatpush1.bf16.msra.mxu0 %v3601
    %5486 = vmatprep.subr.bf16.mxu0 %v3615
    %5487 = vmatpush1.bf16.msra.mxu0 %v3614
    %5488 = vmatprep.subr.bf16.mxu0 %v3628
    %5489 = vmatpush1.bf16.msra.mxu0 %v3627
    %5490 = vmatprep.subr.bf16.mxu0 %v3641
    %5491 = vmatpush1.bf16.msra.mxu0 %v3640
    %5492 = vmatprep.subr.bf16.mxu0 %v3654
    %5493 = vmatpush1.bf16.msra.mxu0 %v3653
    %5494 = vmatprep.subr.bf16.mxu0 %v3667
    %5495 = vmatpush1.bf16.msra.mxu0 %v3666
    %5496 = vmatprep.subr.bf16.mxu0 %v3680
    %5497 = vmatpush1.bf16.msra.mxu0 %v3679
    %5498 = vmatprep.subr.bf16.mxu0 %v3693
    %5499 = vmatpush1.bf16.msra.mxu0 %v3692
    %5500 = vmatprep.mubr.bf16.mxu0 %v184
    %5501 = vmatmul.mubr.bf16.gmra.mrb[0].mxu0 %v183
    %v5502 = vpop.f32.mrb[0].mxu0
    %v5503 = vadd.f32 %v5460, %v5502
    %v5504 = vpop.f32.mrb[0].mxu0
    %v5505 = vadd.f32 %v5462, %v5504
    %v5506 = vpop.f32.mrb[0].mxu0
    %v5507 = vadd.f32 %v5464, %v5506
    %v5508 = vpop.f32.mrb[0].mxu0
    %v5509 = vadd.f32 %v5466, %v5508
    %5510 = vdwg.mxu0
    %5511 = vmatprep.subr.bf16.mxu0 %v3706
    %5512 = vmatpush1.bf16.msra.mxu0 %v3705
    %5513 = vmatprep.subr.bf16.mxu0 %v3719
    %5514 = vmatpush1.bf16.msra.mxu0 %v3718
    %5515 = vmatprep.subr.bf16.mxu0 %v3732
    %5516 = vmatpush1.bf16.msra.mxu0 %v3731
    %5517 = vmatprep.subr.bf16.mxu0 %v3745
    %5518 = vmatpush1.bf16.msra.mxu0 %v3744
    %5519 = vmatprep.subr.bf16.mxu0 %v3758
    %5520 = vmatpush1.bf16.msra.mxu0 %v3757
    %5521 = vmatprep.subr.bf16.mxu0 %v3771
    %5522 = vmatpush1.bf16.msra.mxu0 %v3770
    %5523 = vmatprep.subr.bf16.mxu0 %v3784
    %5524 = vmatpush1.bf16.msra.mxu0 %v3783
    %5525 = vmatprep.subr.bf16.mxu0 %v3797
    %5526 = vmatpush1.bf16.msra.mxu0 %v3796
    %5527 = vmatprep.subr.bf16.mxu0 %v3810
    %5528 = vmatpush1.bf16.msra.mxu0 %v3809
    %5529 = vmatprep.subr.bf16.mxu0 %v3823
    %5530 = vmatpush1.bf16.msra.mxu0 %v3822
    %5531 = vmatprep.subr.bf16.mxu0 %v3836
    %5532 = vmatpush1.bf16.msra.mxu0 %v3835
    %5533 = vmatprep.subr.bf16.mxu0 %v3849
    %5534 = vmatpush1.bf16.msra.mxu0 %v3848
    %5535 = vmatprep.subr.bf16.mxu0 %v3862
    %5536 = vmatpush1.bf16.msra.mxu0 %v3861
    %5537 = vmatprep.subr.bf16.mxu0 %v3875
    %5538 = vmatpush1.bf16.msra.mxu0 %v3874
    %5539 = vmatprep.subr.bf16.mxu0 %v3888
    %5540 = vmatpush1.bf16.msra.mxu0 %v3887
    %5541 = vmatprep.subr.bf16.mxu0 %v3901
    %5542 = vmatpush1.bf16.msra.mxu0 %v3900
    %5543 = vmatprep.mubr.bf16.mxu0 %v186
    %5544 = vmatmul.mubr.bf16.gmra.mrb[0].mxu0 %v185
    %v5545 = vpop.f32.mrb[0].mxu0
    %v5546 = vadd.f32 %v5503, %v5545
    %v5547 = vpop.f32.mrb[0].mxu0
    %v5548 = vadd.f32 %v5505, %v5547
    %v5549 = vpop.f32.mrb[0].mxu0
    %v5550 = vadd.f32 %v5507, %v5549
    %v5551 = vpop.f32.mrb[0].mxu0
    %v5552 = vadd.f32 %v5509, %v5551
    %5553 = vdwg.mxu0
    %5554 = vmatprep.subr.bf16.mxu0 %v3914
    %5555 = vmatpush1.bf16.msra.mxu0 %v3913
    %5556 = vmatprep.subr.bf16.mxu0 %v3927
    %5557 = vmatpush1.bf16.msra.mxu0 %v3926
    %5558 = vmatprep.subr.bf16.mxu0 %v3940
    %5559 = vmatpush1.bf16.msra.mxu0 %v3939
    %5560 = vmatprep.subr.bf16.mxu0 %v3953
    %5561 = vmatpush1.bf16.msra.mxu0 %v3952
    %5562 = vmatprep.subr.bf16.mxu0 %v3966
    %5563 = vmatpush1.bf16.msra.mxu0 %v3965
    %5564 = vmatprep.subr.bf16.mxu0 %v3979
    %5565 = vmatpush1.bf16.msra.mxu0 %v3978
    %5566 = vmatprep.subr.bf16.mxu0 %v3992
    %5567 = vmatpush1.bf16.msra.mxu0 %v3991
    %5568 = vmatprep.subr.bf16.mxu0 %v4005
    %5569 = vmatpush1.bf16.msra.mxu0 %v4004
    %5570 = vmatprep.subr.bf16.mxu0 0
    %5571 = vmatpush1.bf16.msra.mxu0 0
    %5572 = vmatprep.subr.bf16.mxu0 0
    %5573 = vmatpush1.bf16.msra.mxu0 0
    %5574 = vmatprep.subr.bf16.mxu0 0
    %5575 = vmatpush1.bf16.msra.mxu0 0
    %5576 = vmatprep.subr.bf16.mxu0 0
    %5577 = vmatpush1.bf16.msra.mxu0 0
    %5578 = vmatprep.subr.bf16.mxu0 0
    %5579 = vmatpush1.bf16.msra.mxu0 0
    %5580 = vmatprep.subr.bf16.mxu0 0
    %5581 = vmatpush1.bf16.msra.mxu0 0
    %5582 = vmatprep.subr.bf16.mxu0 0
    %5583 = vmatpush1.bf16.msra.mxu0 0
    %5584 = vmatprep.subr.bf16.mxu0 0
    %5585 = vmatpush1.bf16.msra.mxu0 0
    %5586 = vmatprep.mubr.bf16.mxu0 0
    %5587 = vmatmul.mubr.bf16.gmra.mrb[0].mxu0 %v187
    %v5588 = vpop.f32.mrb[0].mxu0
    %v5589 = vadd.f32 %v5546, %v5588
    %v5590 = vpop.f32.mrb[0].mxu0
    %v5591 = vadd.f32 %v5548, %v5590
    %v5592 = vpop.f32.mrb[0].mxu0
    %v5593 = vadd.f32 %v5550, %v5592
    %v5594 = vpop.f32.mrb[0].mxu0
    %v5595 = vadd.f32 %v5552, %v5594
    %5596 = vdwg.mxu0
    %5597 = vmatprep.subr.bf16.mxu0 %v3292
    %5598 = vmatpush1.bf16.msra.mxu0 %v3291
    %5599 = vmatprep.subr.bf16.mxu0 %v3305
    %5600 = vmatpush1.bf16.msra.mxu0 %v3304
    %5601 = vmatprep.subr.bf16.mxu0 %v3318
    %5602 = vmatpush1.bf16.msra.mxu0 %v3317
    %5603 = vmatprep.subr.bf16.mxu0 %v3331
    %5604 = vmatpush1.bf16.msra.mxu0 %v3330
    %5605 = vmatprep.subr.bf16.mxu0 %v3344
    %5606 = vmatpush1.bf16.msra.mxu0 %v3343
    %5607 = vmatprep.subr.bf16.mxu0 %v3357
    %5608 = vmatpush1.bf16.msra.mxu0 %v3356
    %5609 = vmatprep.subr.bf16.mxu0 %v3370
    %5610 = vmatpush1.bf16.msra.mxu0 %v3369
    %5611 = vmatprep.subr.bf16.mxu0 %v3383
    %5612 = vmatpush1.bf16.msra.mxu0 %v3382
    %5613 = vmatprep.subr.bf16.mxu0 %v3396
    %5614 = vmatpush1.bf16.msra.mxu0 %v3395
    %5615 = vmatprep.subr.bf16.mxu0 %v3409
    %5616 = vmatpush1.bf16.msra.mxu0 %v3408
    %5617 = vmatprep.subr.bf16.mxu0 %v3422
    %5618 = vmatpush1.bf16.msra.mxu0 %v3421
    %5619 = vmatprep.subr.bf16.mxu0 %v3435
    %5620 = vmatpush1.bf16.msra.mxu0 %v3434
    %5621 = vmatprep.subr.bf16.mxu0 %v3448
    %5622 = vmatpush1.bf16.msra.mxu0 %v3447
    %5623 = vmatprep.subr.bf16.mxu0 %v3461
    %5624 = vmatpush1.bf16.msra.mxu0 %v3460
    %5625 = vmatprep.subr.bf16.mxu0 %v3474
    %5626 = vmatpush1.bf16.msra.mxu0 %v3473
    %5627 = vmatprep.subr.bf16.mxu0 %v3487
    %5628 = vmatpush1.bf16.msra.mxu0 %v3486
    %5629 = vmatprep.mubr.bf16.mxu0 %v182
    %5630 = vmatmul.mubr.bf16.gmra.mrb[0].mxu0 %v181
    %v5631 = vpop.f32.mrb[0].mxu0
    %v5632 = vadd.f32 %v1019, %v5631
    %v5633 = vpop.f32.mrb[0].mxu0
    %v5634 = vadd.f32 %v1023, %v5633
    %v5635 = vpop.f32.mrb[0].mxu0
    %v5636 = vadd.f32 %v1019, %v5635
    %v5637 = vpop.f32.mrb[0].mxu0
    %v5638 = vadd.f32 %v1023, %v5637
    %5639 = vdwg.mxu0
    %5640 = vmatprep.subr.bf16.mxu0 %v3500
    %5641 = vmatpush1.bf16.msra.mxu0 %v3499
    %5642 = vmatprep.subr.bf16.mxu0 %v3513
    %5643 = vmatpush1.bf16.msra.mxu0 %v3512
    %5644 = vmatprep.subr.bf16.mxu0 %v3526
    %5645 = vmatpush1.bf16.msra.mxu0 %v3525
    %5646 = vmatprep.subr.bf16.mxu0 %v3539
    %5647 = vmatpush1.bf16.msra.mxu0 %v3538
    %5648 = vmatprep.subr.bf16.mxu0 %v3552
    %5649 = vmatpush1.bf16.msra.mxu0 %v3551
    %5650 = vmatprep.subr.bf16.mxu0 %v3565
    %5651 = vmatpush1.bf16.msra.mxu0 %v3564
    %5652 = vmatprep.subr.bf16.mxu0 %v3578
    %5653 = vmatpush1.bf16.msra.mxu0 %v3577
    %5654 = vmatprep.subr.bf16.mxu0 %v3591
    %5655 = vmatpush1.bf16.msra.mxu0 %v3590
    %5656 = vmatprep.subr.bf16.mxu0 %v3604
    %5657 = vmatpush1.bf16.msra.mxu0 %v3603
    %5658 = vmatprep.subr.bf16.mxu0 %v3617
    %5659 = vmatpush1.bf16.msra.mxu0 %v3616
    %5660 = vmatprep.subr.bf16.mxu0 %v3630
    %5661 = vmatpush1.bf16.msra.mxu0 %v3629
    %5662 = vmatprep.subr.bf16.mxu0 %v3643
    %5663 = vmatpush1.bf16.msra.mxu0 %v3642
    %5664 = vmatprep.subr.bf16.mxu0 %v3656
    %5665 = vmatpush1.bf16.msra.mxu0 %v3655
    %5666 = vmatprep.subr.bf16.mxu0 %v3669
    %5667 = vmatpush1.bf16.msra.mxu0 %v3668
    %5668 = vmatprep.subr.bf16.mxu0 %v3682
    %5669 = vmatpush1.bf16.msra.mxu0 %v3681
    %5670 = vmatprep.subr.bf16.mxu0 %v3695
    %5671 = vmatpush1.bf16.msra.mxu0 %v3694
    %5672 = vmatprep.mubr.bf16.mxu0 %v184
    %5673 = vmatmul.mubr.bf16.gmra.mrb[0].mxu0 %v183
    %v5674 = vpop.f32.mrb[0].mxu0
    %v5675 = vadd.f32 %v5632, %v5674
    %v5676 = vpop.f32.mrb[0].mxu0
    %v5677 = vadd.f32 %v5634, %v5676
    %v5678 = vpop.f32.mrb[0].mxu0
    %v5679 = vadd.f32 %v5636, %v5678
    %v5680 = vpop.f32.mrb[0].mxu0
    %v5681 = vadd.f32 %v5638, %v5680
    %5682 = vdwg.mxu0
    %5683 = vmatprep.subr.bf16.mxu0 %v3708
    %5684 = vmatpush1.bf16.msra.mxu0 %v3707
    %5685 = vmatprep.subr.bf16.mxu0 %v3721
    %5686 = vmatpush1.bf16.msra.mxu0 %v3720
    %5687 = vmatprep.subr.bf16.mxu0 %v3734
    %5688 = vmatpush1.bf16.msra.mxu0 %v3733
    %5689 = vmatprep.subr.bf16.mxu0 %v3747
    %5690 = vmatpush1.bf16.msra.mxu0 %v3746
    %5691 = vmatprep.subr.bf16.mxu0 %v3760
    %5692 = vmatpush1.bf16.msra.mxu0 %v3759
    %5693 = vmatprep.subr.bf16.mxu0 %v3773
    %5694 = vmatpush1.bf16.msra.mxu0 %v3772
    %5695 = vmatprep.subr.bf16.mxu0 %v3786
    %5696 = vmatpush1.bf16.msra.mxu0 %v3785
    %5697 = vmatprep.subr.bf16.mxu0 %v3799
    %5698 = vmatpush1.bf16.msra.mxu0 %v3798
    %5699 = vmatprep.subr.bf16.mxu0 %v3812
    %5700 = vmatpush1.bf16.msra.mxu0 %v3811
    %5701 = vmatprep.subr.bf16.mxu0 %v3825
    %5702 = vmatpush1.bf16.msra.mxu0 %v3824
    %5703 = vmatprep.subr.bf16.mxu0 %v3838
    %5704 = vmatpush1.bf16.msra.mxu0 %v3837
    %5705 = vmatprep.subr.bf16.mxu0 %v3851
    %5706 = vmatpush1.bf16.msra.mxu0 %v3850
    %5707 = vmatprep.subr.bf16.mxu0 %v3864
    %5708 = vmatpush1.bf16.msra.mxu0 %v3863
    %5709 = vmatprep.subr.bf16.mxu0 %v3877
    %5710 = vmatpush1.bf16.msra.mxu0 %v3876
    %5711 = vmatprep.subr.bf16.mxu0 %v3890
    %5712 = vmatpush1.bf16.msra.mxu0 %v3889
    %5713 = vmatprep.subr.bf16.mxu0 %v3903
    %5714 = vmatpush1.bf16.msra.mxu0 %v3902
    %5715 = vmatprep.mubr.bf16.mxu0 %v186
    %5716 = vmatmul.mubr.bf16.gmra.mrb[0].mxu0 %v185
    %v5717 = vpop.f32.mrb[0].mxu0
    %v5718 = vadd.f32 %v5675, %v5717
    %v5719 = vpop.f32.mrb[0].mxu0
    %v5720 = vadd.f32 %v5677, %v5719
    %v5721 = vpop.f32.mrb[0].mxu0
    %v5722 = vadd.f32 %v5679, %v5721
    %v5723 = vpop.f32.mrb[0].mxu0
    %v5724 = vadd.f32 %v5681, %v5723
    %5725 = vdwg.mxu0
    %5726 = vmatprep.subr.bf16.mxu0 %v3916
    %5727 = vmatpush1.bf16.msra.mxu0 %v3915
    %5728 = vmatprep.subr.bf16.mxu0 %v3929
    %5729 = vmatpush1.bf16.msra.mxu0 %v3928
    %5730 = vmatprep.subr.bf16.mxu0 %v3942
    %5731 = vmatpush1.bf16.msra.mxu0 %v3941
    %5732 = vmatprep.subr.bf16.mxu0 %v3955
    %5733 = vmatpush1.bf16.msra.mxu0 %v3954
    %5734 = vmatprep.subr.bf16.mxu0 %v3968
    %5735 = vmatpush1.bf16.msra.mxu0 %v3967
    %5736 = vmatprep.subr.bf16.mxu0 %v3981
    %5737 = vmatpush1.bf16.msra.mxu0 %v3980
    %5738 = vmatprep.subr.bf16.mxu0 %v3994
    %5739 = vmatpush1.bf16.msra.mxu0 %v3993
    %5740 = vmatprep.subr.bf16.mxu0 %v4007
    %5741 = vmatpush1.bf16.msra.mxu0 %v4006
    %5742 = vmatprep.subr.bf16.mxu0 0
    %5743 = vmatpush1.bf16.msra.mxu0 0
    %5744 = vmatprep.subr.bf16.mxu0 0
    %5745 = vmatpush1.bf16.msra.mxu0 0
    %5746 = vmatprep.subr.bf16.mxu0 0
    %5747 = vmatpush1.bf16.msra.mxu0 0
    %5748 = vmatprep.subr.bf16.mxu0 0
    %5749 = vmatpush1.bf16.msra.mxu0 0
    %5750 = vmatprep.subr.bf16.mxu0 0
    %5751 = vmatpush1.bf16.msra.mxu0 0
    %5752 = vmatprep.subr.bf16.mxu0 0
    %5753 = vmatpush1.bf16.msra.mxu0 0
    %5754 = vmatprep.subr.bf16.mxu0 0
    %5755 = vmatpush1.bf16.msra.mxu0 0
    %5756 = vmatprep.subr.bf16.mxu0 0
    %5757 = vmatpush1.bf16.msra.mxu0 0
    %5758 = vmatprep.mubr.bf16.mxu0 0
    %5759 = vmatmul.mubr.bf16.gmra.mrb[0].mxu0 %v187
    %v5760 = vpop.f32.mrb[0].mxu0
    %v5761 = vadd.f32 %v5718, %v5760
    %v5762 = vpop.f32.mrb[0].mxu0
    %v5763 = vadd.f32 %v5720, %v5762
    %v5764 = vpop.f32.mrb[0].mxu0
    %v5765 = vadd.f32 %v5722, %v5764
    %v5766 = vpop.f32.mrb[0].mxu0
    %v5767 = vadd.f32 %v5724, %v5766
    %5768 = vdwg.mxu0
    %5769 = vmatprep.subr.bf16.mxu0 0
    %5770 = vmatpush1.bf16.msra.mxu0 %v3293
    %5771 = vmatprep.subr.bf16.mxu0 0
    %5772 = vmatpush1.bf16.msra.mxu0 %v3306
    %5773 = vmatprep.subr.bf16.mxu0 0
    %5774 = vmatpush1.bf16.msra.mxu0 %v3319
    %5775 = vmatprep.subr.bf16.mxu0 0
    %5776 = vmatpush1.bf16.msra.mxu0 %v3332
    %5777 = vmatprep.subr.bf16.mxu0 0
    %5778 = vmatpush1.bf16.msra.mxu0 %v3345
    %5779 = vmatprep.subr.bf16.mxu0 0
    %5780 = vmatpush1.bf16.msra.mxu0 %v3358
    %5781 = vmatprep.subr.bf16.mxu0 0
    %5782 = vmatpush1.bf16.msra.mxu0 %v3371
    %5783 = vmatprep.subr.bf16.mxu0 0
    %5784 = vmatpush1.bf16.msra.mxu0 %v3384
    %5785 = vmatprep.subr.bf16.mxu0 0
    %5786 = vmatpush1.bf16.msra.mxu0 %v3397
    %5787 = vmatprep.subr.bf16.mxu0 0
    %5788 = vmatpush1.bf16.msra.mxu0 %v3410
    %5789 = vmatprep.subr.bf16.mxu0 0
    %5790 = vmatpush1.bf16.msra.mxu0 %v3423
    %5791 = vmatprep.subr.bf16.mxu0 0
    %5792 = vmatpush1.bf16.msra.mxu0 %v3436
    %5793 = vmatprep.subr.bf16.mxu0 0
    %5794 = vmatpush1.bf16.msra.mxu0 %v3449
    %5795 = vmatprep.subr.bf16.mxu0 0
    %5796 = vmatpush1.bf16.msra.mxu0 %v3462
    %5797 = vmatprep.subr.bf16.mxu0 0
    %5798 = vmatpush1.bf16.msra.mxu0 %v3475
    %5799 = vmatprep.subr.bf16.mxu0 0
    %5800 = vmatpush1.bf16.msra.mxu0 %v3488
    %5801 = vmatprep.mubr.bf16.mxu0 %v182
    %5802 = vmatmul.mubr.bf16.gmra.mrb[0].mxu0 %v181
    %v5803 = vpop.f32.mrb[0].mxu0
    %v5804 = vadd.f32 %v1027, %v5803
    %v5805 = vpop.f32.mrb[0].mxu0
    %v5806 = vpop.f32.mrb[0].mxu0
    %v5807 = vadd.f32 %v1027, %v5806
    %v5808 = vpop.f32.mrb[0].mxu0
    %5809 = vdwg.mxu0
    %5810 = vmatprep.subr.bf16.mxu0 0
    %5811 = vmatpush1.bf16.msra.mxu0 %v3501
    %5812 = vmatprep.subr.bf16.mxu0 0
    %5813 = vmatpush1.bf16.msra.mxu0 %v3514
    %5814 = vmatprep.subr.bf16.mxu0 0
    %5815 = vmatpush1.bf16.msra.mxu0 %v3527
    %5816 = vmatprep.subr.bf16.mxu0 0
    %5817 = vmatpush1.bf16.msra.mxu0 %v3540
    %5818 = vmatprep.subr.bf16.mxu0 0
    %5819 = vmatpush1.bf16.msra.mxu0 %v3553
    %5820 = vmatprep.subr.bf16.mxu0 0
    %5821 = vmatpush1.bf16.msra.mxu0 %v3566
    %5822 = vmatprep.subr.bf16.mxu0 0
    %5823 = vmatpush1.bf16.msra.mxu0 %v3579
    %5824 = vmatprep.subr.bf16.mxu0 0
    %5825 = vmatpush1.bf16.msra.mxu0 %v3592
    %5826 = vmatprep.subr.bf16.mxu0 0
    %5827 = vmatpush1.bf16.msra.mxu0 %v3605
    %5828 = vmatprep.subr.bf16.mxu0 0
    %5829 = vmatpush1.bf16.msra.mxu0 %v3618
    %5830 = vmatprep.subr.bf16.mxu0 0
    %5831 = vmatpush1.bf16.msra.mxu0 %v3631
    %5832 = vmatprep.subr.bf16.mxu0 0
    %5833 = vmatpush1.bf16.msra.mxu0 %v3644
    %5834 = vmatprep.subr.bf16.mxu0 0
    %5835 = vmatpush1.bf16.msra.mxu0 %v3657
    %5836 = vmatprep.subr.bf16.mxu0 0
    %5837 = vmatpush1.bf16.msra.mxu0 %v3670
    %5838 = vmatprep.subr.bf16.mxu0 0
    %5839 = vmatpush1.bf16.msra.mxu0 %v3683
    %5840 = vmatprep.subr.bf16.mxu0 0
    %5841 = vmatpush1.bf16.msra.mxu0 %v3696
    %5842 = vmatprep.mubr.bf16.mxu0 %v184
    %5843 = vmatmul.mubr.bf16.gmra.mrb[0].mxu0 %v183
    %v5844 = vpop.f32.mrb[0].mxu0
    %v5845 = vadd.f32 %v5804, %v5844
    %v5846 = vpop.f32.mrb[0].mxu0
    %v5847 = vpop.f32.mrb[0].mxu0
    %v5848 = vadd.f32 %v5807, %v5847
    %v5849 = vpop.f32.mrb[0].mxu0
    %5850 = vdwg.mxu0
    %5851 = vmatprep.subr.bf16.mxu0 0
    %5852 = vmatpush1.bf16.msra.mxu0 %v3709
    %5853 = vmatprep.subr.bf16.mxu0 0
    %5854 = vmatpush1.bf16.msra.mxu0 %v3722
    %5855 = vmatprep.subr.bf16.mxu0 0
    %5856 = vmatpush1.bf16.msra.mxu0 %v3735
    %5857 = vmatprep.subr.bf16.mxu0 0
    %5858 = vmatpush1.bf16.msra.mxu0 %v3748
    %5859 = vmatprep.subr.bf16.mxu0 0
    %5860 = vmatpush1.bf16.msra.mxu0 %v3761
    %5861 = vmatprep.subr.bf16.mxu0 0
    %5862 = vmatpush1.bf16.msra.mxu0 %v3774
    %5863 = vmatprep.subr.bf16.mxu0 0
    %5864 = vmatpush1.bf16.msra.mxu0 %v3787
    %5865 = vmatprep.subr.bf16.mxu0 0
    %5866 = vmatpush1.bf16.msra.mxu0 %v3800
    %5867 = vmatprep.subr.bf16.mxu0 0
    %5868 = vmatpush1.bf16.msra.mxu0 %v3813
    %5869 = vmatprep.subr.bf16.mxu0 0
    %5870 = vmatpush1.bf16.msra.mxu0 %v3826
    %5871 = vmatprep.subr.bf16.mxu0 0
    %5872 = vmatpush1.bf16.msra.mxu0 %v3839
    %5873 = vmatprep.subr.bf16.mxu0 0
    %5874 = vmatpush1.bf16.msra.mxu0 %v3852
    %5875 = vmatprep.subr.bf16.mxu0 0
    %5876 = vmatpush1.bf16.msra.mxu0 %v3865
    %5877 = vmatprep.subr.bf16.mxu0 0
    %5878 = vmatpush1.bf16.msra.mxu0 %v3878
    %5879 = vmatprep.subr.bf16.mxu0 0
    %5880 = vmatpush1.bf16.msra.mxu0 %v3891
    %5881 = vmatprep.subr.bf16.mxu0 0
    %5882 = vmatpush1.bf16.msra.mxu0 %v3904
    %5883 = vmatprep.mubr.bf16.mxu0 %v186
    %5884 = vmatmul.mubr.bf16.gmra.mrb[0].mxu0 %v185
    %v5885 = vpop.f32.mrb[0].mxu0
    %v5886 = vadd.f32 %v5845, %v5885
    %v5887 = vpop.f32.mrb[0].mxu0
    %v5888 = vpop.f32.mrb[0].mxu0
    %v5889 = vadd.f32 %v5848, %v5888
    %v5890 = vpop.f32.mrb[0].mxu0
    %5891 = vdwg.mxu0
    %5892 = vmatprep.subr.bf16.mxu0 0
    %5893 = vmatpush1.bf16.msra.mxu0 %v3917
    %5894 = vmatprep.subr.bf16.mxu0 0
    %5895 = vmatpush1.bf16.msra.mxu0 %v3930
    %5896 = vmatprep.subr.bf16.mxu0 0
    %5897 = vmatpush1.bf16.msra.mxu0 %v3943
    %5898 = vmatprep.subr.bf16.mxu0 0
    %5899 = vmatpush1.bf16.msra.mxu0 %v3956
    %5900 = vmatprep.subr.bf16.mxu0 0
    %5901 = vmatpush1.bf16.msra.mxu0 %v3969
    %5902 = vmatprep.subr.bf16.mxu0 0
    %5903 = vmatpush1.bf16.msra.mxu0 %v3982
    %5904 = vmatprep.subr.bf16.mxu0 0
    %5905 = vmatpush1.bf16.msra.mxu0 %v3995
    %5906 = vmatprep.subr.bf16.mxu0 0
    %5907 = vmatpush1.bf16.msra.mxu0 %v4008
    %5908 = vmatprep.subr.bf16.mxu0 0
    %5909 = vmatpush1.bf16.msra.mxu0 0
    %5910 = vmatprep.subr.bf16.mxu0 0
    %5911 = vmatpush1.bf16.msra.mxu0 0
    %5912 = vmatprep.subr.bf16.mxu0 0
    %5913 = vmatpush1.bf16.msra.mxu0 0
    %5914 = vmatprep.subr.bf16.mxu0 0
    %5915 = vmatpush1.bf16.msra.mxu0 0
    %5916 = vmatprep.subr.bf16.mxu0 0
    %5917 = vmatpush1.bf16.msra.mxu0 0
    %5918 = vmatprep.subr.bf16.mxu0 0
    %5919 = vmatpush1.bf16.msra.mxu0 0
    %5920 = vmatprep.subr.bf16.mxu0 0
    %5921 = vmatpush1.bf16.msra.mxu0 0
    %5922 = vmatprep.subr.bf16.mxu0 0
    %5923 = vmatpush1.bf16.msra.mxu0 0
    %5924 = vmatprep.mubr.bf16.mxu0 0
    %5925 = vmatmul.mubr.bf16.gmra.mrb[0].mxu0 %v187
    %v5926 = vpop.f32.mrb[0].mxu0
    %v5927 = vadd.f32 %v5886, %v5926
    %v5928 = vpop.f32.mrb[0].mxu0
    %v5929 = vpop.f32.mrb[0].mxu0
    %v5930 = vadd.f32 %v5889, %v5929
    %v5931 = vpop.f32.mrb[0].mxu0
    %5932 = vdwg.mxu0
    %5933 = vst [vmem:[%s6] sm:$0xff] %v4901
    %5934 = vst [vmem:[%s6 + $0x8] sm:$0xff] %v4903
    %5935 = vst [vmem:[%s6 + $0x10] sm:$0xff] %v5073
    %5936 = vst [vmem:[%s6 + $0x18] sm:$0xff] %v5075
    %5937 = vst [vmem:[%s6 + $0x20] sm:$0xff] %v5245
    %5938 = vst [vmem:[%s6 + $0x28] sm:$0xff] %v5247
    %5939 = vst [vmem:[%s6 + $0x30] sm:$0xff] %v5417
    %5940 = vst [vmem:[%s6 + $0x38] sm:$0xff] %v5419
    %5941 = vst [vmem:[%s6 + $0x40] sm:$0xff] %v5589
    %5942 = vst [vmem:[%s6 + $0x48] sm:$0xff] %v5591
    %5943 = vst [vmem:[%s6 + $0x50] sm:$0xff] %v5761
    %5944 = vst [vmem:[%s6 + $0x58] sm:$0xff] %v5763
    %5945 = vst [vmem:[%s6 + $0x60] sm:$0xff] %v5927
    %5946 = vst [vmem:[%s6 + $0x68] sm:$0xff] %v4905
    %5947 = vst [vmem:[%s6 + $0x70] sm:$0xff] %v4907
    %5948 = vst [vmem:[%s6 + $0x78] sm:$0xff] %v5077
    %5949 = vst [vmem:[%s6 + $0x80] sm:$0xff] %v5079
    %5950 = vst [vmem:[%s6 + $0x88] sm:$0xff] %v5249
    %5951 = vst [vmem:[%s6 + $0x90] sm:$0xff] %v5251
    %5952 = vst [vmem:[%s6 + $0x98] sm:$0xff] %v5421
    %5953 = vst [vmem:[%s6 + $0xa0] sm:$0xff] %v5423
    %5954 = vst [vmem:[%s6 + $0xa8] sm:$0xff] %v5593
    %5955 = vst [vmem:[%s6 + $0xb0] sm:$0xff] %v5595
    %5956 = vst [vmem:[%s6 + $0xb8] sm:$0xff] %v5765
    %5957 = vst [vmem:[%s6 + $0xc0] sm:$0xff] %v5767
    %5958 = vst [vmem:[%s6 + $0xc8] sm:$0xff] %v5930
    %v5959 = vlaneseq
    %v5960 = vshrl.u32 %v5959, 7
    %v5961 = vadd.s32 %v5960, 8
    %s5962 = smul.u32 0, 16
    %v5963 = vstv %s5962
    %v5964 = vadd.s32 %v5960, %v5963
    %v5965 = vadd.s32 %v5961, %v5963
    %s5966 = sld [smem:[#allocation3]]
    %v5967 = vstv %s5966
    %vm5968 = vcmp.lt.s32.totalorder %v5964, %v5967
    %vm5969 = vcmp.lt.s32.totalorder %v5965, %v5967
    %v5970 = vsel %vm5968, 1, 0
    %v5971 = vsel %vm5969, 1, 0
    %v5972 = vcvt.s32.f32 %v5970
    %v5973 = vcvt.s32.f32 %v5971
    %v5974 = vmul.f32 %v4901, %v5972
    %v5975 = vmul.f32 %v4903, %v5972
    %v5976 = vmul.f32 %v5073, %v5972
    %v5977 = vmul.f32 %v5075, %v5972
    %v5978 = vmul.f32 %v5245, %v5972
    %v5979 = vmul.f32 %v5247, %v5972
    %v5980 = vmul.f32 %v5417, %v5972
    %v5981 = vmul.f32 %v5419, %v5972
    %v5982 = vmul.f32 %v5589, %v5972
    %v5983 = vmul.f32 %v5591, %v5972
    %v5984 = vmul.f32 %v5761, %v5972
    %v5985 = vmul.f32 %v5763, %v5972
    %v5986 = vmul.f32 %v5927, %v5972
    %v5987 = vmul.f32 %v4905, %v5973
    %v5988 = vmul.f32 %v4907, %v5973
    %v5989 = vmul.f32 %v5077, %v5973
    %v5990 = vmul.f32 %v5079, %v5973
    %v5991 = vmul.f32 %v5249, %v5973
    %v5992 = vmul.f32 %v5251, %v5973
    %v5993 = vmul.f32 %v5421, %v5973
    %v5994 = vmul.f32 %v5423, %v5973
    %v5995 = vmul.f32 %v5593, %v5973
    %v5996 = vmul.f32 %v5595, %v5973
    %v5997 = vmul.f32 %v5765, %v5973
    %v5998 = vmul.f32 %v5767, %v5973
    %v5999 = vmul.f32 %v5930, %v5973
    %v6000 = vadd.f32 %v5974, %v5987
    %v6001 = vrot.slane %v6000, 4
    %v6002 = vadd.f32 %v6000, %v6001
    %v6003 = vrot.slane %v6002, 2
    %v6004 = vadd.f32 %v6002, %v6003
    %v6005 = vrot.slane %v6004, 1
    %v6006 = vadd.f32 %v6004, %v6005
    %v6007 = vadd.f32 %v5975, %v5988
    %v6008 = vrot.slane %v6007, 4
    %v6009 = vadd.f32 %v6007, %v6008
    %v6010 = vrot.slane %v6009, 2
    %v6011 = vadd.f32 %v6009, %v6010
    %v6012 = vrot.slane %v6011, 1
    %v6013 = vadd.f32 %v6011, %v6012
    %v6014 = vadd.f32 %v5976, %v5989
    %v6015 = vrot.slane %v6014, 4
    %v6016 = vadd.f32 %v6014, %v6015
    %v6017 = vrot.slane %v6016, 2
    %v6018 = vadd.f32 %v6016, %v6017
    %v6019 = vrot.slane %v6018, 1
    %v6020 = vadd.f32 %v6018, %v6019
    %v6021 = vadd.f32 %v5977, %v5990
    %v6022 = vrot.slane %v6021, 4
    %v6023 = vadd.f32 %v6021, %v6022
    %v6024 = vrot.slane %v6023, 2
    %v6025 = vadd.f32 %v6023, %v6024
    %v6026 = vrot.slane %v6025, 1
    %v6027 = vadd.f32 %v6025, %v6026
    %v6028 = vadd.f32 %v5978, %v5991
    %v6029 = vrot.slane %v6028, 4
    %v6030 = vadd.f32 %v6028, %v6029
    %v6031 = vrot.slane %v6030, 2
    %v6032 = vadd.f32 %v6030, %v6031
    %v6033 = vrot.slane %v6032, 1
    %v6034 = vadd.f32 %v6032, %v6033
    %v6035 = vadd.f32 %v5979, %v5992
    %v6036 = vrot.slane %v6035, 4
    %v6037 = vadd.f32 %v6035, %v6036
    %v6038 = vrot.slane %v6037, 2
    %v6039 = vadd.f32 %v6037, %v6038
    %v6040 = vrot.slane %v6039, 1
    %v6041 = vadd.f32 %v6039, %v6040
    %v6042 = vadd.f32 %v5980, %v5993
    %v6043 = vrot.slane %v6042, 4
    %v6044 = vadd.f32 %v6042, %v6043
    %v6045 = vrot.slane %v6044, 2
    %v6046 = vadd.f32 %v6044, %v6045
    %v6047 = vrot.slane %v6046, 1
    %v6048 = vadd.f32 %v6046, %v6047
    %v6049 = vadd.f32 %v5981, %v5994
    %v6050 = vrot.slane %v6049, 4
    %v6051 = vadd.f32 %v6049, %v6050
    %v6052 = vrot.slane %v6051, 2
    %v6053 = vadd.f32 %v6051, %v6052
    %v6054 = vrot.slane %v6053, 1
    %v6055 = vadd.f32 %v6053, %v6054
    %v6056 = vadd.f32 %v5982, %v5995
    %v6057 = vrot.slane %v6056, 4
    %v6058 = vadd.f32 %v6056, %v6057
    %v6059 = vrot.slane %v6058, 2
    %v6060 = vadd.f32 %v6058, %v6059
    %v6061 = vrot.slane %v6060, 1
    %v6062 = vadd.f32 %v6060, %v6061
    %v6063 = vadd.f32 %v5983, %v5996
    %v6064 = vrot.slane %v6063, 4
    %v6065 = vadd.f32 %v6063, %v6064
    %v6066 = vrot.slane %v6065, 2
    %v6067 = vadd.f32 %v6065, %v6066
    %v6068 = vrot.slane %v6067, 1
    %v6069 = vadd.f32 %v6067, %v6068
    %v6070 = vadd.f32 %v5984, %v5997
    %v6071 = vrot.slane %v6070, 4
    %v6072 = vadd.f32 %v6070, %v6071
    %v6073 = vrot.slane %v6072, 2
    %v6074 = vadd.f32 %v6072, %v6073
    %v6075 = vrot.slane %v6074, 1
    %v6076 = vadd.f32 %v6074, %v6075
    %v6077 = vadd.f32 %v5985, %v5998
    %v6078 = vrot.slane %v6077, 4
    %v6079 = vadd.f32 %v6077, %v6078
    %v6080 = vrot.slane %v6079, 2
    %v6081 = vadd.f32 %v6079, %v6080
    %v6082 = vrot.slane %v6081, 1
    %v6083 = vadd.f32 %v6081, %v6082
    %v6084 = vadd.f32 %v5986, %v5999
    %v6085 = vrot.slane %v6084, 4
    %v6086 = vadd.f32 %v6084, %v6085
    %v6087 = vrot.slane %v6086, 2
    %v6088 = vadd.f32 %v6086, %v6087
    %v6089 = vrot.slane %v6088, 1
    %v6090 = vadd.f32 %v6088, %v6089
    %v6091 = vmul.f32 %v5974, %v5974
    %v6092 = vmul.f32 %v5975, %v5975
    %v6093 = vmul.f32 %v5976, %v5976
    %v6094 = vmul.f32 %v5977, %v5977
    %v6095 = vmul.f32 %v5978, %v5978
    %v6096 = vmul.f32 %v5979, %v5979
    %v6097 = vmul.f32 %v5980, %v5980
    %v6098 = vmul.f32 %v5981, %v5981
    %v6099 = vmul.f32 %v5982, %v5982
    %v6100 = vmul.f32 %v5983, %v5983
    %v6101 = vmul.f32 %v5984, %v5984
    %v6102 = vmul.f32 %v5985, %v5985
    %v6103 = vmul.f32 %v5986, %v5986
    %v6104 = vmul.f32 %v5987, %v5987
    %v6105 = vmul.f32 %v5988, %v5988
    %v6106 = vmul.f32 %v5989, %v5989
    %v6107 = vmul.f32 %v5990, %v5990
    %v6108 = vmul.f32 %v5991, %v5991
    %v6109 = vmul.f32 %v5992, %v5992
    %v6110 = vmul.f32 %v5993, %v5993
    %v6111 = vmul.f32 %v5994, %v5994
    %v6112 = vmul.f32 %v5995, %v5995
    %v6113 = vmul.f32 %v5996, %v5996
    %v6114 = vmul.f32 %v5997, %v5997
    %v6115 = vmul.f32 %v5998, %v5998
    %v6116 = vmul.f32 %v5999, %v5999
    %v6117 = vadd.f32 %v6091, %v6104
    %v6118 = vrot.slane %v6117, 4
    %v6119 = vadd.f32 %v6117, %v6118
    %v6120 = vrot.slane %v6119, 2
    %v6121 = vadd.f32 %v6119, %v6120
    %v6122 = vrot.slane %v6121, 1
    %v6123 = vadd.f32 %v6121, %v6122
    %v6124 = vadd.f32 %v6092, %v6105
    %v6125 = vrot.slane %v6124, 4
    %v6126 = vadd.f32 %v6124, %v6125
    %v6127 = vrot.slane %v6126, 2
    %v6128 = vadd.f32 %v6126, %v6127
    %v6129 = vrot.slane %v6128, 1
    %v6130 = vadd.f32 %v6128, %v6129
    %v6131 = vadd.f32 %v6093, %v6106
    %v6132 = vrot.slane %v6131, 4
    %v6133 = vadd.f32 %v6131, %v6132
    %v6134 = vrot.slane %v6133, 2
    %v6135 = vadd.f32 %v6133, %v6134
    %v6136 = vrot.slane %v6135, 1
    %v6137 = vadd.f32 %v6135, %v6136
    %v6138 = vadd.f32 %v6094, %v6107
    %v6139 = vrot.slane %v6138, 4
    %v6140 = vadd.f32 %v6138, %v6139
    %v6141 = vrot.slane %v6140, 2
    %v6142 = vadd.f32 %v6140, %v6141
    %v6143 = vrot.slane %v6142, 1
    %v6144 = vadd.f32 %v6142, %v6143
    %v6145 = vadd.f32 %v6095, %v6108
    %v6146 = vrot.slane %v6145, 4
    %v6147 = vadd.f32 %v6145, %v6146
    %v6148 = vrot.slane %v6147, 2
    %v6149 = vadd.f32 %v6147, %v6148
    %v6150 = vrot.slane %v6149, 1
    %v6151 = vadd.f32 %v6149, %v6150
    %v6152 = vadd.f32 %v6096, %v6109
    %v6153 = vrot.slane %v6152, 4
    %v6154 = vadd.f32 %v6152, %v6153
    %v6155 = vrot.slane %v6154, 2
    %v6156 = vadd.f32 %v6154, %v6155
    %v6157 = vrot.slane %v6156, 1
    %v6158 = vadd.f32 %v6156, %v6157
    %v6159 = vadd.f32 %v6097, %v6110
    %v6160 = vrot.slane %v6159, 4
    %v6161 = vadd.f32 %v6159, %v6160
    %v6162 = vrot.slane %v6161, 2
    %v6163 = vadd.f32 %v6161, %v6162
    %v6164 = vrot.slane %v6163, 1
    %v6165 = vadd.f32 %v6163, %v6164
    %v6166 = vadd.f32 %v6098, %v6111
    %v6167 = vrot.slane %v6166, 4
    %v6168 = vadd.f32 %v6166, %v6167
    %v6169 = vrot.slane %v6168, 2
    %v6170 = vadd.f32 %v6168, %v6169
    %v6171 = vrot.slane %v6170, 1
    %v6172 = vadd.f32 %v6170, %v6171
    %v6173 = vadd.f32 %v6099, %v6112
    %v6174 = vrot.slane %v6173, 4
    %v6175 = vadd.f32 %v6173, %v6174
    %v6176 = vrot.slane %v6175, 2
    %v6177 = vadd.f32 %v6175, %v6176
    %v6178 = vrot.slane %v6177, 1
    %v6179 = vadd.f32 %v6177, %v6178
    %v6180 = vadd.f32 %v6100, %v6113
    %v6181 = vrot.slane %v6180, 4
    %v6182 = vadd.f32 %v6180, %v6181
    %v6183 = vrot.slane %v6182, 2
    %v6184 = vadd.f32 %v6182, %v6183
    %v6185 = vrot.slane %v6184, 1
    %v6186 = vadd.f32 %v6184, %v6185
    %v6187 = vadd.f32 %v6101, %v6114
    %v6188 = vrot.slane %v6187, 4
    %v6189 = vadd.f32 %v6187, %v6188
    %v6190 = vrot.slane %v6189, 2
    %v6191 = vadd.f32 %v6189, %v6190
    %v6192 = vrot.slane %v6191, 1
    %v6193 = vadd.f32 %v6191, %v6192
    %v6194 = vadd.f32 %v6102, %v6115
    %v6195 = vrot.slane %v6194, 4
    %v6196 = vadd.f32 %v6194, %v6195
    %v6197 = vrot.slane %v6196, 2
    %v6198 = vadd.f32 %v6196, %v6197
    %v6199 = vrot.slane %v6198, 1
    %v6200 = vadd.f32 %v6198, %v6199
    %v6201 = vadd.f32 %v6103, %v6116
    %v6202 = vrot.slane %v6201, 4
    %v6203 = vadd.f32 %v6201, %v6202
    %v6204 = vrot.slane %v6203, 2
    %v6205 = vadd.f32 %v6203, %v6204
    %v6206 = vrot.slane %v6205, 1
    %v6207 = vadd.f32 %v6205, %v6206
    %vm6208 = vcmask 1040384
    %v6209 = vsel %vm6208, %v6006, %v6123
    %v6210 = vsel %vm6208, %v6013, %v6130
    %v6211 = vsel %vm6208, %v6020, %v6137
    %v6212 = vsel %vm6208, %v6027, %v6144
    %v6213 = vsel %vm6208, %v6034, %v6151
    %v6214 = vsel %vm6208, %v6041, %v6158
    %v6215 = vsel %vm6208, %v6048, %v6165
    %v6216 = vsel %vm6208, %v6055, %v6172
    %v6217 = vsel %vm6208, %v6062, %v6179
    %v6218 = vsel %vm6208, %v6069, %v6186
    %v6219 = vsel %vm6208, %v6076, %v6193
    %v6220 = vsel %vm6208, %v6083, %v6200
    %v6221 = vsel %vm6208, %v6090, %v6207
    %v6235 = vcombine.low %v6209, %v6210
    %v6236 = vcombine.low %v6211, %v6212
    %v6238 = vunpack.c.l.s4 1983009808
    %v6239 = vunpack.c.0.s8 %v6238
    %v6240 = vlaneseq
    %v6241 = vshrl.u32 %v6240, 7
    %v6242 = vsub.s32 %v6239, %v6241
    %v6243 = vrot.slane %v6235, %v6242
    %v6245 = vunpack.c.l.s4 1983009808
    %v6246 = vunpack.c.0.s8 %v6245
    %v6247 = vlaneseq
    %v6248 = vshrl.u32 %v6247, 7
    %v6249 = vsub.s32 %v6246, %v6248
    %v6250 = vrot.slane %v6236, %v6249
    %v6251 = vcombine.low %v6243, %v6250
    %v6252 = vcombine.low %v6213, %v6214
    %v6253 = vcombine.low %v6215, %v6216
    %v6255 = vunpack.c.l.s4 1983009808
    %v6256 = vunpack.c.0.s8 %v6255
    %v6257 = vlaneseq
    %v6258 = vshrl.u32 %v6257, 7
    %v6259 = vsub.s32 %v6256, %v6258
    %v6260 = vrot.slane %v6252, %v6259
    %v6262 = vunpack.c.l.s4 1983009808
    %v6263 = vunpack.c.0.s8 %v6262
    %v6264 = vlaneseq
    %v6265 = vshrl.u32 %v6264, 7
    %v6266 = vsub.s32 %v6263, %v6265
    %v6267 = vrot.slane %v6253, %v6266
    %v6268 = vcombine.low %v6260, %v6267
    %v6269 = vcombine.low %v6217, %v6218
    %v6270 = vcombine.low %v6219, %v6220
    %v6272 = vunpack.c.l.s4 1983009808
    %v6273 = vunpack.c.0.s8 %v6272
    %v6274 = vlaneseq
    %v6275 = vshrl.u32 %v6274, 7
    %v6276 = vsub.s32 %v6273, %v6275
    %v6277 = vrot.slane %v6269, %v6276
    %v6279 = vunpack.c.l.s4 1983009808
    %v6280 = vunpack.c.0.s8 %v6279
    %v6281 = vlaneseq
    %v6282 = vshrl.u32 %v6281, 7
    %v6283 = vsub.s32 %v6280, %v6282
    %v6284 = vrot.slane %v6270, %v6283
    %v6285 = vcombine.low %v6277, %v6284
    %v6287 = vunpack.c.l.s4 1983009808
    %v6288 = vunpack.c.0.s8 %v6287
    %v6289 = vlaneseq
    %v6290 = vshrl.u32 %v6289, 7
    %v6291 = vsub.s32 %v6288, %v6290
    %v6292 = vrot.slane %v6221, %v6291
    %6297 = vst [vmem:[%s7] sm:$0xff] %v6251
    %6298 = vst [vmem:[%s7 + $0x8] sm:$0xff] %v6268
    %6299 = vst [vmem:[%s7 + $0x10] sm:$0xff] %v6285
    %6300 = vst [vmem:[%s7 + $0x18] sm:$0x3] %v6292
    // Predicated region
    $region30: #{_forward.4} parent=1 // pred_check
      _
    $region31: #{_forward.4} parent=1 // pred_check_branch
      %6302 = sbr.rel (0) target = $region33
    $region32: #{_forward.4} parent=1 // pred_region
      _
    $region33: #{_forward.4} parent=1 // pred_fallthru
      _
    // Predicated region
    $region34: #{_forward.4} parent=1 // pred_check
      _
    $region35: #{_forward.4} parent=1 // pred_check_branch
      %6304 = sbr.rel (0) target = $region37
    $region36: #{_forward.4} parent=1 // pred_region
      _
    $region37: #{_forward.4} parent=1 // pred_fallthru
      _
    // Predicated region
    $region38: #{_forward.4} parent=1 // pred_check
      _
    $region39: #{_forward.4} parent=1 // pred_check_branch
      %6306 = sbr.rel (0) target = $region41
    $region40: #{_forward.4} parent=1 // pred_region
      _
    $region41: #{_forward.4} parent=1 // pred_fallthru
      _
    // Predicated region
    $region42: #{_forward.4} parent=1 // pred_check
      _
    $region43: #{_forward.4} parent=1 // pred_check_branch
      %6308 = sbr.rel (0) target = $region45
    $region44: #{_forward.4} parent=1 // pred_region
      _
    $region45: #{_forward.4} parent=1 // pred_fallthru
      _
    %6309 = vsyncpa [#allocation5], 1
    %6310 = vsyncpa [#allocation7], 1

// kernel: _forward.5
$region0: #{_forward.5}
  #allocation0 [shape = 'u32[]', space=smem, size = 0x4, offset = 0x4, fixed_abs, tag = 'smem constant byte address 0x4 - core index']
  #allocation1 [shape = 'u32[144,128]{1,0:T(1,128)}', space=vmem, size = 0x12000, scoped, tag = 'internal scratch']
  %s0 = inlined_call_operand.vmem [shape: f32[16,1664], index: 0, kind: input, shape index: {}]
  %s1 = inlined_call_operand.vmem [shape: f32[1,1664], index: 1, kind: input, shape index: {}]
  %s2 = inlined_call_operand.vmem [shape: f32[1,1664], index: 2, kind: input, shape index: {}]
  %s3 = inlined_call_operand.vmem [shape: bf16[1664,896], index: 3, kind: input, shape index: {}]
  %s4 = inlined_call_operand.vmem [shape: f32[1,896], index: 4, kind: input, shape index: {}]
  %s5 = inlined_call_operand.vmem [shape: f32[16,896], index: 5, kind: output, shape index: {}]
  %s6 = sld [smem:[#allocation0]]
  $region30: #{_forward.5} parent=0
    _
  %s8 = ssub.s32 1, %s6
  %s9 = scalar_select 0, %s8, %s6
  // Predicated region
  $region2: #{_forward.5} parent=0 // pred_check
    _
  $region3: #{_forward.5} parent=0 // pred_check_branch
    %11 = sbr.rel (0) target = $region5
  $region4: #{_forward.5} parent=0 // pred_region
    _
  $region5: #{_forward.5} parent=0 // pred_fallthru
    _
  // Predicated region
  $region6: #{_forward.5} parent=0 // pred_check
    _
  $region7: #{_forward.5} parent=0 // pred_check_branch
    %13 = sbr.rel (0) target = $region9
  $region8: #{_forward.5} parent=0 // pred_region
    _
  $region9: #{_forward.5} parent=0 // pred_fallthru
    _
  // Predicated region
  $region10: #{_forward.5} parent=0 // pred_check
    _
  $region11: #{_forward.5} parent=0 // pred_check_branch
    %15 = sbr.rel (0) target = $region13
  $region12: #{_forward.5} parent=0 // pred_region
    _
  $region13: #{_forward.5} parent=0 // pred_fallthru
    _
  // Predicated region
  $region14: #{_forward.5} parent=0 // pred_check
    _
  $region15: #{_forward.5} parent=0 // pred_check_branch
    %17 = sbr.rel (0) target = $region17
  $region16: #{_forward.5} parent=0 // pred_region
    _
  $region17: #{_forward.5} parent=0 // pred_fallthru
    _
  // Predicated region
  $region18: #{_forward.5} parent=0 // pred_check
    _
  $region19: #{_forward.5} parent=0 // pred_check_branch
    %19 = sbr.rel (0) target = $region21
  $region20: #{_forward.5} parent=0 // pred_region
    _
  $region21: #{_forward.5} parent=0 // pred_fallthru
    _
  %v21 = vld [vmem:[%s0] sm:$0xff]
  %v22 = vld [vmem:[%s0 + $0x8] sm:$0xff]
  %v23 = vld [vmem:[%s0 + $0x10] sm:$0xff]
  %v24 = vld [vmem:[%s0 + $0x18] sm:$0xff]
  %v25 = vld [vmem:[%s0 + $0x20] sm:$0xff]
  %v26 = vld [vmem:[%s0 + $0x28] sm:$0xff]
  %v27 = vld [vmem:[%s0 + $0x30] sm:$0xff]
  %v28 = vld [vmem:[%s0 + $0x38] sm:$0xff]
  %v29 = vld [vmem:[%s0 + $0x40] sm:$0xff]
  %v30 = vld [vmem:[%s0 + $0x48] sm:$0xff]
  %v31 = vld [vmem:[%s0 + $0x50] sm:$0xff]
  %v32 = vld [vmem:[%s0 + $0x58] sm:$0xff]
  %v33 = vld [vmem:[%s0 + $0x60] sm:$0xff]
  %v34 = vld [vmem:[%s0 + $0x68] sm:$0xff]
  %v35 = vld [vmem:[%s0 + $0x70] sm:$0xff]
  %v36 = vld [vmem:[%s0 + $0x78] sm:$0xff]
  %v37 = vld [vmem:[%s0 + $0x80] sm:$0xff]
  %v38 = vld [vmem:[%s0 + $0x88] sm:$0xff]
  %v39 = vld [vmem:[%s0 + $0x90] sm:$0xff]
  %v40 = vld [vmem:[%s0 + $0x98] sm:$0xff]
  %v41 = vld [vmem:[%s0 + $0xa0] sm:$0xff]
  %v42 = vld [vmem:[%s0 + $0xa8] sm:$0xff]
  %v43 = vld [vmem:[%s0 + $0xb0] sm:$0xff]
  %v44 = vld [vmem:[%s0 + $0xb8] sm:$0xff]
  %v45 = vld [vmem:[%s0 + $0xc0] sm:$0xff]
  %v46 = vld [vmem:[%s0 + $0xc8] sm:$0xff]
  %v47 = vld [vmem:[%s1] sm:$0xff]
  %v48 = vld [vmem:[%s1 + $0x8] sm:$0x1f]
  %v51 = vlaneseq
  %v52 = vshrl.u32 %v51, 7
  %v53 = vsub.s32 0, %v52
  %v54 = vrot.slane %v47, %v53
  %v55 = vlaneseq
  %v56 = vshrl.u32 %v55, 7
  %v57 = vsub.s32 1, %v56
  %v58 = vrot.slane %v47, %v57
  %v59 = vlaneseq
  %v60 = vshrl.u32 %v59, 7
  %v61 = vsub.s32 2, %v60
  %v62 = vrot.slane %v47, %v61
  %v63 = vlaneseq
  %v64 = vshrl.u32 %v63, 7
  %v65 = vsub.s32 3, %v64
  %v66 = vrot.slane %v47, %v65
  %v67 = vlaneseq
  %v68 = vshrl.u32 %v67, 7
  %v69 = vsub.s32 4, %v68
  %v70 = vrot.slane %v47, %v69
  %v71 = vlaneseq
  %v72 = vshrl.u32 %v71, 7
  %v73 = vsub.s32 5, %v72
  %v74 = vrot.slane %v47, %v73
  %v75 = vlaneseq
  %v76 = vshrl.u32 %v75, 7
  %v77 = vsub.s32 6, %v76
  %v78 = vrot.slane %v47, %v77
  %v79 = vlaneseq
  %v80 = vshrl.u32 %v79, 7
  %v81 = vsub.s32 7, %v80
  %v82 = vrot.slane %v47, %v81
  %v83 = vlaneseq
  %v84 = vshrl.u32 %v83, 7
  %v85 = vsub.s32 0, %v84
  %v86 = vrot.slane %v48, %v85
  %v87 = vlaneseq
  %v88 = vshrl.u32 %v87, 7
  %v89 = vsub.s32 1, %v88
  %v90 = vrot.slane %v48, %v89
  %v91 = vlaneseq
  %v92 = vshrl.u32 %v91, 7
  %v93 = vsub.s32 2, %v92
  %v94 = vrot.slane %v48, %v93
  %v95 = vlaneseq
  %v96 = vshrl.u32 %v95, 7
  %v97 = vsub.s32 3, %v96
  %v98 = vrot.slane %v48, %v97
  %v99 = vlaneseq
  %v100 = vshrl.u32 %v99, 7
  %v101 = vsub.s32 4, %v100
  %v102 = vrot.slane %v48, %v101
  %v116 = vmul.f32 %v21, %v54
  %v117 = vmul.f32 %v22, %v58
  %v118 = vmul.f32 %v23, %v62
  %v119 = vmul.f32 %v24, %v66
  %v120 = vmul.f32 %v25, %v70
  %v121 = vmul.f32 %v26, %v74
  %v122 = vmul.f32 %v27, %v78
  %v123 = vmul.f32 %v28, %v82
  %v124 = vmul.f32 %v29, %v86
  %v125 = vmul.f32 %v30, %v90
  %v126 = vmul.f32 %v31, %v94
  %v127 = vmul.f32 %v32, %v98
  %v128 = vmul.f32 %v33, %v102
  %v129 = vmul.f32 %v34, %v54
  %v130 = vmul.f32 %v35, %v58
  %v131 = vmul.f32 %v36, %v62
  %v132 = vmul.f32 %v37, %v66
  %v133 = vmul.f32 %v38, %v70
  %v134 = vmul.f32 %v39, %v74
  %v135 = vmul.f32 %v40, %v78
  %v136 = vmul.f32 %v41, %v82
  %v137 = vmul.f32 %v42, %v86
  %v138 = vmul.f32 %v43, %v90
  %v139 = vmul.f32 %v44, %v94
  %v140 = vmul.f32 %v45, %v98
  %v141 = vmul.f32 %v46, %v102
  %v142 = vld [vmem:[%s2] sm:$0xff]
  %v143 = vld [vmem:[%s2 + $0x8] sm:$0x1f]
  %v146 = vlaneseq
  %v147 = vshrl.u32 %v146, 7
  %v148 = vsub.s32 0, %v147
  %v149 = vrot.slane %v142, %v148
  %v150 = vlaneseq
  %v151 = vshrl.u32 %v150, 7
  %v152 = vsub.s32 1, %v151
  %v153 = vrot.slane %v142, %v152
  %v154 = vlaneseq
  %v155 = vshrl.u32 %v154, 7
  %v156 = vsub.s32 2, %v155
  %v157 = vrot.slane %v142, %v156
  %v158 = vlaneseq
  %v159 = vshrl.u32 %v158, 7
  %v160 = vsub.s32 3, %v159
  %v161 = vrot.slane %v142, %v160
  %v162 = vlaneseq
  %v163 = vshrl.u32 %v162, 7
  %v164 = vsub.s32 4, %v163
  %v165 = vrot.slane %v142, %v164
  %v166 = vlaneseq
  %v167 = vshrl.u32 %v166, 7
  %v168 = vsub.s32 5, %v167
  %v169 = vrot.slane %v142, %v168
  %v170 = vlaneseq
  %v171 = vshrl.u32 %v170, 7
  %v172 = vsub.s32 6, %v171
  %v173 = vrot.slane %v142, %v172
  %v174 = vlaneseq
  %v175 = vshrl.u32 %v174, 7
  %v176 = vsub.s32 7, %v175
  %v177 = vrot.slane %v142, %v176
  %v178 = vlaneseq
  %v179 = vshrl.u32 %v178, 7
  %v180 = vsub.s32 0, %v179
  %v181 = vrot.slane %v143, %v180
  %v182 = vlaneseq
  %v183 = vshrl.u32 %v182, 7
  %v184 = vsub.s32 1, %v183
  %v185 = vrot.slane %v143, %v184
  %v186 = vlaneseq
  %v187 = vshrl.u32 %v186, 7
  %v188 = vsub.s32 2, %v187
  %v189 = vrot.slane %v143, %v188
  %v190 = vlaneseq
  %v191 = vshrl.u32 %v190, 7
  %v192 = vsub.s32 3, %v191
  %v193 = vrot.slane %v143, %v192
  %v194 = vlaneseq
  %v195 = vshrl.u32 %v194, 7
  %v196 = vsub.s32 4, %v195
  %v197 = vrot.slane %v143, %v196
  %v211 = vadd.f32 %v116, %v149
  %v212 = vadd.f32 %v117, %v153
  %v213 = vadd.f32 %v118, %v157
  %v214 = vadd.f32 %v119, %v161
  %v215 = vadd.f32 %v120, %v165
  %v216 = vadd.f32 %v121, %v169
  %v217 = vadd.f32 %v122, %v173
  %v218 = vadd.f32 %v123, %v177
  %v219 = vadd.f32 %v124, %v181
  %v220 = vadd.f32 %v125, %v185
  %v221 = vadd.f32 %v126, %v189
  %v222 = vadd.f32 %v127, %v193
  %v223 = vadd.f32 %v128, %v197
  %v224 = vadd.f32 %v129, %v149
  %v225 = vadd.f32 %v130, %v153
  %v226 = vadd.f32 %v131, %v157
  %v227 = vadd.f32 %v132, %v161
  %v228 = vadd.f32 %v133, %v165
  %v229 = vadd.f32 %v134, %v169
  %v230 = vadd.f32 %v135, %v173
  %v231 = vadd.f32 %v136, %v177
  %v232 = vadd.f32 %v137, %v181
  %v233 = vadd.f32 %v138, %v185
  %v234 = vadd.f32 %v139, %v189
  %v235 = vadd.f32 %v140, %v193
  %v236 = vadd.f32 %v141, %v197
  %v237 = vmax.f32 %v211, 0.0
  %v238 = vmax.f32 %v212, 0.0
  %v239 = vmax.f32 %v213, 0.0
  %v240 = vmax.f32 %v214, 0.0
  %v241 = vmax.f32 %v215, 0.0
  %v242 = vmax.f32 %v216, 0.0
  %v243 = vmax.f32 %v217, 0.0
  %v244 = vmax.f32 %v218, 0.0
  %v245 = vmax.f32 %v219, 0.0
  %v246 = vmax.f32 %v220, 0.0
  %v247 = vmax.f32 %v221, 0.0
  %v248 = vmax.f32 %v222, 0.0
  %v249 = vmax.f32 %v223, 0.0
  %v250 = vmax.f32 %v224, 0.0
  %v251 = vmax.f32 %v225, 0.0
  %v252 = vmax.f32 %v226, 0.0
  %v253 = vmax.f32 %v227, 0.0
  %v254 = vmax.f32 %v228, 0.0
  %v255 = vmax.f32 %v229, 0.0
  %v256 = vmax.f32 %v230, 0.0
  %v257 = vmax.f32 %v231, 0.0
  %v258 = vmax.f32 %v232, 0.0
  %v259 = vmax.f32 %v233, 0.0
  %v260 = vmax.f32 %v234, 0.0
  %v261 = vmax.f32 %v235, 0.0
  %v262 = vmax.f32 %v236, 0.0
  %v263 = vpack.c.bf16 %v250, %v237
  %v264 = vpack.c.bf16 %v251, %v238
  %v265 = vpack.c.bf16 %v252, %v239
  %v266 = vpack.c.bf16 %v253, %v240
  %v267 = vpack.c.bf16 %v254, %v241
  %v268 = vpack.c.bf16 %v255, %v242
  %v269 = vpack.c.bf16 %v256, %v243
  %v270 = vpack.c.bf16 %v257, %v244
  %v271 = vpack.c.bf16 %v258, %v245
  %v272 = vpack.c.bf16 %v259, %v246
  %v273 = vpack.c.bf16 %v260, %v247
  %v274 = vpack.c.bf16 %v261, %v248
  %v275 = vpack.c.bf16 %v262, %v249
  %v276 = vld [vmem:[%s3] sm:$0xff]
  %v277 = vld [vmem:[%s3 + $0x8] sm:$0xff]
  %v278 = vld [vmem:[%s3 + $0x10] sm:$0xff]
  %v279 = vld [vmem:[%s3 + $0x18] sm:$0xf]
  %v280 = vld [vmem:[%s3 + $0x1c] sm:$0xff]
  %v281 = vld [vmem:[%s3 + $0x24] sm:$0xff]
  %v282 = vld [vmem:[%s3 + $0x2c] sm:$0xff]
  %v283 = vld [vmem:[%s3 + $0x34] sm:$0xf]
  %v284 = vld [vmem:[%s3 + $0x38] sm:$0xff]
  %v285 = vld [vmem:[%s3 + $0x40] sm:$0xff]
  %v286 = vld [vmem:[%s3 + $0x48] sm:$0xff]
  %v287 = vld [vmem:[%s3 + $0x50] sm:$0xf]
  %v288 = vld [vmem:[%s3 + $0x54] sm:$0xff]
  %v289 = vld [vmem:[%s3 + $0x5c] sm:$0xff]
  %v290 = vld [vmem:[%s3 + $0x64] sm:$0xff]
  %v291 = vld [vmem:[%s3 + $0x6c] sm:$0xf]
  %v292 = vld [vmem:[%s3 + $0x70] sm:$0xff]
  %v293 = vld [vmem:[%s3 + $0x78] sm:$0xff]
  %v294 = vld [vmem:[%s3 + $0x80] sm:$0xff]
  %v295 = vld [vmem:[%s3 + $0x88] sm:$0xf]
  %v296 = vld [vmem:[%s3 + $0x8c] sm:$0xff]
  %v297 = vld [vmem:[%s3 + $0x94] sm:$0xff]
  %v298 = vld [vmem:[%s3 + $0x9c] sm:$0xff]
  %v299 = vld [vmem:[%s3 + $0xa4] sm:$0xf]
  %v300 = vld [vmem:[%s3 + $0xa8] sm:$0xff]
  %v301 = vld [vmem:[%s3 + $0xb0] sm:$0xff]
  %v302 = vld [vmem:[%s3 + $0xb8] sm:$0xff]
  %v303 = vld [vmem:[%s3 + $0xc0] sm:$0xf]
  %v304 = vld [vmem:[%s3 + $0xc4] sm:$0xff]
  %v305 = vld [vmem:[%s3 + $0xcc] sm:$0xff]
  %v306 = vld [vmem:[%s3 + $0xd4] sm:$0xff]
  %v307 = vld [vmem:[%s3 + $0xdc] sm:$0xf]
  %v308 = vld [vmem:[%s3 + $0xe0] sm:$0xff]
  %v309 = vld [vmem:[%s3 + $0xe8] sm:$0xff]
  %v310 = vld [vmem:[%s3 + $0xf0] sm:$0xff]
  %v311 = vld [vmem:[%s3 + $0xf8] sm:$0xf]
  %v312 = vld [vmem:[%s3 + $0xfc] sm:$0xff]
  %v313 = vld [vmem:[%s3 + $0x104] sm:$0xff]
  %v314 = vld [vmem:[%s3 + $0x10c] sm:$0xff]
  %v315 = vld [vmem:[%s3 + $0x114] sm:$0xf]
  %v316 = vld [vmem:[%s3 + $0x118] sm:$0xff]
  %v317 = vld [vmem:[%s3 + $0x120] sm:$0xff]
  %v318 = vld [vmem:[%s3 + $0x128] sm:$0xff]
  %v319 = vld [vmem:[%s3 + $0x130] sm:$0xf]
  %v320 = vld [vmem:[%s3 + $0x134] sm:$0xff]
  %v321 = vld [vmem:[%s3 + $0x13c] sm:$0xff]
  %v322 = vld [vmem:[%s3 + $0x144] sm:$0xff]
  %v323 = vld [vmem:[%s3 + $0x14c] sm:$0xf]
  %v324 = vld [vmem:[%s3 + $0x150] sm:$0xff]
  %v325 = vld [vmem:[%s3 + $0x158] sm:$0xff]
  %v326 = vld [vmem:[%s3 + $0x160] sm:$0xff]
  %v327 = vld [vmem:[%s3 + $0x168] sm:$0xf]
  %v328 = vld [vmem:[%s3 + $0x16c] sm:$0xff]
  %v329 = vld [vmem:[%s3 + $0x174] sm:$0xff]
  %v330 = vld [vmem:[%s3 + $0x17c] sm:$0xff]
  %v331 = vld [vmem:[%s3 + $0x184] sm:$0xf]
  %v332 = vld [vmem:[%s3 + $0x188] sm:$0xff]
  %v333 = vld [vmem:[%s3 + $0x190] sm:$0xff]
  %v334 = vld [vmem:[%s3 + $0x198] sm:$0xff]
  %v335 = vld [vmem:[%s3 + $0x1a0] sm:$0xf]
  %v336 = vld [vmem:[%s3 + $0x1a4] sm:$0xff]
  %v337 = vld [vmem:[%s3 + $0x1ac] sm:$0xff]
  %v338 = vld [vmem:[%s3 + $0x1b4] sm:$0xff]
  %v339 = vld [vmem:[%s3 + $0x1bc] sm:$0xf]
  %v340 = vld [vmem:[%s3 + $0x1c0] sm:$0xff]
  %v341 = vld [vmem:[%s3 + $0x1c8] sm:$0xff]
  %v342 = vld [vmem:[%s3 + $0x1d0] sm:$0xff]
  %v343 = vld [vmem:[%s3 + $0x1d8] sm:$0xf]
  %v344 = vld [vmem:[%s3 + $0x1dc] sm:$0xff]
  %v345 = vld [vmem:[%s3 + $0x1e4] sm:$0xff]
  %v346 = vld [vmem:[%s3 + $0x1ec] sm:$0xff]
  %v347 = vld [vmem:[%s3 + $0x1f4] sm:$0xf]
  %v348 = vld [vmem:[%s3 + $0x1f8] sm:$0xff]
  %v349 = vld [vmem:[%s3 + $0x200] sm:$0xff]
  %v350 = vld [vmem:[%s3 + $0x208] sm:$0xff]
  %v351 = vld [vmem:[%s3 + $0x210] sm:$0xf]
  %v352 = vld [vmem:[%s3 + $0x214] sm:$0xff]
  %v353 = vld [vmem:[%s3 + $0x21c] sm:$0xff]
  %v354 = vld [vmem:[%s3 + $0x224] sm:$0xff]
  %v355 = vld [vmem:[%s3 + $0x22c] sm:$0xf]
  %v356 = vld [vmem:[%s3 + $0x230] sm:$0xff]
  %v357 = vld [vmem:[%s3 + $0x238] sm:$0xff]
  %v358 = vld [vmem:[%s3 + $0x240] sm:$0xff]
  %v359 = vld [vmem:[%s3 + $0x248] sm:$0xf]
  %v360 = vld [vmem:[%s3 + $0x24c] sm:$0xff]
  %v361 = vld [vmem:[%s3 + $0x254] sm:$0xff]
  %v362 = vld [vmem:[%s3 + $0x25c] sm:$0xff]
  %v363 = vld [vmem:[%s3 + $0x264] sm:$0xf]
  %v364 = vld [vmem:[%s3 + $0x268] sm:$0xff]
  %v365 = vld [vmem:[%s3 + $0x270] sm:$0xff]
  %v366 = vld [vmem:[%s3 + $0x278] sm:$0xff]
  %v367 = vld [vmem:[%s3 + $0x280] sm:$0xf]
  %v368 = vld [vmem:[%s3 + $0x284] sm:$0xff]
  %v369 = vld [vmem:[%s3 + $0x28c] sm:$0xff]
  %v370 = vld [vmem:[%s3 + $0x294] sm:$0xff]
  %v371 = vld [vmem:[%s3 + $0x29c] sm:$0xf]
  %v372 = vld [vmem:[%s3 + $0x2a0] sm:$0xff]
  %v373 = vld [vmem:[%s3 + $0x2a8] sm:$0xff]
  %v374 = vld [vmem:[%s3 + $0x2b0] sm:$0xff]
  %v375 = vld [vmem:[%s3 + $0x2b8] sm:$0xf]
  %v376 = vld [vmem:[%s3 + $0x2bc] sm:$0xff]
  %v377 = vld [vmem:[%s3 + $0x2c4] sm:$0xff]
  %v378 = vld [vmem:[%s3 + $0x2cc] sm:$0xff]
  %v379 = vld [vmem:[%s3 + $0x2d4] sm:$0xf]
  %v380 = vld [vmem:[%s3 + $0x2d8] sm:$0xff]
  %v381 = vld [vmem:[%s3 + $0x2e0] sm:$0xff]
  %v382 = vld [vmem:[%s3 + $0x2e8] sm:$0xff]
  %v383 = vld [vmem:[%s3 + $0x2f0] sm:$0xf]
  %v384 = vld [vmem:[%s3 + $0x2f4] sm:$0xff]
  %v385 = vld [vmem:[%s3 + $0x2fc] sm:$0xff]
  %v386 = vld [vmem:[%s3 + $0x304] sm:$0xff]
  %v387 = vld [vmem:[%s3 + $0x30c] sm:$0xf]
  %v388 = vld [vmem:[%s3 + $0x310] sm:$0xff]
  %v389 = vld [vmem:[%s3 + $0x318] sm:$0xff]
  %v390 = vld [vmem:[%s3 + $0x320] sm:$0xff]
  %v391 = vld [vmem:[%s3 + $0x328] sm:$0xf]
  %v392 = vld [vmem:[%s3 + $0x32c] sm:$0xff]
  %v393 = vld [vmem:[%s3 + $0x334] sm:$0xff]
  %v394 = vld [vmem:[%s3 + $0x33c] sm:$0xff]
  %v395 = vld [vmem:[%s3 + $0x344] sm:$0xf]
  %v396 = vld [vmem:[%s3 + $0x348] sm:$0xff]
  %v397 = vld [vmem:[%s3 + $0x350] sm:$0xff]
  %v398 = vld [vmem:[%s3 + $0x358] sm:$0xff]
  %v399 = vld [vmem:[%s3 + $0x360] sm:$0xf]
  %v400 = vld [vmem:[%s3 + $0x364] sm:$0xff]
  %v401 = vld [vmem:[%s3 + $0x36c] sm:$0xff]
  %v402 = vld [vmem:[%s3 + $0x374] sm:$0xff]
  %v403 = vld [vmem:[%s3 + $0x37c] sm:$0xf]
  %v404 = vld [vmem:[%s3 + $0x380] sm:$0xff]
  %v405 = vld [vmem:[%s3 + $0x388] sm:$0xff]
  %v406 = vld [vmem:[%s3 + $0x390] sm:$0xff]
  %v407 = vld [vmem:[%s3 + $0x398] sm:$0xf]
  %v408 = vld [vmem:[%s3 + $0x39c] sm:$0xff]
  %v409 = vld [vmem:[%s3 + $0x3a4] sm:$0xff]
  %v410 = vld [vmem:[%s3 + $0x3ac] sm:$0xff]
  %v411 = vld [vmem:[%s3 + $0x3b4] sm:$0xf]
  %v412 = vld [vmem:[%s3 + $0x3b8] sm:$0xff]
  %v413 = vld [vmem:[%s3 + $0x3c0] sm:$0xff]
  %v414 = vld [vmem:[%s3 + $0x3c8] sm:$0xff]
  %v415 = vld [vmem:[%s3 + $0x3d0] sm:$0xf]
  %v416 = vld [vmem:[%s3 + $0x3d4] sm:$0xff]
  %v417 = vld [vmem:[%s3 + $0x3dc] sm:$0xff]
  %v418 = vld [vmem:[%s3 + $0x3e4] sm:$0xff]
  %v419 = vld [vmem:[%s3 + $0x3ec] sm:$0xf]
  %v420 = vld [vmem:[%s3 + $0x3f0] sm:$0xff]
  %v421 = vld [vmem:[%s3 + $0x3f8] sm:$0xff]
  %v422 = vld [vmem:[%s3 + $0x400] sm:$0xff]
  %v423 = vld [vmem:[%s3 + $0x408] sm:$0xf]
  %v424 = vld [vmem:[%s3 + $0x40c] sm:$0xff]
  %v425 = vld [vmem:[%s3 + $0x414] sm:$0xff]
  %v426 = vld [vmem:[%s3 + $0x41c] sm:$0xff]
  %v427 = vld [vmem:[%s3 + $0x424] sm:$0xf]
  %v428 = vld [vmem:[%s3 + $0x428] sm:$0xff]
  %v429 = vld [vmem:[%s3 + $0x430] sm:$0xff]
  %v430 = vld [vmem:[%s3 + $0x438] sm:$0xff]
  %v431 = vld [vmem:[%s3 + $0x440] sm:$0xf]
  %v432 = vld [vmem:[%s3 + $0x444] sm:$0xff]
  %v433 = vld [vmem:[%s3 + $0x44c] sm:$0xff]
  %v434 = vld [vmem:[%s3 + $0x454] sm:$0xff]
  %v435 = vld [vmem:[%s3 + $0x45c] sm:$0xf]
  %v436 = vld [vmem:[%s3 + $0x460] sm:$0xff]
  %v437 = vld [vmem:[%s3 + $0x468] sm:$0xff]
  %v438 = vld [vmem:[%s3 + $0x470] sm:$0xff]
  %v439 = vld [vmem:[%s3 + $0x478] sm:$0xf]
  %v440 = vld [vmem:[%s3 + $0x47c] sm:$0xff]
  %v441 = vld [vmem:[%s3 + $0x484] sm:$0xff]
  %v442 = vld [vmem:[%s3 + $0x48c] sm:$0xff]
  %v443 = vld [vmem:[%s3 + $0x494] sm:$0xf]
  %v444 = vld [vmem:[%s3 + $0x498] sm:$0xff]
  %v445 = vld [vmem:[%s3 + $0x4a0] sm:$0xff]
  %v446 = vld [vmem:[%s3 + $0x4a8] sm:$0xff]
  %v447 = vld [vmem:[%s3 + $0x4b0] sm:$0xf]
  %v448 = vld [vmem:[%s3 + $0x4b4] sm:$0xff]
  %v449 = vld [vmem:[%s3 + $0x4bc] sm:$0xff]
  %v450 = vld [vmem:[%s3 + $0x4c4] sm:$0xff]
  %v451 = vld [vmem:[%s3 + $0x4cc] sm:$0xf]
  %v452 = vld [vmem:[%s3 + $0x4d0] sm:$0xff]
  %v453 = vld [vmem:[%s3 + $0x4d8] sm:$0xff]
  %v454 = vld [vmem:[%s3 + $0x4e0] sm:$0xff]
  %v455 = vld [vmem:[%s3 + $0x4e8] sm:$0xf]
  %v456 = vld [vmem:[%s3 + $0x4ec] sm:$0xff]
  %v457 = vld [vmem:[%s3 + $0x4f4] sm:$0xff]
  %v458 = vld [vmem:[%s3 + $0x4fc] sm:$0xff]
  %v459 = vld [vmem:[%s3 + $0x504] sm:$0xf]
  %v460 = vld [vmem:[%s3 + $0x508] sm:$0xff]
  %v461 = vld [vmem:[%s3 + $0x510] sm:$0xff]
  %v462 = vld [vmem:[%s3 + $0x518] sm:$0xff]
  %v463 = vld [vmem:[%s3 + $0x520] sm:$0xf]
  %v464 = vld [vmem:[%s3 + $0x524] sm:$0xff]
  %v465 = vld [vmem:[%s3 + $0x52c] sm:$0xff]
  %v466 = vld [vmem:[%s3 + $0x534] sm:$0xff]
  %v467 = vld [vmem:[%s3 + $0x53c] sm:$0xf]
  %v468 = vld [vmem:[%s3 + $0x540] sm:$0xff]
  %v469 = vld [vmem:[%s3 + $0x548] sm:$0xff]
  %v470 = vld [vmem:[%s3 + $0x550] sm:$0xff]
  %v471 = vld [vmem:[%s3 + $0x558] sm:$0xf]
  %v472 = vld [vmem:[%s3 + $0x55c] sm:$0xff]
  %v473 = vld [vmem:[%s3 + $0x564] sm:$0xff]
  %v474 = vld [vmem:[%s3 + $0x56c] sm:$0xff]
  %v475 = vld [vmem:[%s3 + $0x574] sm:$0xf]
  %v476 = vld [vmem:[%s3 + $0x578] sm:$0xff]
  %v477 = vld [vmem:[%s3 + $0x580] sm:$0xff]
  %v478 = vld [vmem:[%s3 + $0x588] sm:$0xff]
  %v479 = vld [vmem:[%s3 + $0x590] sm:$0xf]
  %v480 = vld [vmem:[%s3 + $0x594] sm:$0xff]
  %v481 = vld [vmem:[%s3 + $0x59c] sm:$0xff]
  %v482 = vld [vmem:[%s3 + $0x5a4] sm:$0xff]
  %v483 = vld [vmem:[%s3 + $0x5ac] sm:$0xf]
  %v484 = vld [vmem:[%s3 + $0x5b0] sm:$0xff]
  %v485 = vld [vmem:[%s3 + $0x5b8] sm:$0xff]
  %v486 = vld [vmem:[%s3 + $0x5c0] sm:$0xff]
  %v487 = vld [vmem:[%s3 + $0x5c8] sm:$0xf]
  %v488 = vld [vmem:[%s3 + $0x5cc] sm:$0xff]
  %v489 = vld [vmem:[%s3 + $0x5d4] sm:$0xff]
  %v490 = vld [vmem:[%s3 + $0x5dc] sm:$0xff]
  %v491 = vld [vmem:[%s3 + $0x5e4] sm:$0xf]
  %v492 = vld [vmem:[%s3 + $0x5e8] sm:$0xff]
  %v493 = vld [vmem:[%s3 + $0x5f0] sm:$0xff]
  %v494 = vld [vmem:[%s3 + $0x5f8] sm:$0xff]
  %v495 = vld [vmem:[%s3 + $0x600] sm:$0xf]
  %v496 = vld [vmem:[%s3 + $0x604] sm:$0xff]
  %v497 = vld [vmem:[%s3 + $0x60c] sm:$0xff]
  %v498 = vld [vmem:[%s3 + $0x614] sm:$0xff]
  %v499 = vld [vmem:[%s3 + $0x61c] sm:$0xf]
  %v500 = vld [vmem:[%s3 + $0x620] sm:$0xff]
  %v501 = vld [vmem:[%s3 + $0x628] sm:$0xff]
  %v502 = vld [vmem:[%s3 + $0x630] sm:$0xff]
  %v503 = vld [vmem:[%s3 + $0x638] sm:$0xf]
  %v504 = vld [vmem:[%s3 + $0x63c] sm:$0xff]
  %v505 = vld [vmem:[%s3 + $0x644] sm:$0xff]
  %v506 = vld [vmem:[%s3 + $0x64c] sm:$0xff]
  %v507 = vld [vmem:[%s3 + $0x654] sm:$0xf]
  %v508 = vld [vmem:[%s3 + $0x658] sm:$0xff]
  %v509 = vld [vmem:[%s3 + $0x660] sm:$0xff]
  %v510 = vld [vmem:[%s3 + $0x668] sm:$0xff]
  %v511 = vld [vmem:[%s3 + $0x670] sm:$0xf]
  %v512 = vld [vmem:[%s3 + $0x674] sm:$0xff]
  %v513 = vld [vmem:[%s3 + $0x67c] sm:$0xff]
  %v514 = vld [vmem:[%s3 + $0x684] sm:$0xff]
  %v515 = vld [vmem:[%s3 + $0x68c] sm:$0xf]
  %v516 = vld [vmem:[%s3 + $0x690] sm:$0xff]
  %v517 = vld [vmem:[%s3 + $0x698] sm:$0xff]
  %v518 = vld [vmem:[%s3 + $0x6a0] sm:$0xff]
  %v519 = vld [vmem:[%s3 + $0x6a8] sm:$0xf]
  %v520 = vld [vmem:[%s3 + $0x6ac] sm:$0xff]
  %v521 = vld [vmem:[%s3 + $0x6b4] sm:$0xff]
  %v522 = vld [vmem:[%s3 + $0x6bc] sm:$0xff]
  %v523 = vld [vmem:[%s3 + $0x6c4] sm:$0xf]
  %v524 = vld [vmem:[%s3 + $0x6c8] sm:$0xff]
  %v525 = vld [vmem:[%s3 + $0x6d0] sm:$0xff]
  %v526 = vld [vmem:[%s3 + $0x6d8] sm:$0xff]
  %v527 = vld [vmem:[%s3 + $0x6e0] sm:$0xf]
  %v528 = vld [vmem:[%s3 + $0x6e4] sm:$0xff]
  %v529 = vld [vmem:[%s3 + $0x6ec] sm:$0xff]
  %v530 = vld [vmem:[%s3 + $0x6f4] sm:$0xff]
  %v531 = vld [vmem:[%s3 + $0x6fc] sm:$0xf]
  %v532 = vld [vmem:[%s3 + $0x700] sm:$0xff]
  %v533 = vld [vmem:[%s3 + $0x708] sm:$0xff]
  %v534 = vld [vmem:[%s3 + $0x710] sm:$0xff]
  %v535 = vld [vmem:[%s3 + $0x718] sm:$0xf]
  %v536 = vld [vmem:[%s3 + $0x71c] sm:$0xff]
  %v537 = vld [vmem:[%s3 + $0x724] sm:$0xff]
  %v538 = vld [vmem:[%s3 + $0x72c] sm:$0xff]
  %v539 = vld [vmem:[%s3 + $0x734] sm:$0xf]
  %v540 = vld [vmem:[%s3 + $0x738] sm:$0xff]
  %v541 = vld [vmem:[%s3 + $0x740] sm:$0xff]
  %v542 = vld [vmem:[%s3 + $0x748] sm:$0xff]
  %v543 = vld [vmem:[%s3 + $0x750] sm:$0xf]
  %v544 = vld [vmem:[%s3 + $0x754] sm:$0xff]
  %v545 = vld [vmem:[%s3 + $0x75c] sm:$0xff]
  %v546 = vld [vmem:[%s3 + $0x764] sm:$0xff]
  %v547 = vld [vmem:[%s3 + $0x76c] sm:$0xf]
  %v548 = vld [vmem:[%s3 + $0x770] sm:$0xff]
  %v549 = vld [vmem:[%s3 + $0x778] sm:$0xff]
  %v550 = vld [vmem:[%s3 + $0x780] sm:$0xff]
  %v551 = vld [vmem:[%s3 + $0x788] sm:$0xf]
  %v552 = vld [vmem:[%s3 + $0x78c] sm:$0xff]
  %v553 = vld [vmem:[%s3 + $0x794] sm:$0xff]
  %v554 = vld [vmem:[%s3 + $0x79c] sm:$0xff]
  %v555 = vld [vmem:[%s3 + $0x7a4] sm:$0xf]
  %v556 = vld [vmem:[%s3 + $0x7a8] sm:$0xff]
  %v557 = vld [vmem:[%s3 + $0x7b0] sm:$0xff]
  %v558 = vld [vmem:[%s3 + $0x7b8] sm:$0xff]
  %v559 = vld [vmem:[%s3 + $0x7c0] sm:$0xf]
  %v560 = vld [vmem:[%s3 + $0x7c4] sm:$0xff]
  %v561 = vld [vmem:[%s3 + $0x7cc] sm:$0xff]
  %v562 = vld [vmem:[%s3 + $0x7d4] sm:$0xff]
  %v563 = vld [vmem:[%s3 + $0x7dc] sm:$0xf]
  %v564 = vld [vmem:[%s3 + $0x7e0] sm:$0xff]
  %v565 = vld [vmem:[%s3 + $0x7e8] sm:$0xff]
  %v566 = vld [vmem:[%s3 + $0x7f0] sm:$0xff]
  %v567 = vld [vmem:[%s3 + $0x7f8] sm:$0xf]
  %v568 = vld [vmem:[%s3 + $0x7fc] sm:$0xff]
  %v569 = vld [vmem:[%s3 + $0x804] sm:$0xff]
  %v570 = vld [vmem:[%s3 + $0x80c] sm:$0xff]
  %v571 = vld [vmem:[%s3 + $0x814] sm:$0xf]
  %v572 = vld [vmem:[%s3 + $0x818] sm:$0xff]
  %v573 = vld [vmem:[%s3 + $0x820] sm:$0xff]
  %v574 = vld [vmem:[%s3 + $0x828] sm:$0xff]
  %v575 = vld [vmem:[%s3 + $0x830] sm:$0xf]
  %v576 = vld [vmem:[%s3 + $0x834] sm:$0xff]
  %v577 = vld [vmem:[%s3 + $0x83c] sm:$0xff]
  %v578 = vld [vmem:[%s3 + $0x844] sm:$0xff]
  %v579 = vld [vmem:[%s3 + $0x84c] sm:$0xf]
  %v580 = vld [vmem:[%s3 + $0x850] sm:$0xff]
  %v581 = vld [vmem:[%s3 + $0x858] sm:$0xff]
  %v582 = vld [vmem:[%s3 + $0x860] sm:$0xff]
  %v583 = vld [vmem:[%s3 + $0x868] sm:$0xf]
  %v584 = vld [vmem:[%s3 + $0x86c] sm:$0xff]
  %v585 = vld [vmem:[%s3 + $0x874] sm:$0xff]
  %v586 = vld [vmem:[%s3 + $0x87c] sm:$0xff]
  %v587 = vld [vmem:[%s3 + $0x884] sm:$0xf]
  %v588 = vld [vmem:[%s3 + $0x888] sm:$0xff]
  %v589 = vld [vmem:[%s3 + $0x890] sm:$0xff]
  %v590 = vld [vmem:[%s3 + $0x898] sm:$0xff]
  %v591 = vld [vmem:[%s3 + $0x8a0] sm:$0xf]
  %v592 = vld [vmem:[%s3 + $0x8a4] sm:$0xff]
  %v593 = vld [vmem:[%s3 + $0x8ac] sm:$0xff]
  %v594 = vld [vmem:[%s3 + $0x8b4] sm:$0xff]
  %v595 = vld [vmem:[%s3 + $0x8bc] sm:$0xf]
  %v596 = vld [vmem:[%s3 + $0x8c0] sm:$0xff]
  %v597 = vld [vmem:[%s3 + $0x8c8] sm:$0xff]
  %v598 = vld [vmem:[%s3 + $0x8d0] sm:$0xff]
  %v599 = vld [vmem:[%s3 + $0x8d8] sm:$0xf]
  %v600 = vld [vmem:[%s3 + $0x8dc] sm:$0xff]
  %v601 = vld [vmem:[%s3 + $0x8e4] sm:$0xff]
  %v602 = vld [vmem:[%s3 + $0x8ec] sm:$0xff]
  %v603 = vld [vmem:[%s3 + $0x8f4] sm:$0xf]
  %v604 = vld [vmem:[%s3 + $0x8f8] sm:$0xff]
  %v605 = vld [vmem:[%s3 + $0x900] sm:$0xff]
  %v606 = vld [vmem:[%s3 + $0x908] sm:$0xff]
  %v607 = vld [vmem:[%s3 + $0x910] sm:$0xf]
  %v608 = vld [vmem:[%s3 + $0x914] sm:$0xff]
  %v609 = vld [vmem:[%s3 + $0x91c] sm:$0xff]
  %v610 = vld [vmem:[%s3 + $0x924] sm:$0xff]
  %v611 = vld [vmem:[%s3 + $0x92c] sm:$0xf]
  %v612 = vld [vmem:[%s3 + $0x930] sm:$0xff]
  %v613 = vld [vmem:[%s3 + $0x938] sm:$0xff]
  %v614 = vld [vmem:[%s3 + $0x940] sm:$0xff]
  %v615 = vld [vmem:[%s3 + $0x948] sm:$0xf]
  %v616 = vld [vmem:[%s3 + $0x94c] sm:$0xff]
  %v617 = vld [vmem:[%s3 + $0x954] sm:$0xff]
  %v618 = vld [vmem:[%s3 + $0x95c] sm:$0xff]
  %v619 = vld [vmem:[%s3 + $0x964] sm:$0xf]
  %v620 = vld [vmem:[%s3 + $0x968] sm:$0xff]
  %v621 = vld [vmem:[%s3 + $0x970] sm:$0xff]
  %v622 = vld [vmem:[%s3 + $0x978] sm:$0xff]
  %v623 = vld [vmem:[%s3 + $0x980] sm:$0xf]
  %v624 = vld [vmem:[%s3 + $0x984] sm:$0xff]
  %v625 = vld [vmem:[%s3 + $0x98c] sm:$0xff]
  %v626 = vld [vmem:[%s3 + $0x994] sm:$0xff]
  %v627 = vld [vmem:[%s3 + $0x99c] sm:$0xf]
  %v628 = vld [vmem:[%s3 + $0x9a0] sm:$0xff]
  %v629 = vld [vmem:[%s3 + $0x9a8] sm:$0xff]
  %v630 = vld [vmem:[%s3 + $0x9b0] sm:$0xff]
  %v631 = vld [vmem:[%s3 + $0x9b8] sm:$0xf]
  %v632 = vld [vmem:[%s3 + $0x9bc] sm:$0xff]
  %v633 = vld [vmem:[%s3 + $0x9c4] sm:$0xff]
  %v634 = vld [vmem:[%s3 + $0x9cc] sm:$0xff]
  %v635 = vld [vmem:[%s3 + $0x9d4] sm:$0xf]
  %v636 = vld [vmem:[%s3 + $0x9d8] sm:$0xff]
  %v637 = vld [vmem:[%s3 + $0x9e0] sm:$0xff]
  %v638 = vld [vmem:[%s3 + $0x9e8] sm:$0xff]
  %v639 = vld [vmem:[%s3 + $0x9f0] sm:$0xf]
  %v640 = vld [vmem:[%s3 + $0x9f4] sm:$0xff]
  %v641 = vld [vmem:[%s3 + $0x9fc] sm:$0xff]
  %v642 = vld [vmem:[%s3 + $0xa04] sm:$0xff]
  %v643 = vld [vmem:[%s3 + $0xa0c] sm:$0xf]
  %v644 = vld [vmem:[%s3 + $0xa10] sm:$0xff]
  %v645 = vld [vmem:[%s3 + $0xa18] sm:$0xff]
  %v646 = vld [vmem:[%s3 + $0xa20] sm:$0xff]
  %v647 = vld [vmem:[%s3 + $0xa28] sm:$0xf]
  %v648 = vld [vmem:[%s3 + $0xa2c] sm:$0xff]
  %v649 = vld [vmem:[%s3 + $0xa34] sm:$0xff]
  %v650 = vld [vmem:[%s3 + $0xa3c] sm:$0xff]
  %v651 = vld [vmem:[%s3 + $0xa44] sm:$0xf]
  %v652 = vld [vmem:[%s3 + $0xa48] sm:$0xff]
  %v653 = vld [vmem:[%s3 + $0xa50] sm:$0xff]
  %v654 = vld [vmem:[%s3 + $0xa58] sm:$0xff]
  %v655 = vld [vmem:[%s3 + $0xa60] sm:$0xf]
  %v656 = vld [vmem:[%s3 + $0xa64] sm:$0xff]
  %v657 = vld [vmem:[%s3 + $0xa6c] sm:$0xff]
  %v658 = vld [vmem:[%s3 + $0xa74] sm:$0xff]
  %v659 = vld [vmem:[%s3 + $0xa7c] sm:$0xf]
  %v660 = vld [vmem:[%s3 + $0xa80] sm:$0xff]
  %v661 = vld [vmem:[%s3 + $0xa88] sm:$0xff]
  %v662 = vld [vmem:[%s3 + $0xa90] sm:$0xff]
  %v663 = vld [vmem:[%s3 + $0xa98] sm:$0xf]
  %v664 = vld [vmem:[%s3 + $0xa9c] sm:$0xff]
  %v665 = vld [vmem:[%s3 + $0xaa4] sm:$0xff]
  %v666 = vld [vmem:[%s3 + $0xaac] sm:$0xff]
  %v667 = vld [vmem:[%s3 + $0xab4] sm:$0xf]
  %v668 = vld [vmem:[%s3 + $0xab8] sm:$0xff]
  %v669 = vld [vmem:[%s3 + $0xac0] sm:$0xff]
  %v670 = vld [vmem:[%s3 + $0xac8] sm:$0xff]
  %v671 = vld [vmem:[%s3 + $0xad0] sm:$0xf]
  %v672 = vld [vmem:[%s3 + $0xad4] sm:$0xff]
  %v673 = vld [vmem:[%s3 + $0xadc] sm:$0xff]
  %v674 = vld [vmem:[%s3 + $0xae4] sm:$0xff]
  %v675 = vld [vmem:[%s3 + $0xaec] sm:$0xf]
  %v676 = vld [vmem:[%s3 + $0xaf0] sm:$0xff]
  %v677 = vld [vmem:[%s3 + $0xaf8] sm:$0xff]
  %v678 = vld [vmem:[%s3 + $0xb00] sm:$0xff]
  %v679 = vld [vmem:[%s3 + $0xb08] sm:$0xf]
  %v680 = vld [vmem:[%s3 + $0xb0c] sm:$0xff]
  %v681 = vld [vmem:[%s3 + $0xb14] sm:$0xff]
  %v682 = vld [vmem:[%s3 + $0xb1c] sm:$0xff]
  %v683 = vld [vmem:[%s3 + $0xb24] sm:$0xf]
  %v684 = vld [vmem:[%s3 + $0xb28] sm:$0xff]
  %v685 = vld [vmem:[%s3 + $0xb30] sm:$0xff]
  %v686 = vld [vmem:[%s3 + $0xb38] sm:$0xff]
  %v687 = vld [vmem:[%s3 + $0xb40] sm:$0xf]
  %v688 = vld [vmem:[%s3 + $0xb44] sm:$0xff]
  %v689 = vld [vmem:[%s3 + $0xb4c] sm:$0xff]
  %v690 = vld [vmem:[%s3 + $0xb54] sm:$0xff]
  %v691 = vld [vmem:[%s3 + $0xb5c] sm:$0xf]
  %v692 = vld [vmem:[%s3 + $0xb60] sm:$0xff]
  %v693 = vld [vmem:[%s3 + $0xb68] sm:$0xff]
  %v694 = vld [vmem:[%s3 + $0xb70] sm:$0xff]
  %v695 = vld [vmem:[%s3 + $0xb78] sm:$0xf]
  %v696 = vld [vmem:[%s3 + $0xb7c] sm:$0xff]
  %v697 = vld [vmem:[%s3 + $0xb84] sm:$0xff]
  %v698 = vld [vmem:[%s3 + $0xb8c] sm:$0xff]
  %v699 = vld [vmem:[%s3 + $0xb94] sm:$0xf]
  %v700 = vld [vmem:[%s3 + $0xb98] sm:$0xff]
  %v701 = vld [vmem:[%s3 + $0xba0] sm:$0xff]
  %v702 = vld [vmem:[%s3 + $0xba8] sm:$0xff]
  %v703 = vld [vmem:[%s3 + $0xbb0] sm:$0xf]
  %v704 = vld [vmem:[%s3 + $0xbb4] sm:$0xff]
  %v705 = vld [vmem:[%s3 + $0xbbc] sm:$0xff]
  %v706 = vld [vmem:[%s3 + $0xbc4] sm:$0xff]
  %v707 = vld [vmem:[%s3 + $0xbcc] sm:$0xf]
  %v708 = vld [vmem:[%s3 + $0xbd0] sm:$0xff]
  %v709 = vld [vmem:[%s3 + $0xbd8] sm:$0xff]
  %v710 = vld [vmem:[%s3 + $0xbe0] sm:$0xff]
  %v711 = vld [vmem:[%s3 + $0xbe8] sm:$0xf]
  %v712 = vld [vmem:[%s3 + $0xbec] sm:$0xff]
  %v713 = vld [vmem:[%s3 + $0xbf4] sm:$0xff]
  %v714 = vld [vmem:[%s3 + $0xbfc] sm:$0xff]
  %v715 = vld [vmem:[%s3 + $0xc04] sm:$0xf]
  %v716 = vld [vmem:[%s3 + $0xc08] sm:$0xff]
  %v717 = vld [vmem:[%s3 + $0xc10] sm:$0xff]
  %v718 = vld [vmem:[%s3 + $0xc18] sm:$0xff]
  %v719 = vld [vmem:[%s3 + $0xc20] sm:$0xf]
  %v720 = vld [vmem:[%s3 + $0xc24] sm:$0xff]
  %v721 = vld [vmem:[%s3 + $0xc2c] sm:$0xff]
  %v722 = vld [vmem:[%s3 + $0xc34] sm:$0xff]
  %v723 = vld [vmem:[%s3 + $0xc3c] sm:$0xf]
  %v724 = vld [vmem:[%s3 + $0xc40] sm:$0xff]
  %v725 = vld [vmem:[%s3 + $0xc48] sm:$0xff]
  %v726 = vld [vmem:[%s3 + $0xc50] sm:$0xff]
  %v727 = vld [vmem:[%s3 + $0xc58] sm:$0xf]
  %v728 = vld [vmem:[%s3 + $0xc5c] sm:$0xff]
  %v729 = vld [vmem:[%s3 + $0xc64] sm:$0xff]
  %v730 = vld [vmem:[%s3 + $0xc6c] sm:$0xff]
  %v731 = vld [vmem:[%s3 + $0xc74] sm:$0xf]
  %v732 = vld [vmem:[%s3 + $0xc78] sm:$0xff]
  %v733 = vld [vmem:[%s3 + $0xc80] sm:$0xff]
  %v734 = vld [vmem:[%s3 + $0xc88] sm:$0xff]
  %v735 = vld [vmem:[%s3 + $0xc90] sm:$0xf]
  %v736 = vld [vmem:[%s3 + $0xc94] sm:$0xff]
  %v737 = vld [vmem:[%s3 + $0xc9c] sm:$0xff]
  %v738 = vld [vmem:[%s3 + $0xca4] sm:$0xff]
  %v739 = vld [vmem:[%s3 + $0xcac] sm:$0xf]
  %v740 = vld [vmem:[%s3 + $0xcb0] sm:$0xff]
  %v741 = vld [vmem:[%s3 + $0xcb8] sm:$0xff]
  %v742 = vld [vmem:[%s3 + $0xcc0] sm:$0xff]
  %v743 = vld [vmem:[%s3 + $0xcc8] sm:$0xf]
  %v744 = vld [vmem:[%s3 + $0xccc] sm:$0xff]
  %v745 = vld [vmem:[%s3 + $0xcd4] sm:$0xff]
  %v746 = vld [vmem:[%s3 + $0xcdc] sm:$0xff]
  %v747 = vld [vmem:[%s3 + $0xce4] sm:$0xf]
  %v748 = vld [vmem:[%s3 + $0xce8] sm:$0xff]
  %v749 = vld [vmem:[%s3 + $0xcf0] sm:$0xff]
  %v750 = vld [vmem:[%s3 + $0xcf8] sm:$0xff]
  %v751 = vld [vmem:[%s3 + $0xd00] sm:$0xf]
  %v752 = vld [vmem:[%s3 + $0xd04] sm:$0xff]
  %v753 = vld [vmem:[%s3 + $0xd0c] sm:$0xff]
  %v754 = vld [vmem:[%s3 + $0xd14] sm:$0xff]
  %v755 = vld [vmem:[%s3 + $0xd1c] sm:$0xf]
  %v756 = vld [vmem:[%s3 + $0xd20] sm:$0xff]
  %v757 = vld [vmem:[%s3 + $0xd28] sm:$0xff]
  %v758 = vld [vmem:[%s3 + $0xd30] sm:$0xff]
  %v759 = vld [vmem:[%s3 + $0xd38] sm:$0xf]
  %v760 = vld [vmem:[%s3 + $0xd3c] sm:$0xff]
  %v761 = vld [vmem:[%s3 + $0xd44] sm:$0xff]
  %v762 = vld [vmem:[%s3 + $0xd4c] sm:$0xff]
  %v763 = vld [vmem:[%s3 + $0xd54] sm:$0xf]
  %v764 = vld [vmem:[%s3 + $0xd58] sm:$0xff]
  %v765 = vld [vmem:[%s3 + $0xd60] sm:$0xff]
  %v766 = vld [vmem:[%s3 + $0xd68] sm:$0xff]
  %v767 = vld [vmem:[%s3 + $0xd70] sm:$0xf]
  %v768 = vld [vmem:[%s3 + $0xd74] sm:$0xff]
  %v769 = vld [vmem:[%s3 + $0xd7c] sm:$0xff]
  %v770 = vld [vmem:[%s3 + $0xd84] sm:$0xff]
  %v771 = vld [vmem:[%s3 + $0xd8c] sm:$0xf]
  %v772 = vld [vmem:[%s3 + $0xd90] sm:$0xff]
  %v773 = vld [vmem:[%s3 + $0xd98] sm:$0xff]
  %v774 = vld [vmem:[%s3 + $0xda0] sm:$0xff]
  %v775 = vld [vmem:[%s3 + $0xda8] sm:$0xf]
  %v776 = vld [vmem:[%s3 + $0xdac] sm:$0xff]
  %v777 = vld [vmem:[%s3 + $0xdb4] sm:$0xff]
  %v778 = vld [vmem:[%s3 + $0xdbc] sm:$0xff]
  %v779 = vld [vmem:[%s3 + $0xdc4] sm:$0xf]
  %v780 = vld [vmem:[%s3 + $0xdc8] sm:$0xff]
  %v781 = vld [vmem:[%s3 + $0xdd0] sm:$0xff]
  %v782 = vld [vmem:[%s3 + $0xdd8] sm:$0xff]
  %v783 = vld [vmem:[%s3 + $0xde0] sm:$0xf]
  %v784 = vld [vmem:[%s3 + $0xde4] sm:$0xff]
  %v785 = vld [vmem:[%s3 + $0xdec] sm:$0xff]
  %v786 = vld [vmem:[%s3 + $0xdf4] sm:$0xff]
  %v787 = vld [vmem:[%s3 + $0xdfc] sm:$0xf]
  %v788 = vld [vmem:[%s3 + $0xe00] sm:$0xff]
  %v789 = vld [vmem:[%s3 + $0xe08] sm:$0xff]
  %v790 = vld [vmem:[%s3 + $0xe10] sm:$0xff]
  %v791 = vld [vmem:[%s3 + $0xe18] sm:$0xf]
  %v792 = vld [vmem:[%s3 + $0xe1c] sm:$0xff]
  %v793 = vld [vmem:[%s3 + $0xe24] sm:$0xff]
  %v794 = vld [vmem:[%s3 + $0xe2c] sm:$0xff]
  %v795 = vld [vmem:[%s3 + $0xe34] sm:$0xf]
  %v796 = vld [vmem:[%s3 + $0xe38] sm:$0xff]
  %v797 = vld [vmem:[%s3 + $0xe40] sm:$0xff]
  %v798 = vld [vmem:[%s3 + $0xe48] sm:$0xff]
  %v799 = vld [vmem:[%s3 + $0xe50] sm:$0xf]
  %v800 = vld [vmem:[%s3 + $0xe54] sm:$0xff]
  %v801 = vld [vmem:[%s3 + $0xe5c] sm:$0xff]
  %v802 = vld [vmem:[%s3 + $0xe64] sm:$0xff]
  %v803 = vld [vmem:[%s3 + $0xe6c] sm:$0xf]
  %v804 = vld [vmem:[%s3 + $0xe70] sm:$0xff]
  %v805 = vld [vmem:[%s3 + $0xe78] sm:$0xff]
  %v806 = vld [vmem:[%s3 + $0xe80] sm:$0xff]
  %v807 = vld [vmem:[%s3 + $0xe88] sm:$0xf]
  %v808 = vld [vmem:[%s3 + $0xe8c] sm:$0xff]
  %v809 = vld [vmem:[%s3 + $0xe94] sm:$0xff]
  %v810 = vld [vmem:[%s3 + $0xe9c] sm:$0xff]
  %v811 = vld [vmem:[%s3 + $0xea4] sm:$0xf]
  %v812 = vld [vmem:[%s3 + $0xea8] sm:$0xff]
  %v813 = vld [vmem:[%s3 + $0xeb0] sm:$0xff]
  %v814 = vld [vmem:[%s3 + $0xeb8] sm:$0xff]
  %v815 = vld [vmem:[%s3 + $0xec0] sm:$0xf]
  %v816 = vld [vmem:[%s3 + $0xec4] sm:$0xff]
  %v817 = vld [vmem:[%s3 + $0xecc] sm:$0xff]
  %v818 = vld [vmem:[%s3 + $0xed4] sm:$0xff]
  %v819 = vld [vmem:[%s3 + $0xedc] sm:$0xf]
  %v820 = vld [vmem:[%s3 + $0xee0] sm:$0xff]
  %v821 = vld [vmem:[%s3 + $0xee8] sm:$0xff]
  %v822 = vld [vmem:[%s3 + $0xef0] sm:$0xff]
  %v823 = vld [vmem:[%s3 + $0xef8] sm:$0xf]
  %v824 = vld [vmem:[%s3 + $0xefc] sm:$0xff]
  %v825 = vld [vmem:[%s3 + $0xf04] sm:$0xff]
  %v826 = vld [vmem:[%s3 + $0xf0c] sm:$0xff]
  %v827 = vld [vmem:[%s3 + $0xf14] sm:$0xf]
  %v828 = vld [vmem:[%s3 + $0xf18] sm:$0xff]
  %v829 = vld [vmem:[%s3 + $0xf20] sm:$0xff]
  %v830 = vld [vmem:[%s3 + $0xf28] sm:$0xff]
  %v831 = vld [vmem:[%s3 + $0xf30] sm:$0xf]
  %v832 = vld [vmem:[%s3 + $0xf34] sm:$0xff]
  %v833 = vld [vmem:[%s3 + $0xf3c] sm:$0xff]
  %v834 = vld [vmem:[%s3 + $0xf44] sm:$0xff]
  %v835 = vld [vmem:[%s3 + $0xf4c] sm:$0xf]
  %v836 = vld [vmem:[%s3 + $0xf50] sm:$0xff]
  %v837 = vld [vmem:[%s3 + $0xf58] sm:$0xff]
  %v838 = vld [vmem:[%s3 + $0xf60] sm:$0xff]
  %v839 = vld [vmem:[%s3 + $0xf68] sm:$0xf]
  %v840 = vld [vmem:[%s3 + $0xf6c] sm:$0xff]
  %v841 = vld [vmem:[%s3 + $0xf74] sm:$0xff]
  %v842 = vld [vmem:[%s3 + $0xf7c] sm:$0xff]
  %v843 = vld [vmem:[%s3 + $0xf84] sm:$0xf]
  %v844 = vld [vmem:[%s3 + $0xf88] sm:$0xff]
  %v845 = vld [vmem:[%s3 + $0xf90] sm:$0xff]
  %v846 = vld [vmem:[%s3 + $0xf98] sm:$0xff]
  %v847 = vld [vmem:[%s3 + $0xfa0] sm:$0xf]
  %v848 = vld [vmem:[%s3 + $0xfa4] sm:$0xff]
  %v849 = vld [vmem:[%s3 + $0xfac] sm:$0xff]
  %v850 = vld [vmem:[%s3 + $0xfb4] sm:$0xff]
  %v851 = vld [vmem:[%s3 + $0xfbc] sm:$0xf]
  %v852 = vld [vmem:[%s3 + $0xfc0] sm:$0xff]
  %v853 = vld [vmem:[%s3 + $0xfc8] sm:$0xff]
  %v854 = vld [vmem:[%s3 + $0xfd0] sm:$0xff]
  %v855 = vld [vmem:[%s3 + $0xfd8] sm:$0xf]
  %v856 = vld [vmem:[%s3 + $0xfdc] sm:$0xff]
  %v857 = vld [vmem:[%s3 + $0xfe4] sm:$0xff]
  %v858 = vld [vmem:[%s3 + $0xfec] sm:$0xff]
  %v859 = vld [vmem:[%s3 + $0xff4] sm:$0xf]
  %v860 = vld [vmem:[%s3 + $0xff8] sm:$0xff]
  %v861 = vld [vmem:[%s3 + $0x1000] sm:$0xff]
  %v862 = vld [vmem:[%s3 + $0x1008] sm:$0xff]
  %v863 = vld [vmem:[%s3 + $0x1010] sm:$0xf]
  %v864 = vld [vmem:[%s3 + $0x1014] sm:$0xff]
  %v865 = vld [vmem:[%s3 + $0x101c] sm:$0xff]
  %v866 = vld [vmem:[%s3 + $0x1024] sm:$0xff]
  %v867 = vld [vmem:[%s3 + $0x102c] sm:$0xf]
  %v868 = vld [vmem:[%s3 + $0x1030] sm:$0xff]
  %v869 = vld [vmem:[%s3 + $0x1038] sm:$0xff]
  %v870 = vld [vmem:[%s3 + $0x1040] sm:$0xff]
  %v871 = vld [vmem:[%s3 + $0x1048] sm:$0xf]
  %v872 = vld [vmem:[%s3 + $0x104c] sm:$0xff]
  %v873 = vld [vmem:[%s3 + $0x1054] sm:$0xff]
  %v874 = vld [vmem:[%s3 + $0x105c] sm:$0xff]
  %v875 = vld [vmem:[%s3 + $0x1064] sm:$0xf]
  %v876 = vld [vmem:[%s3 + $0x1068] sm:$0xff]
  %v877 = vld [vmem:[%s3 + $0x1070] sm:$0xff]
  %v878 = vld [vmem:[%s3 + $0x1078] sm:$0xff]
  %v879 = vld [vmem:[%s3 + $0x1080] sm:$0xf]
  %v880 = vld [vmem:[%s3 + $0x1084] sm:$0xff]
  %v881 = vld [vmem:[%s3 + $0x108c] sm:$0xff]
  %v882 = vld [vmem:[%s3 + $0x1094] sm:$0xff]
  %v883 = vld [vmem:[%s3 + $0x109c] sm:$0xf]
  %v884 = vld [vmem:[%s3 + $0x10a0] sm:$0xff]
  %v885 = vld [vmem:[%s3 + $0x10a8] sm:$0xff]
  %v886 = vld [vmem:[%s3 + $0x10b0] sm:$0xff]
  %v887 = vld [vmem:[%s3 + $0x10b8] sm:$0xf]
  %v888 = vld [vmem:[%s3 + $0x10bc] sm:$0xff]
  %v889 = vld [vmem:[%s3 + $0x10c4] sm:$0xff]
  %v890 = vld [vmem:[%s3 + $0x10cc] sm:$0xff]
  %v891 = vld [vmem:[%s3 + $0x10d4] sm:$0xf]
  %v892 = vld [vmem:[%s3 + $0x10d8] sm:$0xff]
  %v893 = vld [vmem:[%s3 + $0x10e0] sm:$0xff]
  %v894 = vld [vmem:[%s3 + $0x10e8] sm:$0xff]
  %v895 = vld [vmem:[%s3 + $0x10f0] sm:$0xf]
  %v896 = vld [vmem:[%s3 + $0x10f4] sm:$0xff]
  %v897 = vld [vmem:[%s3 + $0x10fc] sm:$0xff]
  %v898 = vld [vmem:[%s3 + $0x1104] sm:$0xff]
  %v899 = vld [vmem:[%s3 + $0x110c] sm:$0xf]
  %v900 = vld [vmem:[%s3 + $0x1110] sm:$0xff]
  %v901 = vld [vmem:[%s3 + $0x1118] sm:$0xff]
  %v902 = vld [vmem:[%s3 + $0x1120] sm:$0xff]
  %v903 = vld [vmem:[%s3 + $0x1128] sm:$0xf]
  %v904 = vld [vmem:[%s3 + $0x112c] sm:$0xff]
  %v905 = vld [vmem:[%s3 + $0x1134] sm:$0xff]
  %v906 = vld [vmem:[%s3 + $0x113c] sm:$0xff]
  %v907 = vld [vmem:[%s3 + $0x1144] sm:$0xf]
  %v908 = vld [vmem:[%s3 + $0x1148] sm:$0xff]
  %v909 = vld [vmem:[%s3 + $0x1150] sm:$0xff]
  %v910 = vld [vmem:[%s3 + $0x1158] sm:$0xff]
  %v911 = vld [vmem:[%s3 + $0x1160] sm:$0xf]
  %v912 = vld [vmem:[%s3 + $0x1164] sm:$0xff]
  %v913 = vld [vmem:[%s3 + $0x116c] sm:$0xff]
  %v914 = vld [vmem:[%s3 + $0x1174] sm:$0xff]
  %v915 = vld [vmem:[%s3 + $0x117c] sm:$0xf]
  %v916 = vld [vmem:[%s3 + $0x1180] sm:$0xff]
  %v917 = vld [vmem:[%s3 + $0x1188] sm:$0xff]
  %v918 = vld [vmem:[%s3 + $0x1190] sm:$0xff]
  %v919 = vld [vmem:[%s3 + $0x1198] sm:$0xf]
  %v920 = vld [vmem:[%s3 + $0x119c] sm:$0xff]
  %v921 = vld [vmem:[%s3 + $0x11a4] sm:$0xff]
  %v922 = vld [vmem:[%s3 + $0x11ac] sm:$0xff]
  %v923 = vld [vmem:[%s3 + $0x11b4] sm:$0xf]
  %v924 = vld [vmem:[%s3 + $0x11b8] sm:$0xff]
  %v925 = vld [vmem:[%s3 + $0x11c0] sm:$0xff]
  %v926 = vld [vmem:[%s3 + $0x11c8] sm:$0xff]
  %v927 = vld [vmem:[%s3 + $0x11d0] sm:$0xf]
  %v928 = vld [vmem:[%s3 + $0x11d4] sm:$0xff]
  %v929 = vld [vmem:[%s3 + $0x11dc] sm:$0xff]
  %v930 = vld [vmem:[%s3 + $0x11e4] sm:$0xff]
  %v931 = vld [vmem:[%s3 + $0x11ec] sm:$0xf]
  %v932 = vld [vmem:[%s3 + $0x11f0] sm:$0xff]
  %v933 = vld [vmem:[%s3 + $0x11f8] sm:$0xff]
  %v934 = vld [vmem:[%s3 + $0x1200] sm:$0xff]
  %v935 = vld [vmem:[%s3 + $0x1208] sm:$0xf]
  %v936 = vld [vmem:[%s3 + $0x120c] sm:$0xff]
  %v937 = vld [vmem:[%s3 + $0x1214] sm:$0xff]
  %v938 = vld [vmem:[%s3 + $0x121c] sm:$0xff]
  %v939 = vld [vmem:[%s3 + $0x1224] sm:$0xf]
  %v940 = vld [vmem:[%s3 + $0x1228] sm:$0xff]
  %v941 = vld [vmem:[%s3 + $0x1230] sm:$0xff]
  %v942 = vld [vmem:[%s3 + $0x1238] sm:$0xff]
  %v943 = vld [vmem:[%s3 + $0x1240] sm:$0xf]
  %v944 = vld [vmem:[%s3 + $0x1244] sm:$0xff]
  %v945 = vld [vmem:[%s3 + $0x124c] sm:$0xff]
  %v946 = vld [vmem:[%s3 + $0x1254] sm:$0xff]
  %v947 = vld [vmem:[%s3 + $0x125c] sm:$0xf]
  %v948 = vld [vmem:[%s3 + $0x1260] sm:$0xff]
  %v949 = vld [vmem:[%s3 + $0x1268] sm:$0xff]
  %v950 = vld [vmem:[%s3 + $0x1270] sm:$0xff]
  %v951 = vld [vmem:[%s3 + $0x1278] sm:$0xf]
  %v952 = vld [vmem:[%s3 + $0x127c] sm:$0xff]
  %v953 = vld [vmem:[%s3 + $0x1284] sm:$0xff]
  %v954 = vld [vmem:[%s3 + $0x128c] sm:$0xff]
  %v955 = vld [vmem:[%s3 + $0x1294] sm:$0xf]
  %v956 = vld [vmem:[%s3 + $0x1298] sm:$0xff]
  %v957 = vld [vmem:[%s3 + $0x12a0] sm:$0xff]
  %v958 = vld [vmem:[%s3 + $0x12a8] sm:$0xff]
  %v959 = vld [vmem:[%s3 + $0x12b0] sm:$0xf]
  %v960 = vld [vmem:[%s3 + $0x12b4] sm:$0xff]
  %v961 = vld [vmem:[%s3 + $0x12bc] sm:$0xff]
  %v962 = vld [vmem:[%s3 + $0x12c4] sm:$0xff]
  %v963 = vld [vmem:[%s3 + $0x12cc] sm:$0xf]
  %v964 = vld [vmem:[%s3 + $0x12d0] sm:$0xff]
  %v965 = vld [vmem:[%s3 + $0x12d8] sm:$0xff]
  %v966 = vld [vmem:[%s3 + $0x12e0] sm:$0xff]
  %v967 = vld [vmem:[%s3 + $0x12e8] sm:$0xf]
  %v968 = vld [vmem:[%s3 + $0x12ec] sm:$0xff]
  %v969 = vld [vmem:[%s3 + $0x12f4] sm:$0xff]
  %v970 = vld [vmem:[%s3 + $0x12fc] sm:$0xff]
  %v971 = vld [vmem:[%s3 + $0x1304] sm:$0xf]
  %v972 = vld [vmem:[%s3 + $0x1308] sm:$0xff]
  %v973 = vld [vmem:[%s3 + $0x1310] sm:$0xff]
  %v974 = vld [vmem:[%s3 + $0x1318] sm:$0xff]
  %v975 = vld [vmem:[%s3 + $0x1320] sm:$0xf]
  %v976 = vld [vmem:[%s3 + $0x1324] sm:$0xff]
  %v977 = vld [vmem:[%s3 + $0x132c] sm:$0xff]
  %v978 = vld [vmem:[%s3 + $0x1334] sm:$0xff]
  %v979 = vld [vmem:[%s3 + $0x133c] sm:$0xf]
  %v980 = vld [vmem:[%s3 + $0x1340] sm:$0xff]
  %v981 = vld [vmem:[%s3 + $0x1348] sm:$0xff]
  %v982 = vld [vmem:[%s3 + $0x1350] sm:$0xff]
  %v983 = vld [vmem:[%s3 + $0x1358] sm:$0xf]
  %v984 = vld [vmem:[%s3 + $0x135c] sm:$0xff]
  %v985 = vld [vmem:[%s3 + $0x1364] sm:$0xff]
  %v986 = vld [vmem:[%s3 + $0x136c] sm:$0xff]
  %v987 = vld [vmem:[%s3 + $0x1374] sm:$0xf]
  %v988 = vld [vmem:[%s3 + $0x1378] sm:$0xff]
  %v989 = vld [vmem:[%s3 + $0x1380] sm:$0xff]
  %v990 = vld [vmem:[%s3 + $0x1388] sm:$0xff]
  %v991 = vld [vmem:[%s3 + $0x1390] sm:$0xf]
  %v992 = vld [vmem:[%s3 + $0x1394] sm:$0xff]
  %v993 = vld [vmem:[%s3 + $0x139c] sm:$0xff]
  %v994 = vld [vmem:[%s3 + $0x13a4] sm:$0xff]
  %v995 = vld [vmem:[%s3 + $0x13ac] sm:$0xf]
  %v996 = vld [vmem:[%s3 + $0x13b0] sm:$0xff]
  %v997 = vld [vmem:[%s3 + $0x13b8] sm:$0xff]
  %v998 = vld [vmem:[%s3 + $0x13c0] sm:$0xff]
  %v999 = vld [vmem:[%s3 + $0x13c8] sm:$0xf]
  %v1000 = vld [vmem:[%s3 + $0x13cc] sm:$0xff]
  %v1001 = vld [vmem:[%s3 + $0x13d4] sm:$0xff]
  %v1002 = vld [vmem:[%s3 + $0x13dc] sm:$0xff]
  %v1003 = vld [vmem:[%s3 + $0x13e4] sm:$0xf]
  %v1004 = vld [vmem:[%s3 + $0x13e8] sm:$0xff]
  %v1005 = vld [vmem:[%s3 + $0x13f0] sm:$0xff]
  %v1006 = vld [vmem:[%s3 + $0x13f8] sm:$0xff]
  %v1007 = vld [vmem:[%s3 + $0x1400] sm:$0xf]
  %v1008 = vld [vmem:[%s3 + $0x1404] sm:$0xff]
  %v1009 = vld [vmem:[%s3 + $0x140c] sm:$0xff]
  %v1010 = vld [vmem:[%s3 + $0x1414] sm:$0xff]
  %v1011 = vld [vmem:[%s3 + $0x141c] sm:$0xf]
  %v1012 = vld [vmem:[%s3 + $0x1420] sm:$0xff]
  %v1013 = vld [vmem:[%s3 + $0x1428] sm:$0xff]
  %v1014 = vld [vmem:[%s3 + $0x1430] sm:$0xff]
  %v1015 = vld [vmem:[%s3 + $0x1438] sm:$0xf]
  %v1016 = vld [vmem:[%s3 + $0x143c] sm:$0xff]
  %v1017 = vld [vmem:[%s3 + $0x1444] sm:$0xff]
  %v1018 = vld [vmem:[%s3 + $0x144c] sm:$0xff]
  %v1019 = vld [vmem:[%s3 + $0x1454] sm:$0xf]
  %v1020 = vld [vmem:[%s3 + $0x1458] sm:$0xff]
  %v1021 = vld [vmem:[%s3 + $0x1460] sm:$0xff]
  %v1022 = vld [vmem:[%s3 + $0x1468] sm:$0xff]
  %v1023 = vld [vmem:[%s3 + $0x1470] sm:$0xf]
  %v1024 = vld [vmem:[%s3 + $0x1474] sm:$0xff]
  %v1025 = vld [vmem:[%s3 + $0x147c] sm:$0xff]
  %v1026 = vld [vmem:[%s3 + $0x1484] sm:$0xff]
  %v1027 = vld [vmem:[%s3 + $0x148c] sm:$0xf]
  %v1028 = vld [vmem:[%s3 + $0x1490] sm:$0xff]
  %v1029 = vld [vmem:[%s3 + $0x1498] sm:$0xff]
  %v1030 = vld [vmem:[%s3 + $0x14a0] sm:$0xff]
  %v1031 = vld [vmem:[%s3 + $0x14a8] sm:$0xf]
  %v1032 = vld [vmem:[%s3 + $0x14ac] sm:$0xff]
  %v1033 = vld [vmem:[%s3 + $0x14b4] sm:$0xff]
  %v1034 = vld [vmem:[%s3 + $0x14bc] sm:$0xff]
  %v1035 = vld [vmem:[%s3 + $0x14c4] sm:$0xf]
  %v1036 = vld [vmem:[%s3 + $0x14c8] sm:$0xff]
  %v1037 = vld [vmem:[%s3 + $0x14d0] sm:$0xff]
  %v1038 = vld [vmem:[%s3 + $0x14d8] sm:$0xff]
  %v1039 = vld [vmem:[%s3 + $0x14e0] sm:$0xf]
  %v1040 = vld [vmem:[%s3 + $0x14e4] sm:$0xff]
  %v1041 = vld [vmem:[%s3 + $0x14ec] sm:$0xff]
  %v1042 = vld [vmem:[%s3 + $0x14f4] sm:$0xff]
  %v1043 = vld [vmem:[%s3 + $0x14fc] sm:$0xf]
  %v1044 = vld [vmem:[%s3 + $0x1500] sm:$0xff]
  %v1045 = vld [vmem:[%s3 + $0x1508] sm:$0xff]
  %v1046 = vld [vmem:[%s3 + $0x1510] sm:$0xff]
  %v1047 = vld [vmem:[%s3 + $0x1518] sm:$0xf]
  %v1048 = vld [vmem:[%s3 + $0x151c] sm:$0xff]
  %v1049 = vld [vmem:[%s3 + $0x1524] sm:$0xff]
  %v1050 = vld [vmem:[%s3 + $0x152c] sm:$0xff]
  %v1051 = vld [vmem:[%s3 + $0x1534] sm:$0xf]
  %v1052 = vld [vmem:[%s3 + $0x1538] sm:$0xff]
  %v1053 = vld [vmem:[%s3 + $0x1540] sm:$0xff]
  %v1054 = vld [vmem:[%s3 + $0x1548] sm:$0xff]
  %v1055 = vld [vmem:[%s3 + $0x1550] sm:$0xf]
  %v1056 = vld [vmem:[%s3 + $0x1554] sm:$0xff]
  %v1057 = vld [vmem:[%s3 + $0x155c] sm:$0xff]
  %v1058 = vld [vmem:[%s3 + $0x1564] sm:$0xff]
  %v1059 = vld [vmem:[%s3 + $0x156c] sm:$0xf]
  %v1060 = vld [vmem:[%s3 + $0x1570] sm:$0xff]
  %v1061 = vld [vmem:[%s3 + $0x1578] sm:$0xff]
  %v1062 = vld [vmem:[%s3 + $0x1580] sm:$0xff]
  %v1063 = vld [vmem:[%s3 + $0x1588] sm:$0xf]
  %v1064 = vld [vmem:[%s3 + $0x158c] sm:$0xff]
  %v1065 = vld [vmem:[%s3 + $0x1594] sm:$0xff]
  %v1066 = vld [vmem:[%s3 + $0x159c] sm:$0xff]
  %v1067 = vld [vmem:[%s3 + $0x15a4] sm:$0xf]
  %v1068 = vld [vmem:[%s3 + $0x15a8] sm:$0xff]
  %v1069 = vld [vmem:[%s3 + $0x15b0] sm:$0xff]
  %v1070 = vld [vmem:[%s3 + $0x15b8] sm:$0xff]
  %v1071 = vld [vmem:[%s3 + $0x15c0] sm:$0xf]
  %v1072 = vld [vmem:[%s3 + $0x15c4] sm:$0xff]
  %v1073 = vld [vmem:[%s3 + $0x15cc] sm:$0xff]
  %v1074 = vld [vmem:[%s3 + $0x15d4] sm:$0xff]
  %v1075 = vld [vmem:[%s3 + $0x15dc] sm:$0xf]
  %v1076 = vld [vmem:[%s3 + $0x15e0] sm:$0xff]
  %v1077 = vld [vmem:[%s3 + $0x15e8] sm:$0xff]
  %v1078 = vld [vmem:[%s3 + $0x15f0] sm:$0xff]
  %v1079 = vld [vmem:[%s3 + $0x15f8] sm:$0xf]
  %v1080 = vld [vmem:[%s3 + $0x15fc] sm:$0xff]
  %v1081 = vld [vmem:[%s3 + $0x1604] sm:$0xff]
  %v1082 = vld [vmem:[%s3 + $0x160c] sm:$0xff]
  %v1083 = vld [vmem:[%s3 + $0x1614] sm:$0xf]
  %v1084 = vld [vmem:[%s3 + $0x1618] sm:$0xff]
  %v1085 = vld [vmem:[%s3 + $0x1620] sm:$0xff]
  %v1086 = vld [vmem:[%s3 + $0x1628] sm:$0xff]
  %v1087 = vld [vmem:[%s3 + $0x1630] sm:$0xf]
  %v1088 = vld [vmem:[%s3 + $0x1634] sm:$0xff]
  %v1089 = vld [vmem:[%s3 + $0x163c] sm:$0xff]
  %v1090 = vld [vmem:[%s3 + $0x1644] sm:$0xff]
  %v1091 = vld [vmem:[%s3 + $0x164c] sm:$0xf]
  %v1092 = vld [vmem:[%s3 + $0x1650] sm:$0xff]
  %v1093 = vld [vmem:[%s3 + $0x1658] sm:$0xff]
  %v1094 = vld [vmem:[%s3 + $0x1660] sm:$0xff]
  %v1095 = vld [vmem:[%s3 + $0x1668] sm:$0xf]
  %v1096 = vld [vmem:[%s3 + $0x166c] sm:$0xff]
  %v1097 = vld [vmem:[%s3 + $0x1674] sm:$0xff]
  %v1098 = vld [vmem:[%s3 + $0x167c] sm:$0xff]
  %v1099 = vld [vmem:[%s3 + $0x1684] sm:$0xf]
  %v1100 = vld [vmem:[%s3 + $0x1688] sm:$0xff]
  %v1101 = vld [vmem:[%s3 + $0x1690] sm:$0xff]
  %v1102 = vld [vmem:[%s3 + $0x1698] sm:$0xff]
  %v1103 = vld [vmem:[%s3 + $0x16a0] sm:$0xf]
  %v1104 = vld [vmem:[%s3 + $0x16a4] sm:$0xff]
  %v1105 = vld [vmem:[%s3 + $0x16ac] sm:$0xff]
  %v1106 = vld [vmem:[%s3 + $0x16b4] sm:$0xff]
  %v1107 = vld [vmem:[%s3 + $0x16bc] sm:$0xf]
  %v1108 = vld [vmem:[%s4] sm:$0xff]
  %v1110 = vlaneseq
  %v1111 = vshrl.u32 %v1110, 7
  %v1112 = vsub.s32 0, %v1111
  %v1113 = vrot.slane %v1108, %v1112
  %v1114 = vlaneseq
  %v1115 = vshrl.u32 %v1114, 7
  %v1116 = vsub.s32 1, %v1115
  %v1117 = vrot.slane %v1108, %v1116
  %v1118 = vlaneseq
  %v1119 = vshrl.u32 %v1118, 7
  %v1120 = vsub.s32 2, %v1119
  %v1121 = vrot.slane %v1108, %v1120
  %v1122 = vlaneseq
  %v1123 = vshrl.u32 %v1122, 7
  %v1124 = vsub.s32 3, %v1123
  %v1125 = vrot.slane %v1108, %v1124
  %v1126 = vlaneseq
  %v1127 = vshrl.u32 %v1126, 7
  %v1128 = vsub.s32 4, %v1127
  %v1129 = vrot.slane %v1108, %v1128
  %v1130 = vlaneseq
  %v1131 = vshrl.u32 %v1130, 7
  %v1132 = vsub.s32 5, %v1131
  %v1133 = vrot.slane %v1108, %v1132
  %v1134 = vlaneseq
  %v1135 = vshrl.u32 %v1134, 7
  %v1136 = vsub.s32 6, %v1135
  %v1137 = vrot.slane %v1108, %v1136
  %v1977 = vunpack.c.l.b16 %v276
  %v1978 = vunpack.c.h.b16 %v276
  %v1979 = vunpack.c.l.b16 %v277
  %v1980 = vunpack.c.h.b16 %v277
  %v1981 = vunpack.c.l.b16 %v278
  %v1982 = vunpack.c.h.b16 %v278
  %v1983 = vunpack.c.l.b16 %v279
  %v1984 = vunpack.c.l.b16 %v280
  %v1985 = vunpack.c.h.b16 %v280
  %v1986 = vunpack.c.l.b16 %v281
  %v1987 = vunpack.c.h.b16 %v281
  %v1988 = vunpack.c.l.b16 %v282
  %v1989 = vunpack.c.h.b16 %v282
  %v1990 = vunpack.c.l.b16 %v283
  %v1991 = vunpack.c.l.b16 %v284
  %v1992 = vunpack.c.h.b16 %v284
  %v1993 = vunpack.c.l.b16 %v285
  %v1994 = vunpack.c.h.b16 %v285
  %v1995 = vunpack.c.l.b16 %v286
  %v1996 = vunpack.c.h.b16 %v286
  %v1997 = vunpack.c.l.b16 %v287
  %v1998 = vunpack.c.l.b16 %v288
  %v1999 = vunpack.c.h.b16 %v288
  %v2000 = vunpack.c.l.b16 %v289
  %v2001 = vunpack.c.h.b16 %v289
  %v2002 = vunpack.c.l.b16 %v290
  %v2003 = vunpack.c.h.b16 %v290
  %v2004 = vunpack.c.l.b16 %v291
  %v2005 = vunpack.c.l.b16 %v292
  %v2006 = vunpack.c.h.b16 %v292
  %v2007 = vunpack.c.l.b16 %v293
  %v2008 = vunpack.c.h.b16 %v293
  %v2009 = vunpack.c.l.b16 %v294
  %v2010 = vunpack.c.h.b16 %v294
  %v2011 = vunpack.c.l.b16 %v295
  %v2012 = vunpack.c.l.b16 %v296
  %v2013 = vunpack.c.h.b16 %v296
  %v2014 = vunpack.c.l.b16 %v297
  %v2015 = vunpack.c.h.b16 %v297
  %v2016 = vunpack.c.l.b16 %v298
  %v2017 = vunpack.c.h.b16 %v298
  %v2018 = vunpack.c.l.b16 %v299
  %v2019 = vunpack.c.l.b16 %v300
  %v2020 = vunpack.c.h.b16 %v300
  %v2021 = vunpack.c.l.b16 %v301
  %v2022 = vunpack.c.h.b16 %v301
  %v2023 = vunpack.c.l.b16 %v302
  %v2024 = vunpack.c.h.b16 %v302
  %v2025 = vunpack.c.l.b16 %v303
  %v2026 = vunpack.c.l.b16 %v304
  %v2027 = vunpack.c.h.b16 %v304
  %v2028 = vunpack.c.l.b16 %v305
  %v2029 = vunpack.c.h.b16 %v305
  %v2030 = vunpack.c.l.b16 %v306
  %v2031 = vunpack.c.h.b16 %v306
  %v2032 = vunpack.c.l.b16 %v307
  %v2033 = vunpack.c.l.b16 %v308
  %v2034 = vunpack.c.h.b16 %v308
  %v2035 = vunpack.c.l.b16 %v309
  %v2036 = vunpack.c.h.b16 %v309
  %v2037 = vunpack.c.l.b16 %v310
  %v2038 = vunpack.c.h.b16 %v310
  %v2039 = vunpack.c.l.b16 %v311
  %v2040 = vunpack.c.l.b16 %v312
  %v2041 = vunpack.c.h.b16 %v312
  %v2042 = vunpack.c.l.b16 %v313
  %v2043 = vunpack.c.h.b16 %v313
  %v2044 = vunpack.c.l.b16 %v314
  %v2045 = vunpack.c.h.b16 %v314
  %v2046 = vunpack.c.l.b16 %v315
  %v2047 = vunpack.c.l.b16 %v316
  %v2048 = vunpack.c.h.b16 %v316
  %v2049 = vunpack.c.l.b16 %v317
  %v2050 = vunpack.c.h.b16 %v317
  %v2051 = vunpack.c.l.b16 %v318
  %v2052 = vunpack.c.h.b16 %v318
  %v2053 = vunpack.c.l.b16 %v319
  %v2054 = vunpack.c.l.b16 %v320
  %v2055 = vunpack.c.h.b16 %v320
  %v2056 = vunpack.c.l.b16 %v321
  %v2057 = vunpack.c.h.b16 %v321
  %v2058 = vunpack.c.l.b16 %v322
  %v2059 = vunpack.c.h.b16 %v322
  %v2060 = vunpack.c.l.b16 %v323
  %v2061 = vunpack.c.l.b16 %v324
  %v2062 = vunpack.c.h.b16 %v324
  %v2063 = vunpack.c.l.b16 %v325
  %v2064 = vunpack.c.h.b16 %v325
  %v2065 = vunpack.c.l.b16 %v326
  %v2066 = vunpack.c.h.b16 %v326
  %v2067 = vunpack.c.l.b16 %v327
  %v2068 = vunpack.c.l.b16 %v328
  %v2069 = vunpack.c.h.b16 %v328
  %v2070 = vunpack.c.l.b16 %v329
  %v2071 = vunpack.c.h.b16 %v329
  %v2072 = vunpack.c.l.b16 %v330
  %v2073 = vunpack.c.h.b16 %v330
  %v2074 = vunpack.c.l.b16 %v331
  %v2075 = vunpack.c.l.b16 %v332
  %v2076 = vunpack.c.h.b16 %v332
  %v2077 = vunpack.c.l.b16 %v333
  %v2078 = vunpack.c.h.b16 %v333
  %v2079 = vunpack.c.l.b16 %v334
  %v2080 = vunpack.c.h.b16 %v334
  %v2081 = vunpack.c.l.b16 %v335
  %v2082 = vunpack.c.l.b16 %v336
  %v2083 = vunpack.c.h.b16 %v336
  %v2084 = vunpack.c.l.b16 %v337
  %v2085 = vunpack.c.h.b16 %v337
  %v2086 = vunpack.c.l.b16 %v338
  %v2087 = vunpack.c.h.b16 %v338
  %v2088 = vunpack.c.l.b16 %v339
  %v2089 = vunpack.c.l.b16 %v340
  %v2090 = vunpack.c.h.b16 %v340
  %v2091 = vunpack.c.l.b16 %v341
  %v2092 = vunpack.c.h.b16 %v341
  %v2093 = vunpack.c.l.b16 %v342
  %v2094 = vunpack.c.h.b16 %v342
  %v2095 = vunpack.c.l.b16 %v343
  %v2096 = vunpack.c.l.b16 %v344
  %v2097 = vunpack.c.h.b16 %v344
  %v2098 = vunpack.c.l.b16 %v345
  %v2099 = vunpack.c.h.b16 %v345
  %v2100 = vunpack.c.l.b16 %v346
  %v2101 = vunpack.c.h.b16 %v346
  %v2102 = vunpack.c.l.b16 %v347
  %v2103 = vunpack.c.l.b16 %v348
  %v2104 = vunpack.c.h.b16 %v348
  %v2105 = vunpack.c.l.b16 %v349
  %v2106 = vunpack.c.h.b16 %v349
  %v2107 = vunpack.c.l.b16 %v350
  %v2108 = vunpack.c.h.b16 %v350
  %v2109 = vunpack.c.l.b16 %v351
  %v2110 = vunpack.c.l.b16 %v352
  %v2111 = vunpack.c.h.b16 %v352
  %v2112 = vunpack.c.l.b16 %v353
  %v2113 = vunpack.c.h.b16 %v353
  %v2114 = vunpack.c.l.b16 %v354
  %v2115 = vunpack.c.h.b16 %v354
  %v2116 = vunpack.c.l.b16 %v355
  %v2117 = vunpack.c.l.b16 %v356
  %v2118 = vunpack.c.h.b16 %v356
  %v2119 = vunpack.c.l.b16 %v357
  %v2120 = vunpack.c.h.b16 %v357
  %v2121 = vunpack.c.l.b16 %v358
  %v2122 = vunpack.c.h.b16 %v358
  %v2123 = vunpack.c.l.b16 %v359
  %v2124 = vunpack.c.l.b16 %v360
  %v2125 = vunpack.c.h.b16 %v360
  %v2126 = vunpack.c.l.b16 %v361
  %v2127 = vunpack.c.h.b16 %v361
  %v2128 = vunpack.c.l.b16 %v362
  %v2129 = vunpack.c.h.b16 %v362
  %v2130 = vunpack.c.l.b16 %v363
  %v2131 = vunpack.c.l.b16 %v364
  %v2132 = vunpack.c.h.b16 %v364
  %v2133 = vunpack.c.l.b16 %v365
  %v2134 = vunpack.c.h.b16 %v365
  %v2135 = vunpack.c.l.b16 %v366
  %v2136 = vunpack.c.h.b16 %v366
  %v2137 = vunpack.c.l.b16 %v367
  %v2138 = vunpack.c.l.b16 %v368
  %v2139 = vunpack.c.h.b16 %v368
  %v2140 = vunpack.c.l.b16 %v369
  %v2141 = vunpack.c.h.b16 %v369
  %v2142 = vunpack.c.l.b16 %v370
  %v2143 = vunpack.c.h.b16 %v370
  %v2144 = vunpack.c.l.b16 %v371
  %v2145 = vunpack.c.l.b16 %v372
  %v2146 = vunpack.c.h.b16 %v372
  %v2147 = vunpack.c.l.b16 %v373
  %v2148 = vunpack.c.h.b16 %v373
  %v2149 = vunpack.c.l.b16 %v374
  %v2150 = vunpack.c.h.b16 %v374
  %v2151 = vunpack.c.l.b16 %v375
  %v2152 = vunpack.c.l.b16 %v376
  %v2153 = vunpack.c.h.b16 %v376
  %v2154 = vunpack.c.l.b16 %v377
  %v2155 = vunpack.c.h.b16 %v377
  %v2156 = vunpack.c.l.b16 %v378
  %v2157 = vunpack.c.h.b16 %v378
  %v2158 = vunpack.c.l.b16 %v379
  %v2159 = vunpack.c.l.b16 %v380
  %v2160 = vunpack.c.h.b16 %v380
  %v2161 = vunpack.c.l.b16 %v381
  %v2162 = vunpack.c.h.b16 %v381
  %v2163 = vunpack.c.l.b16 %v382
  %v2164 = vunpack.c.h.b16 %v382
  %v2165 = vunpack.c.l.b16 %v383
  %v2166 = vunpack.c.l.b16 %v384
  %v2167 = vunpack.c.h.b16 %v384
  %v2168 = vunpack.c.l.b16 %v385
  %v2169 = vunpack.c.h.b16 %v385
  %v2170 = vunpack.c.l.b16 %v386
  %v2171 = vunpack.c.h.b16 %v386
  %v2172 = vunpack.c.l.b16 %v387
  %v2173 = vunpack.c.l.b16 %v388
  %v2174 = vunpack.c.h.b16 %v388
  %v2175 = vunpack.c.l.b16 %v389
  %v2176 = vunpack.c.h.b16 %v389
  %v2177 = vunpack.c.l.b16 %v390
  %v2178 = vunpack.c.h.b16 %v390
  %v2179 = vunpack.c.l.b16 %v391
  %v2180 = vunpack.c.l.b16 %v392
  %v2181 = vunpack.c.h.b16 %v392
  %v2182 = vunpack.c.l.b16 %v393
  %v2183 = vunpack.c.h.b16 %v393
  %v2184 = vunpack.c.l.b16 %v394
  %v2185 = vunpack.c.h.b16 %v394
  %v2186 = vunpack.c.l.b16 %v395
  %v2187 = vunpack.c.l.b16 %v396
  %v2188 = vunpack.c.h.b16 %v396
  %v2189 = vunpack.c.l.b16 %v397
  %v2190 = vunpack.c.h.b16 %v397
  %v2191 = vunpack.c.l.b16 %v398
  %v2192 = vunpack.c.h.b16 %v398
  %v2193 = vunpack.c.l.b16 %v399
  %v2194 = vunpack.c.l.b16 %v400
  %v2195 = vunpack.c.h.b16 %v400
  %v2196 = vunpack.c.l.b16 %v401
  %v2197 = vunpack.c.h.b16 %v401
  %v2198 = vunpack.c.l.b16 %v402
  %v2199 = vunpack.c.h.b16 %v402
  %v2200 = vunpack.c.l.b16 %v403
  %v2201 = vunpack.c.l.b16 %v404
  %v2202 = vunpack.c.h.b16 %v404
  %v2203 = vunpack.c.l.b16 %v405
  %v2204 = vunpack.c.h.b16 %v405
  %v2205 = vunpack.c.l.b16 %v406
  %v2206 = vunpack.c.h.b16 %v406
  %v2207 = vunpack.c.l.b16 %v407
  %v2208 = vunpack.c.l.b16 %v408
  %v2209 = vunpack.c.h.b16 %v408
  %v2210 = vunpack.c.l.b16 %v409
  %v2211 = vunpack.c.h.b16 %v409
  %v2212 = vunpack.c.l.b16 %v410
  %v2213 = vunpack.c.h.b16 %v410
  %v2214 = vunpack.c.l.b16 %v411
  %v2215 = vunpack.c.l.b16 %v412
  %v2216 = vunpack.c.h.b16 %v412
  %v2217 = vunpack.c.l.b16 %v413
  %v2218 = vunpack.c.h.b16 %v413
  %v2219 = vunpack.c.l.b16 %v414
  %v2220 = vunpack.c.h.b16 %v414
  %v2221 = vunpack.c.l.b16 %v415
  %v2222 = vunpack.c.l.b16 %v416
  %v2223 = vunpack.c.h.b16 %v416
  %v2224 = vunpack.c.l.b16 %v417
  %v2225 = vunpack.c.h.b16 %v417
  %v2226 = vunpack.c.l.b16 %v418
  %v2227 = vunpack.c.h.b16 %v418
  %v2228 = vunpack.c.l.b16 %v419
  %v2229 = vunpack.c.l.b16 %v420
  %v2230 = vunpack.c.h.b16 %v420
  %v2231 = vunpack.c.l.b16 %v421
  %v2232 = vunpack.c.h.b16 %v421
  %v2233 = vunpack.c.l.b16 %v422
  %v2234 = vunpack.c.h.b16 %v422
  %v2235 = vunpack.c.l.b16 %v423
  %v2236 = vunpack.c.l.b16 %v424
  %v2237 = vunpack.c.h.b16 %v424
  %v2238 = vunpack.c.l.b16 %v425
  %v2239 = vunpack.c.h.b16 %v425
  %v2240 = vunpack.c.l.b16 %v426
  %v2241 = vunpack.c.h.b16 %v426
  %v2242 = vunpack.c.l.b16 %v427
  %v2243 = vunpack.c.l.b16 %v428
  %v2244 = vunpack.c.h.b16 %v428
  %v2245 = vunpack.c.l.b16 %v429
  %v2246 = vunpack.c.h.b16 %v429
  %v2247 = vunpack.c.l.b16 %v430
  %v2248 = vunpack.c.h.b16 %v430
  %v2249 = vunpack.c.l.b16 %v431
  %v2250 = vunpack.c.l.b16 %v432
  %v2251 = vunpack.c.h.b16 %v432
  %v2252 = vunpack.c.l.b16 %v433
  %v2253 = vunpack.c.h.b16 %v433
  %v2254 = vunpack.c.l.b16 %v434
  %v2255 = vunpack.c.h.b16 %v434
  %v2256 = vunpack.c.l.b16 %v435
  %v2257 = vunpack.c.l.b16 %v436
  %v2258 = vunpack.c.h.b16 %v436
  %v2259 = vunpack.c.l.b16 %v437
  %v2260 = vunpack.c.h.b16 %v437
  %v2261 = vunpack.c.l.b16 %v438
  %v2262 = vunpack.c.h.b16 %v438
  %v2263 = vunpack.c.l.b16 %v439
  %v2264 = vunpack.c.l.b16 %v440
  %v2265 = vunpack.c.h.b16 %v440
  %v2266 = vunpack.c.l.b16 %v441
  %v2267 = vunpack.c.h.b16 %v441
  %v2268 = vunpack.c.l.b16 %v442
  %v2269 = vunpack.c.h.b16 %v442
  %v2270 = vunpack.c.l.b16 %v443
  %v2271 = vunpack.c.l.b16 %v444
  %v2272 = vunpack.c.h.b16 %v444
  %v2273 = vunpack.c.l.b16 %v445
  %v2274 = vunpack.c.h.b16 %v445
  %v2275 = vunpack.c.l.b16 %v446
  %v2276 = vunpack.c.h.b16 %v446
  %v2277 = vunpack.c.l.b16 %v447
  %v2278 = vunpack.c.l.b16 %v448
  %v2279 = vunpack.c.h.b16 %v448
  %v2280 = vunpack.c.l.b16 %v449
  %v2281 = vunpack.c.h.b16 %v449
  %v2282 = vunpack.c.l.b16 %v450
  %v2283 = vunpack.c.h.b16 %v450
  %v2284 = vunpack.c.l.b16 %v451
  %v2285 = vunpack.c.l.b16 %v452
  %v2286 = vunpack.c.h.b16 %v452
  %v2287 = vunpack.c.l.b16 %v453
  %v2288 = vunpack.c.h.b16 %v453
  %v2289 = vunpack.c.l.b16 %v454
  %v2290 = vunpack.c.h.b16 %v454
  %v2291 = vunpack.c.l.b16 %v455
  %v2292 = vunpack.c.l.b16 %v456
  %v2293 = vunpack.c.h.b16 %v456
  %v2294 = vunpack.c.l.b16 %v457
  %v2295 = vunpack.c.h.b16 %v457
  %v2296 = vunpack.c.l.b16 %v458
  %v2297 = vunpack.c.h.b16 %v458
  %v2298 = vunpack.c.l.b16 %v459
  %v2299 = vunpack.c.l.b16 %v460
  %v2300 = vunpack.c.h.b16 %v460
  %v2301 = vunpack.c.l.b16 %v461
  %v2302 = vunpack.c.h.b16 %v461
  %v2303 = vunpack.c.l.b16 %v462
  %v2304 = vunpack.c.h.b16 %v462
  %v2305 = vunpack.c.l.b16 %v463
  %v2306 = vunpack.c.l.b16 %v464
  %v2307 = vunpack.c.h.b16 %v464
  %v2308 = vunpack.c.l.b16 %v465
  %v2309 = vunpack.c.h.b16 %v465
  %v2310 = vunpack.c.l.b16 %v466
  %v2311 = vunpack.c.h.b16 %v466
  %v2312 = vunpack.c.l.b16 %v467
  %v2313 = vunpack.c.l.b16 %v468
  %v2314 = vunpack.c.h.b16 %v468
  %v2315 = vunpack.c.l.b16 %v469
  %v2316 = vunpack.c.h.b16 %v469
  %v2317 = vunpack.c.l.b16 %v470
  %v2318 = vunpack.c.h.b16 %v470
  %v2319 = vunpack.c.l.b16 %v471
  %v2320 = vunpack.c.l.b16 %v472
  %v2321 = vunpack.c.h.b16 %v472
  %v2322 = vunpack.c.l.b16 %v473
  %v2323 = vunpack.c.h.b16 %v473
  %v2324 = vunpack.c.l.b16 %v474
  %v2325 = vunpack.c.h.b16 %v474
  %v2326 = vunpack.c.l.b16 %v475
  %v2327 = vunpack.c.l.b16 %v476
  %v2328 = vunpack.c.h.b16 %v476
  %v2329 = vunpack.c.l.b16 %v477
  %v2330 = vunpack.c.h.b16 %v477
  %v2331 = vunpack.c.l.b16 %v478
  %v2332 = vunpack.c.h.b16 %v478
  %v2333 = vunpack.c.l.b16 %v479
  %v2334 = vunpack.c.l.b16 %v480
  %v2335 = vunpack.c.h.b16 %v480
  %v2336 = vunpack.c.l.b16 %v481
  %v2337 = vunpack.c.h.b16 %v481
  %v2338 = vunpack.c.l.b16 %v482
  %v2339 = vunpack.c.h.b16 %v482
  %v2340 = vunpack.c.l.b16 %v483
  %v2341 = vunpack.c.l.b16 %v484
  %v2342 = vunpack.c.h.b16 %v484
  %v2343 = vunpack.c.l.b16 %v485
  %v2344 = vunpack.c.h.b16 %v485
  %v2345 = vunpack.c.l.b16 %v486
  %v2346 = vunpack.c.h.b16 %v486
  %v2347 = vunpack.c.l.b16 %v487
  %v2348 = vunpack.c.l.b16 %v488
  %v2349 = vunpack.c.h.b16 %v488
  %v2350 = vunpack.c.l.b16 %v489
  %v2351 = vunpack.c.h.b16 %v489
  %v2352 = vunpack.c.l.b16 %v490
  %v2353 = vunpack.c.h.b16 %v490
  %v2354 = vunpack.c.l.b16 %v491
  %v2355 = vunpack.c.l.b16 %v492
  %v2356 = vunpack.c.h.b16 %v492
  %v2357 = vunpack.c.l.b16 %v493
  %v2358 = vunpack.c.h.b16 %v493
  %v2359 = vunpack.c.l.b16 %v494
  %v2360 = vunpack.c.h.b16 %v494
  %v2361 = vunpack.c.l.b16 %v495
  %v2362 = vunpack.c.l.b16 %v496
  %v2363 = vunpack.c.h.b16 %v496
  %v2364 = vunpack.c.l.b16 %v497
  %v2365 = vunpack.c.h.b16 %v497
  %v2366 = vunpack.c.l.b16 %v498
  %v2367 = vunpack.c.h.b16 %v498
  %v2368 = vunpack.c.l.b16 %v499
  %v2369 = vunpack.c.l.b16 %v500
  %v2370 = vunpack.c.h.b16 %v500
  %v2371 = vunpack.c.l.b16 %v501
  %v2372 = vunpack.c.h.b16 %v501
  %v2373 = vunpack.c.l.b16 %v502
  %v2374 = vunpack.c.h.b16 %v502
  %v2375 = vunpack.c.l.b16 %v503
  %v2376 = vunpack.c.l.b16 %v504
  %v2377 = vunpack.c.h.b16 %v504
  %v2378 = vunpack.c.l.b16 %v505
  %v2379 = vunpack.c.h.b16 %v505
  %v2380 = vunpack.c.l.b16 %v506
  %v2381 = vunpack.c.h.b16 %v506
  %v2382 = vunpack.c.l.b16 %v507
  %v2383 = vunpack.c.l.b16 %v508
  %v2384 = vunpack.c.h.b16 %v508
  %v2385 = vunpack.c.l.b16 %v509
  %v2386 = vunpack.c.h.b16 %v509
  %v2387 = vunpack.c.l.b16 %v510
  %v2388 = vunpack.c.h.b16 %v510
  %v2389 = vunpack.c.l.b16 %v511
  %v2390 = vunpack.c.l.b16 %v512
  %v2391 = vunpack.c.h.b16 %v512
  %v2392 = vunpack.c.l.b16 %v513
  %v2393 = vunpack.c.h.b16 %v513
  %v2394 = vunpack.c.l.b16 %v514
  %v2395 = vunpack.c.h.b16 %v514
  %v2396 = vunpack.c.l.b16 %v515
  %v2397 = vunpack.c.l.b16 %v516
  %v2398 = vunpack.c.h.b16 %v516
  %v2399 = vunpack.c.l.b16 %v517
  %v2400 = vunpack.c.h.b16 %v517
  %v2401 = vunpack.c.l.b16 %v518
  %v2402 = vunpack.c.h.b16 %v518
  %v2403 = vunpack.c.l.b16 %v519
  %v2404 = vunpack.c.l.b16 %v520
  %v2405 = vunpack.c.h.b16 %v520
  %v2406 = vunpack.c.l.b16 %v521
  %v2407 = vunpack.c.h.b16 %v521
  %v2408 = vunpack.c.l.b16 %v522
  %v2409 = vunpack.c.h.b16 %v522
  %v2410 = vunpack.c.l.b16 %v523
  %v2411 = vunpack.c.l.b16 %v524
  %v2412 = vunpack.c.h.b16 %v524
  %v2413 = vunpack.c.l.b16 %v525
  %v2414 = vunpack.c.h.b16 %v525
  %v2415 = vunpack.c.l.b16 %v526
  %v2416 = vunpack.c.h.b16 %v526
  %v2417 = vunpack.c.l.b16 %v527
  %v2418 = vunpack.c.l.b16 %v528
  %v2419 = vunpack.c.h.b16 %v528
  %v2420 = vunpack.c.l.b16 %v529
  %v2421 = vunpack.c.h.b16 %v529
  %v2422 = vunpack.c.l.b16 %v530
  %v2423 = vunpack.c.h.b16 %v530
  %v2424 = vunpack.c.l.b16 %v531
  %v2425 = vunpack.c.l.b16 %v532
  %v2426 = vunpack.c.h.b16 %v532
  %v2427 = vunpack.c.l.b16 %v533
  %v2428 = vunpack.c.h.b16 %v533
  %v2429 = vunpack.c.l.b16 %v534
  %v2430 = vunpack.c.h.b16 %v534
  %v2431 = vunpack.c.l.b16 %v535
  %v2432 = vunpack.c.l.b16 %v536
  %v2433 = vunpack.c.h.b16 %v536
  %v2434 = vunpack.c.l.b16 %v537
  %v2435 = vunpack.c.h.b16 %v537
  %v2436 = vunpack.c.l.b16 %v538
  %v2437 = vunpack.c.h.b16 %v538
  %v2438 = vunpack.c.l.b16 %v539
  %v2439 = vunpack.c.l.b16 %v540
  %v2440 = vunpack.c.h.b16 %v540
  %v2441 = vunpack.c.l.b16 %v541
  %v2442 = vunpack.c.h.b16 %v541
  %v2443 = vunpack.c.l.b16 %v542
  %v2444 = vunpack.c.h.b16 %v542
  %v2445 = vunpack.c.l.b16 %v543
  %v2446 = vunpack.c.l.b16 %v544
  %v2447 = vunpack.c.h.b16 %v544
  %v2448 = vunpack.c.l.b16 %v545
  %v2449 = vunpack.c.h.b16 %v545
  %v2450 = vunpack.c.l.b16 %v546
  %v2451 = vunpack.c.h.b16 %v546
  %v2452 = vunpack.c.l.b16 %v547
  %v2453 = vunpack.c.l.b16 %v548
  %v2454 = vunpack.c.h.b16 %v548
  %v2455 = vunpack.c.l.b16 %v549
  %v2456 = vunpack.c.h.b16 %v549
  %v2457 = vunpack.c.l.b16 %v550
  %v2458 = vunpack.c.h.b16 %v550
  %v2459 = vunpack.c.l.b16 %v551
  %v2460 = vunpack.c.l.b16 %v552
  %v2461 = vunpack.c.h.b16 %v552
  %v2462 = vunpack.c.l.b16 %v553
  %v2463 = vunpack.c.h.b16 %v553
  %v2464 = vunpack.c.l.b16 %v554
  %v2465 = vunpack.c.h.b16 %v554
  %v2466 = vunpack.c.l.b16 %v555
  %v2467 = vunpack.c.l.b16 %v556
  %v2468 = vunpack.c.h.b16 %v556
  %v2469 = vunpack.c.l.b16 %v557
  %v2470 = vunpack.c.h.b16 %v557
  %v2471 = vunpack.c.l.b16 %v558
  %v2472 = vunpack.c.h.b16 %v558
  %v2473 = vunpack.c.l.b16 %v559
  %v2474 = vunpack.c.l.b16 %v560
  %v2475 = vunpack.c.h.b16 %v560
  %v2476 = vunpack.c.l.b16 %v561
  %v2477 = vunpack.c.h.b16 %v561
  %v2478 = vunpack.c.l.b16 %v562
  %v2479 = vunpack.c.h.b16 %v562
  %v2480 = vunpack.c.l.b16 %v563
  %v2481 = vunpack.c.l.b16 %v564
  %v2482 = vunpack.c.h.b16 %v564
  %v2483 = vunpack.c.l.b16 %v565
  %v2484 = vunpack.c.h.b16 %v565
  %v2485 = vunpack.c.l.b16 %v566
  %v2486 = vunpack.c.h.b16 %v566
  %v2487 = vunpack.c.l.b16 %v567
  %v2488 = vunpack.c.l.b16 %v568
  %v2489 = vunpack.c.h.b16 %v568
  %v2490 = vunpack.c.l.b16 %v569
  %v2491 = vunpack.c.h.b16 %v569
  %v2492 = vunpack.c.l.b16 %v570
  %v2493 = vunpack.c.h.b16 %v570
  %v2494 = vunpack.c.l.b16 %v571
  %v2495 = vunpack.c.l.b16 %v572
  %v2496 = vunpack.c.h.b16 %v572
  %v2497 = vunpack.c.l.b16 %v573
  %v2498 = vunpack.c.h.b16 %v573
  %v2499 = vunpack.c.l.b16 %v574
  %v2500 = vunpack.c.h.b16 %v574
  %v2501 = vunpack.c.l.b16 %v575
  %v2502 = vunpack.c.l.b16 %v576
  %v2503 = vunpack.c.h.b16 %v576
  %v2504 = vunpack.c.l.b16 %v577
  %v2505 = vunpack.c.h.b16 %v577
  %v2506 = vunpack.c.l.b16 %v578
  %v2507 = vunpack.c.h.b16 %v578
  %v2508 = vunpack.c.l.b16 %v579
  %v2509 = vunpack.c.l.b16 %v580
  %v2510 = vunpack.c.h.b16 %v580
  %v2511 = vunpack.c.l.b16 %v581
  %v2512 = vunpack.c.h.b16 %v581
  %v2513 = vunpack.c.l.b16 %v582
  %v2514 = vunpack.c.h.b16 %v582
  %v2515 = vunpack.c.l.b16 %v583
  %v2516 = vunpack.c.l.b16 %v584
  %v2517 = vunpack.c.h.b16 %v584
  %v2518 = vunpack.c.l.b16 %v585
  %v2519 = vunpack.c.h.b16 %v585
  %v2520 = vunpack.c.l.b16 %v586
  %v2521 = vunpack.c.h.b16 %v586
  %v2522 = vunpack.c.l.b16 %v587
  %v2523 = vunpack.c.l.b16 %v588
  %v2524 = vunpack.c.h.b16 %v588
  %v2525 = vunpack.c.l.b16 %v589
  %v2526 = vunpack.c.h.b16 %v589
  %v2527 = vunpack.c.l.b16 %v590
  %v2528 = vunpack.c.h.b16 %v590
  %v2529 = vunpack.c.l.b16 %v591
  %v2530 = vunpack.c.l.b16 %v592
  %v2531 = vunpack.c.h.b16 %v592
  %v2532 = vunpack.c.l.b16 %v593
  %v2533 = vunpack.c.h.b16 %v593
  %v2534 = vunpack.c.l.b16 %v594
  %v2535 = vunpack.c.h.b16 %v594
  %v2536 = vunpack.c.l.b16 %v595
  %v2537 = vunpack.c.l.b16 %v596
  %v2538 = vunpack.c.h.b16 %v596
  %v2539 = vunpack.c.l.b16 %v597
  %v2540 = vunpack.c.h.b16 %v597
  %v2541 = vunpack.c.l.b16 %v598
  %v2542 = vunpack.c.h.b16 %v598
  %v2543 = vunpack.c.l.b16 %v599
  %v2544 = vunpack.c.l.b16 %v600
  %v2545 = vunpack.c.h.b16 %v600
  %v2546 = vunpack.c.l.b16 %v601
  %v2547 = vunpack.c.h.b16 %v601
  %v2548 = vunpack.c.l.b16 %v602
  %v2549 = vunpack.c.h.b16 %v602
  %v2550 = vunpack.c.l.b16 %v603
  %v2551 = vunpack.c.l.b16 %v604
  %v2552 = vunpack.c.h.b16 %v604
  %v2553 = vunpack.c.l.b16 %v605
  %v2554 = vunpack.c.h.b16 %v605
  %v2555 = vunpack.c.l.b16 %v606
  %v2556 = vunpack.c.h.b16 %v606
  %v2557 = vunpack.c.l.b16 %v607
  %v2558 = vunpack.c.l.b16 %v608
  %v2559 = vunpack.c.h.b16 %v608
  %v2560 = vunpack.c.l.b16 %v609
  %v2561 = vunpack.c.h.b16 %v609
  %v2562 = vunpack.c.l.b16 %v610
  %v2563 = vunpack.c.h.b16 %v610
  %v2564 = vunpack.c.l.b16 %v611
  %v2565 = vunpack.c.l.b16 %v612
  %v2566 = vunpack.c.h.b16 %v612
  %v2567 = vunpack.c.l.b16 %v613
  %v2568 = vunpack.c.h.b16 %v613
  %v2569 = vunpack.c.l.b16 %v614
  %v2570 = vunpack.c.h.b16 %v614
  %v2571 = vunpack.c.l.b16 %v615
  %v2572 = vunpack.c.l.b16 %v616
  %v2573 = vunpack.c.h.b16 %v616
  %v2574 = vunpack.c.l.b16 %v617
  %v2575 = vunpack.c.h.b16 %v617
  %v2576 = vunpack.c.l.b16 %v618
  %v2577 = vunpack.c.h.b16 %v618
  %v2578 = vunpack.c.l.b16 %v619
  %v2579 = vunpack.c.l.b16 %v620
  %v2580 = vunpack.c.h.b16 %v620
  %v2581 = vunpack.c.l.b16 %v621
  %v2582 = vunpack.c.h.b16 %v621
  %v2583 = vunpack.c.l.b16 %v622
  %v2584 = vunpack.c.h.b16 %v622
  %v2585 = vunpack.c.l.b16 %v623
  %v2586 = vunpack.c.l.b16 %v624
  %v2587 = vunpack.c.h.b16 %v624
  %v2588 = vunpack.c.l.b16 %v625
  %v2589 = vunpack.c.h.b16 %v625
  %v2590 = vunpack.c.l.b16 %v626
  %v2591 = vunpack.c.h.b16 %v626
  %v2592 = vunpack.c.l.b16 %v627
  %v2593 = vunpack.c.l.b16 %v628
  %v2594 = vunpack.c.h.b16 %v628
  %v2595 = vunpack.c.l.b16 %v629
  %v2596 = vunpack.c.h.b16 %v629
  %v2597 = vunpack.c.l.b16 %v630
  %v2598 = vunpack.c.h.b16 %v630
  %v2599 = vunpack.c.l.b16 %v631
  %v2600 = vunpack.c.l.b16 %v632
  %v2601 = vunpack.c.h.b16 %v632
  %v2602 = vunpack.c.l.b16 %v633
  %v2603 = vunpack.c.h.b16 %v633
  %v2604 = vunpack.c.l.b16 %v634
  %v2605 = vunpack.c.h.b16 %v634
  %v2606 = vunpack.c.l.b16 %v635
  %v2607 = vunpack.c.l.b16 %v636
  %v2608 = vunpack.c.h.b16 %v636
  %v2609 = vunpack.c.l.b16 %v637
  %v2610 = vunpack.c.h.b16 %v637
  %v2611 = vunpack.c.l.b16 %v638
  %v2612 = vunpack.c.h.b16 %v638
  %v2613 = vunpack.c.l.b16 %v639
  %v2614 = vunpack.c.l.b16 %v640
  %v2615 = vunpack.c.h.b16 %v640
  %v2616 = vunpack.c.l.b16 %v641
  %v2617 = vunpack.c.h.b16 %v641
  %v2618 = vunpack.c.l.b16 %v642
  %v2619 = vunpack.c.h.b16 %v642
  %v2620 = vunpack.c.l.b16 %v643
  %v2621 = vunpack.c.l.b16 %v644
  %v2622 = vunpack.c.h.b16 %v644
  %v2623 = vunpack.c.l.b16 %v645
  %v2624 = vunpack.c.h.b16 %v645
  %v2625 = vunpack.c.l.b16 %v646
  %v2626 = vunpack.c.h.b16 %v646
  %v2627 = vunpack.c.l.b16 %v647
  %v2628 = vunpack.c.l.b16 %v648
  %v2629 = vunpack.c.h.b16 %v648
  %v2630 = vunpack.c.l.b16 %v649
  %v2631 = vunpack.c.h.b16 %v649
  %v2632 = vunpack.c.l.b16 %v650
  %v2633 = vunpack.c.h.b16 %v650
  %v2634 = vunpack.c.l.b16 %v651
  %v2635 = vunpack.c.l.b16 %v652
  %v2636 = vunpack.c.h.b16 %v652
  %v2637 = vunpack.c.l.b16 %v653
  %v2638 = vunpack.c.h.b16 %v653
  %v2639 = vunpack.c.l.b16 %v654
  %v2640 = vunpack.c.h.b16 %v654
  %v2641 = vunpack.c.l.b16 %v655
  %v2642 = vunpack.c.l.b16 %v656
  %v2643 = vunpack.c.h.b16 %v656
  %v2644 = vunpack.c.l.b16 %v657
  %v2645 = vunpack.c.h.b16 %v657
  %v2646 = vunpack.c.l.b16 %v658
  %v2647 = vunpack.c.h.b16 %v658
  %v2648 = vunpack.c.l.b16 %v659
  %v2649 = vunpack.c.l.b16 %v660
  %v2650 = vunpack.c.h.b16 %v660
  %v2651 = vunpack.c.l.b16 %v661
  %v2652 = vunpack.c.h.b16 %v661
  %v2653 = vunpack.c.l.b16 %v662
  %v2654 = vunpack.c.h.b16 %v662
  %v2655 = vunpack.c.l.b16 %v663
  %v2656 = vunpack.c.l.b16 %v664
  %v2657 = vunpack.c.h.b16 %v664
  %v2658 = vunpack.c.l.b16 %v665
  %v2659 = vunpack.c.h.b16 %v665
  %v2660 = vunpack.c.l.b16 %v666
  %v2661 = vunpack.c.h.b16 %v666
  %v2662 = vunpack.c.l.b16 %v667
  %v2663 = vunpack.c.l.b16 %v668
  %v2664 = vunpack.c.h.b16 %v668
  %v2665 = vunpack.c.l.b16 %v669
  %v2666 = vunpack.c.h.b16 %v669
  %v2667 = vunpack.c.l.b16 %v670
  %v2668 = vunpack.c.h.b16 %v670
  %v2669 = vunpack.c.l.b16 %v671
  %v2670 = vunpack.c.l.b16 %v672
  %v2671 = vunpack.c.h.b16 %v672
  %v2672 = vunpack.c.l.b16 %v673
  %v2673 = vunpack.c.h.b16 %v673
  %v2674 = vunpack.c.l.b16 %v674
  %v2675 = vunpack.c.h.b16 %v674
  %v2676 = vunpack.c.l.b16 %v675
  %v2677 = vunpack.c.l.b16 %v676
  %v2678 = vunpack.c.h.b16 %v676
  %v2679 = vunpack.c.l.b16 %v677
  %v2680 = vunpack.c.h.b16 %v677
  %v2681 = vunpack.c.l.b16 %v678
  %v2682 = vunpack.c.h.b16 %v678
  %v2683 = vunpack.c.l.b16 %v679
  %v2684 = vunpack.c.l.b16 %v680
  %v2685 = vunpack.c.h.b16 %v680
  %v2686 = vunpack.c.l.b16 %v681
  %v2687 = vunpack.c.h.b16 %v681
  %v2688 = vunpack.c.l.b16 %v682
  %v2689 = vunpack.c.h.b16 %v682
  %v2690 = vunpack.c.l.b16 %v683
  %v2691 = vunpack.c.l.b16 %v684
  %v2692 = vunpack.c.h.b16 %v684
  %v2693 = vunpack.c.l.b16 %v685
  %v2694 = vunpack.c.h.b16 %v685
  %v2695 = vunpack.c.l.b16 %v686
  %v2696 = vunpack.c.h.b16 %v686
  %v2697 = vunpack.c.l.b16 %v687
  %v2698 = vunpack.c.l.b16 %v688
  %v2699 = vunpack.c.h.b16 %v688
  %v2700 = vunpack.c.l.b16 %v689
  %v2701 = vunpack.c.h.b16 %v689
  %v2702 = vunpack.c.l.b16 %v690
  %v2703 = vunpack.c.h.b16 %v690
  %v2704 = vunpack.c.l.b16 %v691
  %v2705 = vunpack.c.l.b16 %v692
  %v2706 = vunpack.c.h.b16 %v692
  %v2707 = vunpack.c.l.b16 %v693
  %v2708 = vunpack.c.h.b16 %v693
  %v2709 = vunpack.c.l.b16 %v694
  %v2710 = vunpack.c.h.b16 %v694
  %v2711 = vunpack.c.l.b16 %v695
  %v2712 = vunpack.c.l.b16 %v696
  %v2713 = vunpack.c.h.b16 %v696
  %v2714 = vunpack.c.l.b16 %v697
  %v2715 = vunpack.c.h.b16 %v697
  %v2716 = vunpack.c.l.b16 %v698
  %v2717 = vunpack.c.h.b16 %v698
  %v2718 = vunpack.c.l.b16 %v699
  %v2719 = vunpack.c.l.b16 %v700
  %v2720 = vunpack.c.h.b16 %v700
  %v2721 = vunpack.c.l.b16 %v701
  %v2722 = vunpack.c.h.b16 %v701
  %v2723 = vunpack.c.l.b16 %v702
  %v2724 = vunpack.c.h.b16 %v702
  %v2725 = vunpack.c.l.b16 %v703
  %v2726 = vunpack.c.l.b16 %v704
  %v2727 = vunpack.c.h.b16 %v704
  %v2728 = vunpack.c.l.b16 %v705
  %v2729 = vunpack.c.h.b16 %v705
  %v2730 = vunpack.c.l.b16 %v706
  %v2731 = vunpack.c.h.b16 %v706
  %v2732 = vunpack.c.l.b16 %v707
  %v2733 = vunpack.c.l.b16 %v708
  %v2734 = vunpack.c.h.b16 %v708
  %v2735 = vunpack.c.l.b16 %v709
  %v2736 = vunpack.c.h.b16 %v709
  %v2737 = vunpack.c.l.b16 %v710
  %v2738 = vunpack.c.h.b16 %v710
  %v2739 = vunpack.c.l.b16 %v711
  %v2740 = vunpack.c.l.b16 %v712
  %v2741 = vunpack.c.h.b16 %v712
  %v2742 = vunpack.c.l.b16 %v713
  %v2743 = vunpack.c.h.b16 %v713
  %v2744 = vunpack.c.l.b16 %v714
  %v2745 = vunpack.c.h.b16 %v714
  %v2746 = vunpack.c.l.b16 %v715
  %v2747 = vunpack.c.l.b16 %v716
  %v2748 = vunpack.c.h.b16 %v716
  %v2749 = vunpack.c.l.b16 %v717
  %v2750 = vunpack.c.h.b16 %v717
  %v2751 = vunpack.c.l.b16 %v718
  %v2752 = vunpack.c.h.b16 %v718
  %v2753 = vunpack.c.l.b16 %v719
  %v2754 = vunpack.c.l.b16 %v720
  %v2755 = vunpack.c.h.b16 %v720
  %v2756 = vunpack.c.l.b16 %v721
  %v2757 = vunpack.c.h.b16 %v721
  %v2758 = vunpack.c.l.b16 %v722
  %v2759 = vunpack.c.h.b16 %v722
  %v2760 = vunpack.c.l.b16 %v723
  %v2761 = vunpack.c.l.b16 %v724
  %v2762 = vunpack.c.h.b16 %v724
  %v2763 = vunpack.c.l.b16 %v725
  %v2764 = vunpack.c.h.b16 %v725
  %v2765 = vunpack.c.l.b16 %v726
  %v2766 = vunpack.c.h.b16 %v726
  %v2767 = vunpack.c.l.b16 %v727
  %v2768 = vunpack.c.l.b16 %v728
  %v2769 = vunpack.c.h.b16 %v728
  %v2770 = vunpack.c.l.b16 %v729
  %v2771 = vunpack.c.h.b16 %v729
  %v2772 = vunpack.c.l.b16 %v730
  %v2773 = vunpack.c.h.b16 %v730
  %v2774 = vunpack.c.l.b16 %v731
  %v2775 = vunpack.c.l.b16 %v732
  %v2776 = vunpack.c.h.b16 %v732
  %v2777 = vunpack.c.l.b16 %v733
  %v2778 = vunpack.c.h.b16 %v733
  %v2779 = vunpack.c.l.b16 %v734
  %v2780 = vunpack.c.h.b16 %v734
  %v2781 = vunpack.c.l.b16 %v735
  %v2782 = vunpack.c.l.b16 %v736
  %v2783 = vunpack.c.h.b16 %v736
  %v2784 = vunpack.c.l.b16 %v737
  %v2785 = vunpack.c.h.b16 %v737
  %v2786 = vunpack.c.l.b16 %v738
  %v2787 = vunpack.c.h.b16 %v738
  %v2788 = vunpack.c.l.b16 %v739
  %v2789 = vunpack.c.l.b16 %v740
  %v2790 = vunpack.c.h.b16 %v740
  %v2791 = vunpack.c.l.b16 %v741
  %v2792 = vunpack.c.h.b16 %v741
  %v2793 = vunpack.c.l.b16 %v742
  %v2794 = vunpack.c.h.b16 %v742
  %v2795 = vunpack.c.l.b16 %v743
  %v2796 = vunpack.c.l.b16 %v744
  %v2797 = vunpack.c.h.b16 %v744
  %v2798 = vunpack.c.l.b16 %v745
  %v2799 = vunpack.c.h.b16 %v745
  %v2800 = vunpack.c.l.b16 %v746
  %v2801 = vunpack.c.h.b16 %v746
  %v2802 = vunpack.c.l.b16 %v747
  %v2803 = vunpack.c.l.b16 %v748
  %v2804 = vunpack.c.h.b16 %v748
  %v2805 = vunpack.c.l.b16 %v749
  %v2806 = vunpack.c.h.b16 %v749
  %v2807 = vunpack.c.l.b16 %v750
  %v2808 = vunpack.c.h.b16 %v750
  %v2809 = vunpack.c.l.b16 %v751
  %v2810 = vunpack.c.l.b16 %v752
  %v2811 = vunpack.c.h.b16 %v752
  %v2812 = vunpack.c.l.b16 %v753
  %v2813 = vunpack.c.h.b16 %v753
  %v2814 = vunpack.c.l.b16 %v754
  %v2815 = vunpack.c.h.b16 %v754
  %v2816 = vunpack.c.l.b16 %v755
  %v2817 = vunpack.c.l.b16 %v756
  %v2818 = vunpack.c.h.b16 %v756
  %v2819 = vunpack.c.l.b16 %v757
  %v2820 = vunpack.c.h.b16 %v757
  %v2821 = vunpack.c.l.b16 %v758
  %v2822 = vunpack.c.h.b16 %v758
  %v2823 = vunpack.c.l.b16 %v759
  %v2824 = vunpack.c.l.b16 %v760
  %v2825 = vunpack.c.h.b16 %v760
  %v2826 = vunpack.c.l.b16 %v761
  %v2827 = vunpack.c.h.b16 %v761
  %v2828 = vunpack.c.l.b16 %v762
  %v2829 = vunpack.c.h.b16 %v762
  %v2830 = vunpack.c.l.b16 %v763
  %v2831 = vunpack.c.l.b16 %v764
  %v2832 = vunpack.c.h.b16 %v764
  %v2833 = vunpack.c.l.b16 %v765
  %v2834 = vunpack.c.h.b16 %v765
  %v2835 = vunpack.c.l.b16 %v766
  %v2836 = vunpack.c.h.b16 %v766
  %v2837 = vunpack.c.l.b16 %v767
  %v2838 = vunpack.c.l.b16 %v768
  %v2839 = vunpack.c.h.b16 %v768
  %v2840 = vunpack.c.l.b16 %v769
  %v2841 = vunpack.c.h.b16 %v769
  %v2842 = vunpack.c.l.b16 %v770
  %v2843 = vunpack.c.h.b16 %v770
  %v2844 = vunpack.c.l.b16 %v771
  %v2845 = vunpack.c.l.b16 %v772
  %v2846 = vunpack.c.h.b16 %v772
  %v2847 = vunpack.c.l.b16 %v773
  %v2848 = vunpack.c.h.b16 %v773
  %v2849 = vunpack.c.l.b16 %v774
  %v2850 = vunpack.c.h.b16 %v774
  %v2851 = vunpack.c.l.b16 %v775
  %v2852 = vunpack.c.l.b16 %v776
  %v2853 = vunpack.c.h.b16 %v776
  %v2854 = vunpack.c.l.b16 %v777
  %v2855 = vunpack.c.h.b16 %v777
  %v2856 = vunpack.c.l.b16 %v778
  %v2857 = vunpack.c.h.b16 %v778
  %v2858 = vunpack.c.l.b16 %v779
  %v2859 = vunpack.c.l.b16 %v780
  %v2860 = vunpack.c.h.b16 %v780
  %v2861 = vunpack.c.l.b16 %v781
  %v2862 = vunpack.c.h.b16 %v781
  %v2863 = vunpack.c.l.b16 %v782
  %v2864 = vunpack.c.h.b16 %v782
  %v2865 = vunpack.c.l.b16 %v783
  %v2866 = vunpack.c.l.b16 %v784
  %v2867 = vunpack.c.h.b16 %v784
  %v2868 = vunpack.c.l.b16 %v785
  %v2869 = vunpack.c.h.b16 %v785
  %v2870 = vunpack.c.l.b16 %v786
  %v2871 = vunpack.c.h.b16 %v786
  %v2872 = vunpack.c.l.b16 %v787
  %v2873 = vunpack.c.l.b16 %v788
  %v2874 = vunpack.c.h.b16 %v788
  %v2875 = vunpack.c.l.b16 %v789
  %v2876 = vunpack.c.h.b16 %v789
  %v2877 = vunpack.c.l.b16 %v790
  %v2878 = vunpack.c.h.b16 %v790
  %v2879 = vunpack.c.l.b16 %v791
  %v2880 = vunpack.c.l.b16 %v792
  %v2881 = vunpack.c.h.b16 %v792
  %v2882 = vunpack.c.l.b16 %v793
  %v2883 = vunpack.c.h.b16 %v793
  %v2884 = vunpack.c.l.b16 %v794
  %v2885 = vunpack.c.h.b16 %v794
  %v2886 = vunpack.c.l.b16 %v795
  %v2887 = vunpack.c.l.b16 %v796
  %v2888 = vunpack.c.h.b16 %v796
  %v2889 = vunpack.c.l.b16 %v797
  %v2890 = vunpack.c.h.b16 %v797
  %v2891 = vunpack.c.l.b16 %v798
  %v2892 = vunpack.c.h.b16 %v798
  %v2893 = vunpack.c.l.b16 %v799
  %v2894 = vunpack.c.l.b16 %v800
  %v2895 = vunpack.c.h.b16 %v800
  %v2896 = vunpack.c.l.b16 %v801
  %v2897 = vunpack.c.h.b16 %v801
  %v2898 = vunpack.c.l.b16 %v802
  %v2899 = vunpack.c.h.b16 %v802
  %v2900 = vunpack.c.l.b16 %v803
  %v2901 = vunpack.c.l.b16 %v804
  %v2902 = vunpack.c.h.b16 %v804
  %v2903 = vunpack.c.l.b16 %v805
  %v2904 = vunpack.c.h.b16 %v805
  %v2905 = vunpack.c.l.b16 %v806
  %v2906 = vunpack.c.h.b16 %v806
  %v2907 = vunpack.c.l.b16 %v807
  %v2908 = vunpack.c.l.b16 %v808
  %v2909 = vunpack.c.h.b16 %v808
  %v2910 = vunpack.c.l.b16 %v809
  %v2911 = vunpack.c.h.b16 %v809
  %v2912 = vunpack.c.l.b16 %v810
  %v2913 = vunpack.c.h.b16 %v810
  %v2914 = vunpack.c.l.b16 %v811
  %v2915 = vunpack.c.l.b16 %v812
  %v2916 = vunpack.c.h.b16 %v812
  %v2917 = vunpack.c.l.b16 %v813
  %v2918 = vunpack.c.h.b16 %v813
  %v2919 = vunpack.c.l.b16 %v814
  %v2920 = vunpack.c.h.b16 %v814
  %v2921 = vunpack.c.l.b16 %v815
  %v2922 = vunpack.c.l.b16 %v816
  %v2923 = vunpack.c.h.b16 %v816
  %v2924 = vunpack.c.l.b16 %v817
  %v2925 = vunpack.c.h.b16 %v817
  %v2926 = vunpack.c.l.b16 %v818
  %v2927 = vunpack.c.h.b16 %v818
  %v2928 = vunpack.c.l.b16 %v819
  %v2929 = vunpack.c.l.b16 %v820
  %v2930 = vunpack.c.h.b16 %v820
  %v2931 = vunpack.c.l.b16 %v821
  %v2932 = vunpack.c.h.b16 %v821
  %v2933 = vunpack.c.l.b16 %v822
  %v2934 = vunpack.c.h.b16 %v822
  %v2935 = vunpack.c.l.b16 %v823
  %v2936 = vunpack.c.l.b16 %v824
  %v2937 = vunpack.c.h.b16 %v824
  %v2938 = vunpack.c.l.b16 %v825
  %v2939 = vunpack.c.h.b16 %v825
  %v2940 = vunpack.c.l.b16 %v826
  %v2941 = vunpack.c.h.b16 %v826
  %v2942 = vunpack.c.l.b16 %v827
  %v2943 = vunpack.c.l.b16 %v828
  %v2944 = vunpack.c.h.b16 %v828
  %v2945 = vunpack.c.l.b16 %v829
  %v2946 = vunpack.c.h.b16 %v829
  %v2947 = vunpack.c.l.b16 %v830
  %v2948 = vunpack.c.h.b16 %v830
  %v2949 = vunpack.c.l.b16 %v831
  %v2950 = vunpack.c.l.b16 %v832
  %v2951 = vunpack.c.h.b16 %v832
  %v2952 = vunpack.c.l.b16 %v833
  %v2953 = vunpack.c.h.b16 %v833
  %v2954 = vunpack.c.l.b16 %v834
  %v2955 = vunpack.c.h.b16 %v834
  %v2956 = vunpack.c.l.b16 %v835
  %v2957 = vunpack.c.l.b16 %v836
  %v2958 = vunpack.c.h.b16 %v836
  %v2959 = vunpack.c.l.b16 %v837
  %v2960 = vunpack.c.h.b16 %v837
  %v2961 = vunpack.c.l.b16 %v838
  %v2962 = vunpack.c.h.b16 %v838
  %v2963 = vunpack.c.l.b16 %v839
  %v2964 = vunpack.c.l.b16 %v840
  %v2965 = vunpack.c.h.b16 %v840
  %v2966 = vunpack.c.l.b16 %v841
  %v2967 = vunpack.c.h.b16 %v841
  %v2968 = vunpack.c.l.b16 %v842
  %v2969 = vunpack.c.h.b16 %v842
  %v2970 = vunpack.c.l.b16 %v843
  %v2971 = vunpack.c.l.b16 %v844
  %v2972 = vunpack.c.h.b16 %v844
  %v2973 = vunpack.c.l.b16 %v845
  %v2974 = vunpack.c.h.b16 %v845
  %v2975 = vunpack.c.l.b16 %v846
  %v2976 = vunpack.c.h.b16 %v846
  %v2977 = vunpack.c.l.b16 %v847
  %v2978 = vunpack.c.l.b16 %v848
  %v2979 = vunpack.c.h.b16 %v848
  %v2980 = vunpack.c.l.b16 %v849
  %v2981 = vunpack.c.h.b16 %v849
  %v2982 = vunpack.c.l.b16 %v850
  %v2983 = vunpack.c.h.b16 %v850
  %v2984 = vunpack.c.l.b16 %v851
  %v2985 = vunpack.c.l.b16 %v852
  %v2986 = vunpack.c.h.b16 %v852
  %v2987 = vunpack.c.l.b16 %v853
  %v2988 = vunpack.c.h.b16 %v853
  %v2989 = vunpack.c.l.b16 %v854
  %v2990 = vunpack.c.h.b16 %v854
  %v2991 = vunpack.c.l.b16 %v855
  %v2992 = vunpack.c.l.b16 %v856
  %v2993 = vunpack.c.h.b16 %v856
  %v2994 = vunpack.c.l.b16 %v857
  %v2995 = vunpack.c.h.b16 %v857
  %v2996 = vunpack.c.l.b16 %v858
  %v2997 = vunpack.c.h.b16 %v858
  %v2998 = vunpack.c.l.b16 %v859
  %v2999 = vunpack.c.l.b16 %v860
  %v3000 = vunpack.c.h.b16 %v860
  %v3001 = vunpack.c.l.b16 %v861
  %v3002 = vunpack.c.h.b16 %v861
  %v3003 = vunpack.c.l.b16 %v862
  %v3004 = vunpack.c.h.b16 %v862
  %v3005 = vunpack.c.l.b16 %v863
  %v3006 = vunpack.c.l.b16 %v864
  %v3007 = vunpack.c.h.b16 %v864
  %v3008 = vunpack.c.l.b16 %v865
  %v3009 = vunpack.c.h.b16 %v865
  %v3010 = vunpack.c.l.b16 %v866
  %v3011 = vunpack.c.h.b16 %v866
  %v3012 = vunpack.c.l.b16 %v867
  %v3013 = vunpack.c.l.b16 %v868
  %v3014 = vunpack.c.h.b16 %v868
  %v3015 = vunpack.c.l.b16 %v869
  %v3016 = vunpack.c.h.b16 %v869
  %v3017 = vunpack.c.l.b16 %v870
  %v3018 = vunpack.c.h.b16 %v870
  %v3019 = vunpack.c.l.b16 %v871
  %v3020 = vunpack.c.l.b16 %v872
  %v3021 = vunpack.c.h.b16 %v872
  %v3022 = vunpack.c.l.b16 %v873
  %v3023 = vunpack.c.h.b16 %v873
  %v3024 = vunpack.c.l.b16 %v874
  %v3025 = vunpack.c.h.b16 %v874
  %v3026 = vunpack.c.l.b16 %v875
  %v3027 = vunpack.c.l.b16 %v876
  %v3028 = vunpack.c.h.b16 %v876
  %v3029 = vunpack.c.l.b16 %v877
  %v3030 = vunpack.c.h.b16 %v877
  %v3031 = vunpack.c.l.b16 %v878
  %v3032 = vunpack.c.h.b16 %v878
  %v3033 = vunpack.c.l.b16 %v879
  %v3034 = vunpack.c.l.b16 %v880
  %v3035 = vunpack.c.h.b16 %v880
  %v3036 = vunpack.c.l.b16 %v881
  %v3037 = vunpack.c.h.b16 %v881
  %v3038 = vunpack.c.l.b16 %v882
  %v3039 = vunpack.c.h.b16 %v882
  %v3040 = vunpack.c.l.b16 %v883
  %v3041 = vunpack.c.l.b16 %v884
  %v3042 = vunpack.c.h.b16 %v884
  %v3043 = vunpack.c.l.b16 %v885
  %v3044 = vunpack.c.h.b16 %v885
  %v3045 = vunpack.c.l.b16 %v886
  %v3046 = vunpack.c.h.b16 %v886
  %v3047 = vunpack.c.l.b16 %v887
  %v3048 = vunpack.c.l.b16 %v888
  %v3049 = vunpack.c.h.b16 %v888
  %v3050 = vunpack.c.l.b16 %v889
  %v3051 = vunpack.c.h.b16 %v889
  %v3052 = vunpack.c.l.b16 %v890
  %v3053 = vunpack.c.h.b16 %v890
  %v3054 = vunpack.c.l.b16 %v891
  %v3055 = vunpack.c.l.b16 %v892
  %v3056 = vunpack.c.h.b16 %v892
  %v3057 = vunpack.c.l.b16 %v893
  %v3058 = vunpack.c.h.b16 %v893
  %v3059 = vunpack.c.l.b16 %v894
  %v3060 = vunpack.c.h.b16 %v894
  %v3061 = vunpack.c.l.b16 %v895
  %v3062 = vunpack.c.l.b16 %v896
  %v3063 = vunpack.c.h.b16 %v896
  %v3064 = vunpack.c.l.b16 %v897
  %v3065 = vunpack.c.h.b16 %v897
  %v3066 = vunpack.c.l.b16 %v898
  %v3067 = vunpack.c.h.b16 %v898
  %v3068 = vunpack.c.l.b16 %v899
  %v3069 = vunpack.c.l.b16 %v900
  %v3070 = vunpack.c.h.b16 %v900
  %v3071 = vunpack.c.l.b16 %v901
  %v3072 = vunpack.c.h.b16 %v901
  %v3073 = vunpack.c.l.b16 %v902
  %v3074 = vunpack.c.h.b16 %v902
  %v3075 = vunpack.c.l.b16 %v903
  %v3076 = vunpack.c.l.b16 %v904
  %v3077 = vunpack.c.h.b16 %v904
  %v3078 = vunpack.c.l.b16 %v905
  %v3079 = vunpack.c.h.b16 %v905
  %v3080 = vunpack.c.l.b16 %v906
  %v3081 = vunpack.c.h.b16 %v906
  %v3082 = vunpack.c.l.b16 %v907
  %v3083 = vunpack.c.l.b16 %v908
  %v3084 = vunpack.c.h.b16 %v908
  %v3085 = vunpack.c.l.b16 %v909
  %v3086 = vunpack.c.h.b16 %v909
  %v3087 = vunpack.c.l.b16 %v910
  %v3088 = vunpack.c.h.b16 %v910
  %v3089 = vunpack.c.l.b16 %v911
  %v3090 = vunpack.c.l.b16 %v912
  %v3091 = vunpack.c.h.b16 %v912
  %v3092 = vunpack.c.l.b16 %v913
  %v3093 = vunpack.c.h.b16 %v913
  %v3094 = vunpack.c.l.b16 %v914
  %v3095 = vunpack.c.h.b16 %v914
  %v3096 = vunpack.c.l.b16 %v915
  %v3097 = vunpack.c.l.b16 %v916
  %v3098 = vunpack.c.h.b16 %v916
  %v3099 = vunpack.c.l.b16 %v917
  %v3100 = vunpack.c.h.b16 %v917
  %v3101 = vunpack.c.l.b16 %v918
  %v3102 = vunpack.c.h.b16 %v918
  %v3103 = vunpack.c.l.b16 %v919
  %v3104 = vunpack.c.l.b16 %v920
  %v3105 = vunpack.c.h.b16 %v920
  %v3106 = vunpack.c.l.b16 %v921
  %v3107 = vunpack.c.h.b16 %v921
  %v3108 = vunpack.c.l.b16 %v922
  %v3109 = vunpack.c.h.b16 %v922
  %v3110 = vunpack.c.l.b16 %v923
  %v3111 = vunpack.c.l.b16 %v924
  %v3112 = vunpack.c.h.b16 %v924
  %v3113 = vunpack.c.l.b16 %v925
  %v3114 = vunpack.c.h.b16 %v925
  %v3115 = vunpack.c.l.b16 %v926
  %v3116 = vunpack.c.h.b16 %v926
  %v3117 = vunpack.c.l.b16 %v927
  %v3118 = vunpack.c.l.b16 %v928
  %v3119 = vunpack.c.h.b16 %v928
  %v3120 = vunpack.c.l.b16 %v929
  %v3121 = vunpack.c.h.b16 %v929
  %v3122 = vunpack.c.l.b16 %v930
  %v3123 = vunpack.c.h.b16 %v930
  %v3124 = vunpack.c.l.b16 %v931
  %v3125 = vunpack.c.l.b16 %v932
  %v3126 = vunpack.c.h.b16 %v932
  %v3127 = vunpack.c.l.b16 %v933
  %v3128 = vunpack.c.h.b16 %v933
  %v3129 = vunpack.c.l.b16 %v934
  %v3130 = vunpack.c.h.b16 %v934
  %v3131 = vunpack.c.l.b16 %v935
  %v3132 = vunpack.c.l.b16 %v936
  %v3133 = vunpack.c.h.b16 %v936
  %v3134 = vunpack.c.l.b16 %v937
  %v3135 = vunpack.c.h.b16 %v937
  %v3136 = vunpack.c.l.b16 %v938
  %v3137 = vunpack.c.h.b16 %v938
  %v3138 = vunpack.c.l.b16 %v939
  %v3139 = vunpack.c.l.b16 %v940
  %v3140 = vunpack.c.h.b16 %v940
  %v3141 = vunpack.c.l.b16 %v941
  %v3142 = vunpack.c.h.b16 %v941
  %v3143 = vunpack.c.l.b16 %v942
  %v3144 = vunpack.c.h.b16 %v942
  %v3145 = vunpack.c.l.b16 %v943
  %v3146 = vunpack.c.l.b16 %v944
  %v3147 = vunpack.c.h.b16 %v944
  %v3148 = vunpack.c.l.b16 %v945
  %v3149 = vunpack.c.h.b16 %v945
  %v3150 = vunpack.c.l.b16 %v946
  %v3151 = vunpack.c.h.b16 %v946
  %v3152 = vunpack.c.l.b16 %v947
  %v3153 = vunpack.c.l.b16 %v948
  %v3154 = vunpack.c.h.b16 %v948
  %v3155 = vunpack.c.l.b16 %v949
  %v3156 = vunpack.c.h.b16 %v949
  %v3157 = vunpack.c.l.b16 %v950
  %v3158 = vunpack.c.h.b16 %v950
  %v3159 = vunpack.c.l.b16 %v951
  %v3160 = vunpack.c.l.b16 %v952
  %v3161 = vunpack.c.h.b16 %v952
  %v3162 = vunpack.c.l.b16 %v953
  %v3163 = vunpack.c.h.b16 %v953
  %v3164 = vunpack.c.l.b16 %v954
  %v3165 = vunpack.c.h.b16 %v954
  %v3166 = vunpack.c.l.b16 %v955
  %v3167 = vunpack.c.l.b16 %v956
  %v3168 = vunpack.c.h.b16 %v956
  %v3169 = vunpack.c.l.b16 %v957
  %v3170 = vunpack.c.h.b16 %v957
  %v3171 = vunpack.c.l.b16 %v958
  %v3172 = vunpack.c.h.b16 %v958
  %v3173 = vunpack.c.l.b16 %v959
  %v3174 = vunpack.c.l.b16 %v960
  %v3175 = vunpack.c.h.b16 %v960
  %v3176 = vunpack.c.l.b16 %v961
  %v3177 = vunpack.c.h.b16 %v961
  %v3178 = vunpack.c.l.b16 %v962
  %v3179 = vunpack.c.h.b16 %v962
  %v3180 = vunpack.c.l.b16 %v963
  %v3181 = vunpack.c.l.b16 %v964
  %v3182 = vunpack.c.h.b16 %v964
  %v3183 = vunpack.c.l.b16 %v965
  %v3184 = vunpack.c.h.b16 %v965
  %v3185 = vunpack.c.l.b16 %v966
  %v3186 = vunpack.c.h.b16 %v966
  %v3187 = vunpack.c.l.b16 %v967
  %v3188 = vunpack.c.l.b16 %v968
  %v3189 = vunpack.c.h.b16 %v968
  %v3190 = vunpack.c.l.b16 %v969
  %v3191 = vunpack.c.h.b16 %v969
  %v3192 = vunpack.c.l.b16 %v970
  %v3193 = vunpack.c.h.b16 %v970
  %v3194 = vunpack.c.l.b16 %v971
  %v3195 = vunpack.c.l.b16 %v972
  %v3196 = vunpack.c.h.b16 %v972
  %v3197 = vunpack.c.l.b16 %v973
  %v3198 = vunpack.c.h.b16 %v973
  %v3199 = vunpack.c.l.b16 %v974
  %v3200 = vunpack.c.h.b16 %v974
  %v3201 = vunpack.c.l.b16 %v975
  %v3202 = vunpack.c.l.b16 %v976
  %v3203 = vunpack.c.h.b16 %v976
  %v3204 = vunpack.c.l.b16 %v977
  %v3205 = vunpack.c.h.b16 %v977
  %v3206 = vunpack.c.l.b16 %v978
  %v3207 = vunpack.c.h.b16 %v978
  %v3208 = vunpack.c.l.b16 %v979
  %v3209 = vunpack.c.l.b16 %v980
  %v3210 = vunpack.c.h.b16 %v980
  %v3211 = vunpack.c.l.b16 %v981
  %v3212 = vunpack.c.h.b16 %v981
  %v3213 = vunpack.c.l.b16 %v982
  %v3214 = vunpack.c.h.b16 %v982
  %v3215 = vunpack.c.l.b16 %v983
  %v3216 = vunpack.c.l.b16 %v984
  %v3217 = vunpack.c.h.b16 %v984
  %v3218 = vunpack.c.l.b16 %v985
  %v3219 = vunpack.c.h.b16 %v985
  %v3220 = vunpack.c.l.b16 %v986
  %v3221 = vunpack.c.h.b16 %v986
  %v3222 = vunpack.c.l.b16 %v987
  %v3223 = vunpack.c.l.b16 %v988
  %v3224 = vunpack.c.h.b16 %v988
  %v3225 = vunpack.c.l.b16 %v989
  %v3226 = vunpack.c.h.b16 %v989
  %v3227 = vunpack.c.l.b16 %v990
  %v3228 = vunpack.c.h.b16 %v990
  %v3229 = vunpack.c.l.b16 %v991
  %v3230 = vunpack.c.l.b16 %v992
  %v3231 = vunpack.c.h.b16 %v992
  %v3232 = vunpack.c.l.b16 %v993
  %v3233 = vunpack.c.h.b16 %v993
  %v3234 = vunpack.c.l.b16 %v994
  %v3235 = vunpack.c.h.b16 %v994
  %v3236 = vunpack.c.l.b16 %v995
  %v3237 = vunpack.c.l.b16 %v996
  %v3238 = vunpack.c.h.b16 %v996
  %v3239 = vunpack.c.l.b16 %v997
  %v3240 = vunpack.c.h.b16 %v997
  %v3241 = vunpack.c.l.b16 %v998
  %v3242 = vunpack.c.h.b16 %v998
  %v3243 = vunpack.c.l.b16 %v999
  %v3244 = vunpack.c.l.b16 %v1000
  %v3245 = vunpack.c.h.b16 %v1000
  %v3246 = vunpack.c.l.b16 %v1001
  %v3247 = vunpack.c.h.b16 %v1001
  %v3248 = vunpack.c.l.b16 %v1002
  %v3249 = vunpack.c.h.b16 %v1002
  %v3250 = vunpack.c.l.b16 %v1003
  %v3251 = vunpack.c.l.b16 %v1004
  %v3252 = vunpack.c.h.b16 %v1004
  %v3253 = vunpack.c.l.b16 %v1005
  %v3254 = vunpack.c.h.b16 %v1005
  %v3255 = vunpack.c.l.b16 %v1006
  %v3256 = vunpack.c.h.b16 %v1006
  %v3257 = vunpack.c.l.b16 %v1007
  %v3258 = vunpack.c.l.b16 %v1008
  %v3259 = vunpack.c.h.b16 %v1008
  %v3260 = vunpack.c.l.b16 %v1009
  %v3261 = vunpack.c.h.b16 %v1009
  %v3262 = vunpack.c.l.b16 %v1010
  %v3263 = vunpack.c.h.b16 %v1010
  %v3264 = vunpack.c.l.b16 %v1011
  %v3265 = vunpack.c.l.b16 %v1012
  %v3266 = vunpack.c.h.b16 %v1012
  %v3267 = vunpack.c.l.b16 %v1013
  %v3268 = vunpack.c.h.b16 %v1013
  %v3269 = vunpack.c.l.b16 %v1014
  %v3270 = vunpack.c.h.b16 %v1014
  %v3271 = vunpack.c.l.b16 %v1015
  %v3272 = vunpack.c.l.b16 %v1016
  %v3273 = vunpack.c.h.b16 %v1016
  %v3274 = vunpack.c.l.b16 %v1017
  %v3275 = vunpack.c.h.b16 %v1017
  %v3276 = vunpack.c.l.b16 %v1018
  %v3277 = vunpack.c.h.b16 %v1018
  %v3278 = vunpack.c.l.b16 %v1019
  %v3279 = vunpack.c.l.b16 %v1020
  %v3280 = vunpack.c.h.b16 %v1020
  %v3281 = vunpack.c.l.b16 %v1021
  %v3282 = vunpack.c.h.b16 %v1021
  %v3283 = vunpack.c.l.b16 %v1022
  %v3284 = vunpack.c.h.b16 %v1022
  %v3285 = vunpack.c.l.b16 %v1023
  %v3286 = vunpack.c.l.b16 %v1024
  %v3287 = vunpack.c.h.b16 %v1024
  %v3288 = vunpack.c.l.b16 %v1025
  %v3289 = vunpack.c.h.b16 %v1025
  %v3290 = vunpack.c.l.b16 %v1026
  %v3291 = vunpack.c.h.b16 %v1026
  %v3292 = vunpack.c.l.b16 %v1027
  %v3293 = vunpack.c.l.b16 %v1028
  %v3294 = vunpack.c.h.b16 %v1028
  %v3295 = vunpack.c.l.b16 %v1029
  %v3296 = vunpack.c.h.b16 %v1029
  %v3297 = vunpack.c.l.b16 %v1030
  %v3298 = vunpack.c.h.b16 %v1030
  %v3299 = vunpack.c.l.b16 %v1031
  %v3300 = vunpack.c.l.b16 %v1032
  %v3301 = vunpack.c.h.b16 %v1032
  %v3302 = vunpack.c.l.b16 %v1033
  %v3303 = vunpack.c.h.b16 %v1033
  %v3304 = vunpack.c.l.b16 %v1034
  %v3305 = vunpack.c.h.b16 %v1034
  %v3306 = vunpack.c.l.b16 %v1035
  %v3307 = vunpack.c.l.b16 %v1036
  %v3308 = vunpack.c.h.b16 %v1036
  %v3309 = vunpack.c.l.b16 %v1037
  %v3310 = vunpack.c.h.b16 %v1037
  %v3311 = vunpack.c.l.b16 %v1038
  %v3312 = vunpack.c.h.b16 %v1038
  %v3313 = vunpack.c.l.b16 %v1039
  %v3314 = vunpack.c.l.b16 %v1040
  %v3315 = vunpack.c.h.b16 %v1040
  %v3316 = vunpack.c.l.b16 %v1041
  %v3317 = vunpack.c.h.b16 %v1041
  %v3318 = vunpack.c.l.b16 %v1042
  %v3319 = vunpack.c.h.b16 %v1042
  %v3320 = vunpack.c.l.b16 %v1043
  %v3321 = vunpack.c.l.b16 %v1044
  %v3322 = vunpack.c.h.b16 %v1044
  %v3323 = vunpack.c.l.b16 %v1045
  %v3324 = vunpack.c.h.b16 %v1045
  %v3325 = vunpack.c.l.b16 %v1046
  %v3326 = vunpack.c.h.b16 %v1046
  %v3327 = vunpack.c.l.b16 %v1047
  %v3328 = vunpack.c.l.b16 %v1048
  %v3329 = vunpack.c.h.b16 %v1048
  %v3330 = vunpack.c.l.b16 %v1049
  %v3331 = vunpack.c.h.b16 %v1049
  %v3332 = vunpack.c.l.b16 %v1050
  %v3333 = vunpack.c.h.b16 %v1050
  %v3334 = vunpack.c.l.b16 %v1051
  %v3335 = vunpack.c.l.b16 %v1052
  %v3336 = vunpack.c.h.b16 %v1052
  %v3337 = vunpack.c.l.b16 %v1053
  %v3338 = vunpack.c.h.b16 %v1053
  %v3339 = vunpack.c.l.b16 %v1054
  %v3340 = vunpack.c.h.b16 %v1054
  %v3341 = vunpack.c.l.b16 %v1055
  %v3342 = vunpack.c.l.b16 %v1056
  %v3343 = vunpack.c.h.b16 %v1056
  %v3344 = vunpack.c.l.b16 %v1057
  %v3345 = vunpack.c.h.b16 %v1057
  %v3346 = vunpack.c.l.b16 %v1058
  %v3347 = vunpack.c.h.b16 %v1058
  %v3348 = vunpack.c.l.b16 %v1059
  %v3349 = vunpack.c.l.b16 %v1060
  %v3350 = vunpack.c.h.b16 %v1060
  %v3351 = vunpack.c.l.b16 %v1061
  %v3352 = vunpack.c.h.b16 %v1061
  %v3353 = vunpack.c.l.b16 %v1062
  %v3354 = vunpack.c.h.b16 %v1062
  %v3355 = vunpack.c.l.b16 %v1063
  %v3356 = vunpack.c.l.b16 %v1064
  %v3357 = vunpack.c.h.b16 %v1064
  %v3358 = vunpack.c.l.b16 %v1065
  %v3359 = vunpack.c.h.b16 %v1065
  %v3360 = vunpack.c.l.b16 %v1066
  %v3361 = vunpack.c.h.b16 %v1066
  %v3362 = vunpack.c.l.b16 %v1067
  %v3363 = vunpack.c.l.b16 %v1068
  %v3364 = vunpack.c.h.b16 %v1068
  %v3365 = vunpack.c.l.b16 %v1069
  %v3366 = vunpack.c.h.b16 %v1069
  %v3367 = vunpack.c.l.b16 %v1070
  %v3368 = vunpack.c.h.b16 %v1070
  %v3369 = vunpack.c.l.b16 %v1071
  %v3370 = vunpack.c.l.b16 %v1072
  %v3371 = vunpack.c.h.b16 %v1072
  %v3372 = vunpack.c.l.b16 %v1073
  %v3373 = vunpack.c.h.b16 %v1073
  %v3374 = vunpack.c.l.b16 %v1074
  %v3375 = vunpack.c.h.b16 %v1074
  %v3376 = vunpack.c.l.b16 %v1075
  %v3377 = vunpack.c.l.b16 %v1076
  %v3378 = vunpack.c.h.b16 %v1076
  %v3379 = vunpack.c.l.b16 %v1077
  %v3380 = vunpack.c.h.b16 %v1077
  %v3381 = vunpack.c.l.b16 %v1078
  %v3382 = vunpack.c.h.b16 %v1078
  %v3383 = vunpack.c.l.b16 %v1079
  %v3384 = vunpack.c.l.b16 %v1080
  %v3385 = vunpack.c.h.b16 %v1080
  %v3386 = vunpack.c.l.b16 %v1081
  %v3387 = vunpack.c.h.b16 %v1081
  %v3388 = vunpack.c.l.b16 %v1082
  %v3389 = vunpack.c.h.b16 %v1082
  %v3390 = vunpack.c.l.b16 %v1083
  %v3391 = vunpack.c.l.b16 %v1084
  %v3392 = vunpack.c.h.b16 %v1084
  %v3393 = vunpack.c.l.b16 %v1085
  %v3394 = vunpack.c.h.b16 %v1085
  %v3395 = vunpack.c.l.b16 %v1086
  %v3396 = vunpack.c.h.b16 %v1086
  %v3397 = vunpack.c.l.b16 %v1087
  %v3398 = vunpack.c.l.b16 %v1088
  %v3399 = vunpack.c.h.b16 %v1088
  %v3400 = vunpack.c.l.b16 %v1089
  %v3401 = vunpack.c.h.b16 %v1089
  %v3402 = vunpack.c.l.b16 %v1090
  %v3403 = vunpack.c.h.b16 %v1090
  %v3404 = vunpack.c.l.b16 %v1091
  %v3405 = vunpack.c.l.b16 %v1092
  %v3406 = vunpack.c.h.b16 %v1092
  %v3407 = vunpack.c.l.b16 %v1093
  %v3408 = vunpack.c.h.b16 %v1093
  %v3409 = vunpack.c.l.b16 %v1094
  %v3410 = vunpack.c.h.b16 %v1094
  %v3411 = vunpack.c.l.b16 %v1095
  %v3412 = vunpack.c.l.b16 %v1096
  %v3413 = vunpack.c.h.b16 %v1096
  %v3414 = vunpack.c.l.b16 %v1097
  %v3415 = vunpack.c.h.b16 %v1097
  %v3416 = vunpack.c.l.b16 %v1098
  %v3417 = vunpack.c.h.b16 %v1098
  %v3418 = vunpack.c.l.b16 %v1099
  %v3419 = vunpack.c.l.b16 %v1100
  %v3420 = vunpack.c.h.b16 %v1100
  %v3421 = vunpack.c.l.b16 %v1101
  %v3422 = vunpack.c.h.b16 %v1101
  %v3423 = vunpack.c.l.b16 %v1102
  %v3424 = vunpack.c.h.b16 %v1102
  %v3425 = vunpack.c.l.b16 %v1103
  %v3426 = vunpack.c.l.b16 %v1104
  %v3427 = vunpack.c.h.b16 %v1104
  %v3428 = vunpack.c.l.b16 %v1105
  %v3429 = vunpack.c.h.b16 %v1105
  %v3430 = vunpack.c.l.b16 %v1106
  %v3431 = vunpack.c.h.b16 %v1106
  %v3432 = vunpack.c.l.b16 %v1107
  %v3433 = vpack.c.b16 %v1984, %v1977
  %v3434 = vpack.c.b16 %v1985, %v1978
  %v3435 = vpack.c.b16 %v1986, %v1979
  %v3436 = vpack.c.b16 %v1987, %v1980
  %v3437 = vpack.c.b16 %v1988, %v1981
  %v3438 = vpack.c.b16 %v1989, %v1982
  %v3439 = vpack.c.b16 %v1990, %v1983
  %v3440 = vpack.c.b16 %v1998, %v1991
  %v3441 = vpack.c.b16 %v1999, %v1992
  %v3442 = vpack.c.b16 %v2000, %v1993
  %v3443 = vpack.c.b16 %v2001, %v1994
  %v3444 = vpack.c.b16 %v2002, %v1995
  %v3445 = vpack.c.b16 %v2003, %v1996
  %v3446 = vpack.c.b16 %v2004, %v1997
  %v3447 = vpack.c.b16 %v2012, %v2005
  %v3448 = vpack.c.b16 %v2013, %v2006
  %v3449 = vpack.c.b16 %v2014, %v2007
  %v3450 = vpack.c.b16 %v2015, %v2008
  %v3451 = vpack.c.b16 %v2016, %v2009
  %v3452 = vpack.c.b16 %v2017, %v2010
  %v3453 = vpack.c.b16 %v2018, %v2011
  %v3454 = vpack.c.b16 %v2026, %v2019
  %v3455 = vpack.c.b16 %v2027, %v2020
  %v3456 = vpack.c.b16 %v2028, %v2021
  %v3457 = vpack.c.b16 %v2029, %v2022
  %v3458 = vpack.c.b16 %v2030, %v2023
  %v3459 = vpack.c.b16 %v2031, %v2024
  %v3460 = vpack.c.b16 %v2032, %v2025
  %v3461 = vpack.c.b16 %v2040, %v2033
  %v3462 = vpack.c.b16 %v2041, %v2034
  %v3463 = vpack.c.b16 %v2042, %v2035
  %v3464 = vpack.c.b16 %v2043, %v2036
  %v3465 = vpack.c.b16 %v2044, %v2037
  %v3466 = vpack.c.b16 %v2045, %v2038
  %v3467 = vpack.c.b16 %v2046, %v2039
  %v3468 = vpack.c.b16 %v2054, %v2047
  %v3469 = vpack.c.b16 %v2055, %v2048
  %v3470 = vpack.c.b16 %v2056, %v2049
  %v3471 = vpack.c.b16 %v2057, %v2050
  %v3472 = vpack.c.b16 %v2058, %v2051
  %v3473 = vpack.c.b16 %v2059, %v2052
  %v3474 = vpack.c.b16 %v2060, %v2053
  %v3475 = vpack.c.b16 %v2068, %v2061
  %v3476 = vpack.c.b16 %v2069, %v2062
  %v3477 = vpack.c.b16 %v2070, %v2063
  %v3478 = vpack.c.b16 %v2071, %v2064
  %v3479 = vpack.c.b16 %v2072, %v2065
  %v3480 = vpack.c.b16 %v2073, %v2066
  %v3481 = vpack.c.b16 %v2074, %v2067
  %v3482 = vpack.c.b16 %v2082, %v2075
  %v3483 = vpack.c.b16 %v2083, %v2076
  %v3484 = vpack.c.b16 %v2084, %v2077
  %v3485 = vpack.c.b16 %v2085, %v2078
  %v3486 = vpack.c.b16 %v2086, %v2079
  %v3487 = vpack.c.b16 %v2087, %v2080
  %v3488 = vpack.c.b16 %v2088, %v2081
  %v3489 = vpack.c.b16 %v2096, %v2089
  %v3490 = vpack.c.b16 %v2097, %v2090
  %v3491 = vpack.c.b16 %v2098, %v2091
  %v3492 = vpack.c.b16 %v2099, %v2092
  %v3493 = vpack.c.b16 %v2100, %v2093
  %v3494 = vpack.c.b16 %v2101, %v2094
  %v3495 = vpack.c.b16 %v2102, %v2095
  %v3496 = vpack.c.b16 %v2110, %v2103
  %v3497 = vpack.c.b16 %v2111, %v2104
  %v3498 = vpack.c.b16 %v2112, %v2105
  %v3499 = vpack.c.b16 %v2113, %v2106
  %v3500 = vpack.c.b16 %v2114, %v2107
  %v3501 = vpack.c.b16 %v2115, %v2108
  %v3502 = vpack.c.b16 %v2116, %v2109
  %v3503 = vpack.c.b16 %v2124, %v2117
  %v3504 = vpack.c.b16 %v2125, %v2118
  %v3505 = vpack.c.b16 %v2126, %v2119
  %v3506 = vpack.c.b16 %v2127, %v2120
  %v3507 = vpack.c.b16 %v2128, %v2121
  %v3508 = vpack.c.b16 %v2129, %v2122
  %v3509 = vpack.c.b16 %v2130, %v2123
  %v3510 = vpack.c.b16 %v2138, %v2131
  %v3511 = vpack.c.b16 %v2139, %v2132
  %v3512 = vpack.c.b16 %v2140, %v2133
  %v3513 = vpack.c.b16 %v2141, %v2134
  %v3514 = vpack.c.b16 %v2142, %v2135
  %v3515 = vpack.c.b16 %v2143, %v2136
  %v3516 = vpack.c.b16 %v2144, %v2137
  %v3517 = vpack.c.b16 %v2152, %v2145
  %v3518 = vpack.c.b16 %v2153, %v2146
  %v3519 = vpack.c.b16 %v2154, %v2147
  %v3520 = vpack.c.b16 %v2155, %v2148
  %v3521 = vpack.c.b16 %v2156, %v2149
  %v3522 = vpack.c.b16 %v2157, %v2150
  %v3523 = vpack.c.b16 %v2158, %v2151
  %v3524 = vpack.c.b16 %v2166, %v2159
  %v3525 = vpack.c.b16 %v2167, %v2160
  %v3526 = vpack.c.b16 %v2168, %v2161
  %v3527 = vpack.c.b16 %v2169, %v2162
  %v3528 = vpack.c.b16 %v2170, %v2163
  %v3529 = vpack.c.b16 %v2171, %v2164
  %v3530 = vpack.c.b16 %v2172, %v2165
  %v3531 = vpack.c.b16 %v2180, %v2173
  %v3532 = vpack.c.b16 %v2181, %v2174
  %v3533 = vpack.c.b16 %v2182, %v2175
  %v3534 = vpack.c.b16 %v2183, %v2176
  %v3535 = vpack.c.b16 %v2184, %v2177
  %v3536 = vpack.c.b16 %v2185, %v2178
  %v3537 = vpack.c.b16 %v2186, %v2179
  %v3538 = vpack.c.b16 %v2194, %v2187
  %v3539 = vpack.c.b16 %v2195, %v2188
  %v3540 = vpack.c.b16 %v2196, %v2189
  %v3541 = vpack.c.b16 %v2197, %v2190
  %v3542 = vpack.c.b16 %v2198, %v2191
  %v3543 = vpack.c.b16 %v2199, %v2192
  %v3544 = vpack.c.b16 %v2200, %v2193
  %v3545 = vpack.c.b16 %v2208, %v2201
  %v3546 = vpack.c.b16 %v2209, %v2202
  %v3547 = vpack.c.b16 %v2210, %v2203
  %v3548 = vpack.c.b16 %v2211, %v2204
  %v3549 = vpack.c.b16 %v2212, %v2205
  %v3550 = vpack.c.b16 %v2213, %v2206
  %v3551 = vpack.c.b16 %v2214, %v2207
  %v3552 = vpack.c.b16 %v2222, %v2215
  %v3553 = vpack.c.b16 %v2223, %v2216
  %v3554 = vpack.c.b16 %v2224, %v2217
  %v3555 = vpack.c.b16 %v2225, %v2218
  %v3556 = vpack.c.b16 %v2226, %v2219
  %v3557 = vpack.c.b16 %v2227, %v2220
  %v3558 = vpack.c.b16 %v2228, %v2221
  %v3559 = vpack.c.b16 %v2236, %v2229
  %v3560 = vpack.c.b16 %v2237, %v2230
  %v3561 = vpack.c.b16 %v2238, %v2231
  %v3562 = vpack.c.b16 %v2239, %v2232
  %v3563 = vpack.c.b16 %v2240, %v2233
  %v3564 = vpack.c.b16 %v2241, %v2234
  %v3565 = vpack.c.b16 %v2242, %v2235
  %v3566 = vpack.c.b16 %v2250, %v2243
  %v3567 = vpack.c.b16 %v2251, %v2244
  %v3568 = vpack.c.b16 %v2252, %v2245
  %v3569 = vpack.c.b16 %v2253, %v2246
  %v3570 = vpack.c.b16 %v2254, %v2247
  %v3571 = vpack.c.b16 %v2255, %v2248
  %v3572 = vpack.c.b16 %v2256, %v2249
  %v3573 = vpack.c.b16 %v2264, %v2257
  %v3574 = vpack.c.b16 %v2265, %v2258
  %v3575 = vpack.c.b16 %v2266, %v2259
  %v3576 = vpack.c.b16 %v2267, %v2260
  %v3577 = vpack.c.b16 %v2268, %v2261
  %v3578 = vpack.c.b16 %v2269, %v2262
  %v3579 = vpack.c.b16 %v2270, %v2263
  %v3580 = vpack.c.b16 %v2278, %v2271
  %v3581 = vpack.c.b16 %v2279, %v2272
  %v3582 = vpack.c.b16 %v2280, %v2273
  %v3583 = vpack.c.b16 %v2281, %v2274
  %v3584 = vpack.c.b16 %v2282, %v2275
  %v3585 = vpack.c.b16 %v2283, %v2276
  %v3586 = vpack.c.b16 %v2284, %v2277
  %v3587 = vpack.c.b16 %v2292, %v2285
  %v3588 = vpack.c.b16 %v2293, %v2286
  %v3589 = vpack.c.b16 %v2294, %v2287
  %v3590 = vpack.c.b16 %v2295, %v2288
  %v3591 = vpack.c.b16 %v2296, %v2289
  %v3592 = vpack.c.b16 %v2297, %v2290
  %v3593 = vpack.c.b16 %v2298, %v2291
  %v3594 = vpack.c.b16 %v2306, %v2299
  %v3595 = vpack.c.b16 %v2307, %v2300
  %v3596 = vpack.c.b16 %v2308, %v2301
  %v3597 = vpack.c.b16 %v2309, %v2302
  %v3598 = vpack.c.b16 %v2310, %v2303
  %v3599 = vpack.c.b16 %v2311, %v2304
  %v3600 = vpack.c.b16 %v2312, %v2305
  %v3601 = vpack.c.b16 %v2320, %v2313
  %v3602 = vpack.c.b16 %v2321, %v2314
  %v3603 = vpack.c.b16 %v2322, %v2315
  %v3604 = vpack.c.b16 %v2323, %v2316
  %v3605 = vpack.c.b16 %v2324, %v2317
  %v3606 = vpack.c.b16 %v2325, %v2318
  %v3607 = vpack.c.b16 %v2326, %v2319
  %v3608 = vpack.c.b16 %v2334, %v2327
  %v3609 = vpack.c.b16 %v2335, %v2328
  %v3610 = vpack.c.b16 %v2336, %v2329
  %v3611 = vpack.c.b16 %v2337, %v2330
  %v3612 = vpack.c.b16 %v2338, %v2331
  %v3613 = vpack.c.b16 %v2339, %v2332
  %v3614 = vpack.c.b16 %v2340, %v2333
  %v3615 = vpack.c.b16 %v2348, %v2341
  %v3616 = vpack.c.b16 %v2349, %v2342
  %v3617 = vpack.c.b16 %v2350, %v2343
  %v3618 = vpack.c.b16 %v2351, %v2344
  %v3619 = vpack.c.b16 %v2352, %v2345
  %v3620 = vpack.c.b16 %v2353, %v2346
  %v3621 = vpack.c.b16 %v2354, %v2347
  %v3622 = vpack.c.b16 %v2362, %v2355
  %v3623 = vpack.c.b16 %v2363, %v2356
  %v3624 = vpack.c.b16 %v2364, %v2357
  %v3625 = vpack.c.b16 %v2365, %v2358
  %v3626 = vpack.c.b16 %v2366, %v2359
  %v3627 = vpack.c.b16 %v2367, %v2360
  %v3628 = vpack.c.b16 %v2368, %v2361
  %v3629 = vpack.c.b16 %v2376, %v2369
  %v3630 = vpack.c.b16 %v2377, %v2370
  %v3631 = vpack.c.b16 %v2378, %v2371
  %v3632 = vpack.c.b16 %v2379, %v2372
  %v3633 = vpack.c.b16 %v2380, %v2373
  %v3634 = vpack.c.b16 %v2381, %v2374
  %v3635 = vpack.c.b16 %v2382, %v2375
  %v3636 = vpack.c.b16 %v2390, %v2383
  %v3637 = vpack.c.b16 %v2391, %v2384
  %v3638 = vpack.c.b16 %v2392, %v2385
  %v3639 = vpack.c.b16 %v2393, %v2386
  %v3640 = vpack.c.b16 %v2394, %v2387
  %v3641 = vpack.c.b16 %v2395, %v2388
  %v3642 = vpack.c.b16 %v2396, %v2389
  %v3643 = vpack.c.b16 %v2404, %v2397
  %v3644 = vpack.c.b16 %v2405, %v2398
  %v3645 = vpack.c.b16 %v2406, %v2399
  %v3646 = vpack.c.b16 %v2407, %v2400
  %v3647 = vpack.c.b16 %v2408, %v2401
  %v3648 = vpack.c.b16 %v2409, %v2402
  %v3649 = vpack.c.b16 %v2410, %v2403
  %v3650 = vpack.c.b16 %v2418, %v2411
  %v3651 = vpack.c.b16 %v2419, %v2412
  %v3652 = vpack.c.b16 %v2420, %v2413
  %v3653 = vpack.c.b16 %v2421, %v2414
  %v3654 = vpack.c.b16 %v2422, %v2415
  %v3655 = vpack.c.b16 %v2423, %v2416
  %v3656 = vpack.c.b16 %v2424, %v2417
  %v3657 = vpack.c.b16 %v2432, %v2425
  %v3658 = vpack.c.b16 %v2433, %v2426
  %v3659 = vpack.c.b16 %v2434, %v2427
  %v3660 = vpack.c.b16 %v2435, %v2428
  %v3661 = vpack.c.b16 %v2436, %v2429
  %v3662 = vpack.c.b16 %v2437, %v2430
  %v3663 = vpack.c.b16 %v2438, %v2431
  %v3664 = vpack.c.b16 %v2446, %v2439
  %v3665 = vpack.c.b16 %v2447, %v2440
  %v3666 = vpack.c.b16 %v2448, %v2441
  %v3667 = vpack.c.b16 %v2449, %v2442
  %v3668 = vpack.c.b16 %v2450, %v2443
  %v3669 = vpack.c.b16 %v2451, %v2444
  %v3670 = vpack.c.b16 %v2452, %v2445
  %v3671 = vpack.c.b16 %v2460, %v2453
  %v3672 = vpack.c.b16 %v2461, %v2454
  %v3673 = vpack.c.b16 %v2462, %v2455
  %v3674 = vpack.c.b16 %v2463, %v2456
  %v3675 = vpack.c.b16 %v2464, %v2457
  %v3676 = vpack.c.b16 %v2465, %v2458
  %v3677 = vpack.c.b16 %v2466, %v2459
  %v3678 = vpack.c.b16 %v2474, %v2467
  %v3679 = vpack.c.b16 %v2475, %v2468
  %v3680 = vpack.c.b16 %v2476, %v2469
  %v3681 = vpack.c.b16 %v2477, %v2470
  %v3682 = vpack.c.b16 %v2478, %v2471
  %v3683 = vpack.c.b16 %v2479, %v2472
  %v3684 = vpack.c.b16 %v2480, %v2473
  %v3685 = vpack.c.b16 %v2488, %v2481
  %v3686 = vpack.c.b16 %v2489, %v2482
  %v3687 = vpack.c.b16 %v2490, %v2483
  %v3688 = vpack.c.b16 %v2491, %v2484
  %v3689 = vpack.c.b16 %v2492, %v2485
  %v3690 = vpack.c.b16 %v2493, %v2486
  %v3691 = vpack.c.b16 %v2494, %v2487
  %v3692 = vpack.c.b16 %v2502, %v2495
  %v3693 = vpack.c.b16 %v2503, %v2496
  %v3694 = vpack.c.b16 %v2504, %v2497
  %v3695 = vpack.c.b16 %v2505, %v2498
  %v3696 = vpack.c.b16 %v2506, %v2499
  %v3697 = vpack.c.b16 %v2507, %v2500
  %v3698 = vpack.c.b16 %v2508, %v2501
  %v3699 = vpack.c.b16 %v2516, %v2509
  %v3700 = vpack.c.b16 %v2517, %v2510
  %v3701 = vpack.c.b16 %v2518, %v2511
  %v3702 = vpack.c.b16 %v2519, %v2512
  %v3703 = vpack.c.b16 %v2520, %v2513
  %v3704 = vpack.c.b16 %v2521, %v2514
  %v3705 = vpack.c.b16 %v2522, %v2515
  %v3706 = vpack.c.b16 %v2530, %v2523
  %v3707 = vpack.c.b16 %v2531, %v2524
  %v3708 = vpack.c.b16 %v2532, %v2525
  %v3709 = vpack.c.b16 %v2533, %v2526
  %v3710 = vpack.c.b16 %v2534, %v2527
  %v3711 = vpack.c.b16 %v2535, %v2528
  %v3712 = vpack.c.b16 %v2536, %v2529
  %v3713 = vpack.c.b16 %v2544, %v2537
  %v3714 = vpack.c.b16 %v2545, %v2538
  %v3715 = vpack.c.b16 %v2546, %v2539
  %v3716 = vpack.c.b16 %v2547, %v2540
  %v3717 = vpack.c.b16 %v2548, %v2541
  %v3718 = vpack.c.b16 %v2549, %v2542
  %v3719 = vpack.c.b16 %v2550, %v2543
  %v3720 = vpack.c.b16 %v2558, %v2551
  %v3721 = vpack.c.b16 %v2559, %v2552
  %v3722 = vpack.c.b16 %v2560, %v2553
  %v3723 = vpack.c.b16 %v2561, %v2554
  %v3724 = vpack.c.b16 %v2562, %v2555
  %v3725 = vpack.c.b16 %v2563, %v2556
  %v3726 = vpack.c.b16 %v2564, %v2557
  %v3727 = vpack.c.b16 %v2572, %v2565
  %v3728 = vpack.c.b16 %v2573, %v2566
  %v3729 = vpack.c.b16 %v2574, %v2567
  %v3730 = vpack.c.b16 %v2575, %v2568
  %v3731 = vpack.c.b16 %v2576, %v2569
  %v3732 = vpack.c.b16 %v2577, %v2570
  %v3733 = vpack.c.b16 %v2578, %v2571
  %v3734 = vpack.c.b16 %v2586, %v2579
  %v3735 = vpack.c.b16 %v2587, %v2580
  %v3736 = vpack.c.b16 %v2588, %v2581
  %v3737 = vpack.c.b16 %v2589, %v2582
  %v3738 = vpack.c.b16 %v2590, %v2583
  %v3739 = vpack.c.b16 %v2591, %v2584
  %v3740 = vpack.c.b16 %v2592, %v2585
  %v3741 = vpack.c.b16 %v2600, %v2593
  %v3742 = vpack.c.b16 %v2601, %v2594
  %v3743 = vpack.c.b16 %v2602, %v2595
  %v3744 = vpack.c.b16 %v2603, %v2596
  %v3745 = vpack.c.b16 %v2604, %v2597
  %v3746 = vpack.c.b16 %v2605, %v2598
  %v3747 = vpack.c.b16 %v2606, %v2599
  %v3748 = vpack.c.b16 %v2614, %v2607
  %v3749 = vpack.c.b16 %v2615, %v2608
  %v3750 = vpack.c.b16 %v2616, %v2609
  %v3751 = vpack.c.b16 %v2617, %v2610
  %v3752 = vpack.c.b16 %v2618, %v2611
  %v3753 = vpack.c.b16 %v2619, %v2612
  %v3754 = vpack.c.b16 %v2620, %v2613
  %v3755 = vpack.c.b16 %v2628, %v2621
  %v3756 = vpack.c.b16 %v2629, %v2622
  %v3757 = vpack.c.b16 %v2630, %v2623
  %v3758 = vpack.c.b16 %v2631, %v2624
  %v3759 = vpack.c.b16 %v2632, %v2625
  %v3760 = vpack.c.b16 %v2633, %v2626
  %v3761 = vpack.c.b16 %v2634, %v2627
  %v3762 = vpack.c.b16 %v2642, %v2635
  %v3763 = vpack.c.b16 %v2643, %v2636
  %v3764 = vpack.c.b16 %v2644, %v2637
  %v3765 = vpack.c.b16 %v2645, %v2638
  %v3766 = vpack.c.b16 %v2646, %v2639
  %v3767 = vpack.c.b16 %v2647, %v2640
  %v3768 = vpack.c.b16 %v2648, %v2641
  %v3769 = vpack.c.b16 %v2656, %v2649
  %v3770 = vpack.c.b16 %v2657, %v2650
  %v3771 = vpack.c.b16 %v2658, %v2651
  %v3772 = vpack.c.b16 %v2659, %v2652
  %v3773 = vpack.c.b16 %v2660, %v2653
  %v3774 = vpack.c.b16 %v2661, %v2654
  %v3775 = vpack.c.b16 %v2662, %v2655
  %v3776 = vpack.c.b16 %v2670, %v2663
  %v3777 = vpack.c.b16 %v2671, %v2664
  %v3778 = vpack.c.b16 %v2672, %v2665
  %v3779 = vpack.c.b16 %v2673, %v2666
  %v3780 = vpack.c.b16 %v2674, %v2667
  %v3781 = vpack.c.b16 %v2675, %v2668
  %v3782 = vpack.c.b16 %v2676, %v2669
  %v3783 = vpack.c.b16 %v2684, %v2677
  %v3784 = vpack.c.b16 %v2685, %v2678
  %v3785 = vpack.c.b16 %v2686, %v2679
  %v3786 = vpack.c.b16 %v2687, %v2680
  %v3787 = vpack.c.b16 %v2688, %v2681
  %v3788 = vpack.c.b16 %v2689, %v2682
  %v3789 = vpack.c.b16 %v2690, %v2683
  %v3790 = vpack.c.b16 %v2698, %v2691
  %v3791 = vpack.c.b16 %v2699, %v2692
  %v3792 = vpack.c.b16 %v2700, %v2693
  %v3793 = vpack.c.b16 %v2701, %v2694
  %v3794 = vpack.c.b16 %v2702, %v2695
  %v3795 = vpack.c.b16 %v2703, %v2696
  %v3796 = vpack.c.b16 %v2704, %v2697
  %v3797 = vpack.c.b16 %v2712, %v2705
  %v3798 = vpack.c.b16 %v2713, %v2706
  %v3799 = vpack.c.b16 %v2714, %v2707
  %v3800 = vpack.c.b16 %v2715, %v2708
  %v3801 = vpack.c.b16 %v2716, %v2709
  %v3802 = vpack.c.b16 %v2717, %v2710
  %v3803 = vpack.c.b16 %v2718, %v2711
  %v3804 = vpack.c.b16 %v2726, %v2719
  %v3805 = vpack.c.b16 %v2727, %v2720
  %v3806 = vpack.c.b16 %v2728, %v2721
  %v3807 = vpack.c.b16 %v2729, %v2722
  %v3808 = vpack.c.b16 %v2730, %v2723
  %v3809 = vpack.c.b16 %v2731, %v2724
  %v3810 = vpack.c.b16 %v2732, %v2725
  %v3811 = vpack.c.b16 %v2740, %v2733
  %v3812 = vpack.c.b16 %v2741, %v2734
  %v3813 = vpack.c.b16 %v2742, %v2735
  %v3814 = vpack.c.b16 %v2743, %v2736
  %v3815 = vpack.c.b16 %v2744, %v2737
  %v3816 = vpack.c.b16 %v2745, %v2738
  %v3817 = vpack.c.b16 %v2746, %v2739
  %v3818 = vpack.c.b16 %v2754, %v2747
  %v3819 = vpack.c.b16 %v2755, %v2748
  %v3820 = vpack.c.b16 %v2756, %v2749
  %v3821 = vpack.c.b16 %v2757, %v2750
  %v3822 = vpack.c.b16 %v2758, %v2751
  %v3823 = vpack.c.b16 %v2759, %v2752
  %v3824 = vpack.c.b16 %v2760, %v2753
  %v3825 = vpack.c.b16 %v2768, %v2761
  %v3826 = vpack.c.b16 %v2769, %v2762
  %v3827 = vpack.c.b16 %v2770, %v2763
  %v3828 = vpack.c.b16 %v2771, %v2764
  %v3829 = vpack.c.b16 %v2772, %v2765
  %v3830 = vpack.c.b16 %v2773, %v2766
  %v3831 = vpack.c.b16 %v2774, %v2767
  %v3832 = vpack.c.b16 %v2782, %v2775
  %v3833 = vpack.c.b16 %v2783, %v2776
  %v3834 = vpack.c.b16 %v2784, %v2777
  %v3835 = vpack.c.b16 %v2785, %v2778
  %v3836 = vpack.c.b16 %v2786, %v2779
  %v3837 = vpack.c.b16 %v2787, %v2780
  %v3838 = vpack.c.b16 %v2788, %v2781
  %v3839 = vpack.c.b16 %v2796, %v2789
  %v3840 = vpack.c.b16 %v2797, %v2790
  %v3841 = vpack.c.b16 %v2798, %v2791
  %v3842 = vpack.c.b16 %v2799, %v2792
  %v3843 = vpack.c.b16 %v2800, %v2793
  %v3844 = vpack.c.b16 %v2801, %v2794
  %v3845 = vpack.c.b16 %v2802, %v2795
  %v3846 = vpack.c.b16 %v2810, %v2803
  %v3847 = vpack.c.b16 %v2811, %v2804
  %v3848 = vpack.c.b16 %v2812, %v2805
  %v3849 = vpack.c.b16 %v2813, %v2806
  %v3850 = vpack.c.b16 %v2814, %v2807
  %v3851 = vpack.c.b16 %v2815, %v2808
  %v3852 = vpack.c.b16 %v2816, %v2809
  %v3853 = vpack.c.b16 %v2824, %v2817
  %v3854 = vpack.c.b16 %v2825, %v2818
  %v3855 = vpack.c.b16 %v2826, %v2819
  %v3856 = vpack.c.b16 %v2827, %v2820
  %v3857 = vpack.c.b16 %v2828, %v2821
  %v3858 = vpack.c.b16 %v2829, %v2822
  %v3859 = vpack.c.b16 %v2830, %v2823
  %v3860 = vpack.c.b16 %v2838, %v2831
  %v3861 = vpack.c.b16 %v2839, %v2832
  %v3862 = vpack.c.b16 %v2840, %v2833
  %v3863 = vpack.c.b16 %v2841, %v2834
  %v3864 = vpack.c.b16 %v2842, %v2835
  %v3865 = vpack.c.b16 %v2843, %v2836
  %v3866 = vpack.c.b16 %v2844, %v2837
  %v3867 = vpack.c.b16 %v2852, %v2845
  %v3868 = vpack.c.b16 %v2853, %v2846
  %v3869 = vpack.c.b16 %v2854, %v2847
  %v3870 = vpack.c.b16 %v2855, %v2848
  %v3871 = vpack.c.b16 %v2856, %v2849
  %v3872 = vpack.c.b16 %v2857, %v2850
  %v3873 = vpack.c.b16 %v2858, %v2851
  %v3874 = vpack.c.b16 %v2866, %v2859
  %v3875 = vpack.c.b16 %v2867, %v2860
  %v3876 = vpack.c.b16 %v2868, %v2861
  %v3877 = vpack.c.b16 %v2869, %v2862
  %v3878 = vpack.c.b16 %v2870, %v2863
  %v3879 = vpack.c.b16 %v2871, %v2864
  %v3880 = vpack.c.b16 %v2872, %v2865
  %v3881 = vpack.c.b16 %v2880, %v2873
  %v3882 = vpack.c.b16 %v2881, %v2874
  %v3883 = vpack.c.b16 %v2882, %v2875
  %v3884 = vpack.c.b16 %v2883, %v2876
  %v3885 = vpack.c.b16 %v2884, %v2877
  %v3886 = vpack.c.b16 %v2885, %v2878
  %v3887 = vpack.c.b16 %v2886, %v2879
  %v3888 = vpack.c.b16 %v2894, %v2887
  %v3889 = vpack.c.b16 %v2895, %v2888
  %v3890 = vpack.c.b16 %v2896, %v2889
  %v3891 = vpack.c.b16 %v2897, %v2890
  %v3892 = vpack.c.b16 %v2898, %v2891
  %v3893 = vpack.c.b16 %v2899, %v2892
  %v3894 = vpack.c.b16 %v2900, %v2893
  %v3895 = vpack.c.b16 %v2908, %v2901
  %v3896 = vpack.c.b16 %v2909, %v2902
  %v3897 = vpack.c.b16 %v2910, %v2903
  %v3898 = vpack.c.b16 %v2911, %v2904
  %v3899 = vpack.c.b16 %v2912, %v2905
  %v3900 = vpack.c.b16 %v2913, %v2906
  %v3901 = vpack.c.b16 %v2914, %v2907
  %v3902 = vpack.c.b16 %v2922, %v2915
  %v3903 = vpack.c.b16 %v2923, %v2916
  %v3904 = vpack.c.b16 %v2924, %v2917
  %v3905 = vpack.c.b16 %v2925, %v2918
  %v3906 = vpack.c.b16 %v2926, %v2919
  %v3907 = vpack.c.b16 %v2927, %v2920
  %v3908 = vpack.c.b16 %v2928, %v2921
  %v3909 = vpack.c.b16 %v2936, %v2929
  %v3910 = vpack.c.b16 %v2937, %v2930
  %v3911 = vpack.c.b16 %v2938, %v2931
  %v3912 = vpack.c.b16 %v2939, %v2932
  %v3913 = vpack.c.b16 %v2940, %v2933
  %v3914 = vpack.c.b16 %v2941, %v2934
  %v3915 = vpack.c.b16 %v2942, %v2935
  %v3916 = vpack.c.b16 %v2950, %v2943
  %v3917 = vpack.c.b16 %v2951, %v2944
  %v3918 = vpack.c.b16 %v2952, %v2945
  %v3919 = vpack.c.b16 %v2953, %v2946
  %v3920 = vpack.c.b16 %v2954, %v2947
  %v3921 = vpack.c.b16 %v2955, %v2948
  %v3922 = vpack.c.b16 %v2956, %v2949
  %v3923 = vpack.c.b16 %v2964, %v2957
  %v3924 = vpack.c.b16 %v2965, %v2958
  %v3925 = vpack.c.b16 %v2966, %v2959
  %v3926 = vpack.c.b16 %v2967, %v2960
  %v3927 = vpack.c.b16 %v2968, %v2961
  %v3928 = vpack.c.b16 %v2969, %v2962
  %v3929 = vpack.c.b16 %v2970, %v2963
  %v3930 = vpack.c.b16 %v2978, %v2971
  %v3931 = vpack.c.b16 %v2979, %v2972
  %v3932 = vpack.c.b16 %v2980, %v2973
  %v3933 = vpack.c.b16 %v2981, %v2974
  %v3934 = vpack.c.b16 %v2982, %v2975
  %v3935 = vpack.c.b16 %v2983, %v2976
  %v3936 = vpack.c.b16 %v2984, %v2977
  %v3937 = vpack.c.b16 %v2992, %v2985
  %v3938 = vpack.c.b16 %v2993, %v2986
  %v3939 = vpack.c.b16 %v2994, %v2987
  %v3940 = vpack.c.b16 %v2995, %v2988
  %v3941 = vpack.c.b16 %v2996, %v2989
  %v3942 = vpack.c.b16 %v2997, %v2990
  %v3943 = vpack.c.b16 %v2998, %v2991
  %v3944 = vpack.c.b16 %v3006, %v2999
  %v3945 = vpack.c.b16 %v3007, %v3000
  %v3946 = vpack.c.b16 %v3008, %v3001
  %v3947 = vpack.c.b16 %v3009, %v3002
  %v3948 = vpack.c.b16 %v3010, %v3003
  %v3949 = vpack.c.b16 %v3011, %v3004
  %v3950 = vpack.c.b16 %v3012, %v3005
  %v3951 = vpack.c.b16 %v3020, %v3013
  %v3952 = vpack.c.b16 %v3021, %v3014
  %v3953 = vpack.c.b16 %v3022, %v3015
  %v3954 = vpack.c.b16 %v3023, %v3016
  %v3955 = vpack.c.b16 %v3024, %v3017
  %v3956 = vpack.c.b16 %v3025, %v3018
  %v3957 = vpack.c.b16 %v3026, %v3019
  %v3958 = vpack.c.b16 %v3034, %v3027
  %v3959 = vpack.c.b16 %v3035, %v3028
  %v3960 = vpack.c.b16 %v3036, %v3029
  %v3961 = vpack.c.b16 %v3037, %v3030
  %v3962 = vpack.c.b16 %v3038, %v3031
  %v3963 = vpack.c.b16 %v3039, %v3032
  %v3964 = vpack.c.b16 %v3040, %v3033
  %v3965 = vpack.c.b16 %v3048, %v3041
  %v3966 = vpack.c.b16 %v3049, %v3042
  %v3967 = vpack.c.b16 %v3050, %v3043
  %v3968 = vpack.c.b16 %v3051, %v3044
  %v3969 = vpack.c.b16 %v3052, %v3045
  %v3970 = vpack.c.b16 %v3053, %v3046
  %v3971 = vpack.c.b16 %v3054, %v3047
  %v3972 = vpack.c.b16 %v3062, %v3055
  %v3973 = vpack.c.b16 %v3063, %v3056
  %v3974 = vpack.c.b16 %v3064, %v3057
  %v3975 = vpack.c.b16 %v3065, %v3058
  %v3976 = vpack.c.b16 %v3066, %v3059
  %v3977 = vpack.c.b16 %v3067, %v3060
  %v3978 = vpack.c.b16 %v3068, %v3061
  %v3979 = vpack.c.b16 %v3076, %v3069
  %v3980 = vpack.c.b16 %v3077, %v3070
  %v3981 = vpack.c.b16 %v3078, %v3071
  %v3982 = vpack.c.b16 %v3079, %v3072
  %v3983 = vpack.c.b16 %v3080, %v3073
  %v3984 = vpack.c.b16 %v3081, %v3074
  %v3985 = vpack.c.b16 %v3082, %v3075
  %v3986 = vpack.c.b16 %v3090, %v3083
  %v3987 = vpack.c.b16 %v3091, %v3084
  %v3988 = vpack.c.b16 %v3092, %v3085
  %v3989 = vpack.c.b16 %v3093, %v3086
  %v3990 = vpack.c.b16 %v3094, %v3087
  %v3991 = vpack.c.b16 %v3095, %v3088
  %v3992 = vpack.c.b16 %v3096, %v3089
  %v3993 = vpack.c.b16 %v3104, %v3097
  %v3994 = vpack.c.b16 %v3105, %v3098
  %v3995 = vpack.c.b16 %v3106, %v3099
  %v3996 = vpack.c.b16 %v3107, %v3100
  %v3997 = vpack.c.b16 %v3108, %v3101
  %v3998 = vpack.c.b16 %v3109, %v3102
  %v3999 = vpack.c.b16 %v3110, %v3103
  %v4000 = vpack.c.b16 %v3118, %v3111
  %v4001 = vpack.c.b16 %v3119, %v3112
  %v4002 = vpack.c.b16 %v3120, %v3113
  %v4003 = vpack.c.b16 %v3121, %v3114
  %v4004 = vpack.c.b16 %v3122, %v3115
  %v4005 = vpack.c.b16 %v3123, %v3116
  %v4006 = vpack.c.b16 %v3124, %v3117
  %v4007 = vpack.c.b16 %v3132, %v3125
  %v4008 = vpack.c.b16 %v3133, %v3126
  %v4009 = vpack.c.b16 %v3134, %v3127
  %v4010 = vpack.c.b16 %v3135, %v3128
  %v4011 = vpack.c.b16 %v3136, %v3129
  %v4012 = vpack.c.b16 %v3137, %v3130
  %v4013 = vpack.c.b16 %v3138, %v3131
  %v4014 = vpack.c.b16 %v3146, %v3139
  %v4015 = vpack.c.b16 %v3147, %v3140
  %v4016 = vpack.c.b16 %v3148, %v3141
  %v4017 = vpack.c.b16 %v3149, %v3142
  %v4018 = vpack.c.b16 %v3150, %v3143
  %v4019 = vpack.c.b16 %v3151, %v3144
  %v4020 = vpack.c.b16 %v3152, %v3145
  %v4021 = vpack.c.b16 %v3160, %v3153
  %v4022 = vpack.c.b16 %v3161, %v3154
  %v4023 = vpack.c.b16 %v3162, %v3155
  %v4024 = vpack.c.b16 %v3163, %v3156
  %v4025 = vpack.c.b16 %v3164, %v3157
  %v4026 = vpack.c.b16 %v3165, %v3158
  %v4027 = vpack.c.b16 %v3166, %v3159
  %v4028 = vpack.c.b16 %v3174, %v3167
  %v4029 = vpack.c.b16 %v3175, %v3168
  %v4030 = vpack.c.b16 %v3176, %v3169
  %v4031 = vpack.c.b16 %v3177, %v3170
  %v4032 = vpack.c.b16 %v3178, %v3171
  %v4033 = vpack.c.b16 %v3179, %v3172
  %v4034 = vpack.c.b16 %v3180, %v3173
  %v4035 = vpack.c.b16 %v3188, %v3181
  %v4036 = vpack.c.b16 %v3189, %v3182
  %v4037 = vpack.c.b16 %v3190, %v3183
  %v4038 = vpack.c.b16 %v3191, %v3184
  %v4039 = vpack.c.b16 %v3192, %v3185
  %v4040 = vpack.c.b16 %v3193, %v3186
  %v4041 = vpack.c.b16 %v3194, %v3187
  %v4042 = vpack.c.b16 %v3202, %v3195
  %v4043 = vpack.c.b16 %v3203, %v3196
  %v4044 = vpack.c.b16 %v3204, %v3197
  %v4045 = vpack.c.b16 %v3205, %v3198
  %v4046 = vpack.c.b16 %v3206, %v3199
  %v4047 = vpack.c.b16 %v3207, %v3200
  %v4048 = vpack.c.b16 %v3208, %v3201
  %v4049 = vpack.c.b16 %v3216, %v3209
  %v4050 = vpack.c.b16 %v3217, %v3210
  %v4051 = vpack.c.b16 %v3218, %v3211
  %v4052 = vpack.c.b16 %v3219, %v3212
  %v4053 = vpack.c.b16 %v3220, %v3213
  %v4054 = vpack.c.b16 %v3221, %v3214
  %v4055 = vpack.c.b16 %v3222, %v3215
  %v4056 = vpack.c.b16 %v3230, %v3223
  %v4057 = vpack.c.b16 %v3231, %v3224
  %v4058 = vpack.c.b16 %v3232, %v3225
  %v4059 = vpack.c.b16 %v3233, %v3226
  %v4060 = vpack.c.b16 %v3234, %v3227
  %v4061 = vpack.c.b16 %v3235, %v3228
  %v4062 = vpack.c.b16 %v3236, %v3229
  %v4063 = vpack.c.b16 %v3244, %v3237
  %v4064 = vpack.c.b16 %v3245, %v3238
  %v4065 = vpack.c.b16 %v3246, %v3239
  %v4066 = vpack.c.b16 %v3247, %v3240
  %v4067 = vpack.c.b16 %v3248, %v3241
  %v4068 = vpack.c.b16 %v3249, %v3242
  %v4069 = vpack.c.b16 %v3250, %v3243
  %v4070 = vpack.c.b16 %v3258, %v3251
  %v4071 = vpack.c.b16 %v3259, %v3252
  %v4072 = vpack.c.b16 %v3260, %v3253
  %v4073 = vpack.c.b16 %v3261, %v3254
  %v4074 = vpack.c.b16 %v3262, %v3255
  %v4075 = vpack.c.b16 %v3263, %v3256
  %v4076 = vpack.c.b16 %v3264, %v3257
  %v4077 = vpack.c.b16 %v3272, %v3265
  %v4078 = vpack.c.b16 %v3273, %v3266
  %v4079 = vpack.c.b16 %v3274, %v3267
  %v4080 = vpack.c.b16 %v3275, %v3268
  %v4081 = vpack.c.b16 %v3276, %v3269
  %v4082 = vpack.c.b16 %v3277, %v3270
  %v4083 = vpack.c.b16 %v3278, %v3271
  %v4084 = vpack.c.b16 %v3286, %v3279
  %v4085 = vpack.c.b16 %v3287, %v3280
  %v4086 = vpack.c.b16 %v3288, %v3281
  %v4087 = vpack.c.b16 %v3289, %v3282
  %v4088 = vpack.c.b16 %v3290, %v3283
  %v4089 = vpack.c.b16 %v3291, %v3284
  %v4090 = vpack.c.b16 %v3292, %v3285
  %v4091 = vpack.c.b16 %v3300, %v3293
  %v4092 = vpack.c.b16 %v3301, %v3294
  %v4093 = vpack.c.b16 %v3302, %v3295
  %v4094 = vpack.c.b16 %v3303, %v3296
  %v4095 = vpack.c.b16 %v3304, %v3297
  %v4096 = vpack.c.b16 %v3305, %v3298
  %v4097 = vpack.c.b16 %v3306, %v3299
  %v4098 = vpack.c.b16 %v3314, %v3307
  %v4099 = vpack.c.b16 %v3315, %v3308
  %v4100 = vpack.c.b16 %v3316, %v3309
  %v4101 = vpack.c.b16 %v3317, %v3310
  %v4102 = vpack.c.b16 %v3318, %v3311
  %v4103 = vpack.c.b16 %v3319, %v3312
  %v4104 = vpack.c.b16 %v3320, %v3313
  %v4105 = vpack.c.b16 %v3328, %v3321
  %v4106 = vpack.c.b16 %v3329, %v3322
  %v4107 = vpack.c.b16 %v3330, %v3323
  %v4108 = vpack.c.b16 %v3331, %v3324
  %v4109 = vpack.c.b16 %v3332, %v3325
  %v4110 = vpack.c.b16 %v3333, %v3326
  %v4111 = vpack.c.b16 %v3334, %v3327
  %v4112 = vpack.c.b16 %v3342, %v3335
  %v4113 = vpack.c.b16 %v3343, %v3336
  %v4114 = vpack.c.b16 %v3344, %v3337
  %v4115 = vpack.c.b16 %v3345, %v3338
  %v4116 = vpack.c.b16 %v3346, %v3339
  %v4117 = vpack.c.b16 %v3347, %v3340
  %v4118 = vpack.c.b16 %v3348, %v3341
  %v4119 = vpack.c.b16 %v3356, %v3349
  %v4120 = vpack.c.b16 %v3357, %v3350
  %v4121 = vpack.c.b16 %v3358, %v3351
  %v4122 = vpack.c.b16 %v3359, %v3352
  %v4123 = vpack.c.b16 %v3360, %v3353
  %v4124 = vpack.c.b16 %v3361, %v3354
  %v4125 = vpack.c.b16 %v3362, %v3355
  %v4126 = vpack.c.b16 %v3370, %v3363
  %v4127 = vpack.c.b16 %v3371, %v3364
  %v4128 = vpack.c.b16 %v3372, %v3365
  %v4129 = vpack.c.b16 %v3373, %v3366
  %v4130 = vpack.c.b16 %v3374, %v3367
  %v4131 = vpack.c.b16 %v3375, %v3368
  %v4132 = vpack.c.b16 %v3376, %v3369
  %v4133 = vpack.c.b16 %v3384, %v3377
  %v4134 = vpack.c.b16 %v3385, %v3378
  %v4135 = vpack.c.b16 %v3386, %v3379
  %v4136 = vpack.c.b16 %v3387, %v3380
  %v4137 = vpack.c.b16 %v3388, %v3381
  %v4138 = vpack.c.b16 %v3389, %v3382
  %v4139 = vpack.c.b16 %v3390, %v3383
  %v4140 = vpack.c.b16 %v3398, %v3391
  %v4141 = vpack.c.b16 %v3399, %v3392
  %v4142 = vpack.c.b16 %v3400, %v3393
  %v4143 = vpack.c.b16 %v3401, %v3394
  %v4144 = vpack.c.b16 %v3402, %v3395
  %v4145 = vpack.c.b16 %v3403, %v3396
  %v4146 = vpack.c.b16 %v3404, %v3397
  %v4147 = vpack.c.b16 %v3412, %v3405
  %v4148 = vpack.c.b16 %v3413, %v3406
  %v4149 = vpack.c.b16 %v3414, %v3407
  %v4150 = vpack.c.b16 %v3415, %v3408
  %v4151 = vpack.c.b16 %v3416, %v3409
  %v4152 = vpack.c.b16 %v3417, %v3410
  %v4153 = vpack.c.b16 %v3418, %v3411
  %v4154 = vpack.c.b16 %v3426, %v3419
  %v4155 = vpack.c.b16 %v3427, %v3420
  %v4156 = vpack.c.b16 %v3428, %v3421
  %v4157 = vpack.c.b16 %v3429, %v3422
  %v4158 = vpack.c.b16 %v3430, %v3423
  %v4159 = vpack.c.b16 %v3431, %v3424
  %v4160 = vpack.c.b16 %v3432, %v3425
  %4889 = vmatprep.subr.bf16.mxu0 %v3434
  %4890 = vmatpush1.bf16.msra.mxu0 %v3433
  %4891 = vmatprep.subr.bf16.mxu0 %v3441
  %4892 = vmatpush1.bf16.msra.mxu0 %v3440
  %4893 = vmatprep.subr.bf16.mxu0 %v3448
  %4894 = vmatpush1.bf16.msra.mxu0 %v3447
  %4895 = vmatprep.subr.bf16.mxu0 %v3455
  %4896 = vmatpush1.bf16.msra.mxu0 %v3454
  %4897 = vmatprep.subr.bf16.mxu0 %v3462
  %4898 = vmatpush1.bf16.msra.mxu0 %v3461
  %4899 = vmatprep.subr.bf16.mxu0 %v3469
  %4900 = vmatpush1.bf16.msra.mxu0 %v3468
  %4901 = vmatprep.subr.bf16.mxu0 %v3476
  %4902 = vmatpush1.bf16.msra.mxu0 %v3475
  %4903 = vmatprep.subr.bf16.mxu0 %v3483
  %4904 = vmatpush1.bf16.msra.mxu0 %v3482
  %4905 = vmatprep.subr.bf16.mxu0 %v3490
  %4906 = vmatpush1.bf16.msra.mxu0 %v3489
  %4907 = vmatprep.subr.bf16.mxu0 %v3497
  %4908 = vmatpush1.bf16.msra.mxu0 %v3496
  %4909 = vmatprep.subr.bf16.mxu0 %v3504
  %4910 = vmatpush1.bf16.msra.mxu0 %v3503
  %4911 = vmatprep.subr.bf16.mxu0 %v3511
  %4912 = vmatpush1.bf16.msra.mxu0 %v3510
  %4913 = vmatprep.subr.bf16.mxu0 %v3518
  %4914 = vmatpush1.bf16.msra.mxu0 %v3517
  %4915 = vmatprep.subr.bf16.mxu0 %v3525
  %4916 = vmatpush1.bf16.msra.mxu0 %v3524
  %4917 = vmatprep.subr.bf16.mxu0 %v3532
  %4918 = vmatpush1.bf16.msra.mxu0 %v3531
  %4919 = vmatprep.subr.bf16.mxu0 %v3539
  %4920 = vmatpush1.bf16.msra.mxu0 %v3538
  %4921 = vmatprep.mubr.bf16.mxu0 %v264
  %4922 = vmatmul.mubr.bf16.gmra.mrb[0].mxu0 %v263
  %v4923 = vpop.f32.mrb[0].mxu0
  %v4924 = vadd.f32 %v1113, %v4923
  %v4925 = vpop.f32.mrb[0].mxu0
  %v4926 = vadd.f32 %v1117, %v4925
  %v4927 = vpop.f32.mrb[0].mxu0
  %v4928 = vadd.f32 %v1113, %v4927
  %v4929 = vpop.f32.mrb[0].mxu0
  %v4930 = vadd.f32 %v1117, %v4929
  %4931 = vdwg.mxu0
  %4932 = vmatprep.subr.bf16.mxu0 %v3546
  %4933 = vmatpush1.bf16.msra.mxu0 %v3545
  %4934 = vmatprep.subr.bf16.mxu0 %v3553
  %4935 = vmatpush1.bf16.msra.mxu0 %v3552
  %4936 = vmatprep.subr.bf16.mxu0 %v3560
  %4937 = vmatpush1.bf16.msra.mxu0 %v3559
  %4938 = vmatprep.subr.bf16.mxu0 %v3567
  %4939 = vmatpush1.bf16.msra.mxu0 %v3566
  %4940 = vmatprep.subr.bf16.mxu0 %v3574
  %4941 = vmatpush1.bf16.msra.mxu0 %v3573
  %4942 = vmatprep.subr.bf16.mxu0 %v3581
  %4943 = vmatpush1.bf16.msra.mxu0 %v3580
  %4944 = vmatprep.subr.bf16.mxu0 %v3588
  %4945 = vmatpush1.bf16.msra.mxu0 %v3587
  %4946 = vmatprep.subr.bf16.mxu0 %v3595
  %4947 = vmatpush1.bf16.msra.mxu0 %v3594
  %4948 = vmatprep.subr.bf16.mxu0 %v3602
  %4949 = vmatpush1.bf16.msra.mxu0 %v3601
  %4950 = vmatprep.subr.bf16.mxu0 %v3609
  %4951 = vmatpush1.bf16.msra.mxu0 %v3608
  %4952 = vmatprep.subr.bf16.mxu0 %v3616
  %4953 = vmatpush1.bf16.msra.mxu0 %v3615
  %4954 = vmatprep.subr.bf16.mxu0 %v3623
  %4955 = vmatpush1.bf16.msra.mxu0 %v3622
  %4956 = vmatprep.subr.bf16.mxu0 %v3630
  %4957 = vmatpush1.bf16.msra.mxu0 %v3629
  %4958 = vmatprep.subr.bf16.mxu0 %v3637
  %4959 = vmatpush1.bf16.msra.mxu0 %v3636
  %4960 = vmatprep.subr.bf16.mxu0 %v3644
  %4961 = vmatpush1.bf16.msra.mxu0 %v3643
  %4962 = vmatprep.subr.bf16.mxu0 %v3651
  %4963 = vmatpush1.bf16.msra.mxu0 %v3650
  %4964 = vmatprep.mubr.bf16.mxu0 %v266
  %4965 = vmatmul.mubr.bf16.gmra.mrb[0].mxu0 %v265
  %v4966 = vpop.f32.mrb[0].mxu0
  %v4967 = vadd.f32 %v4924, %v4966
  %v4968 = vpop.f32.mrb[0].mxu0
  %v4969 = vadd.f32 %v4926, %v4968
  %v4970 = vpop.f32.mrb[0].mxu0
  %v4971 = vadd.f32 %v4928, %v4970
  %v4972 = vpop.f32.mrb[0].mxu0
  %v4973 = vadd.f32 %v4930, %v4972
  %4974 = vdwg.mxu0
  %4975 = vmatprep.subr.bf16.mxu0 %v3658
  %4976 = vmatpush1.bf16.msra.mxu0 %v3657
  %4977 = vmatprep.subr.bf16.mxu0 %v3665
  %4978 = vmatpush1.bf16.msra.mxu0 %v3664
  %4979 = vmatprep.subr.bf16.mxu0 %v3672
  %4980 = vmatpush1.bf16.msra.mxu0 %v3671
  %4981 = vmatprep.subr.bf16.mxu0 %v3679
  %4982 = vmatpush1.bf16.msra.mxu0 %v3678
  %4983 = vmatprep.subr.bf16.mxu0 %v3686
  %4984 = vmatpush1.bf16.msra.mxu0 %v3685
  %4985 = vmatprep.subr.bf16.mxu0 %v3693
  %4986 = vmatpush1.bf16.msra.mxu0 %v3692
  %4987 = vmatprep.subr.bf16.mxu0 %v3700
  %4988 = vmatpush1.bf16.msra.mxu0 %v3699
  %4989 = vmatprep.subr.bf16.mxu0 %v3707
  %4990 = vmatpush1.bf16.msra.mxu0 %v3706
  %4991 = vmatprep.subr.bf16.mxu0 %v3714
  %4992 = vmatpush1.bf16.msra.mxu0 %v3713
  %4993 = vmatprep.subr.bf16.mxu0 %v3721
  %4994 = vmatpush1.bf16.msra.mxu0 %v3720
  %4995 = vmatprep.subr.bf16.mxu0 %v3728
  %4996 = vmatpush1.bf16.msra.mxu0 %v3727
  %4997 = vmatprep.subr.bf16.mxu0 %v3735
  %4998 = vmatpush1.bf16.msra.mxu0 %v3734
  %4999 = vmatprep.subr.bf16.mxu0 %v3742
  %5000 = vmatpush1.bf16.msra.mxu0 %v3741
  %5001 = vmatprep.subr.bf16.mxu0 %v3749
  %5002 = vmatpush1.bf16.msra.mxu0 %v3748
  %5003 = vmatprep.subr.bf16.mxu0 %v3756
  %5004 = vmatpush1.bf16.msra.mxu0 %v3755
  %5005 = vmatprep.subr.bf16.mxu0 %v3763
  %5006 = vmatpush1.bf16.msra.mxu0 %v3762
  %5007 = vmatprep.mubr.bf16.mxu0 %v268
  %5008 = vmatmul.mubr.bf16.gmra.mrb[0].mxu0 %v267
  %v5009 = vpop.f32.mrb[0].mxu0
  %v5010 = vadd.f32 %v4967, %v5009
  %v5011 = vpop.f32.mrb[0].mxu0
  %v5012 = vadd.f32 %v4969, %v5011
  %v5013 = vpop.f32.mrb[0].mxu0
  %v5014 = vadd.f32 %v4971, %v5013
  %v5015 = vpop.f32.mrb[0].mxu0
  %v5016 = vadd.f32 %v4973, %v5015
  %5017 = vdwg.mxu0
  %5018 = vmatprep.subr.bf16.mxu0 %v3770
  %5019 = vmatpush1.bf16.msra.mxu0 %v3769
  %5020 = vmatprep.subr.bf16.mxu0 %v3777
  %5021 = vmatpush1.bf16.msra.mxu0 %v3776
  %5022 = vmatprep.subr.bf16.mxu0 %v3784
  %5023 = vmatpush1.bf16.msra.mxu0 %v3783
  %5024 = vmatprep.subr.bf16.mxu0 %v3791
  %5025 = vmatpush1.bf16.msra.mxu0 %v3790
  %5026 = vmatprep.subr.bf16.mxu0 %v3798
  %5027 = vmatpush1.bf16.msra.mxu0 %v3797
  %5028 = vmatprep.subr.bf16.mxu0 %v3805
  %5029 = vmatpush1.bf16.msra.mxu0 %v3804
  %5030 = vmatprep.subr.bf16.mxu0 %v3812
  %5031 = vmatpush1.bf16.msra.mxu0 %v3811
  %5032 = vmatprep.subr.bf16.mxu0 %v3819
  %5033 = vmatpush1.bf16.msra.mxu0 %v3818
  %5034 = vmatprep.subr.bf16.mxu0 %v3826
  %5035 = vmatpush1.bf16.msra.mxu0 %v3825
  %5036 = vmatprep.subr.bf16.mxu0 %v3833
  %5037 = vmatpush1.bf16.msra.mxu0 %v3832
  %5038 = vmatprep.subr.bf16.mxu0 %v3840
  %5039 = vmatpush1.bf16.msra.mxu0 %v3839
  %5040 = vmatprep.subr.bf16.mxu0 %v3847
  %5041 = vmatpush1.bf16.msra.mxu0 %v3846
  %5042 = vmatprep.subr.bf16.mxu0 %v3854
  %5043 = vmatpush1.bf16.msra.mxu0 %v3853
  %5044 = vmatprep.subr.bf16.mxu0 %v3861
  %5045 = vmatpush1.bf16.msra.mxu0 %v3860
  %5046 = vmatprep.subr.bf16.mxu0 %v3868
  %5047 = vmatpush1.bf16.msra.mxu0 %v3867
  %5048 = vmatprep.subr.bf16.mxu0 %v3875
  %5049 = vmatpush1.bf16.msra.mxu0 %v3874
  %5050 = vmatprep.mubr.bf16.mxu0 %v270
  %5051 = vmatmul.mubr.bf16.gmra.mrb[0].mxu0 %v269
  %v5052 = vpop.f32.mrb[0].mxu0
  %v5053 = vadd.f32 %v5010, %v5052
  %v5054 = vpop.f32.mrb[0].mxu0
  %v5055 = vadd.f32 %v5012, %v5054
  %v5056 = vpop.f32.mrb[0].mxu0
  %v5057 = vadd.f32 %v5014, %v5056
  %v5058 = vpop.f32.mrb[0].mxu0
  %v5059 = vadd.f32 %v5016, %v5058
  %5060 = vdwg.mxu0
  %5061 = vmatprep.subr.bf16.mxu0 %v3882
  %5062 = vmatpush1.bf16.msra.mxu0 %v3881
  %5063 = vmatprep.subr.bf16.mxu0 %v3889
  %5064 = vmatpush1.bf16.msra.mxu0 %v3888
  %5065 = vmatprep.subr.bf16.mxu0 %v3896
  %5066 = vmatpush1.bf16.msra.mxu0 %v3895
  %5067 = vmatprep.subr.bf16.mxu0 %v3903
  %5068 = vmatpush1.bf16.msra.mxu0 %v3902
  %5069 = vmatprep.subr.bf16.mxu0 %v3910
  %5070 = vmatpush1.bf16.msra.mxu0 %v3909
  %5071 = vmatprep.subr.bf16.mxu0 %v3917
  %5072 = vmatpush1.bf16.msra.mxu0 %v3916
  %5073 = vmatprep.subr.bf16.mxu0 %v3924
  %5074 = vmatpush1.bf16.msra.mxu0 %v3923
  %5075 = vmatprep.subr.bf16.mxu0 %v3931
  %5076 = vmatpush1.bf16.msra.mxu0 %v3930
  %5077 = vmatprep.subr.bf16.mxu0 %v3938
  %5078 = vmatpush1.bf16.msra.mxu0 %v3937
  %5079 = vmatprep.subr.bf16.mxu0 %v3945
  %5080 = vmatpush1.bf16.msra.mxu0 %v3944
  %5081 = vmatprep.subr.bf16.mxu0 %v3952
  %5082 = vmatpush1.bf16.msra.mxu0 %v3951
  %5083 = vmatprep.subr.bf16.mxu0 %v3959
  %5084 = vmatpush1.bf16.msra.mxu0 %v3958
  %5085 = vmatprep.subr.bf16.mxu0 %v3966
  %5086 = vmatpush1.bf16.msra.mxu0 %v3965
  %5087 = vmatprep.subr.bf16.mxu0 %v3973
  %5088 = vmatpush1.bf16.msra.mxu0 %v3972
  %5089 = vmatprep.subr.bf16.mxu0 %v3980
  %5090 = vmatpush1.bf16.msra.mxu0 %v3979
  %5091 = vmatprep.subr.bf16.mxu0 %v3987
  %5092 = vmatpush1.bf16.msra.mxu0 %v3986
  %5093 = vmatprep.mubr.bf16.mxu0 %v272
  %5094 = vmatmul.mubr.bf16.gmra.mrb[0].mxu0 %v271
  %v5095 = vpop.f32.mrb[0].mxu0
  %v5096 = vadd.f32 %v5053, %v5095
  %v5097 = vpop.f32.mrb[0].mxu0
  %v5098 = vadd.f32 %v5055, %v5097
  %v5099 = vpop.f32.mrb[0].mxu0
  %v5100 = vadd.f32 %v5057, %v5099
  %v5101 = vpop.f32.mrb[0].mxu0
  %v5102 = vadd.f32 %v5059, %v5101
  %5103 = vdwg.mxu0
  %5104 = vmatprep.subr.bf16.mxu0 %v3994
  %5105 = vmatpush1.bf16.msra.mxu0 %v3993
  %5106 = vmatprep.subr.bf16.mxu0 %v4001
  %5107 = vmatpush1.bf16.msra.mxu0 %v4000
  %5108 = vmatprep.subr.bf16.mxu0 %v4008
  %5109 = vmatpush1.bf16.msra.mxu0 %v4007
  %5110 = vmatprep.subr.bf16.mxu0 %v4015
  %5111 = vmatpush1.bf16.msra.mxu0 %v4014
  %5112 = vmatprep.subr.bf16.mxu0 %v4022
  %5113 = vmatpush1.bf16.msra.mxu0 %v4021
  %5114 = vmatprep.subr.bf16.mxu0 %v4029
  %5115 = vmatpush1.bf16.msra.mxu0 %v4028
  %5116 = vmatprep.subr.bf16.mxu0 %v4036
  %5117 = vmatpush1.bf16.msra.mxu0 %v4035
  %5118 = vmatprep.subr.bf16.mxu0 %v4043
  %5119 = vmatpush1.bf16.msra.mxu0 %v4042
  %5120 = vmatprep.subr.bf16.mxu0 %v4050
  %5121 = vmatpush1.bf16.msra.mxu0 %v4049
  %5122 = vmatprep.subr.bf16.mxu0 %v4057
  %5123 = vmatpush1.bf16.msra.mxu0 %v4056
  %5124 = vmatprep.subr.bf16.mxu0 %v4064
  %5125 = vmatpush1.bf16.msra.mxu0 %v4063
  %5126 = vmatprep.subr.bf16.mxu0 %v4071
  %5127 = vmatpush1.bf16.msra.mxu0 %v4070
  %5128 = vmatprep.subr.bf16.mxu0 %v4078
  %5129 = vmatpush1.bf16.msra.mxu0 %v4077
  %5130 = vmatprep.subr.bf16.mxu0 %v4085
  %5131 = vmatpush1.bf16.msra.mxu0 %v4084
  %5132 = vmatprep.subr.bf16.mxu0 %v4092
  %5133 = vmatpush1.bf16.msra.mxu0 %v4091
  %5134 = vmatprep.subr.bf16.mxu0 %v4099
  %5135 = vmatpush1.bf16.msra.mxu0 %v4098
  %5136 = vmatprep.mubr.bf16.mxu0 %v274
  %5137 = vmatmul.mubr.bf16.gmra.mrb[0].mxu0 %v273
  %v5138 = vpop.f32.mrb[0].mxu0
  %v5139 = vadd.f32 %v5096, %v5138
  %v5140 = vpop.f32.mrb[0].mxu0
  %v5141 = vadd.f32 %v5098, %v5140
  %v5142 = vpop.f32.mrb[0].mxu0
  %v5143 = vadd.f32 %v5100, %v5142
  %v5144 = vpop.f32.mrb[0].mxu0
  %v5145 = vadd.f32 %v5102, %v5144
  %5146 = vdwg.mxu0
  %5147 = vmatprep.subr.bf16.mxu0 %v4106
  %5148 = vmatpush1.bf16.msra.mxu0 %v4105
  %5149 = vmatprep.subr.bf16.mxu0 %v4113
  %5150 = vmatpush1.bf16.msra.mxu0 %v4112
  %5151 = vmatprep.subr.bf16.mxu0 %v4120
  %5152 = vmatpush1.bf16.msra.mxu0 %v4119
  %5153 = vmatprep.subr.bf16.mxu0 %v4127
  %5154 = vmatpush1.bf16.msra.mxu0 %v4126
  %5155 = vmatprep.subr.bf16.mxu0 %v4134
  %5156 = vmatpush1.bf16.msra.mxu0 %v4133
  %5157 = vmatprep.subr.bf16.mxu0 %v4141
  %5158 = vmatpush1.bf16.msra.mxu0 %v4140
  %5159 = vmatprep.subr.bf16.mxu0 %v4148
  %5160 = vmatpush1.bf16.msra.mxu0 %v4147
  %5161 = vmatprep.subr.bf16.mxu0 %v4155
  %5162 = vmatpush1.bf16.msra.mxu0 %v4154
  %5163 = vmatprep.subr.bf16.mxu0 0
  %5164 = vmatpush1.bf16.msra.mxu0 0
  %5165 = vmatprep.subr.bf16.mxu0 0
  %5166 = vmatpush1.bf16.msra.mxu0 0
  %5167 = vmatprep.subr.bf16.mxu0 0
  %5168 = vmatpush1.bf16.msra.mxu0 0
  %5169 = vmatprep.subr.bf16.mxu0 0
  %5170 = vmatpush1.bf16.msra.mxu0 0
  %5171 = vmatprep.subr.bf16.mxu0 0
  %5172 = vmatpush1.bf16.msra.mxu0 0
  %5173 = vmatprep.subr.bf16.mxu0 0
  %5174 = vmatpush1.bf16.msra.mxu0 0
  %5175 = vmatprep.subr.bf16.mxu0 0
  %5176 = vmatpush1.bf16.msra.mxu0 0
  %5177 = vmatprep.subr.bf16.mxu0 0
  %5178 = vmatpush1.bf16.msra.mxu0 0
  %5179 = vmatprep.mubr.bf16.mxu0 0
  %5180 = vmatmul.mubr.bf16.gmra.mrb[0].mxu0 %v275
  %v5181 = vpop.f32.mrb[0].mxu0
  %v5182 = vadd.f32 %v5139, %v5181
  %v5183 = vpop.f32.mrb[0].mxu0
  %v5184 = vadd.f32 %v5141, %v5183
  %v5185 = vpop.f32.mrb[0].mxu0
  %v5186 = vadd.f32 %v5143, %v5185
  %v5187 = vpop.f32.mrb[0].mxu0
  %v5188 = vadd.f32 %v5145, %v5187
  %5189 = vdwg.mxu0
  %5190 = vmatprep.subr.bf16.mxu0 %v3436
  %5191 = vmatpush1.bf16.msra.mxu0 %v3435
  %5192 = vmatprep.subr.bf16.mxu0 %v3443
  %5193 = vmatpush1.bf16.msra.mxu0 %v3442
  %5194 = vmatprep.subr.bf16.mxu0 %v3450
  %5195 = vmatpush1.bf16.msra.mxu0 %v3449
  %5196 = vmatprep.subr.bf16.mxu0 %v3457
  %5197 = vmatpush1.bf16.msra.mxu0 %v3456
  %5198 = vmatprep.subr.bf16.mxu0 %v3464
  %5199 = vmatpush1.bf16.msra.mxu0 %v3463
  %5200 = vmatprep.subr.bf16.mxu0 %v3471
  %5201 = vmatpush1.bf16.msra.mxu0 %v3470
  %5202 = vmatprep.subr.bf16.mxu0 %v3478
  %5203 = vmatpush1.bf16.msra.mxu0 %v3477
  %5204 = vmatprep.subr.bf16.mxu0 %v3485
  %5205 = vmatpush1.bf16.msra.mxu0 %v3484
  %5206 = vmatprep.subr.bf16.mxu0 %v3492
  %5207 = vmatpush1.bf16.msra.mxu0 %v3491
  %5208 = vmatprep.subr.bf16.mxu0 %v3499
  %5209 = vmatpush1.bf16.msra.mxu0 %v3498
  %5210 = vmatprep.subr.bf16.mxu0 %v3506
  %5211 = vmatpush1.bf16.msra.mxu0 %v3505
  %5212 = vmatprep.subr.bf16.mxu0 %v3513
  %5213 = vmatpush1.bf16.msra.mxu0 %v3512
  %5214 = vmatprep.subr.bf16.mxu0 %v3520
  %5215 = vmatpush1.bf16.msra.mxu0 %v3519
  %5216 = vmatprep.subr.bf16.mxu0 %v3527
  %5217 = vmatpush1.bf16.msra.mxu0 %v3526
  %5218 = vmatprep.subr.bf16.mxu0 %v3534
  %5219 = vmatpush1.bf16.msra.mxu0 %v3533
  %5220 = vmatprep.subr.bf16.mxu0 %v3541
  %5221 = vmatpush1.bf16.msra.mxu0 %v3540
  %5222 = vmatprep.mubr.bf16.mxu0 %v264
  %5223 = vmatmul.mubr.bf16.gmra.mrb[0].mxu0 %v263
  %v5224 = vpop.f32.mrb[0].mxu0
  %v5225 = vadd.f32 %v1121, %v5224
  %v5226 = vpop.f32.mrb[0].mxu0
  %v5227 = vadd.f32 %v1125, %v5226
  %v5228 = vpop.f32.mrb[0].mxu0
  %v5229 = vadd.f32 %v1121, %v5228
  %v5230 = vpop.f32.mrb[0].mxu0
  %v5231 = vadd.f32 %v1125, %v5230
  %5232 = vdwg.mxu0
  %5233 = vmatprep.subr.bf16.mxu0 %v3548
  %5234 = vmatpush1.bf16.msra.mxu0 %v3547
  %5235 = vmatprep.subr.bf16.mxu0 %v3555
  %5236 = vmatpush1.bf16.msra.mxu0 %v3554
  %5237 = vmatprep.subr.bf16.mxu0 %v3562
  %5238 = vmatpush1.bf16.msra.mxu0 %v3561
  %5239 = vmatprep.subr.bf16.mxu0 %v3569
  %5240 = vmatpush1.bf16.msra.mxu0 %v3568
  %5241 = vmatprep.subr.bf16.mxu0 %v3576
  %5242 = vmatpush1.bf16.msra.mxu0 %v3575
  %5243 = vmatprep.subr.bf16.mxu0 %v3583
  %5244 = vmatpush1.bf16.msra.mxu0 %v3582
  %5245 = vmatprep.subr.bf16.mxu0 %v3590
  %5246 = vmatpush1.bf16.msra.mxu0 %v3589
  %5247 = vmatprep.subr.bf16.mxu0 %v3597
  %5248 = vmatpush1.bf16.msra.mxu0 %v3596
  %5249 = vmatprep.subr.bf16.mxu0 %v3604
  %5250 = vmatpush1.bf16.msra.mxu0 %v3603
  %5251 = vmatprep.subr.bf16.mxu0 %v3611
  %5252 = vmatpush1.bf16.msra.mxu0 %v3610
  %5253 = vmatprep.subr.bf16.mxu0 %v3618
  %5254 = vmatpush1.bf16.msra.mxu0 %v3617
  %5255 = vmatprep.subr.bf16.mxu0 %v3625
  %5256 = vmatpush1.bf16.msra.mxu0 %v3624
  %5257 = vmatprep.subr.bf16.mxu0 %v3632
  %5258 = vmatpush1.bf16.msra.mxu0 %v3631
  %5259 = vmatprep.subr.bf16.mxu0 %v3639
  %5260 = vmatpush1.bf16.msra.mxu0 %v3638
  %5261 = vmatprep.subr.bf16.mxu0 %v3646
  %5262 = vmatpush1.bf16.msra.mxu0 %v3645
  %5263 = vmatprep.subr.bf16.mxu0 %v3653
  %5264 = vmatpush1.bf16.msra.mxu0 %v3652
  %5265 = vmatprep.mubr.bf16.mxu0 %v266
  %5266 = vmatmul.mubr.bf16.gmra.mrb[0].mxu0 %v265
  %v5267 = vpop.f32.mrb[0].mxu0
  %v5268 = vadd.f32 %v5225, %v5267
  %v5269 = vpop.f32.mrb[0].mxu0
  %v5270 = vadd.f32 %v5227, %v5269
  %v5271 = vpop.f32.mrb[0].mxu0
  %v5272 = vadd.f32 %v5229, %v5271
  %v5273 = vpop.f32.mrb[0].mxu0
  %v5274 = vadd.f32 %v5231, %v5273
  %5275 = vdwg.mxu0
  %5276 = vmatprep.subr.bf16.mxu0 %v3660
  %5277 = vmatpush1.bf16.msra.mxu0 %v3659
  %5278 = vmatprep.subr.bf16.mxu0 %v3667
  %5279 = vmatpush1.bf16.msra.mxu0 %v3666
  %5280 = vmatprep.subr.bf16.mxu0 %v3674
  %5281 = vmatpush1.bf16.msra.mxu0 %v3673
  %5282 = vmatprep.subr.bf16.mxu0 %v3681
  %5283 = vmatpush1.bf16.msra.mxu0 %v3680
  %5284 = vmatprep.subr.bf16.mxu0 %v3688
  %5285 = vmatpush1.bf16.msra.mxu0 %v3687
  %5286 = vmatprep.subr.bf16.mxu0 %v3695
  %5287 = vmatpush1.bf16.msra.mxu0 %v3694
  %5288 = vmatprep.subr.bf16.mxu0 %v3702
  %5289 = vmatpush1.bf16.msra.mxu0 %v3701
  %5290 = vmatprep.subr.bf16.mxu0 %v3709
  %5291 = vmatpush1.bf16.msra.mxu0 %v3708
  %5292 = vmatprep.subr.bf16.mxu0 %v3716
  %5293 = vmatpush1.bf16.msra.mxu0 %v3715
  %5294 = vmatprep.subr.bf16.mxu0 %v3723
  %5295 = vmatpush1.bf16.msra.mxu0 %v3722
  %5296 = vmatprep.subr.bf16.mxu0 %v3730
  %5297 = vmatpush1.bf16.msra.mxu0 %v3729
  %5298 = vmatprep.subr.bf16.mxu0 %v3737
  %5299 = vmatpush1.bf16.msra.mxu0 %v3736
  %5300 = vmatprep.subr.bf16.mxu0 %v3744
  %5301 = vmatpush1.bf16.msra.mxu0 %v3743
  %5302 = vmatprep.subr.bf16.mxu0 %v3751
  %5303 = vmatpush1.bf16.msra.mxu0 %v3750
  %5304 = vmatprep.subr.bf16.mxu0 %v3758
  %5305 = vmatpush1.bf16.msra.mxu0 %v3757
  %5306 = vmatprep.subr.bf16.mxu0 %v3765
  %5307 = vmatpush1.bf16.msra.mxu0 %v3764
  %5308 = vmatprep.mubr.bf16.mxu0 %v268
  %5309 = vmatmul.mubr.bf16.gmra.mrb[0].mxu0 %v267
  %v5310 = vpop.f32.mrb[0].mxu0
  %v5311 = vadd.f32 %v5268, %v5310
  %v5312 = vpop.f32.mrb[0].mxu0
  %v5313 = vadd.f32 %v5270, %v5312
  %v5314 = vpop.f32.mrb[0].mxu0
  %v5315 = vadd.f32 %v5272, %v5314
  %v5316 = vpop.f32.mrb[0].mxu0
  %v5317 = vadd.f32 %v5274, %v5316
  %5318 = vdwg.mxu0
  %5319 = vmatprep.subr.bf16.mxu0 %v3772
  %5320 = vmatpush1.bf16.msra.mxu0 %v3771
  %5321 = vmatprep.subr.bf16.mxu0 %v3779
  %5322 = vmatpush1.bf16.msra.mxu0 %v3778
  %5323 = vmatprep.subr.bf16.mxu0 %v3786
  %5324 = vmatpush1.bf16.msra.mxu0 %v3785
  %5325 = vmatprep.subr.bf16.mxu0 %v3793
  %5326 = vmatpush1.bf16.msra.mxu0 %v3792
  %5327 = vmatprep.subr.bf16.mxu0 %v3800
  %5328 = vmatpush1.bf16.msra.mxu0 %v3799
  %5329 = vmatprep.subr.bf16.mxu0 %v3807
  %5330 = vmatpush1.bf16.msra.mxu0 %v3806
  %5331 = vmatprep.subr.bf16.mxu0 %v3814
  %5332 = vmatpush1.bf16.msra.mxu0 %v3813
  %5333 = vmatprep.subr.bf16.mxu0 %v3821
  %5334 = vmatpush1.bf16.msra.mxu0 %v3820
  %5335 = vmatprep.subr.bf16.mxu0 %v3828
  %5336 = vmatpush1.bf16.msra.mxu0 %v3827
  %5337 = vmatprep.subr.bf16.mxu0 %v3835
  %5338 = vmatpush1.bf16.msra.mxu0 %v3834
  %5339 = vmatprep.subr.bf16.mxu0 %v3842
  %5340 = vmatpush1.bf16.msra.mxu0 %v3841
  %5341 = vmatprep.subr.bf16.mxu0 %v3849
  %5342 = vmatpush1.bf16.msra.mxu0 %v3848
  %5343 = vmatprep.subr.bf16.mxu0 %v3856
  %5344 = vmatpush1.bf16.msra.mxu0 %v3855
  %5345 = vmatprep.subr.bf16.mxu0 %v3863
  %5346 = vmatpush1.bf16.msra.mxu0 %v3862
  %5347 = vmatprep.subr.bf16.mxu0 %v3870
  %5348 = vmatpush1.bf16.msra.mxu0 %v3869
  %5349 = vmatprep.subr.bf16.mxu0 %v3877
  %5350 = vmatpush1.bf16.msra.mxu0 %v3876
  %5351 = vmatprep.mubr.bf16.mxu0 %v270
  %5352 = vmatmul.mubr.bf16.gmra.mrb[0].mxu0 %v269
  %v5353 = vpop.f32.mrb[0].mxu0
  %v5354 = vadd.f32 %v5311, %v5353
  %v5355 = vpop.f32.mrb[0].mxu0
  %v5356 = vadd.f32 %v5313, %v5355
  %v5357 = vpop.f32.mrb[0].mxu0
  %v5358 = vadd.f32 %v5315, %v5357
  %v5359 = vpop.f32.mrb[0].mxu0
  %v5360 = vadd.f32 %v5317, %v5359
  %5361 = vdwg.mxu0
  %5362 = vmatprep.subr.bf16.mxu0 %v3884
  %5363 = vmatpush1.bf16.msra.mxu0 %v3883
  %5364 = vmatprep.subr.bf16.mxu0 %v3891
  %5365 = vmatpush1.bf16.msra.mxu0 %v3890
  %5366 = vmatprep.subr.bf16.mxu0 %v3898
  %5367 = vmatpush1.bf16.msra.mxu0 %v3897
  %5368 = vmatprep.subr.bf16.mxu0 %v3905
  %5369 = vmatpush1.bf16.msra.mxu0 %v3904
  %5370 = vmatprep.subr.bf16.mxu0 %v3912
  %5371 = vmatpush1.bf16.msra.mxu0 %v3911
  %5372 = vmatprep.subr.bf16.mxu0 %v3919
  %5373 = vmatpush1.bf16.msra.mxu0 %v3918
  %5374 = vmatprep.subr.bf16.mxu0 %v3926
  %5375 = vmatpush1.bf16.msra.mxu0 %v3925
  %5376 = vmatprep.subr.bf16.mxu0 %v3933
  %5377 = vmatpush1.bf16.msra.mxu0 %v3932
  %5378 = vmatprep.subr.bf16.mxu0 %v3940
  %5379 = vmatpush1.bf16.msra.mxu0 %v3939
  %5380 = vmatprep.subr.bf16.mxu0 %v3947
  %5381 = vmatpush1.bf16.msra.mxu0 %v3946
  %5382 = vmatprep.subr.bf16.mxu0 %v3954
  %5383 = vmatpush1.bf16.msra.mxu0 %v3953
  %5384 = vmatprep.subr.bf16.mxu0 %v3961
  %5385 = vmatpush1.bf16.msra.mxu0 %v3960
  %5386 = vmatprep.subr.bf16.mxu0 %v3968
  %5387 = vmatpush1.bf16.msra.mxu0 %v3967
  %5388 = vmatprep.subr.bf16.mxu0 %v3975
  %5389 = vmatpush1.bf16.msra.mxu0 %v3974
  %5390 = vmatprep.subr.bf16.mxu0 %v3982
  %5391 = vmatpush1.bf16.msra.mxu0 %v3981
  %5392 = vmatprep.subr.bf16.mxu0 %v3989
  %5393 = vmatpush1.bf16.msra.mxu0 %v3988
  %5394 = vmatprep.mubr.bf16.mxu0 %v272
  %5395 = vmatmul.mubr.bf16.gmra.mrb[0].mxu0 %v271
  %v5396 = vpop.f32.mrb[0].mxu0
  %v5397 = vadd.f32 %v5354, %v5396
  %v5398 = vpop.f32.mrb[0].mxu0
  %v5399 = vadd.f32 %v5356, %v5398
  %v5400 = vpop.f32.mrb[0].mxu0
  %v5401 = vadd.f32 %v5358, %v5400
  %v5402 = vpop.f32.mrb[0].mxu0
  %v5403 = vadd.f32 %v5360, %v5402
  %5404 = vdwg.mxu0
  %5405 = vmatprep.subr.bf16.mxu0 %v3996
  %5406 = vmatpush1.bf16.msra.mxu0 %v3995
  %5407 = vmatprep.subr.bf16.mxu0 %v4003
  %5408 = vmatpush1.bf16.msra.mxu0 %v4002
  %5409 = vmatprep.subr.bf16.mxu0 %v4010
  %5410 = vmatpush1.bf16.msra.mxu0 %v4009
  %5411 = vmatprep.subr.bf16.mxu0 %v4017
  %5412 = vmatpush1.bf16.msra.mxu0 %v4016
  %5413 = vmatprep.subr.bf16.mxu0 %v4024
  %5414 = vmatpush1.bf16.msra.mxu0 %v4023
  %5415 = vmatprep.subr.bf16.mxu0 %v4031
  %5416 = vmatpush1.bf16.msra.mxu0 %v4030
  %5417 = vmatprep.subr.bf16.mxu0 %v4038
  %5418 = vmatpush1.bf16.msra.mxu0 %v4037
  %5419 = vmatprep.subr.bf16.mxu0 %v4045
  %5420 = vmatpush1.bf16.msra.mxu0 %v4044
  %5421 = vmatprep.subr.bf16.mxu0 %v4052
  %5422 = vmatpush1.bf16.msra.mxu0 %v4051
  %5423 = vmatprep.subr.bf16.mxu0 %v4059
  %5424 = vmatpush1.bf16.msra.mxu0 %v4058
  %5425 = vmatprep.subr.bf16.mxu0 %v4066
  %5426 = vmatpush1.bf16.msra.mxu0 %v4065
  %5427 = vmatprep.subr.bf16.mxu0 %v4073
  %5428 = vmatpush1.bf16.msra.mxu0 %v4072
  %5429 = vmatprep.subr.bf16.mxu0 %v4080
  %5430 = vmatpush1.bf16.msra.mxu0 %v4079
  %5431 = vmatprep.subr.bf16.mxu0 %v4087
  %5432 = vmatpush1.bf16.msra.mxu0 %v4086
  %5433 = vmatprep.subr.bf16.mxu0 %v4094
  %5434 = vmatpush1.bf16.msra.mxu0 %v4093
  %5435 = vmatprep.subr.bf16.mxu0 %v4101
  %5436 = vmatpush1.bf16.msra.mxu0 %v4100
  %5437 = vmatprep.mubr.bf16.mxu0 %v274
  %5438 = vmatmul.mubr.bf16.gmra.mrb[0].mxu0 %v273
  %v5439 = vpop.f32.mrb[0].mxu0
  %v5440 = vadd.f32 %v5397, %v5439
  %v5441 = vpop.f32.mrb[0].mxu0
  %v5442 = vadd.f32 %v5399, %v5441
  %v5443 = vpop.f32.mrb[0].mxu0
  %v5444 = vadd.f32 %v5401, %v5443
  %v5445 = vpop.f32.mrb[0].mxu0
  %v5446 = vadd.f32 %v5403, %v5445
  %5447 = vdwg.mxu0
  %5448 = vmatprep.subr.bf16.mxu0 %v4108
  %5449 = vmatpush1.bf16.msra.mxu0 %v4107
  %5450 = vmatprep.subr.bf16.mxu0 %v4115
  %5451 = vmatpush1.bf16.msra.mxu0 %v4114
  %5452 = vmatprep.subr.bf16.mxu0 %v4122
  %5453 = vmatpush1.bf16.msra.mxu0 %v4121
  %5454 = vmatprep.subr.bf16.mxu0 %v4129
  %5455 = vmatpush1.bf16.msra.mxu0 %v4128
  %5456 = vmatprep.subr.bf16.mxu0 %v4136
  %5457 = vmatpush1.bf16.msra.mxu0 %v4135
  %5458 = vmatprep.subr.bf16.mxu0 %v4143
  %5459 = vmatpush1.bf16.msra.mxu0 %v4142
  %5460 = vmatprep.subr.bf16.mxu0 %v4150
  %5461 = vmatpush1.bf16.msra.mxu0 %v4149
  %5462 = vmatprep.subr.bf16.mxu0 %v4157
  %5463 = vmatpush1.bf16.msra.mxu0 %v4156
  %5464 = vmatprep.subr.bf16.mxu0 0
  %5465 = vmatpush1.bf16.msra.mxu0 0
  %5466 = vmatprep.subr.bf16.mxu0 0
  %5467 = vmatpush1.bf16.msra.mxu0 0
  %5468 = vmatprep.subr.bf16.mxu0 0
  %5469 = vmatpush1.bf16.msra.mxu0 0
  %5470 = vmatprep.subr.bf16.mxu0 0
  %5471 = vmatpush1.bf16.msra.mxu0 0
  %5472 = vmatprep.subr.bf16.mxu0 0
  %5473 = vmatpush1.bf16.msra.mxu0 0
  %5474 = vmatprep.subr.bf16.mxu0 0
  %5475 = vmatpush1.bf16.msra.mxu0 0
  %5476 = vmatprep.subr.bf16.mxu0 0
  %5477 = vmatpush1.bf16.msra.mxu0 0
  %5478 = vmatprep.subr.bf16.mxu0 0
  %5479 = vmatpush1.bf16.msra.mxu0 0
  %5480 = vmatprep.mubr.bf16.mxu0 0
  %5481 = vmatmul.mubr.bf16.gmra.mrb[0].mxu0 %v275
  %v5482 = vpop.f32.mrb[0].mxu0
  %v5483 = vadd.f32 %v5440, %v5482
  %v5484 = vpop.f32.mrb[0].mxu0
  %v5485 = vadd.f32 %v5442, %v5484
  %v5486 = vpop.f32.mrb[0].mxu0
  %v5487 = vadd.f32 %v5444, %v5486
  %v5488 = vpop.f32.mrb[0].mxu0
  %v5489 = vadd.f32 %v5446, %v5488
  %5490 = vdwg.mxu0
  %5491 = vmatprep.subr.bf16.mxu0 %v3438
  %5492 = vmatpush1.bf16.msra.mxu0 %v3437
  %5493 = vmatprep.subr.bf16.mxu0 %v3445
  %5494 = vmatpush1.bf16.msra.mxu0 %v3444
  %5495 = vmatprep.subr.bf16.mxu0 %v3452
  %5496 = vmatpush1.bf16.msra.mxu0 %v3451
  %5497 = vmatprep.subr.bf16.mxu0 %v3459
  %5498 = vmatpush1.bf16.msra.mxu0 %v3458
  %5499 = vmatprep.subr.bf16.mxu0 %v3466
  %5500 = vmatpush1.bf16.msra.mxu0 %v3465
  %5501 = vmatprep.subr.bf16.mxu0 %v3473
  %5502 = vmatpush1.bf16.msra.mxu0 %v3472
  %5503 = vmatprep.subr.bf16.mxu0 %v3480
  %5504 = vmatpush1.bf16.msra.mxu0 %v3479
  %5505 = vmatprep.subr.bf16.mxu0 %v3487
  %5506 = vmatpush1.bf16.msra.mxu0 %v3486
  %5507 = vmatprep.subr.bf16.mxu0 %v3494
  %5508 = vmatpush1.bf16.msra.mxu0 %v3493
  %5509 = vmatprep.subr.bf16.mxu0 %v3501
  %5510 = vmatpush1.bf16.msra.mxu0 %v3500
  %5511 = vmatprep.subr.bf16.mxu0 %v3508
  %5512 = vmatpush1.bf16.msra.mxu0 %v3507
  %5513 = vmatprep.subr.bf16.mxu0 %v3515
  %5514 = vmatpush1.bf16.msra.mxu0 %v3514
  %5515 = vmatprep.subr.bf16.mxu0 %v3522
  %5516 = vmatpush1.bf16.msra.mxu0 %v3521
  %5517 = vmatprep.subr.bf16.mxu0 %v3529
  %5518 = vmatpush1.bf16.msra.mxu0 %v3528
  %5519 = vmatprep.subr.bf16.mxu0 %v3536
  %5520 = vmatpush1.bf16.msra.mxu0 %v3535
  %5521 = vmatprep.subr.bf16.mxu0 %v3543
  %5522 = vmatpush1.bf16.msra.mxu0 %v3542
  %5523 = vmatprep.mubr.bf16.mxu0 %v264
  %5524 = vmatmul.mubr.bf16.gmra.mrb[0].mxu0 %v263
  %v5525 = vpop.f32.mrb[0].mxu0
  %v5526 = vadd.f32 %v1129, %v5525
  %v5527 = vpop.f32.mrb[0].mxu0
  %v5528 = vadd.f32 %v1133, %v5527
  %v5529 = vpop.f32.mrb[0].mxu0
  %v5530 = vadd.f32 %v1129, %v5529
  %v5531 = vpop.f32.mrb[0].mxu0
  %v5532 = vadd.f32 %v1133, %v5531
  %5533 = vdwg.mxu0
  %5534 = vmatprep.subr.bf16.mxu0 %v3550
  %5535 = vmatpush1.bf16.msra.mxu0 %v3549
  %5536 = vmatprep.subr.bf16.mxu0 %v3557
  %5537 = vmatpush1.bf16.msra.mxu0 %v3556
  %5538 = vmatprep.subr.bf16.mxu0 %v3564
  %5539 = vmatpush1.bf16.msra.mxu0 %v3563
  %5540 = vmatprep.subr.bf16.mxu0 %v3571
  %5541 = vmatpush1.bf16.msra.mxu0 %v3570
  %5542 = vmatprep.subr.bf16.mxu0 %v3578
  %5543 = vmatpush1.bf16.msra.mxu0 %v3577
  %5544 = vmatprep.subr.bf16.mxu0 %v3585
  %5545 = vmatpush1.bf16.msra.mxu0 %v3584
  %5546 = vmatprep.subr.bf16.mxu0 %v3592
  %5547 = vmatpush1.bf16.msra.mxu0 %v3591
  %5548 = vmatprep.subr.bf16.mxu0 %v3599
  %5549 = vmatpush1.bf16.msra.mxu0 %v3598
  %5550 = vmatprep.subr.bf16.mxu0 %v3606
  %5551 = vmatpush1.bf16.msra.mxu0 %v3605
  %5552 = vmatprep.subr.bf16.mxu0 %v3613
  %5553 = vmatpush1.bf16.msra.mxu0 %v3612
  %5554 = vmatprep.subr.bf16.mxu0 %v3620
  %5555 = vmatpush1.bf16.msra.mxu0 %v3619
  %5556 = vmatprep.subr.bf16.mxu0 %v3627
  %5557 = vmatpush1.bf16.msra.mxu0 %v3626
  %5558 = vmatprep.subr.bf16.mxu0 %v3634
  %5559 = vmatpush1.bf16.msra.mxu0 %v3633
  %5560 = vmatprep.subr.bf16.mxu0 %v3641
  %5561 = vmatpush1.bf16.msra.mxu0 %v3640
  %5562 = vmatprep.subr.bf16.mxu0 %v3648
  %5563 = vmatpush1.bf16.msra.mxu0 %v3647
  %5564 = vmatprep.subr.bf16.mxu0 %v3655
  %5565 = vmatpush1.bf16.msra.mxu0 %v3654
  %5566 = vmatprep.mubr.bf16.mxu0 %v266
  %5567 = vmatmul.mubr.bf16.gmra.mrb[0].mxu0 %v265
  %v5568 = vpop.f32.mrb[0].mxu0
  %v5569 = vadd.f32 %v5526, %v5568
  %v5570 = vpop.f32.mrb[0].mxu0
  %v5571 = vadd.f32 %v5528, %v5570
  %v5572 = vpop.f32.mrb[0].mxu0
  %v5573 = vadd.f32 %v5530, %v5572
  %v5574 = vpop.f32.mrb[0].mxu0
  %v5575 = vadd.f32 %v5532, %v5574
  %5576 = vdwg.mxu0
  %5577 = vmatprep.subr.bf16.mxu0 %v3662
  %5578 = vmatpush1.bf16.msra.mxu0 %v3661
  %5579 = vmatprep.subr.bf16.mxu0 %v3669
  %5580 = vmatpush1.bf16.msra.mxu0 %v3668
  %5581 = vmatprep.subr.bf16.mxu0 %v3676
  %5582 = vmatpush1.bf16.msra.mxu0 %v3675
  %5583 = vmatprep.subr.bf16.mxu0 %v3683
  %5584 = vmatpush1.bf16.msra.mxu0 %v3682
  %5585 = vmatprep.subr.bf16.mxu0 %v3690
  %5586 = vmatpush1.bf16.msra.mxu0 %v3689
  %5587 = vmatprep.subr.bf16.mxu0 %v3697
  %5588 = vmatpush1.bf16.msra.mxu0 %v3696
  %5589 = vmatprep.subr.bf16.mxu0 %v3704
  %5590 = vmatpush1.bf16.msra.mxu0 %v3703
  %5591 = vmatprep.subr.bf16.mxu0 %v3711
  %5592 = vmatpush1.bf16.msra.mxu0 %v3710
  %5593 = vmatprep.subr.bf16.mxu0 %v3718
  %5594 = vmatpush1.bf16.msra.mxu0 %v3717
  %5595 = vmatprep.subr.bf16.mxu0 %v3725
  %5596 = vmatpush1.bf16.msra.mxu0 %v3724
  %5597 = vmatprep.subr.bf16.mxu0 %v3732
  %5598 = vmatpush1.bf16.msra.mxu0 %v3731
  %5599 = vmatprep.subr.bf16.mxu0 %v3739
  %5600 = vmatpush1.bf16.msra.mxu0 %v3738
  %5601 = vmatprep.subr.bf16.mxu0 %v3746
  %5602 = vmatpush1.bf16.msra.mxu0 %v3745
  %5603 = vmatprep.subr.bf16.mxu0 %v3753
  %5604 = vmatpush1.bf16.msra.mxu0 %v3752
  %5605 = vmatprep.subr.bf16.mxu0 %v3760
  %5606 = vmatpush1.bf16.msra.mxu0 %v3759
  %5607 = vmatprep.subr.bf16.mxu0 %v3767
  %5608 = vmatpush1.bf16.msra.mxu0 %v3766
  %5609 = vmatprep.mubr.bf16.mxu0 %v268
  %5610 = vmatmul.mubr.bf16.gmra.mrb[0].mxu0 %v267
  %v5611 = vpop.f32.mrb[0].mxu0
  %v5612 = vadd.f32 %v5569, %v5611
  %v5613 = vpop.f32.mrb[0].mxu0
  %v5614 = vadd.f32 %v5571, %v5613
  %v5615 = vpop.f32.mrb[0].mxu0
  %v5616 = vadd.f32 %v5573, %v5615
  %v5617 = vpop.f32.mrb[0].mxu0
  %v5618 = vadd.f32 %v5575, %v5617
  %5619 = vdwg.mxu0
  %5620 = vmatprep.subr.bf16.mxu0 %v3774
  %5621 = vmatpush1.bf16.msra.mxu0 %v3773
  %5622 = vmatprep.subr.bf16.mxu0 %v3781
  %5623 = vmatpush1.bf16.msra.mxu0 %v3780
  %5624 = vmatprep.subr.bf16.mxu0 %v3788
  %5625 = vmatpush1.bf16.msra.mxu0 %v3787
  %5626 = vmatprep.subr.bf16.mxu0 %v3795
  %5627 = vmatpush1.bf16.msra.mxu0 %v3794
  %5628 = vmatprep.subr.bf16.mxu0 %v3802
  %5629 = vmatpush1.bf16.msra.mxu0 %v3801
  %5630 = vmatprep.subr.bf16.mxu0 %v3809
  %5631 = vmatpush1.bf16.msra.mxu0 %v3808
  %5632 = vmatprep.subr.bf16.mxu0 %v3816
  %5633 = vmatpush1.bf16.msra.mxu0 %v3815
  %5634 = vmatprep.subr.bf16.mxu0 %v3823
  %5635 = vmatpush1.bf16.msra.mxu0 %v3822
  %5636 = vmatprep.subr.bf16.mxu0 %v3830
  %5637 = vmatpush1.bf16.msra.mxu0 %v3829
  %5638 = vmatprep.subr.bf16.mxu0 %v3837
  %5639 = vmatpush1.bf16.msra.mxu0 %v3836
  %5640 = vmatprep.subr.bf16.mxu0 %v3844
  %5641 = vmatpush1.bf16.msra.mxu0 %v3843
  %5642 = vmatprep.subr.bf16.mxu0 %v3851
  %5643 = vmatpush1.bf16.msra.mxu0 %v3850
  %5644 = vmatprep.subr.bf16.mxu0 %v3858
  %5645 = vmatpush1.bf16.msra.mxu0 %v3857
  %5646 = vmatprep.subr.bf16.mxu0 %v3865
  %5647 = vmatpush1.bf16.msra.mxu0 %v3864
  %5648 = vmatprep.subr.bf16.mxu0 %v3872
  %5649 = vmatpush1.bf16.msra.mxu0 %v3871
  %5650 = vmatprep.subr.bf16.mxu0 %v3879
  %5651 = vmatpush1.bf16.msra.mxu0 %v3878
  %5652 = vmatprep.mubr.bf16.mxu0 %v270
  %5653 = vmatmul.mubr.bf16.gmra.mrb[0].mxu0 %v269
  %v5654 = vpop.f32.mrb[0].mxu0
  %v5655 = vadd.f32 %v5612, %v5654
  %v5656 = vpop.f32.mrb[0].mxu0
  %v5657 = vadd.f32 %v5614, %v5656
  %v5658 = vpop.f32.mrb[0].mxu0
  %v5659 = vadd.f32 %v5616, %v5658
  %v5660 = vpop.f32.mrb[0].mxu0
  %v5661 = vadd.f32 %v5618, %v5660
  %5662 = vdwg.mxu0
  %5663 = vmatprep.subr.bf16.mxu0 %v3886
  %5664 = vmatpush1.bf16.msra.mxu0 %v3885
  %5665 = vmatprep.subr.bf16.mxu0 %v3893
  %5666 = vmatpush1.bf16.msra.mxu0 %v3892
  %5667 = vmatprep.subr.bf16.mxu0 %v3900
  %5668 = vmatpush1.bf16.msra.mxu0 %v3899
  %5669 = vmatprep.subr.bf16.mxu0 %v3907
  %5670 = vmatpush1.bf16.msra.mxu0 %v3906
  %5671 = vmatprep.subr.bf16.mxu0 %v3914
  %5672 = vmatpush1.bf16.msra.mxu0 %v3913
  %5673 = vmatprep.subr.bf16.mxu0 %v3921
  %5674 = vmatpush1.bf16.msra.mxu0 %v3920
  %5675 = vmatprep.subr.bf16.mxu0 %v3928
  %5676 = vmatpush1.bf16.msra.mxu0 %v3927
  %5677 = vmatprep.subr.bf16.mxu0 %v3935
  %5678 = vmatpush1.bf16.msra.mxu0 %v3934
  %5679 = vmatprep.subr.bf16.mxu0 %v3942
  %5680 = vmatpush1.bf16.msra.mxu0 %v3941
  %5681 = vmatprep.subr.bf16.mxu0 %v3949
  %5682 = vmatpush1.bf16.msra.mxu0 %v3948
  %5683 = vmatprep.subr.bf16.mxu0 %v3956
  %5684 = vmatpush1.bf16.msra.mxu0 %v3955
  %5685 = vmatprep.subr.bf16.mxu0 %v3963
  %5686 = vmatpush1.bf16.msra.mxu0 %v3962
  %5687 = vmatprep.subr.bf16.mxu0 %v3970
  %5688 = vmatpush1.bf16.msra.mxu0 %v3969
  %5689 = vmatprep.subr.bf16.mxu0 %v3977
  %5690 = vmatpush1.bf16.msra.mxu0 %v3976
  %5691 = vmatprep.subr.bf16.mxu0 %v3984
  %5692 = vmatpush1.bf16.msra.mxu0 %v3983
  %5693 = vmatprep.subr.bf16.mxu0 %v3991
  %5694 = vmatpush1.bf16.msra.mxu0 %v3990
  %5695 = vmatprep.mubr.bf16.mxu0 %v272
  %5696 = vmatmul.mubr.bf16.gmra.mrb[0].mxu0 %v271
  %v5697 = vpop.f32.mrb[0].mxu0
  %v5698 = vadd.f32 %v5655, %v5697
  %v5699 = vpop.f32.mrb[0].mxu0
  %v5700 = vadd.f32 %v5657, %v5699
  %v5701 = vpop.f32.mrb[0].mxu0
  %v5702 = vadd.f32 %v5659, %v5701
  %v5703 = vpop.f32.mrb[0].mxu0
  %v5704 = vadd.f32 %v5661, %v5703
  %5705 = vdwg.mxu0
  %5706 = vmatprep.subr.bf16.mxu0 %v3998
  %5707 = vmatpush1.bf16.msra.mxu0 %v3997
  %5708 = vmatprep.subr.bf16.mxu0 %v4005
  %5709 = vmatpush1.bf16.msra.mxu0 %v4004
  %5710 = vmatprep.subr.bf16.mxu0 %v4012
  %5711 = vmatpush1.bf16.msra.mxu0 %v4011
  %5712 = vmatprep.subr.bf16.mxu0 %v4019
  %5713 = vmatpush1.bf16.msra.mxu0 %v4018
  %5714 = vmatprep.subr.bf16.mxu0 %v4026
  %5715 = vmatpush1.bf16.msra.mxu0 %v4025
  %5716 = vmatprep.subr.bf16.mxu0 %v4033
  %5717 = vmatpush1.bf16.msra.mxu0 %v4032
  %5718 = vmatprep.subr.bf16.mxu0 %v4040
  %5719 = vmatpush1.bf16.msra.mxu0 %v4039
  %5720 = vmatprep.subr.bf16.mxu0 %v4047
  %5721 = vmatpush1.bf16.msra.mxu0 %v4046
  %5722 = vmatprep.subr.bf16.mxu0 %v4054
  %5723 = vmatpush1.bf16.msra.mxu0 %v4053
  %5724 = vmatprep.subr.bf16.mxu0 %v4061
  %5725 = vmatpush1.bf16.msra.mxu0 %v4060
  %5726 = vmatprep.subr.bf16.mxu0 %v4068
  %5727 = vmatpush1.bf16.msra.mxu0 %v4067
  %5728 = vmatprep.subr.bf16.mxu0 %v4075
  %5729 = vmatpush1.bf16.msra.mxu0 %v4074
  %5730 = vmatprep.subr.bf16.mxu0 %v4082
  %5731 = vmatpush1.bf16.msra.mxu0 %v4081
  %5732 = vmatprep.subr.bf16.mxu0 %v4089
  %5733 = vmatpush1.bf16.msra.mxu0 %v4088
  %5734 = vmatprep.subr.bf16.mxu0 %v4096
  %5735 = vmatpush1.bf16.msra.mxu0 %v4095
  %5736 = vmatprep.subr.bf16.mxu0 %v4103
  %5737 = vmatpush1.bf16.msra.mxu0 %v4102
  %5738 = vmatprep.mubr.bf16.mxu0 %v274
  %5739 = vmatmul.mubr.bf16.gmra.mrb[0].mxu0 %v273
  %v5740 = vpop.f32.mrb[0].mxu0
  %v5741 = vadd.f32 %v5698, %v5740
  %v5742 = vpop.f32.mrb[0].mxu0
  %v5743 = vadd.f32 %v5700, %v5742
  %v5744 = vpop.f32.mrb[0].mxu0
  %v5745 = vadd.f32 %v5702, %v5744
  %v5746 = vpop.f32.mrb[0].mxu0
  %v5747 = vadd.f32 %v5704, %v5746
  %5748 = vdwg.mxu0
  %5749 = vmatprep.subr.bf16.mxu0 %v4110
  %5750 = vmatpush1.bf16.msra.mxu0 %v4109
  %5751 = vmatprep.subr.bf16.mxu0 %v4117
  %5752 = vmatpush1.bf16.msra.mxu0 %v4116
  %5753 = vmatprep.subr.bf16.mxu0 %v4124
  %5754 = vmatpush1.bf16.msra.mxu0 %v4123
  %5755 = vmatprep.subr.bf16.mxu0 %v4131
  %5756 = vmatpush1.bf16.msra.mxu0 %v4130
  %5757 = vmatprep.subr.bf16.mxu0 %v4138
  %5758 = vmatpush1.bf16.msra.mxu0 %v4137
  %5759 = vmatprep.subr.bf16.mxu0 %v4145
  %5760 = vmatpush1.bf16.msra.mxu0 %v4144
  %5761 = vmatprep.subr.bf16.mxu0 %v4152
  %5762 = vmatpush1.bf16.msra.mxu0 %v4151
  %5763 = vmatprep.subr.bf16.mxu0 %v4159
  %5764 = vmatpush1.bf16.msra.mxu0 %v4158
  %5765 = vmatprep.subr.bf16.mxu0 0
  %5766 = vmatpush1.bf16.msra.mxu0 0
  %5767 = vmatprep.subr.bf16.mxu0 0
  %5768 = vmatpush1.bf16.msra.mxu0 0
  %5769 = vmatprep.subr.bf16.mxu0 0
  %5770 = vmatpush1.bf16.msra.mxu0 0
  %5771 = vmatprep.subr.bf16.mxu0 0
  %5772 = vmatpush1.bf16.msra.mxu0 0
  %5773 = vmatprep.subr.bf16.mxu0 0
  %5774 = vmatpush1.bf16.msra.mxu0 0
  %5775 = vmatprep.subr.bf16.mxu0 0
  %5776 = vmatpush1.bf16.msra.mxu0 0
  %5777 = vmatprep.subr.bf16.mxu0 0
  %5778 = vmatpush1.bf16.msra.mxu0 0
  %5779 = vmatprep.subr.bf16.mxu0 0
  %5780 = vmatpush1.bf16.msra.mxu0 0
  %5781 = vmatprep.mubr.bf16.mxu0 0
  %5782 = vmatmul.mubr.bf16.gmra.mrb[0].mxu0 %v275
  %v5783 = vpop.f32.mrb[0].mxu0
  %v5784 = vadd.f32 %v5741, %v5783
  %v5785 = vpop.f32.mrb[0].mxu0
  %v5786 = vadd.f32 %v5743, %v5785
  %v5787 = vpop.f32.mrb[0].mxu0
  %v5788 = vadd.f32 %v5745, %v5787
  %v5789 = vpop.f32.mrb[0].mxu0
  %v5790 = vadd.f32 %v5747, %v5789
  %5791 = vdwg.mxu0
  %5792 = vmatprep.subr.bf16.mxu0 0
  %5793 = vmatpush1.bf16.msra.mxu0 %v3439
  %5794 = vmatprep.subr.bf16.mxu0 0
  %5795 = vmatpush1.bf16.msra.mxu0 %v3446
  %5796 = vmatprep.subr.bf16.mxu0 0
  %5797 = vmatpush1.bf16.msra.mxu0 %v3453
  %5798 = vmatprep.subr.bf16.mxu0 0
  %5799 = vmatpush1.bf16.msra.mxu0 %v3460
  %5800 = vmatprep.subr.bf16.mxu0 0
  %5801 = vmatpush1.bf16.msra.mxu0 %v3467
  %5802 = vmatprep.subr.bf16.mxu0 0
  %5803 = vmatpush1.bf16.msra.mxu0 %v3474
  %5804 = vmatprep.subr.bf16.mxu0 0
  %5805 = vmatpush1.bf16.msra.mxu0 %v3481
  %5806 = vmatprep.subr.bf16.mxu0 0
  %5807 = vmatpush1.bf16.msra.mxu0 %v3488
  %5808 = vmatprep.subr.bf16.mxu0 0
  %5809 = vmatpush1.bf16.msra.mxu0 %v3495
  %5810 = vmatprep.subr.bf16.mxu0 0
  %5811 = vmatpush1.bf16.msra.mxu0 %v3502
  %5812 = vmatprep.subr.bf16.mxu0 0
  %5813 = vmatpush1.bf16.msra.mxu0 %v3509
  %5814 = vmatprep.subr.bf16.mxu0 0
  %5815 = vmatpush1.bf16.msra.mxu0 %v3516
  %5816 = vmatprep.subr.bf16.mxu0 0
  %5817 = vmatpush1.bf16.msra.mxu0 %v3523
  %5818 = vmatprep.subr.bf16.mxu0 0
  %5819 = vmatpush1.bf16.msra.mxu0 %v3530
  %5820 = vmatprep.subr.bf16.mxu0 0
  %5821 = vmatpush1.bf16.msra.mxu0 %v3537
  %5822 = vmatprep.subr.bf16.mxu0 0
  %5823 = vmatpush1.bf16.msra.mxu0 %v3544
  %5824 = vmatprep.mubr.bf16.mxu0 %v264
  %5825 = vmatmul.mubr.bf16.gmra.mrb[0].mxu0 %v263
  %v5826 = vpop.f32.mrb[0].mxu0
  %v5827 = vadd.f32 %v1137, %v5826
  %v5828 = vpop.f32.mrb[0].mxu0
  %v5829 = vpop.f32.mrb[0].mxu0
  %v5830 = vadd.f32 %v1137, %v5829
  %v5831 = vpop.f32.mrb[0].mxu0
  %5832 = vdwg.mxu0
  %5833 = vmatprep.subr.bf16.mxu0 0
  %5834 = vmatpush1.bf16.msra.mxu0 %v3551
  %5835 = vmatprep.subr.bf16.mxu0 0
  %5836 = vmatpush1.bf16.msra.mxu0 %v3558
  %5837 = vmatprep.subr.bf16.mxu0 0
  %5838 = vmatpush1.bf16.msra.mxu0 %v3565
  %5839 = vmatprep.subr.bf16.mxu0 0
  %5840 = vmatpush1.bf16.msra.mxu0 %v3572
  %5841 = vmatprep.subr.bf16.mxu0 0
  %5842 = vmatpush1.bf16.msra.mxu0 %v3579
  %5843 = vmatprep.subr.bf16.mxu0 0
  %5844 = vmatpush1.bf16.msra.mxu0 %v3586
  %5845 = vmatprep.subr.bf16.mxu0 0
  %5846 = vmatpush1.bf16.msra.mxu0 %v3593
  %5847 = vmatprep.subr.bf16.mxu0 0
  %5848 = vmatpush1.bf16.msra.mxu0 %v3600
  %5849 = vmatprep.subr.bf16.mxu0 0
  %5850 = vmatpush1.bf16.msra.mxu0 %v3607
  %5851 = vmatprep.subr.bf16.mxu0 0
  %5852 = vmatpush1.bf16.msra.mxu0 %v3614
  %5853 = vmatprep.subr.bf16.mxu0 0
  %5854 = vmatpush1.bf16.msra.mxu0 %v3621
  %5855 = vmatprep.subr.bf16.mxu0 0
  %5856 = vmatpush1.bf16.msra.mxu0 %v3628
  %5857 = vmatprep.subr.bf16.mxu0 0
  %5858 = vmatpush1.bf16.msra.mxu0 %v3635
  %5859 = vmatprep.subr.bf16.mxu0 0
  %5860 = vmatpush1.bf16.msra.mxu0 %v3642
  %5861 = vmatprep.subr.bf16.mxu0 0
  %5862 = vmatpush1.bf16.msra.mxu0 %v3649
  %5863 = vmatprep.subr.bf16.mxu0 0
  %5864 = vmatpush1.bf16.msra.mxu0 %v3656
  %5865 = vmatprep.mubr.bf16.mxu0 %v266
  %5866 = vmatmul.mubr.bf16.gmra.mrb[0].mxu0 %v265
  %v5867 = vpop.f32.mrb[0].mxu0
  %v5868 = vadd.f32 %v5827, %v5867
  %v5869 = vpop.f32.mrb[0].mxu0
  %v5870 = vpop.f32.mrb[0].mxu0
  %v5871 = vadd.f32 %v5830, %v5870
  %v5872 = vpop.f32.mrb[0].mxu0
  %5873 = vdwg.mxu0
  %5874 = vmatprep.subr.bf16.mxu0 0
  %5875 = vmatpush1.bf16.msra.mxu0 %v3663
  %5876 = vmatprep.subr.bf16.mxu0 0
  %5877 = vmatpush1.bf16.msra.mxu0 %v3670
  %5878 = vmatprep.subr.bf16.mxu0 0
  %5879 = vmatpush1.bf16.msra.mxu0 %v3677
  %5880 = vmatprep.subr.bf16.mxu0 0
  %5881 = vmatpush1.bf16.msra.mxu0 %v3684
  %5882 = vmatprep.subr.bf16.mxu0 0
  %5883 = vmatpush1.bf16.msra.mxu0 %v3691
  %5884 = vmatprep.subr.bf16.mxu0 0
  %5885 = vmatpush1.bf16.msra.mxu0 %v3698
  %5886 = vmatprep.subr.bf16.mxu0 0
  %5887 = vmatpush1.bf16.msra.mxu0 %v3705
  %5888 = vmatprep.subr.bf16.mxu0 0
  %5889 = vmatpush1.bf16.msra.mxu0 %v3712
  %5890 = vmatprep.subr.bf16.mxu0 0
  %5891 = vmatpush1.bf16.msra.mxu0 %v3719
  %5892 = vmatprep.subr.bf16.mxu0 0
  %5893 = vmatpush1.bf16.msra.mxu0 %v3726
  %5894 = vmatprep.subr.bf16.mxu0 0
  %5895 = vmatpush1.bf16.msra.mxu0 %v3733
  %5896 = vmatprep.subr.bf16.mxu0 0
  %5897 = vmatpush1.bf16.msra.mxu0 %v3740
  %5898 = vmatprep.subr.bf16.mxu0 0
  %5899 = vmatpush1.bf16.msra.mxu0 %v3747
  %5900 = vmatprep.subr.bf16.mxu0 0
  %5901 = vmatpush1.bf16.msra.mxu0 %v3754
  %5902 = vmatprep.subr.bf16.mxu0 0
  %5903 = vmatpush1.bf16.msra.mxu0 %v3761
  %5904 = vmatprep.subr.bf16.mxu0 0
  %5905 = vmatpush1.bf16.msra.mxu0 %v3768
  %5906 = vmatprep.mubr.bf16.mxu0 %v268
  %5907 = vmatmul.mubr.bf16.gmra.mrb[0].mxu0 %v267
  %v5908 = vpop.f32.mrb[0].mxu0
  %v5909 = vadd.f32 %v5868, %v5908
  %v5910 = vpop.f32.mrb[0].mxu0
  %v5911 = vpop.f32.mrb[0].mxu0
  %v5912 = vadd.f32 %v5871, %v5911
  %v5913 = vpop.f32.mrb[0].mxu0
  %5914 = vdwg.mxu0
  %5915 = vmatprep.subr.bf16.mxu0 0
  %5916 = vmatpush1.bf16.msra.mxu0 %v3775
  %5917 = vmatprep.subr.bf16.mxu0 0
  %5918 = vmatpush1.bf16.msra.mxu0 %v3782
  %5919 = vmatprep.subr.bf16.mxu0 0
  %5920 = vmatpush1.bf16.msra.mxu0 %v3789
  %5921 = vmatprep.subr.bf16.mxu0 0
  %5922 = vmatpush1.bf16.msra.mxu0 %v3796
  %5923 = vmatprep.subr.bf16.mxu0 0
  %5924 = vmatpush1.bf16.msra.mxu0 %v3803
  %5925 = vmatprep.subr.bf16.mxu0 0
  %5926 = vmatpush1.bf16.msra.mxu0 %v3810
  %5927 = vmatprep.subr.bf16.mxu0 0
  %5928 = vmatpush1.bf16.msra.mxu0 %v3817
  %5929 = vmatprep.subr.bf16.mxu0 0
  %5930 = vmatpush1.bf16.msra.mxu0 %v3824
  %5931 = vmatprep.subr.bf16.mxu0 0
  %5932 = vmatpush1.bf16.msra.mxu0 %v3831
  %5933 = vmatprep.subr.bf16.mxu0 0
  %5934 = vmatpush1.bf16.msra.mxu0 %v3838
  %5935 = vmatprep.subr.bf16.mxu0 0
  %5936 = vmatpush1.bf16.msra.mxu0 %v3845
  %5937 = vmatprep.subr.bf16.mxu0 0
  %5938 = vmatpush1.bf16.msra.mxu0 %v3852
  %5939 = vmatprep.subr.bf16.mxu0 0
  %5940 = vmatpush1.bf16.msra.mxu0 %v3859
  %5941 = vmatprep.subr.bf16.mxu0 0
  %5942 = vmatpush1.bf16.msra.mxu0 %v3866
  %5943 = vmatprep.subr.bf16.mxu0 0
  %5944 = vmatpush1.bf16.msra.mxu0 %v3873
  %5945 = vmatprep.subr.bf16.mxu0 0
  %5946 = vmatpush1.bf16.msra.mxu0 %v3880
  %5947 = vmatprep.mubr.bf16.mxu0 %v270
  %5948 = vmatmul.mubr.bf16.gmra.mrb[0].mxu0 %v269
  %v5949 = vpop.f32.mrb[0].mxu0
  %v5950 = vadd.f32 %v5909, %v5949
  %v5951 = vpop.f32.mrb[0].mxu0
  %v5952 = vpop.f32.mrb[0].mxu0
  %v5953 = vadd.f32 %v5912, %v5952
  %v5954 = vpop.f32.mrb[0].mxu0
  %5955 = vdwg.mxu0
  %5956 = vmatprep.subr.bf16.mxu0 0
  %5957 = vmatpush1.bf16.msra.mxu0 %v3887
  %5958 = vmatprep.subr.bf16.mxu0 0
  %5959 = vmatpush1.bf16.msra.mxu0 %v3894
  %5960 = vmatprep.subr.bf16.mxu0 0
  %5961 = vmatpush1.bf16.msra.mxu0 %v3901
  %5962 = vmatprep.subr.bf16.mxu0 0
  %5963 = vmatpush1.bf16.msra.mxu0 %v3908
  %5964 = vmatprep.subr.bf16.mxu0 0
  %5965 = vmatpush1.bf16.msra.mxu0 %v3915
  %5966 = vmatprep.subr.bf16.mxu0 0
  %5967 = vmatpush1.bf16.msra.mxu0 %v3922
  %5968 = vmatprep.subr.bf16.mxu0 0
  %5969 = vmatpush1.bf16.msra.mxu0 %v3929
  %5970 = vmatprep.subr.bf16.mxu0 0
  %5971 = vmatpush1.bf16.msra.mxu0 %v3936
  %5972 = vmatprep.subr.bf16.mxu0 0
  %5973 = vmatpush1.bf16.msra.mxu0 %v3943
  %5974 = vmatprep.subr.bf16.mxu0 0
  %5975 = vmatpush1.bf16.msra.mxu0 %v3950
  %5976 = vmatprep.subr.bf16.mxu0 0
  %5977 = vmatpush1.bf16.msra.mxu0 %v3957
  %5978 = vmatprep.subr.bf16.mxu0 0
  %5979 = vmatpush1.bf16.msra.mxu0 %v3964
  %5980 = vmatprep.subr.bf16.mxu0 0
  %5981 = vmatpush1.bf16.msra.mxu0 %v3971
  %5982 = vmatprep.subr.bf16.mxu0 0
  %5983 = vmatpush1.bf16.msra.mxu0 %v3978
  %5984 = vmatprep.subr.bf16.mxu0 0
  %5985 = vmatpush1.bf16.msra.mxu0 %v3985
  %5986 = vmatprep.subr.bf16.mxu0 0
  %5987 = vmatpush1.bf16.msra.mxu0 %v3992
  %5988 = vmatprep.mubr.bf16.mxu0 %v272
  %5989 = vmatmul.mubr.bf16.gmra.mrb[0].mxu0 %v271
  %v5990 = vpop.f32.mrb[0].mxu0
  %v5991 = vadd.f32 %v5950, %v5990
  %v5992 = vpop.f32.mrb[0].mxu0
  %v5993 = vpop.f32.mrb[0].mxu0
  %v5994 = vadd.f32 %v5953, %v5993
  %v5995 = vpop.f32.mrb[0].mxu0
  %5996 = vdwg.mxu0
  %5997 = vmatprep.subr.bf16.mxu0 0
  %5998 = vmatpush1.bf16.msra.mxu0 %v3999
  %5999 = vmatprep.subr.bf16.mxu0 0
  %6000 = vmatpush1.bf16.msra.mxu0 %v4006
  %6001 = vmatprep.subr.bf16.mxu0 0
  %6002 = vmatpush1.bf16.msra.mxu0 %v4013
  %6003 = vmatprep.subr.bf16.mxu0 0
  %6004 = vmatpush1.bf16.msra.mxu0 %v4020
  %6005 = vmatprep.subr.bf16.mxu0 0
  %6006 = vmatpush1.bf16.msra.mxu0 %v4027
  %6007 = vmatprep.subr.bf16.mxu0 0
  %6008 = vmatpush1.bf16.msra.mxu0 %v4034
  %6009 = vmatprep.subr.bf16.mxu0 0
  %6010 = vmatpush1.bf16.msra.mxu0 %v4041
  %6011 = vmatprep.subr.bf16.mxu0 0
  %6012 = vmatpush1.bf16.msra.mxu0 %v4048
  %6013 = vmatprep.subr.bf16.mxu0 0
  %6014 = vmatpush1.bf16.msra.mxu0 %v4055
  %6015 = vmatprep.subr.bf16.mxu0 0
  %6016 = vmatpush1.bf16.msra.mxu0 %v4062
  %6017 = vmatprep.subr.bf16.mxu0 0
  %6018 = vmatpush1.bf16.msra.mxu0 %v4069
  %6019 = vmatprep.subr.bf16.mxu0 0
  %6020 = vmatpush1.bf16.msra.mxu0 %v4076
  %6021 = vmatprep.subr.bf16.mxu0 0
  %6022 = vmatpush1.bf16.msra.mxu0 %v4083
  %6023 = vmatprep.subr.bf16.mxu0 0
  %6024 = vmatpush1.bf16.msra.mxu0 %v4090
  %6025 = vmatprep.subr.bf16.mxu0 0
  %6026 = vmatpush1.bf16.msra.mxu0 %v4097
  %6027 = vmatprep.subr.bf16.mxu0 0
  %6028 = vmatpush1.bf16.msra.mxu0 %v4104
  %6029 = vmatprep.mubr.bf16.mxu0 %v274
  %6030 = vmatmul.mubr.bf16.gmra.mrb[0].mxu0 %v273
  %v6031 = vpop.f32.mrb[0].mxu0
  %v6032 = vadd.f32 %v5991, %v6031
  %v6033 = vpop.f32.mrb[0].mxu0
  %v6034 = vpop.f32.mrb[0].mxu0
  %v6035 = vadd.f32 %v5994, %v6034
  %v6036 = vpop.f32.mrb[0].mxu0
  %6037 = vdwg.mxu0
  %6038 = vmatprep.subr.bf16.mxu0 0
  %6039 = vmatpush1.bf16.msra.mxu0 %v4111
  %6040 = vmatprep.subr.bf16.mxu0 0
  %6041 = vmatpush1.bf16.msra.mxu0 %v4118
  %6042 = vmatprep.subr.bf16.mxu0 0
  %6043 = vmatpush1.bf16.msra.mxu0 %v4125
  %6044 = vmatprep.subr.bf16.mxu0 0
  %6045 = vmatpush1.bf16.msra.mxu0 %v4132
  %6046 = vmatprep.subr.bf16.mxu0 0
  %6047 = vmatpush1.bf16.msra.mxu0 %v4139
  %6048 = vmatprep.subr.bf16.mxu0 0
  %6049 = vmatpush1.bf16.msra.mxu0 %v4146
  %6050 = vmatprep.subr.bf16.mxu0 0
  %6051 = vmatpush1.bf16.msra.mxu0 %v4153
  %6052 = vmatprep.subr.bf16.mxu0 0
  %6053 = vmatpush1.bf16.msra.mxu0 %v4160
  %6054 = vmatprep.subr.bf16.mxu0 0
  %6055 = vmatpush1.bf16.msra.mxu0 0
  %6056 = vmatprep.subr.bf16.mxu0 0
  %6057 = vmatpush1.bf16.msra.mxu0 0
  %6058 = vmatprep.subr.bf16.mxu0 0
  %6059 = vmatpush1.bf16.msra.mxu0 0
  %6060 = vmatprep.subr.bf16.mxu0 0
  %6061 = vmatpush1.bf16.msra.mxu0 0
  %6062 = vmatprep.subr.bf16.mxu0 0
  %6063 = vmatpush1.bf16.msra.mxu0 0
  %6064 = vmatprep.subr.bf16.mxu0 0
  %6065 = vmatpush1.bf16.msra.mxu0 0
  %6066 = vmatprep.subr.bf16.mxu0 0
  %6067 = vmatpush1.bf16.msra.mxu0 0
  %6068 = vmatprep.subr.bf16.mxu0 0
  %6069 = vmatpush1.bf16.msra.mxu0 0
  %6070 = vmatprep.mubr.bf16.mxu0 0
  %6071 = vmatmul.mubr.bf16.gmra.mrb[0].mxu0 %v275
  %v6072 = vpop.f32.mrb[0].mxu0
  %v6073 = vadd.f32 %v6032, %v6072
  %v6074 = vpop.f32.mrb[0].mxu0
  %v6075 = vpop.f32.mrb[0].mxu0
  %v6076 = vadd.f32 %v6035, %v6075
  %v6077 = vpop.f32.mrb[0].mxu0
  %6078 = vdwg.mxu0
  %v6079 = vmul.f32 %v5182, 0.5
  %v6080 = vmul.f32 %v5184, 0.5
  %v6081 = vmul.f32 %v5483, 0.5
  %v6082 = vmul.f32 %v5485, 0.5
  %v6083 = vmul.f32 %v5784, 0.5
  %v6084 = vmul.f32 %v5786, 0.5
  %v6085 = vmul.f32 %v6073, 0.5
  %v6086 = vmul.f32 %v5186, 0.5
  %v6087 = vmul.f32 %v5188, 0.5
  %v6088 = vmul.f32 %v5487, 0.5
  %v6089 = vmul.f32 %v5489, 0.5
  %v6090 = vmul.f32 %v5788, 0.5
  %v6091 = vmul.f32 %v5790, 0.5
  %v6092 = vmul.f32 %v6076, 0.5
  %v6093 = vtanh.pop %v6079
  %v6094 = vtanh.pop %v6080
  %v6095 = vtanh.pop %v6081
  %v6096 = vtanh.pop %v6082
  %v6097 = vtanh.pop %v6083
  %v6098 = vtanh.pop %v6084
  %v6099 = vtanh.pop %v6085
  %v6100 = vtanh.pop %v6086
  %v6101 = vtanh.pop %v6087
  %v6102 = vtanh.pop %v6088
  %v6103 = vtanh.pop %v6089
  %v6104 = vtanh.pop %v6090
  %v6105 = vtanh.pop %v6091
  %v6106 = vtanh.pop %v6092
  %v6107 = vmul.f32 %v6093, 0.5
  %v6108 = vmul.f32 %v6094, 0.5
  %v6109 = vmul.f32 %v6095, 0.5
  %v6110 = vmul.f32 %v6096, 0.5
  %v6111 = vmul.f32 %v6097, 0.5
  %v6112 = vmul.f32 %v6098, 0.5
  %v6113 = vmul.f32 %v6099, 0.5
  %v6114 = vmul.f32 %v6100, 0.5
  %v6115 = vmul.f32 %v6101, 0.5
  %v6116 = vmul.f32 %v6102, 0.5
  %v6117 = vmul.f32 %v6103, 0.5
  %v6118 = vmul.f32 %v6104, 0.5
  %v6119 = vmul.f32 %v6105, 0.5
  %v6120 = vmul.f32 %v6106, 0.5
  %v6121 = vadd.f32 %v6107, 0.5
  %v6122 = vadd.f32 %v6108, 0.5
  %v6123 = vadd.f32 %v6109, 0.5
  %v6124 = vadd.f32 %v6110, 0.5
  %v6125 = vadd.f32 %v6111, 0.5
  %v6126 = vadd.f32 %v6112, 0.5
  %v6127 = vadd.f32 %v6113, 0.5
  %v6128 = vadd.f32 %v6114, 0.5
  %v6129 = vadd.f32 %v6115, 0.5
  %v6130 = vadd.f32 %v6116, 0.5
  %v6131 = vadd.f32 %v6117, 0.5
  %v6132 = vadd.f32 %v6118, 0.5
  %v6133 = vadd.f32 %v6119, 0.5
  %v6134 = vadd.f32 %v6120, 0.5
  %6135 = vst [vmem:[%s5] sm:$0xff] %v6121
  %6136 = vst [vmem:[%s5 + $0x8] sm:$0xff] %v6122
  %6137 = vst [vmem:[%s5 + $0x10] sm:$0xff] %v6123
  %6138 = vst [vmem:[%s5 + $0x18] sm:$0xff] %v6124
  %6139 = vst [vmem:[%s5 + $0x20] sm:$0xff] %v6125
  %6140 = vst [vmem:[%s5 + $0x28] sm:$0xff] %v6126
  %6141 = vst [vmem:[%s5 + $0x30] sm:$0xff] %v6127
  %6142 = vst [vmem:[%s5 + $0x38] sm:$0xff] %v6128
  %6143 = vst [vmem:[%s5 + $0x40] sm:$0xff] %v6129
  %6144 = vst [vmem:[%s5 + $0x48] sm:$0xff] %v6130
  %6145 = vst [vmem:[%s5 + $0x50] sm:$0xff] %v6131
  %6146 = vst [vmem:[%s5 + $0x58] sm:$0xff] %v6132
  %6147 = vst [vmem:[%s5 + $0x60] sm:$0xff] %v6133
  %6148 = vst [vmem:[%s5 + $0x68] sm:$0xff] %v6134
  // Predicated region
  $region22: #{_forward.5} parent=0 // pred_check
    _
  $region23: #{_forward.5} parent=0 // pred_check_branch
    %6150 = sbr.rel (0) target = $region25
  $region24: #{_forward.5} parent=0 // pred_region
    _
  $region25: #{_forward.5} parent=0 // pred_fallthru
    _
  // Predicated region
  $region26: #{_forward.5} parent=0 // pred_check
    _
  $region27: #{_forward.5} parent=0 // pred_check_branch
    %6152 = sbr.rel (0) target = $region29
  $region28: #{_forward.5} parent=0 // pred_region
    _
  $region29: #{_forward.5} parent=0 // pred_fallthru
    _

</llo_original>
